<compile_context>
chip_gen: v6e
topology: v6e:2x2x1
jax: 0.10.0
libtpu: 0.0.40
codegen_flags: <defaults>
</compile_context>

<pallas_src>
import functools

import jax
import jax.numpy as jnp
from jax import lax
from jax.experimental import pallas as pl
from jax.experimental.pallas import tpu as pltpu

_LN_EPS = 1e-5


def _sigmoid(x):
    # Single EUP transcendental (tanh) instead of exp + divide.
    return 0.5 * (jnp.tanh(0.5 * x) + 1.0)


def _softplus(x):
    return jnp.maximum(x, 0.0) + jnp.log(1.0 + jnp.exp(-jnp.abs(x)))


def _layer_norm(x, g, b):
    mu = jnp.mean(x, axis=-1, keepdims=True)
    var = jnp.mean(jnp.square(x - mu), axis=-1, keepdims=True)
    return (x - mu) * lax.rsqrt(var + _LN_EPS) * g + b


# ----------------------------------------------------------------- kernels

def diff_ln_inproj_kernel(x_ref, y_ref, g_ref, b_ref, wx_ref, wz_ref,
                          diff_ref, xc_ref, z_ref):
    """|x - y|, LayerNorm over channels, in_proj (x and z halves), fused."""
    diff = jnp.abs(x_ref[...] - y_ref[...])                    # (TM, C)
    diff_ref[...] = diff
    xn = _layer_norm(diff, g_ref[...], b_ref[...]).astype(jnp.bfloat16)
    xc_ref[...] = jnp.dot(xn, wx_ref[...], preferred_element_type=jnp.float32)
    z_ref[...] = jnp.dot(xn, wz_ref[...], preferred_element_type=jnp.float32)


def dwconv_silu_kernel(x_ref, w_ref, b_ref, o_ref, pad_ref):
    """Depthwise 3x3 conv (pad=1) + SiLU on one (H, W, D) batch block."""
    H, W, D = x_ref.shape
    pad_ref[...] = jnp.zeros_like(pad_ref)                     # halo = zeros
    pad_ref[1:H + 1, 1:W + 1, :] = x_ref[...]
    acc = jnp.zeros((H, W, D), jnp.float32) + b_ref[...]
    for dh in range(3):
        for dw in range(3):
            acc = acc + (pad_ref[dh:dh + H, dw:dw + W, :]
                         * w_ref[dh:dh + 1, dw:dw + 1, :])
    o_ref[...] = acc * _sigmoid(acc)


def proj_kernel(x_ref, w_ref, dtw_ref, dtb_ref, dt_ref, b_ref, c_ref,
                *, dt_rank, d_state):
    """One wide x_proj matmul per direction + fused dt low-rank projection."""
    xb = x_ref[...].astype(jnp.bfloat16)                       # (TM, D)
    dbc = jnp.dot(xb, w_ref[...], preferred_element_type=jnp.float32)
    dtr = dbc[:, :dt_rank].astype(jnp.bfloat16)
    dt_ref[...] = (jnp.dot(dtr, dtw_ref[...], preferred_element_type=jnp.float32)
                   + dtb_ref[...])
    b_ref[...] = dbc[:, dt_rank:dt_rank + d_state]
    c_ref[...] = dbc[:, dt_rank + d_state:]


def scan_kernel(u_ref, dt_ref, b_ref, c_ref, a_ref, d_ref, *rest,
                reverse, accumulate, chunk):
    """Selective scan for one (batch, direction) block.

    State kept as a single (d_state, d_inner) block; per-chunk full-width
    elementwise prep; reversed traversal implements the flipped directions and
    (optionally) accumulates into an aliased output.
    """
    if accumulate:
        yin_ref, y_ref = rest
    else:
        (y_ref,) = rest
    L, D = u_ref.shape
    S = a_ref.shape[0]
    T = chunk
    n_chunks = L // T

    A = a_ref[...]                                             # (S, D)
    Dp = d_ref[...]                                            # (1, D)
    eye_s = (lax.broadcasted_iota(jnp.int32, (S, S), 0)
             == lax.broadcasted_iota(jnp.int32, (S, S), 1)).astype(jnp.float32)

    def chunk_body(c, h):
        if reverse:
            base = (n_chunks - 1 - c) * T
        else:
            base = c * T
        base = pl.multiple_of(base, T)
        u_c = u_ref[pl.ds(base, T), :]                         # (T, D)
        dt_c = dt_ref[pl.ds(base, T), :]                       # (T, D)
        B_c = b_ref[pl.ds(base, T), :]                         # (T, S)
        C_c = c_ref[pl.ds(base, T), :]                         # (T, S)
        # Hoisted full-width elementwise work (not inside the serial loop).
        delta_c = _softplus(dt_c)
        du_c = delta_c * u_c
        # B chunk transposed to (S, T) via the q@k.T MXU contraction pattern
        # (avoids a vector transpose / relayout in the hot loop).
        Bt_c = lax.dot_general(eye_s, B_c, (((1,), (1,)), ((), ())),
                               preferred_element_type=jnp.float32)
        y_rows = [None] * T
        order = range(T - 1, -1, -1) if reverse else range(T)
        for t in order:
            dA_t = jnp.exp(delta_c[t:t + 1, :] * A)                    # (S, D)
            h = dA_t * h + Bt_c[:, t:t + 1] * du_c[t:t + 1, :]         # (S, D)
            y_rows[t] = jnp.dot(C_c[t:t + 1, :], h,
                                preferred_element_type=jnp.float32)    # (1, D)
        ys = jnp.concatenate(y_rows, axis=0) + Dp * u_c                # (T, D)
        if accumulate:
            ys = ys + yin_ref[pl.ds(base, T), :]
        y_ref[pl.ds(base, T), :] = ys                       # 8-row aligned store
        return h

    h0 = jnp.zeros((S, D), jnp.float32)
    lax.fori_loop(0, n_chunks, chunk_body, h0)


def out_kernel(yrm_ref, ycm_ref, z_ref, diff_ref, g_ref, b_ref, w_ref, o_ref):
    """Sum scan orders, out_norm, SiLU(z) gate, out_proj, residual (fused)."""
    y = yrm_ref[...] + ycm_ref[...]
    yn = _layer_norm(y, g_ref[...], b_ref[...])
    z = z_ref[...]
    yg = (yn * (z * _sigmoid(z))).astype(jnp.bfloat16)
    o_ref[...] = (jnp.dot(yg, w_ref[...], preferred_element_type=jnp.float32)
                  + diff_ref[...])


# ----------------------------------------------------------------- wrapper

def _row_tile(n, cap=512):
    for t in (cap, 256, 128, 64, 32, 16, 8):
        if t <= n and n % t == 0:
            return t
    return n


def _cp(sem):
    return pltpu.CompilerParams(dimension_semantics=sem,
                                vmem_limit_bytes=32 * 1024 * 1024)


def temporal_spectrum_block(x, y, p):
    B, H, W, C = x.shape
    L = H * W
    N = B * L
    K, S, D = p['A_t'].shape                   # directions, d_state, d_inner
    R = p['dt_w'].shape[1]                     # dt_rank
    f32 = jnp.float32
    bf16 = jnp.bfloat16

    xf = x.reshape(N, C).astype(f32)
    yf = y.reshape(N, C).astype(f32)

    wx = p['w_in'][:, :D].astype(bf16)
    wz = p['w_in'][:, D:].astype(bf16)
    w_xproj = p['x_proj_w'].astype(bf16)
    w_dt = p['dt_w'].astype(bf16)
    w_out = p['w_out'].astype(bf16)

    TM = _row_tile(N)
    row2 = lambda i: (i, 0)
    full2 = lambda i: (0, 0)

    # --- fused |x - y| + LayerNorm + in_proj (row-tiled, bf16 MXU) -----------
    diff, x_in, z_part = pl.pallas_call(
        diff_ln_inproj_kernel,
        grid=(N // TM,),
        in_specs=[pl.BlockSpec((TM, C), row2),
                  pl.BlockSpec((TM, C), row2),
                  pl.BlockSpec((1, C), full2),
                  pl.BlockSpec((1, C), full2),
                  pl.BlockSpec((C, D), full2),
                  pl.BlockSpec((C, D), full2)],
        out_specs=(pl.BlockSpec((TM, C), row2),
                   pl.BlockSpec((TM, D), row2),
                   pl.BlockSpec((TM, D), row2)),
        out_shape=(jax.ShapeDtypeStruct((N, C), f32),
                   jax.ShapeDtypeStruct((N, D), f32),
                   jax.ShapeDtypeStruct((N, D), f32)),
        compiler_params=_cp(("parallel",)),
    )(xf, yf, p['ln1_g'], p['ln1_b'], wx, wz)

    # --- depthwise 3x3 conv + SiLU, per-batch block, in-kernel halo ----------
    # TODO(synk): for large H*W, tile spatially with explicit halos instead of
    # one (H, W, D) block per batch.
    x_conv = pl.pallas_call(
        dwconv_silu_kernel,
        grid=(B,),
        in_specs=[pl.BlockSpec((None, H, W, D), lambda b: (b, 0, 0, 0)),
                  pl.BlockSpec((3, 3, D), lambda b: (0, 0, 0)),
                  pl.BlockSpec((1, D), lambda b: (0, 0))],
        out_specs=pl.BlockSpec((None, H, W, D), lambda b: (b, 0, 0, 0)),
        out_shape=jax.ShapeDtypeStruct((B, H, W, D), f32),
        scratch_shapes=[pltpu.VMEM((H + 2, W + 2, D), f32)],
        compiler_params=_cp(("parallel",)),
    )(x_in.reshape(B, H, W, D), p['conv_w'], p['conv_b'])

    # --- the two physical scan orders (row-major, col-major) -----------------
    x_rm = x_conv.reshape(B, L, D)
    x_cm = x_conv.transpose(0, 2, 1, 3).reshape(B, L, D)
    x2 = jnp.stack([x_rm, x_cm], axis=0)                       # (2, B, L, D)

    # --- per-direction x_proj + dt projection --------------------------------
    dts, Bs, Cs = pl.pallas_call(
        functools.partial(proj_kernel, dt_rank=R, d_state=S),
        grid=(K, N // TM),
        in_specs=[pl.BlockSpec((None, TM, D), lambda k, m: (k % 2, m, 0)),
                  pl.BlockSpec((None, D, R + 2 * S), lambda k, m: (k, 0, 0)),
                  pl.BlockSpec((None, R, D), lambda k, m: (k, 0, 0)),
                  pl.BlockSpec((None, 1, D), lambda k, m: (k, 0, 0))],
        out_specs=(pl.BlockSpec((None, TM, D), lambda k, m: (k, m, 0)),
                   pl.BlockSpec((None, TM, S), lambda k, m: (k, m, 0)),
                   pl.BlockSpec((None, TM, S), lambda k, m: (k, m, 0))),
        out_shape=(jax.ShapeDtypeStruct((K, N, D), f32),
                   jax.ShapeDtypeStruct((K, N, S), f32),
                   jax.ShapeDtypeStruct((K, N, S), f32)),
        compiler_params=_cp(("parallel", "parallel")),
    )(x2.reshape(2, N, D), w_xproj, w_dt, p['dt_b'])

    dts = dts.reshape(K, B, L, D)
    Bs = Bs.reshape(K, B, L, S)
    Cs = Cs.reshape(K, B, L, S)

    # --- selective scan: forward (dirs 0,1), then reverse (dirs 2,3) ---------
    chunk = 8
    while L % chunk:
        chunk //= 2
    seq_spec = pl.BlockSpec((None, None, L, D), lambda b, k: (k, b, 0, 0))
    coef_spec = pl.BlockSpec((None, None, L, S), lambda b, k: (k, b, 0, 0))
    a_spec = pl.BlockSpec((None, S, D), lambda b, k: (k, 0, 0))
    dd_spec = pl.BlockSpec((None, 1, D), lambda b, k: (k, 0, 0))
    seq_spec_r = pl.BlockSpec((None, None, L, D), lambda b, k: (k + 2, b, 0, 0))
    coef_spec_r = pl.BlockSpec((None, None, L, S), lambda b, k: (k + 2, b, 0, 0))
    a_spec_r = pl.BlockSpec((None, S, D), lambda b, k: (k + 2, 0, 0))
    dd_spec_r = pl.BlockSpec((None, 1, D), lambda b, k: (k + 2, 0, 0))
    y_spec = pl.BlockSpec((None, None, L, D), lambda b, k: (b, k, 0, 0))

    y_fwd = pl.pallas_call(
        functools.partial(scan_kernel, reverse=False, accumulate=False,
                          chunk=chunk),
        grid=(B, 2),
        in_specs=[seq_spec, seq_spec, coef_spec, coef_spec, a_spec, dd_spec],
        out_specs=y_spec,
        out_shape=jax.ShapeDtypeStruct((B, 2, L, D), f32),
        compiler_params=_cp(("parallel", "parallel")),
    )(x2, dts, Bs, Cs, p['A_t'], p['D_k'])

    y_cmb = pl.pallas_call(
        functools.partial(scan_kernel, reverse=True, accumulate=True,
                          chunk=chunk),
        grid=(B, 2),
        in_specs=[seq_spec, seq_spec_r, coef_spec_r, coef_spec_r, a_spec_r,
                  dd_spec_r, y_spec],
        out_specs=y_spec,
        out_shape=jax.ShapeDtypeStruct((B, 2, L, D), f32),
        input_output_aliases={6: 0},
        compiler_params=_cp(("parallel", "parallel")),
    )(x2, dts, Bs, Cs, p['A_t'], p['D_k'], y_fwd)

    # dirs 0+2 are row-major; dirs 1+3 are col-major -> bring back to row-major.
    y_rm = y_cmb[:, 0].reshape(N, D)
    y_cm = y_cmb[:, 1].reshape(B, W, H, D).transpose(0, 2, 1, 3).reshape(N, D)

    # --- out_norm + SiLU(z) gate + out_proj + residual (row-tiled) -----------
    out = pl.pallas_call(
        out_kernel,
        grid=(N // TM,),
        in_specs=[pl.BlockSpec((TM, D), row2),
                  pl.BlockSpec((TM, D), row2),
                  pl.BlockSpec((TM, D), row2),
                  pl.BlockSpec((TM, C), row2),
                  pl.BlockSpec((1, D), full2),
                  pl.BlockSpec((1, D), full2),
                  pl.BlockSpec((D, C), full2)],
        out_specs=pl.BlockSpec((TM, C), row2),
        out_shape=jax.ShapeDtypeStruct((N, C), f32),
        compiler_params=_cp(("parallel",)),
    )(y_rm, y_cm, z_part, diff, p['out_norm_g'], p['out_norm_b'], w_out)

    return out.reshape(B, H, W, C)


# ----------------------------------------------------------------- params

def init_params(key, dim, expand=2, d_state=16, K=4):
    d_inner = dim * expand
    dt_rank = max(1, (dim + 15) // 16)
    ks = jax.random.split(key, 7)
    n = lambda k, s: jax.random.normal(k, s, jnp.float32)
    A = jnp.tile(jnp.arange(1, d_state + 1, dtype=jnp.float32)[None, None, :],
                 (K, d_inner, 1))                              # (K, d_inner, d_state)
    A_logs = jnp.log(A)
    return {
        'ln1_g': jnp.ones((1, dim), jnp.float32),
        'ln1_b': jnp.zeros((1, dim), jnp.float32),
        'w_in': 0.05 * n(ks[0], (dim, 2 * d_inner)),           # in_proj (no bias)
        'conv_w': 0.2 * n(ks[1], (3, 3, d_inner)),             # depthwise 3x3
        'conv_b': 0.05 * n(ks[2], (1, d_inner)),
        'x_proj_w': 0.05 * n(ks[3], (K, d_inner, dt_rank + 2 * d_state)),
        'dt_w': 0.1 * n(ks[4], (K, dt_rank, d_inner)),
        'dt_b': 0.05 * n(ks[5], (K, 1, d_inner)),
        'A_t': -jnp.exp(A_logs).transpose(0, 2, 1),            # (K, d_state, d_inner)
        'D_k': jnp.ones((K, 1, d_inner), jnp.float32),
        'out_norm_g': jnp.ones((1, d_inner), jnp.float32),
        'out_norm_b': jnp.zeros((1, d_inner), jnp.float32),
        'w_out': 0.05 * n(ks[6], (d_inner, dim)),              # out_proj (no bias)
    }


if __name__ == "__main__":
    B, H, W, dim = 2, 8, 8, 32
    key = jax.random.PRNGKey(0)
    kx, ky, kp = jax.random.split(key, 3)
    x = jax.random.normal(kx, (B, H, W, dim), jnp.float32)
    y = jax.random.normal(ky, (B, H, W, dim), jnp.float32)
    params = init_params(kp, dim)

    fwd = jax.jit(temporal_spectrum_block)
    out = fwd(x, y, params)
    jax.block_until_ready(out)
    assert out.shape == (B, H, W, dim)
    assert bool(jnp.all(jnp.isfinite(out)))
    print("KERNEL_OK")
</pallas_src>

<mosaic_0001>
module attributes {stable_mosaic.version = 11 : i64} {
  func.func @diff_ln_inproj_kernel(%arg0: i32, %arg1: memref<128x32xf32, #tpu.memory_space<vmem>>, %arg2: memref<128x32xf32, #tpu.memory_space<vmem>>, %arg3: memref<1x32xf32, #tpu.memory_space<vmem>>, %arg4: memref<1x32xf32, #tpu.memory_space<vmem>>, %arg5: memref<32x64xbf16, #tpu.memory_space<vmem>>, %arg6: memref<32x64xbf16, #tpu.memory_space<vmem>>, %arg7: memref<128x32xf32, #tpu.memory_space<vmem>>, %arg8: memref<128x64xf32, #tpu.memory_space<vmem>>, %arg9: memref<128x64xf32, #tpu.memory_space<vmem>>) attributes {dimension_semantics = [#tpu.dimension_semantics<parallel>], iteration_bounds = array<i64: 1>, scalar_prefetch = 0 : i64, scratch_operands = 0 : i64, tpu.core_type = #tpu.core_type<tc>, window_params = [{transform_indices = @transform_0, window_bounds = array<i64: 128, 32>}, {transform_indices = @transform_1, window_bounds = array<i64: 128, 32>}, {pipeline_mode = #tpu.pipeline_mode<synchronous>, transform_indices = @transform_2, window_bounds = array<i64: 1, 32>}, {pipeline_mode = #tpu.pipeline_mode<synchronous>, transform_indices = @transform_3, window_bounds = array<i64: 1, 32>}, {pipeline_mode = #tpu.pipeline_mode<synchronous>, transform_indices = @transform_4, window_bounds = array<i64: 32, 64>}, {pipeline_mode = #tpu.pipeline_mode<synchronous>, transform_indices = @transform_5, window_bounds = array<i64: 32, 64>}, {transform_indices = @transform_6, window_bounds = array<i64: 128, 32>}, {transform_indices = @transform_7, window_bounds = array<i64: 128, 64>}, {transform_indices = @transform_8, window_bounds = array<i64: 128, 64>}]} {
    %c0 = arith.constant 0 : index
    %c0_0 = arith.constant 0 : index
    %0 = vector.load %arg1[%c0, %c0_0] : memref<128x32xf32, #tpu.memory_space<vmem>>, vector<128x32xf32>
    %c0_1 = arith.constant 0 : index
    %c0_2 = arith.constant 0 : index
    %1 = vector.load %arg2[%c0_1, %c0_2] : memref<128x32xf32, #tpu.memory_space<vmem>>, vector<128x32xf32>
    %2 = arith.subf %0, %1 : vector<128x32xf32>
    %3 = math.absf %2 : vector<128x32xf32>
    %c0_3 = arith.constant 0 : index
    %c0_4 = arith.constant 0 : index
    %4 = vector.load %arg7[%c0_3, %c0_4] : memref<128x32xf32, #tpu.memory_space<vmem>>, vector<128x32xf32>
    tpu.vector_store %arg7[%c0_3, %c0_4], %3 {strides = array<i32>} : memref<128x32xf32, #tpu.memory_space<vmem>>, vector<128x32xf32>,
    %c0_5 = arith.constant 0 : index
    %c0_6 = arith.constant 0 : index
    %5 = vector.load %arg3[%c0_5, %c0_6] : memref<1x32xf32, #tpu.memory_space<vmem>>, vector<1x32xf32>
    %c0_7 = arith.constant 0 : index
    %c0_8 = arith.constant 0 : index
    %6 = vector.load %arg4[%c0_7, %c0_8] : memref<1x32xf32, #tpu.memory_space<vmem>>, vector<1x32xf32>
    %cst = arith.constant dense<0.000000e+00> : vector<128xf32>
    %7 = vector.multi_reduction <add>, %3, %cst [1] : vector<128x32xf32> to vector<128xf32>
    %8 = vector.shape_cast %7 : vector<128xf32> to vector<128x1xf32>
    %cst_9 = arith.constant 3.200000e+01 : f32
    %9 = vector.broadcast %cst_9 : f32 to vector<128x1xf32>
    %10 = arith.divf %8, %9 : vector<128x1xf32>
    %11 = vector.broadcast %10 : vector<128x1xf32> to vector<128x32xf32>
    %12 = arith.subf %3, %11 : vector<128x32xf32>
    %13 = arith.mulf %12, %12 : vector<128x32xf32>
    %cst_10 = arith.constant dense<0.000000e+00> : vector<128xf32>
    %14 = vector.multi_reduction <add>, %13, %cst_10 [1] : vector<128x32xf32> to vector<128xf32>
    %15 = vector.shape_cast %14 : vector<128xf32> to vector<128x1xf32>
    %cst_11 = arith.constant 3.200000e+01 : f32
    %16 = vector.broadcast %cst_11 : f32 to vector<128x1xf32>
    %17 = arith.divf %15, %16 : vector<128x1xf32>
    %18 = vector.broadcast %10 : vector<128x1xf32> to vector<128x32xf32>
    %19 = arith.subf %3, %18 : vector<128x32xf32>
    %cst_12 = arith.constant 9.99999974E-6 : f32
    %20 = vector.broadcast %cst_12 : f32 to vector<128x1xf32>
    %21 = arith.addf %17, %20 : vector<128x1xf32>
    %22 = math.rsqrt %21 : vector<128x1xf32>
    %23 = vector.broadcast %22 : vector<128x1xf32> to vector<128x32xf32>
    %24 = arith.mulf %19, %23 : vector<128x32xf32>
    %25 = vector.broadcast %5 : vector<1x32xf32> to vector<128x32xf32>
    %26 = arith.mulf %24, %25 : vector<128x32xf32>
    %27 = vector.broadcast %6 : vector<1x32xf32> to vector<128x32xf32>
    %28 = arith.addf %26, %27 : vector<128x32xf32>
    %29 = arith.truncf %28 : vector<128x32xf32> to vector<128x32xbf16>
    %c0_13 = arith.constant 0 : index
    %c0_14 = arith.constant 0 : index
    %30 = vector.load %arg5[%c0_13, %c0_14] : memref<32x64xbf16, #tpu.memory_space<vmem>>, vector<32x64xbf16>
    %cst_15 = arith.constant dense<0.000000e+00> : vector<128x64xf32>
    %31 = tpu.matmul %29, %30, %cst_15 {dimension_numbers = #tpu.dot_dimension_numbers<[1], [0], [0], [1], [0, 0, 1, 1], [], []>} : vector<128x32xbf16>, vector<32x64xbf16>, vector<128x64xf32> -> vector<128x64xf32>
    %c0_16 = arith.constant 0 : index
    %c0_17 = arith.constant 0 : index
    %32 = vector.load %arg8[%c0_16, %c0_17] : memref<128x64xf32, #tpu.memory_space<vmem>>, vector<128x64xf32>
    tpu.vector_store %arg8[%c0_16, %c0_17], %31 {strides = array<i32>} : memref<128x64xf32, #tpu.memory_space<vmem>>, vector<128x64xf32>,
    %c0_18 = arith.constant 0 : index
    %c0_19 = arith.constant 0 : index
    %33 = vector.load %arg6[%c0_18, %c0_19] : memref<32x64xbf16, #tpu.memory_space<vmem>>, vector<32x64xbf16>
    %cst_20 = arith.constant dense<0.000000e+00> : vector<128x64xf32>
    %34 = tpu.matmul %29, %33, %cst_20 {dimension_numbers = #tpu.dot_dimension_numbers<[1], [0], [0], [1], [0, 0, 1, 1], [], []>} : vector<128x32xbf16>, vector<32x64xbf16>, vector<128x64xf32> -> vector<128x64xf32>
    %c0_21 = arith.constant 0 : index
    %c0_22 = arith.constant 0 : index
    %35 = vector.load %arg9[%c0_21, %c0_22] : memref<128x64xf32, #tpu.memory_space<vmem>>, vector<128x64xf32>
    tpu.vector_store %arg9[%c0_21, %c0_22], %34 {strides = array<i32>} : memref<128x64xf32, #tpu.memory_space<vmem>>, vector<128x64xf32>,
    return
  }
  func.func @transform_0(%arg0: i32) -> (i32, i32) {
    %c0_i32 = arith.constant 0 : i32
    %c0_i32_0 = arith.constant 0 : i32
    return %arg0, %c0_i32 : i32, i32
  }
  func.func @transform_1(%arg0: i32) -> (i32, i32) {
    %c0_i32 = arith.constant 0 : i32
    %c0_i32_0 = arith.constant 0 : i32
    return %arg0, %c0_i32 : i32, i32
  }
  func.func @transform_2(%arg0: i32) -> (i32, i32) {
    %c0_i32 = arith.constant 0 : i32
    %c0_i32_0 = arith.constant 0 : i32
    %c0_i32_1 = arith.constant 0 : i32
    return %c0_i32, %c0_i32_0 : i32, i32
  }
  func.func @transform_3(%arg0: i32) -> (i32, i32) {
    %c0_i32 = arith.constant 0 : i32
    %c0_i32_0 = arith.constant 0 : i32
    %c0_i32_1 = arith.constant 0 : i32
    return %c0_i32, %c0_i32_0 : i32, i32
  }
  func.func @transform_4(%arg0: i32) -> (i32, i32) {
    %c0_i32 = arith.constant 0 : i32
    %c0_i32_0 = arith.constant 0 : i32
    %c0_i32_1 = arith.constant 0 : i32
    return %c0_i32, %c0_i32_0 : i32, i32
  }
  func.func @transform_5(%arg0: i32) -> (i32, i32) {
    %c0_i32 = arith.constant 0 : i32
    %c0_i32_0 = arith.constant 0 : i32
    %c0_i32_1 = arith.constant 0 : i32
    return %c0_i32, %c0_i32_0 : i32, i32
  }
  func.func @transform_6(%arg0: i32) -> (i32, i32) {
    %c0_i32 = arith.constant 0 : i32
    %c0_i32_0 = arith.constant 0 : i32
    return %arg0, %c0_i32 : i32, i32
  }
  func.func @transform_7(%arg0: i32) -> (i32, i32) {
    %c0_i32 = arith.constant 0 : i32
    %c0_i32_0 = arith.constant 0 : i32
    return %arg0, %c0_i32 : i32, i32
  }
  func.func @transform_8(%arg0: i32) -> (i32, i32) {
    %c0_i32 = arith.constant 0 : i32
    %c0_i32_0 = arith.constant 0 : i32
    return %arg0, %c0_i32 : i32, i32
  }
}

module attributes {stable_mosaic.version = 11 : i64} {
  func.func @dwconv_silu_kernel(%arg0: i32, %arg1: memref<1x8x8x64xf32, #tpu.memory_space<vmem>>, %arg2: memref<3x3x64xf32, #tpu.memory_space<vmem>>, %arg3: memref<1x64xf32, #tpu.memory_space<vmem>>, %arg4: memref<1x8x8x64xf32, #tpu.memory_space<vmem>>, %arg5: memref<10x10x64xf32, #tpu.memory_space<vmem>>) attributes {dimension_semantics = [#tpu.dimension_semantics<parallel>], iteration_bounds = array<i64: 2>, scalar_prefetch = 0 : i64, scratch_operands = 1 : i64, tpu.core_type = #tpu.core_type<tc>, window_params = [{transform_indices = @transform_0, window_bounds = array<i64: 1, 8, 8, 64>}, {pipeline_mode = #tpu.pipeline_mode<synchronous>, transform_indices = @transform_1, window_bounds = array<i64: 3, 3, 64>}, {pipeline_mode = #tpu.pipeline_mode<synchronous>, transform_indices = @transform_2, window_bounds = array<i64: 1, 64>}, {transform_indices = @transform_3, window_bounds = array<i64: 1, 8, 8, 64>}]} {
    %cst = arith.constant 0.000000e+00 : f32
    %0 = vector.broadcast %cst : f32 to vector<10x10x64xf32>
    %c0 = arith.constant 0 : index
    %c0_0 = arith.constant 0 : index
    %c0_1 = arith.constant 0 : index
    %1 = vector.load %arg5[%c0, %c0_0, %c0_1] : memref<10x10x64xf32, #tpu.memory_space<vmem>>, vector<10x10x64xf32>
    tpu.vector_store %arg5[%c0, %c0_0, %c0_1], %0 {strides = array<i32>} : memref<10x10x64xf32, #tpu.memory_space<vmem>>, vector<10x10x64xf32>,
    %c0_2 = arith.constant 0 : index
    %c0_3 = arith.constant 0 : index
    %c0_4 = arith.constant 0 : index
    %c0_5 = arith.constant 0 : index
    %2 = vector.load %arg1[%c0_2, %c0_3, %c0_4, %c0_5] : memref<1x8x8x64xf32, #tpu.memory_space<vmem>>, vector<1x8x8x64xf32>
    %3 = vector.shape_cast %2 : vector<1x8x8x64xf32> to vector<8x8x64xf32>
    %c1 = arith.constant 1 : index
    %c1_6 = arith.constant 1 : index
    %c0_7 = arith.constant 0 : index
    %4 = vector.load %arg5[%c1, %c1_6, %c0_7] : memref<10x10x64xf32, #tpu.memory_space<vmem>>, vector<8x8x64xf32>
    tpu.vector_store %arg5[%c1, %c1_6, %c0_7], %3 {strides = array<i32>} : memref<10x10x64xf32, #tpu.memory_space<vmem>>, vector<8x8x64xf32>,
    %cst_8 = arith.constant 0.000000e+00 : f32
    %5 = vector.broadcast %cst_8 : f32 to vector<8x8x64xf32>
    %c0_9 = arith.constant 0 : index
    %c0_10 = arith.constant 0 : index
    %6 = vector.load %arg3[%c0_9, %c0_10] : memref<1x64xf32, #tpu.memory_space<vmem>>, vector<1x64xf32>
    %7 = vector.shape_cast %6 : vector<1x64xf32> to vector<1x1x64xf32>
    %8 = vector.broadcast %7 : vector<1x1x64xf32> to vector<8x8x64xf32>
    %9 = arith.addf %5, %8 : vector<8x8x64xf32>
    %c0_11 = arith.constant 0 : index
    %c0_12 = arith.constant 0 : index
    %c0_13 = arith.constant 0 : index
    %10 = vector.load %arg5[%c0_11, %c0_12, %c0_13] : memref<10x10x64xf32, #tpu.memory_space<vmem>>, vector<8x8x64xf32>
    %c0_14 = arith.constant 0 : index
    %c0_15 = arith.constant 0 : index
    %c0_16 = arith.constant 0 : index
    %11 = vector.load %arg2[%c0_14, %c0_15, %c0_16] : memref<3x3x64xf32, #tpu.memory_space<vmem>>, vector<1x1x64xf32>
    %12 = vector.broadcast %11 : vector<1x1x64xf32> to vector<8x8x64xf32>
    %13 = arith.mulf %10, %12 : vector<8x8x64xf32>
    %14 = arith.addf %9, %13 : vector<8x8x64xf32>
    %c0_17 = arith.constant 0 : index
    %c1_18 = arith.constant 1 : index
    %c0_19 = arith.constant 0 : index
    %15 = vector.load %arg5[%c0_17, %c1_18, %c0_19] : memref<10x10x64xf32, #tpu.memory_space<vmem>>, vector<8x8x64xf32>
    %c0_20 = arith.constant 0 : index
    %c1_21 = arith.constant 1 : index
    %c0_22 = arith.constant 0 : index
    %16 = vector.load %arg2[%c0_20, %c1_21, %c0_22] : memref<3x3x64xf32, #tpu.memory_space<vmem>>, vector<1x1x64xf32>
    %17 = vector.broadcast %16 : vector<1x1x64xf32> to vector<8x8x64xf32>
    %18 = arith.mulf %15, %17 : vector<8x8x64xf32>
    %19 = arith.addf %14, %18 : vector<8x8x64xf32>
    %c0_23 = arith.constant 0 : index
    %c2 = arith.constant 2 : index
    %c0_24 = arith.constant 0 : index
    %20 = vector.load %arg5[%c0_23, %c2, %c0_24] : memref<10x10x64xf32, #tpu.memory_space<vmem>>, vector<8x8x64xf32>
    %c0_25 = arith.constant 0 : index
    %c2_26 = arith.constant 2 : index
    %c0_27 = arith.constant 0 : index
    %21 = vector.load %arg2[%c0_25, %c2_26, %c0_27] : memref<3x3x64xf32, #tpu.memory_space<vmem>>, vector<1x1x64xf32>
    %22 = vector.broadcast %21 : vector<1x1x64xf32> to vector<8x8x64xf32>
    %23 = arith.mulf %20, %22 : vector<8x8x64xf32>
    %24 = arith.addf %19, %23 : vector<8x8x64xf32>
    %c1_28 = arith.constant 1 : index
    %c0_29 = arith.constant 0 : index
    %c0_30 = arith.constant 0 : index
    %25 = vector.load %arg5[%c1_28, %c0_29, %c0_30] : memref<10x10x64xf32, #tpu.memory_space<vmem>>, vector<8x8x64xf32>
    %c1_31 = arith.constant 1 : index
    %c0_32 = arith.constant 0 : index
    %c0_33 = arith.constant 0 : index
    %26 = vector.load %arg2[%c1_31, %c0_32, %c0_33] : memref<3x3x64xf32, #tpu.memory_space<vmem>>, vector<1x1x64xf32>
    %27 = vector.broadcast %26 : vector<1x1x64xf32> to vector<8x8x64xf32>
    %28 = arith.mulf %25, %27 : vector<8x8x64xf32>
    %29 = arith.addf %24, %28 : vector<8x8x64xf32>
    %c1_34 = arith.constant 1 : index
    %c1_35 = arith.constant 1 : index
    %c0_36 = arith.constant 0 : index
    %30 = vector.load %arg5[%c1_34, %c1_35, %c0_36] : memref<10x10x64xf32, #tpu.memory_space<vmem>>, vector<8x8x64xf32>
    %c1_37 = arith.constant 1 : index
    %c1_38 = arith.constant 1 : index
    %c0_39 = arith.constant 0 : index
    %31 = vector.load %arg2[%c1_37, %c1_38, %c0_39] : memref<3x3x64xf32, #tpu.memory_space<vmem>>, vector<1x1x64xf32>
    %32 = vector.broadcast %31 : vector<1x1x64xf32> to vector<8x8x64xf32>
    %33 = arith.mulf %30, %32 : vector<8x8x64xf32>
    %34 = arith.addf %29, %33 : vector<8x8x64xf32>
    %c1_40 = arith.constant 1 : index
    %c2_41 = arith.constant 2 : index
    %c0_42 = arith.constant 0 : index
    %35 = vector.load %arg5[%c1_40, %c2_41, %c0_42] : memref<10x10x64xf32, #tpu.memory_space<vmem>>, vector<8x8x64xf32>
    %c1_43 = arith.constant 1 : index
    %c2_44 = arith.constant 2 : index
    %c0_45 = arith.constant 0 : index
    %36 = vector.load %arg2[%c1_43, %c2_44, %c0_45] : memref<3x3x64xf32, #tpu.memory_space<vmem>>, vector<1x1x64xf32>
    %37 = vector.broadcast %36 : vector<1x1x64xf32> to vector<8x8x64xf32>
    %38 = arith.mulf %35, %37 : vector<8x8x64xf32>
    %39 = arith.addf %34, %38 : vector<8x8x64xf32>
    %c2_46 = arith.constant 2 : index
    %c0_47 = arith.constant 0 : index
    %c0_48 = arith.constant 0 : index
    %40 = vector.load %arg5[%c2_46, %c0_47, %c0_48] : memref<10x10x64xf32, #tpu.memory_space<vmem>>, vector<8x8x64xf32>
    %c2_49 = arith.constant 2 : index
    %c0_50 = arith.constant 0 : index
    %c0_51 = arith.constant 0 : index
    %41 = vector.load %arg2[%c2_49, %c0_50, %c0_51] : memref<3x3x64xf32, #tpu.memory_space<vmem>>, vector<1x1x64xf32>
    %42 = vector.broadcast %41 : vector<1x1x64xf32> to vector<8x8x64xf32>
    %43 = arith.mulf %40, %42 : vector<8x8x64xf32>
    %44 = arith.addf %39, %43 : vector<8x8x64xf32>
    %c2_52 = arith.constant 2 : index
    %c1_53 = arith.constant 1 : index
    %c0_54 = arith.constant 0 : index
    %45 = vector.load %arg5[%c2_52, %c1_53, %c0_54] : memref<10x10x64xf32, #tpu.memory_space<vmem>>, vector<8x8x64xf32>
    %c2_55 = arith.constant 2 : index
    %c1_56 = arith.constant 1 : index
    %c0_57 = arith.constant 0 : index
    %46 = vector.load %arg2[%c2_55, %c1_56, %c0_57] : memref<3x3x64xf32, #tpu.memory_space<vmem>>, vector<1x1x64xf32>
    %47 = vector.broadcast %46 : vector<1x1x64xf32> to vector<8x8x64xf32>
    %48 = arith.mulf %45, %47 : vector<8x8x64xf32>
    %49 = arith.addf %44, %48 : vector<8x8x64xf32>
    %c2_58 = arith.constant 2 : index
    %c2_59 = arith.constant 2 : index
    %c0_60 = arith.constant 0 : index
    %50 = vector.load %arg5[%c2_58, %c2_59, %c0_60] : memref<10x10x64xf32, #tpu.memory_space<vmem>>, vector<8x8x64xf32>
    %c2_61 = arith.constant 2 : index
    %c2_62 = arith.constant 2 : index
    %c0_63 = arith.constant 0 : index
    %51 = vector.load %arg2[%c2_61, %c2_62, %c0_63] : memref<3x3x64xf32, #tpu.memory_space<vmem>>, vector<1x1x64xf32>
    %52 = vector.broadcast %51 : vector<1x1x64xf32> to vector<8x8x64xf32>
    %53 = arith.mulf %50, %52 : vector<8x8x64xf32>
    %54 = arith.addf %49, %53 : vector<8x8x64xf32>
    %cst_64 = arith.constant 5.000000e-01 : f32
    %55 = vector.broadcast %cst_64 : f32 to vector<8x8x64xf32>
    %56 = arith.mulf %55, %54 : vector<8x8x64xf32>
    %57 = math.tanh %56 : vector<8x8x64xf32>
    %cst_65 = arith.constant 1.000000e+00 : f32
    %58 = vector.broadcast %cst_65 : f32 to vector<8x8x64xf32>
    %59 = arith.addf %57, %58 : vector<8x8x64xf32>
    %cst_66 = arith.constant 5.000000e-01 : f32
    %60 = vector.broadcast %cst_66 : f32 to vector<8x8x64xf32>
    %61 = arith.mulf %60, %59 : vector<8x8x64xf32>
    %62 = arith.mulf %54, %61 : vector<8x8x64xf32>
    %c0_67 = arith.constant 0 : index
    %c0_68 = arith.constant 0 : index
    %c0_69 = arith.constant 0 : index
    %c0_70 = arith.constant 0 : index
    %63 = vector.load %arg4[%c0_67, %c0_68, %c0_69, %c0_70] : memref<1x8x8x64xf32, #tpu.memory_space<vmem>>, vector<1x8x8x64xf32>
    %64 = vector.shape_cast %63 : vector<1x8x8x64xf32> to vector<8x8x64xf32>
    %65 = vector.shape_cast %62 : vector<8x8x64xf32> to vector<1x8x8x64xf32>
    tpu.vector_store %arg4[%c0_67, %c0_68, %c0_69, %c0_70], %65 {strides = array<i32>} : memref<1x8x8x64xf32, #tpu.memory_space<vmem>>, vector<1x8x8x64xf32>,
    return
  }
  func.func @transform_0(%arg0: i32) -> (i32, i32, i32, i32) {
    %c0_i32 = arith.constant 0 : i32
    %c0_i32_0 = arith.constant 0 : i32
    %c0_i32_1 = arith.constant 0 : i32
    %c0_i32_2 = arith.constant 0 : i32
    return %arg0, %c0_i32, %c0_i32_0, %c0_i32_1 : i32, i32, i32, i32
  }
  func.func @transform_1(%arg0: i32) -> (i32, i32, i32) {
    %c0_i32 = arith.constant 0 : i32
    %c0_i32_0 = arith.constant 0 : i32
    %c0_i32_1 = arith.constant 0 : i32
    %c0_i32_2 = arith.constant 0 : i32
    return %c0_i32, %c0_i32_0, %c0_i32_1 : i32, i32, i32
  }
  func.func @transform_2(%arg0: i32) -> (i32, i32) {
    %c0_i32 = arith.constant 0 : i32
    %c0_i32_0 = arith.constant 0 : i32
    %c0_i32_1 = arith.constant 0 : i32
    return %c0_i32, %c0_i32_0 : i32, i32
  }
  func.func @transform_3(%arg0: i32) -> (i32, i32, i32, i32) {
    %c0_i32 = arith.constant 0 : i32
    %c0_i32_0 = arith.constant 0 : i32
    %c0_i32_1 = arith.constant 0 : i32
    %c0_i32_2 = arith.constant 0 : i32
    return %arg0, %c0_i32, %c0_i32_0, %c0_i32_1 : i32, i32, i32, i32
  }
}

module attributes {stable_mosaic.version = 11 : i64} {
  func.func @proj_kernel(%arg0: i32, %arg1: i32, %arg2: memref<1x128x64xf32, #tpu.memory_space<vmem>>, %arg3: memref<1x64x34xbf16, #tpu.memory_space<vmem>>, %arg4: memref<1x2x64xbf16, #tpu.memory_space<vmem>>, %arg5: memref<1x1x64xf32, #tpu.memory_space<vmem>>, %arg6: memref<1x128x64xf32, #tpu.memory_space<vmem>>, %arg7: memref<1x128x16xf32, #tpu.memory_space<vmem>>, %arg8: memref<1x128x16xf32, #tpu.memory_space<vmem>>) attributes {dimension_semantics = [#tpu.dimension_semantics<parallel>, #tpu.dimension_semantics<parallel>], iteration_bounds = array<i64: 4, 1>, scalar_prefetch = 0 : i64, scratch_operands = 0 : i64, tpu.core_type = #tpu.core_type<tc>, window_params = [{transform_indices = @transform_0, window_bounds = array<i64: 1, 128, 64>}, {transform_indices = @transform_1, window_bounds = array<i64: 1, 64, 34>}, {transform_indices = @transform_2, window_bounds = array<i64: 1, 2, 64>}, {transform_indices = @transform_3, window_bounds = array<i64: 1, 1, 64>}, {transform_indices = @transform_4, window_bounds = array<i64: 1, 128, 64>}, {transform_indices = @transform_5, window_bounds = array<i64: 1, 128, 16>}, {transform_indices = @transform_6, window_bounds = array<i64: 1, 128, 16>}]} {
    %c0 = arith.constant 0 : index
    %c0_0 = arith.constant 0 : index
    %c0_1 = arith.constant 0 : index
    %0 = vector.load %arg2[%c0, %c0_0, %c0_1] : memref<1x128x64xf32, #tpu.memory_space<vmem>>, vector<1x128x64xf32>
    %1 = vector.shape_cast %0 : vector<1x128x64xf32> to vector<128x64xf32>
    %2 = arith.truncf %1 : vector<128x64xf32> to vector<128x64xbf16>
    %c0_2 = arith.constant 0 : index
    %c0_3 = arith.constant 0 : index
    %c0_4 = arith.constant 0 : index
    %3 = vector.load %arg3[%c0_2, %c0_3, %c0_4] : memref<1x64x34xbf16, #tpu.memory_space<vmem>>, vector<1x64x34xbf16>
    %4 = vector.shape_cast %3 : vector<1x64x34xbf16> to vector<64x34xbf16>
    %cst = arith.constant dense<0.000000e+00> : vector<128x34xf32>
    %5 = tpu.matmul %2, %4, %cst {dimension_numbers = #tpu.dot_dimension_numbers<[1], [0], [0], [1], [0, 0, 1, 1], [], []>} : vector<128x64xbf16>, vector<64x34xbf16>, vector<128x34xf32> -> vector<128x34xf32>
    %6 = vector.extract_strided_slice %5 {offsets = [0, 0], sizes = [128, 2], strides = [1, 1]} : vector<128x34xf32> to vector<128x2xf32>
    %7 = arith.truncf %6 : vector<128x2xf32> to vector<128x2xbf16>
    %c0_5 = arith.constant 0 : index
    %c0_6 = arith.constant 0 : index
    %c0_7 = arith.constant 0 : index
    %8 = vector.load %arg4[%c0_5, %c0_6, %c0_7] : memref<1x2x64xbf16, #tpu.memory_space<vmem>>, vector<1x2x64xbf16>
    %9 = vector.shape_cast %8 : vector<1x2x64xbf16> to vector<2x64xbf16>
    %cst_8 = arith.constant dense<0.000000e+00> : vector<128x64xf32>
    %10 = tpu.matmul %7, %9, %cst_8 {dimension_numbers = #tpu.dot_dimension_numbers<[1], [0], [0], [1], [0, 0, 1, 1], [], []>} : vector<128x2xbf16>, vector<2x64xbf16>, vector<128x64xf32> -> vector<128x64xf32>
    %c0_9 = arith.constant 0 : index
    %c0_10 = arith.constant 0 : index
    %c0_11 = arith.constant 0 : index
    %11 = vector.load %arg5[%c0_9, %c0_10, %c0_11] : memref<1x1x64xf32, #tpu.memory_space<vmem>>, vector<1x1x64xf32>
    %12 = vector.shape_cast %11 : vector<1x1x64xf32> to vector<1x64xf32>
    %13 = vector.broadcast %12 : vector<1x64xf32> to vector<128x64xf32>
    %14 = arith.addf %10, %13 : vector<128x64xf32>
    %c0_12 = arith.constant 0 : index
    %c0_13 = arith.constant 0 : index
    %c0_14 = arith.constant 0 : index
    %15 = vector.load %arg6[%c0_12, %c0_13, %c0_14] : memref<1x128x64xf32, #tpu.memory_space<vmem>>, vector<1x128x64xf32>
    %16 = vector.shape_cast %15 : vector<1x128x64xf32> to vector<128x64xf32>
    %17 = vector.shape_cast %14 : vector<128x64xf32> to vector<1x128x64xf32>
    tpu.vector_store %arg6[%c0_12, %c0_13, %c0_14], %17 {strides = array<i32>} : memref<1x128x64xf32, #tpu.memory_space<vmem>>, vector<1x128x64xf32>,
    %18 = vector.extract_strided_slice %5 {offsets = [0, 2], sizes = [128, 16], strides = [1, 1]} : vector<128x34xf32> to vector<128x16xf32>
    %c0_15 = arith.constant 0 : index
    %c0_16 = arith.constant 0 : index
    %c0_17 = arith.constant 0 : index
    %19 = vector.load %arg7[%c0_15, %c0_16, %c0_17] : memref<1x128x16xf32, #tpu.memory_space<vmem>>, vector<1x128x16xf32>
    %20 = vector.shape_cast %19 : vector<1x128x16xf32> to vector<128x16xf32>
    %21 = vector.shape_cast %18 : vector<128x16xf32> to vector<1x128x16xf32>
    tpu.vector_store %arg7[%c0_15, %c0_16, %c0_17], %21 {strides = array<i32>} : memref<1x128x16xf32, #tpu.memory_space<vmem>>, vector<1x128x16xf32>,
    %22 = vector.extract_strided_slice %5 {offsets = [0, 18], sizes = [128, 16], strides = [1, 1]} : vector<128x34xf32> to vector<128x16xf32>
    %c0_18 = arith.constant 0 : index
    %c0_19 = arith.constant 0 : index
    %c0_20 = arith.constant 0 : index
    %23 = vector.load %arg8[%c0_18, %c0_19, %c0_20] : memref<1x128x16xf32, #tpu.memory_space<vmem>>, vector<1x128x16xf32>
    %24 = vector.shape_cast %23 : vector<1x128x16xf32> to vector<128x16xf32>
    %25 = vector.shape_cast %22 : vector<128x16xf32> to vector<1x128x16xf32>
    tpu.vector_store %arg8[%c0_18, %c0_19, %c0_20], %25 {strides = array<i32>} : memref<1x128x16xf32, #tpu.memory_space<vmem>>, vector<1x128x16xf32>,
    return
  }
  func.func @transform_0(%arg0: i32, %arg1: i32) -> (i32, i32, i32) {
    %c2_i32 = arith.constant 2 : i32
    %c0_i32 = arith.constant 0 : i32
    %0 = arith.cmpi eq, %c2_i32, %c0_i32 : i32
    %c1_i32 = arith.constant 1 : i32
    %1 = arith.select %0, %c1_i32, %c2_i32 : i32
    %2 = arith.remsi %arg0, %1 : i32
    %c0_i32_0 = arith.constant 0 : i32
    %3 = arith.cmpi ne, %2, %c0_i32_0 : i32
    %c0_i32_1 = arith.constant 0 : i32
    %4 = arith.cmpi slt, %2, %c0_i32_1 : i32
    %c0_i32_2 = arith.constant 0 : i32
    %5 = arith.cmpi slt, %1, %c0_i32_2 : i32
    %6 = arith.xori %4, %5 : i1
    %7 = arith.andi %6, %3 : i1
    %8 = arith.addi %2, %1 : i32
    %9 = arith.select %7, %8, %2 : i32
    %c0_i32_3 = arith.constant 0 : i32
    %c0_i32_4 = arith.constant 0 : i32
    return %9, %arg1, %c0_i32_3 : i32, i32, i32
  }
  func.func @transform_1(%arg0: i32, %arg1: i32) -> (i32, i32, i32) {
    %c0_i32 = arith.constant 0 : i32
    %c0_i32_0 = arith.constant 0 : i32
    %c0_i32_1 = arith.constant 0 : i32
    return %arg0, %c0_i32, %c0_i32_0 : i32, i32, i32
  }
  func.func @transform_2(%arg0: i32, %arg1: i32) -> (i32, i32, i32) {
    %c0_i32 = arith.constant 0 : i32
    %c0_i32_0 = arith.constant 0 : i32
    %c0_i32_1 = arith.constant 0 : i32
    return %arg0, %c0_i32, %c0_i32_0 : i32, i32, i32
  }
  func.func @transform_3(%arg0: i32, %arg1: i32) -> (i32, i32, i32) {
    %c0_i32 = arith.constant 0 : i32
    %c0_i32_0 = arith.constant 0 : i32
    %c0_i32_1 = arith.constant 0 : i32
    return %arg0, %c0_i32, %c0_i32_0 : i32, i32, i32
  }
  func.func @transform_4(%arg0: i32, %arg1: i32) -> (i32, i32, i32) {
    %c0_i32 = arith.constant 0 : i32
    %c0_i32_0 = arith.constant 0 : i32
    return %arg0, %arg1, %c0_i32 : i32, i32, i32
  }
  func.func @transform_5(%arg0: i32, %arg1: i32) -> (i32, i32, i32) {
    %c0_i32 = arith.constant 0 : i32
    %c0_i32_0 = arith.constant 0 : i32
    return %arg0, %arg1, %c0_i32 : i32, i32, i32
  }
  func.func @transform_6(%arg0: i32, %arg1: i32) -> (i32, i32, i32) {
    %c0_i32 = arith.constant 0 : i32
    %c0_i32_0 = arith.constant 0 : i32
    return %arg0, %arg1, %c0_i32 : i32, i32, i32
  }
}

module attributes {stable_mosaic.version = 11 : i64} {
  func.func @scan_kernel(%arg0: i32, %arg1: i32, %arg2: memref<1x1x64x64xf32, #tpu.memory_space<vmem>>, %arg3: memref<1x1x64x64xf32, #tpu.memory_space<vmem>>, %arg4: memref<1x1x64x16xf32, #tpu.memory_space<vmem>>, %arg5: memref<1x1x64x16xf32, #tpu.memory_space<vmem>>, %arg6: memref<1x16x64xf32, #tpu.memory_space<vmem>>, %arg7: memref<1x1x64xf32, #tpu.memory_space<vmem>>, %arg8: memref<1x1x64x64xf32, #tpu.memory_space<vmem>>) attributes {dimension_semantics = [#tpu.dimension_semantics<parallel>, #tpu.dimension_semantics<parallel>], iteration_bounds = array<i64: 2, 2>, scalar_prefetch = 0 : i64, scratch_operands = 0 : i64, tpu.core_type = #tpu.core_type<tc>, window_params = [{transform_indices = @transform_0, window_bounds = array<i64: 1, 1, 64, 64>}, {transform_indices = @transform_1, window_bounds = array<i64: 1, 1, 64, 64>}, {transform_indices = @transform_2, window_bounds = array<i64: 1, 1, 64, 16>}, {transform_indices = @transform_3, window_bounds = array<i64: 1, 1, 64, 16>}, {transform_indices = @transform_4, window_bounds = array<i64: 1, 16, 64>}, {transform_indices = @transform_5, window_bounds = array<i64: 1, 1, 64>}, {transform_indices = @transform_6, window_bounds = array<i64: 1, 1, 64, 64>}]} {
    %c0 = arith.constant 0 : index
    %c0_0 = arith.constant 0 : index
    %c0_1 = arith.constant 0 : index
    %0 = vector.load %arg6[%c0, %c0_0, %c0_1] : memref<1x16x64xf32, #tpu.memory_space<vmem>>, vector<1x16x64xf32>
    %1 = vector.shape_cast %0 : vector<1x16x64xf32> to vector<16x64xf32>
    %c0_2 = arith.constant 0 : index
    %c0_3 = arith.constant 0 : index
    %c0_4 = arith.constant 0 : index
    %2 = vector.load %arg7[%c0_2, %c0_3, %c0_4] : memref<1x1x64xf32, #tpu.memory_space<vmem>>, vector<1x1x64xf32>
    %3 = vector.shape_cast %2 : vector<1x1x64xf32> to vector<1x64xf32>
    %4 = tpu.iota {dimensions = array<i32: 0>} : vector<16x16xi32>
    %5 = tpu.iota {dimensions = array<i32: 1>} : vector<16x16xi32>
    %6 = arith.cmpi eq, %4, %5 : vector<16x16xi32>
    %7 = arith.extui %6 : vector<16x16xi1> to vector<16x16xi32>
    %8 = arith.sitofp %7 : vector<16x16xi32> to vector<16x16xf32>
    %cst = arith.constant 0.000000e+00 : f32
    %9 = vector.broadcast %cst : f32 to vector<16x64xf32>
    %c0_i32 = arith.constant 0 : i32
    %c8_i32 = arith.constant 8 : i32
    %10 = arith.addi %c0_i32, %c8_i32 : i32
    %c1_i32 = arith.constant 1 : i32
    %11 = scf.for %arg9 = %c0_i32 to %10 step %c1_i32 iter_args(%arg10 = %9) -> (vector<16x64xf32>)  : i32 {
      %c8_i32_6 = arith.constant 8 : i32
      %12 = arith.muli %arg9, %c8_i32_6 : i32
      %13 = tpu.assume_multiple %12, 8 : i32
      %c0_7 = arith.constant 0 : index
      %c0_8 = arith.constant 0 : index
      %14 = arith.index_cast %13 : i32 to index
      %c0_9 = arith.constant 0 : index
      %15 = vector.load %arg2[%c0_7, %c0_8, %14, %c0_9] : memref<1x1x64x64xf32, #tpu.memory_space<vmem>>, vector<1x1x8x64xf32>
      %16 = vector.shape_cast %15 : vector<1x1x8x64xf32> to vector<8x64xf32>
      %c0_10 = arith.constant 0 : index
      %c0_11 = arith.constant 0 : index
      %17 = arith.index_cast %13 : i32 to index
      %c0_12 = arith.constant 0 : index
      %18 = vector.load %arg3[%c0_10, %c0_11, %17, %c0_12] : memref<1x1x64x64xf32, #tpu.memory_space<vmem>>, vector<1x1x8x64xf32>
      %19 = vector.shape_cast %18 : vector<1x1x8x64xf32> to vector<8x64xf32>
      %c0_13 = arith.constant 0 : index
      %c0_14 = arith.constant 0 : index
      %20 = arith.index_cast %13 : i32 to index
      %c0_15 = arith.constant 0 : index
      %21 = vector.load %arg4[%c0_13, %c0_14, %20, %c0_15] : memref<1x1x64x16xf32, #tpu.memory_space<vmem>>, vector<1x1x8x16xf32>
      %22 = vector.shape_cast %21 : vector<1x1x8x16xf32> to vector<8x16xf32>
      %c0_16 = arith.constant 0 : index
      %c0_17 = arith.constant 0 : index
      %23 = arith.index_cast %13 : i32 to index
      %c0_18 = arith.constant 0 : index
      %24 = vector.load %arg5[%c0_16, %c0_17, %23, %c0_18] : memref<1x1x64x16xf32, #tpu.memory_space<vmem>>, vector<1x1x8x16xf32>
      %25 = vector.shape_cast %24 : vector<1x1x8x16xf32> to vector<8x16xf32>
      %cst_19 = arith.constant 0.000000e+00 : f32
      %26 = vector.broadcast %cst_19 : f32 to vector<8x64xf32>
      %27 = arith.maximumf %19, %26 : vector<8x64xf32>
      %28 = math.absf %19 : vector<8x64xf32>
      %cst_20 = arith.constant 0.000000e+00 : f32
      %29 = vector.broadcast %cst_20 : f32 to vector<8x64xf32>
      %30 = arith.subf %29, %28 : vector<8x64xf32>
      %31 = math.exp %30 : vector<8x64xf32>
      %cst_21 = arith.constant 1.000000e+00 : f32
      %32 = vector.broadcast %cst_21 : f32 to vector<8x64xf32>
      %33 = arith.addf %32, %31 : vector<8x64xf32>
      %34 = math.log %33 : vector<8x64xf32>
      %35 = arith.addf %27, %34 : vector<8x64xf32>
      %36 = arith.mulf %35, %16 : vector<8x64xf32>
      %cst_22 = arith.constant dense<0.000000e+00> : vector<16x8xf32>
      %37 = tpu.matmul %8, %22, %cst_22 {dimension_numbers = #tpu.dot_dimension_numbers<[1], [1], [0], [0], [0, 0, 1, 0], [], []>} : vector<16x16xf32>, vector<8x16xf32>, vector<16x8xf32> -> vector<16x8xf32>
      %38 = vector.extract_strided_slice %35 {offsets = [0, 0], sizes = [1, 64], strides = [1, 1]} : vector<8x64xf32> to vector<1x64xf32>
      %39 = vector.broadcast %38 : vector<1x64xf32> to vector<16x64xf32>
      %40 = arith.mulf %39, %1 : vector<16x64xf32>
      %41 = math.exp %40 : vector<16x64xf32>
      %42 = arith.mulf %41, %arg10 : vector<16x64xf32>
      %43 = vector.extract_strided_slice %37 {offsets = [0, 0], sizes = [16, 1], strides = [1, 1]} : vector<16x8xf32> to vector<16x1xf32>
      %44 = vector.extract_strided_slice %36 {offsets = [0, 0], sizes = [1, 64], strides = [1, 1]} : vector<8x64xf32> to vector<1x64xf32>
      %45 = vector.broadcast %43 : vector<16x1xf32> to vector<16x64xf32>
      %46 = vector.broadcast %44 : vector<1x64xf32> to vector<16x64xf32>
      %47 = arith.mulf %45, %46 : vector<16x64xf32>
      %48 = arith.addf %42, %47 : vector<16x64xf32>
      %49 = vector.extract_strided_slice %25 {offsets = [0, 0], sizes = [1, 16], strides = [1, 1]} : vector<8x16xf32> to vector<1x16xf32>
      %cst_23 = arith.constant dense<0.000000e+00> : vector<1x64xf32>
      %50 = tpu.matmul %49, %48, %cst_23 {dimension_numbers = #tpu.dot_dimension_numbers<[1], [0], [0], [1], [0, 0, 1, 1], [], []>} : vector<1x16xf32>, vector<16x64xf32>, vector<1x64xf32> -> vector<1x64xf32>
      %51 = vector.extract_strided_slice %35 {offsets = [1, 0], sizes = [1, 64], strides = [1, 1]} : vector<8x64xf32> to vector<1x64xf32>
      %52 = vector.broadcast %51 : vector<1x64xf32> to vector<16x64xf32>
      %53 = arith.mulf %52, %1 : vector<16x64xf32>
      %54 = math.exp %53 : vector<16x64xf32>
      %55 = arith.mulf %54, %48 : vector<16x64xf32>
      %56 = vector.extract_strided_slice %37 {offsets = [0, 1], sizes = [16, 1], strides = [1, 1]} : vector<16x8xf32> to vector<16x1xf32>
      %57 = vector.extract_strided_slice %36 {offsets = [1, 0], sizes = [1, 64], strides = [1, 1]} : vector<8x64xf32> to vector<1x64xf32>
      %58 = vector.broadcast %56 : vector<16x1xf32> to vector<16x64xf32>
      %59 = vector.broadcast %57 : vector<1x64xf32> to vector<16x64xf32>
      %60 = arith.mulf %58, %59 : vector<16x64xf32>
      %61 = arith.addf %55, %60 : vector<16x64xf32>
      %62 = vector.extract_strided_slice %25 {offsets = [1, 0], sizes = [1, 16], strides = [1, 1]} : vector<8x16xf32> to vector<1x16xf32>
      %cst_24 = arith.constant dense<0.000000e+00> : vector<1x64xf32>
      %63 = tpu.matmul %62, %61, %cst_24 {dimension_numbers = #tpu.dot_dimension_numbers<[1], [0], [0], [1], [0, 0, 1, 1], [], []>} : vector<1x16xf32>, vector<16x64xf32>, vector<1x64xf32> -> vector<1x64xf32>
      %64 = vector.extract_strided_slice %35 {offsets = [2, 0], sizes = [1, 64], strides = [1, 1]} : vector<8x64xf32> to vector<1x64xf32>
      %65 = vector.broadcast %64 : vector<1x64xf32> to vector<16x64xf32>
      %66 = arith.mulf %65, %1 : vector<16x64xf32>
      %67 = math.exp %66 : vector<16x64xf32>
      %68 = arith.mulf %67, %61 : vector<16x64xf32>
      %69 = vector.extract_strided_slice %37 {offsets = [0, 2], sizes = [16, 1], strides = [1, 1]} : vector<16x8xf32> to vector<16x1xf32>
      %70 = vector.extract_strided_slice %36 {offsets = [2, 0], sizes = [1, 64], strides = [1, 1]} : vector<8x64xf32> to vector<1x64xf32>
      %71 = vector.broadcast %69 : vector<16x1xf32> to vector<16x64xf32>
      %72 = vector.broadcast %70 : vector<1x64xf32> to vector<16x64xf32>
      %73 = arith.mulf %71, %72 : vector<16x64xf32>
      %74 = arith.addf %68, %73 : vector<16x64xf32>
      %75 = vector.extract_strided_slice %25 {offsets = [2, 0], sizes = [1, 16], strides = [1, 1]} : vector<8x16xf32> to vector<1x16xf32>
      %cst_25 = arith.constant dense<0.000000e+00> : vector<1x64xf32>
      %76 = tpu.matmul %75, %74, %cst_25 {dimension_numbers = #tpu.dot_dimension_numbers<[1], [0], [0], [1], [0, 0, 1, 1], [], []>} : vector<1x16xf32>, vector<16x64xf32>, vector<1x64xf32> -> vector<1x64xf32>
      %77 = vector.extract_strided_slice %35 {offsets = [3, 0], sizes = [1, 64], strides = [1, 1]} : vector<8x64xf32> to vector<1x64xf32>
      %78 = vector.broadcast %77 : vector<1x64xf32> to vector<16x64xf32>
      %79 = arith.mulf %78, %1 : vector<16x64xf32>
      %80 = math.exp %79 : vector<16x64xf32>
      %81 = arith.mulf %80, %74 : vector<16x64xf32>
      %82 = vector.extract_strided_slice %37 {offsets = [0, 3], sizes = [16, 1], strides = [1, 1]} : vector<16x8xf32> to vector<16x1xf32>
      %83 = vector.extract_strided_slice %36 {offsets = [3, 0], sizes = [1, 64], strides = [1, 1]} : vector<8x64xf32> to vector<1x64xf32>
      %84 = vector.broadcast %82 : vector<16x1xf32> to vector<16x64xf32>
      %85 = vector.broadcast %83 : vector<1x64xf32> to vector<16x64xf32>
      %86 = arith.mulf %84, %85 : vector<16x64xf32>
      %87 = arith.addf %81, %86 : vector<16x64xf32>
      %88 = vector.extract_strided_slice %25 {offsets = [3, 0], sizes = [1, 16], strides = [1, 1]} : vector<8x16xf32> to vector<1x16xf32>
      %cst_26 = arith.constant dense<0.000000e+00> : vector<1x64xf32>
      %89 = tpu.matmul %88, %87, %cst_26 {dimension_numbers = #tpu.dot_dimension_numbers<[1], [0], [0], [1], [0, 0, 1, 1], [], []>} : vector<1x16xf32>, vector<16x64xf32>, vector<1x64xf32> -> vector<1x64xf32>
      %90 = vector.extract_strided_slice %35 {offsets = [4, 0], sizes = [1, 64], strides = [1, 1]} : vector<8x64xf32> to vector<1x64xf32>
      %91 = vector.broadcast %90 : vector<1x64xf32> to vector<16x64xf32>
      %92 = arith.mulf %91, %1 : vector<16x64xf32>
      %93 = math.exp %92 : vector<16x64xf32>
      %94 = arith.mulf %93, %87 : vector<16x64xf32>
      %95 = vector.extract_strided_slice %37 {offsets = [0, 4], sizes = [16, 1], strides = [1, 1]} : vector<16x8xf32> to vector<16x1xf32>
      %96 = vector.extract_strided_slice %36 {offsets = [4, 0], sizes = [1, 64], strides = [1, 1]} : vector<8x64xf32> to vector<1x64xf32>
      %97 = vector.broadcast %95 : vector<16x1xf32> to vector<16x64xf32>
      %98 = vector.broadcast %96 : vector<1x64xf32> to vector<16x64xf32>
      %99 = arith.mulf %97, %98 : vector<16x64xf32>
      %100 = arith.addf %94, %99 : vector<16x64xf32>
      %101 = vector.extract_strided_slice %25 {offsets = [4, 0], sizes = [1, 16], strides = [1, 1]} : vector<8x16xf32> to vector<1x16xf32>
      %cst_27 = arith.constant dense<0.000000e+00> : vector<1x64xf32>
      %102 = tpu.matmul %101, %100, %cst_27 {dimension_numbers = #tpu.dot_dimension_numbers<[1], [0], [0], [1], [0, 0, 1, 1], [], []>} : vector<1x16xf32>, vector<16x64xf32>, vector<1x64xf32> -> vector<1x64xf32>
      %103 = vector.extract_strided_slice %35 {offsets = [5, 0], sizes = [1, 64], strides = [1, 1]} : vector<8x64xf32> to vector<1x64xf32>
      %104 = vector.broadcast %103 : vector<1x64xf32> to vector<16x64xf32>
      %105 = arith.mulf %104, %1 : vector<16x64xf32>
      %106 = math.exp %105 : vector<16x64xf32>
      %107 = arith.mulf %106, %100 : vector<16x64xf32>
      %108 = vector.extract_strided_slice %37 {offsets = [0, 5], sizes = [16, 1], strides = [1, 1]} : vector<16x8xf32> to vector<16x1xf32>
      %109 = vector.extract_strided_slice %36 {offsets = [5, 0], sizes = [1, 64], strides = [1, 1]} : vector<8x64xf32> to vector<1x64xf32>
      %110 = vector.broadcast %108 : vector<16x1xf32> to vector<16x64xf32>
      %111 = vector.broadcast %109 : vector<1x64xf32> to vector<16x64xf32>
      %112 = arith.mulf %110, %111 : vector<16x64xf32>
      %113 = arith.addf %107, %112 : vector<16x64xf32>
      %114 = vector.extract_strided_slice %25 {offsets = [5, 0], sizes = [1, 16], strides = [1, 1]} : vector<8x16xf32> to vector<1x16xf32>
      %cst_28 = arith.constant dense<0.000000e+00> : vector<1x64xf32>
      %115 = tpu.matmul %114, %113, %cst_28 {dimension_numbers = #tpu.dot_dimension_numbers<[1], [0], [0], [1], [0, 0, 1, 1], [], []>} : vector<1x16xf32>, vector<16x64xf32>, vector<1x64xf32> -> vector<1x64xf32>
      %116 = vector.extract_strided_slice %35 {offsets = [6, 0], sizes = [1, 64], strides = [1, 1]} : vector<8x64xf32> to vector<1x64xf32>
      %117 = vector.broadcast %116 : vector<1x64xf32> to vector<16x64xf32>
      %118 = arith.mulf %117, %1 : vector<16x64xf32>
      %119 = math.exp %118 : vector<16x64xf32>
      %120 = arith.mulf %119, %113 : vector<16x64xf32>
      %121 = vector.extract_strided_slice %37 {offsets = [0, 6], sizes = [16, 1], strides = [1, 1]} : vector<16x8xf32> to vector<16x1xf32>
      %122 = vector.extract_strided_slice %36 {offsets = [6, 0], sizes = [1, 64], strides = [1, 1]} : vector<8x64xf32> to vector<1x64xf32>
      %123 = vector.broadcast %121 : vector<16x1xf32> to vector<16x64xf32>
      %124 = vector.broadcast %122 : vector<1x64xf32> to vector<16x64xf32>
      %125 = arith.mulf %123, %124 : vector<16x64xf32>
      %126 = arith.addf %120, %125 : vector<16x64xf32>
      %127 = vector.extract_strided_slice %25 {offsets = [6, 0], sizes = [1, 16], strides = [1, 1]} : vector<8x16xf32> to vector<1x16xf32>
      %cst_29 = arith.constant dense<0.000000e+00> : vector<1x64xf32>
      %128 = tpu.matmul %127, %126, %cst_29 {dimension_numbers = #tpu.dot_dimension_numbers<[1], [0], [0], [1], [0, 0, 1, 1], [], []>} : vector<1x16xf32>, vector<16x64xf32>, vector<1x64xf32> -> vector<1x64xf32>
      %129 = vector.extract_strided_slice %35 {offsets = [7, 0], sizes = [1, 64], strides = [1, 1]} : vector<8x64xf32> to vector<1x64xf32>
      %130 = vector.broadcast %129 : vector<1x64xf32> to vector<16x64xf32>
      %131 = arith.mulf %130, %1 : vector<16x64xf32>
      %132 = math.exp %131 : vector<16x64xf32>
      %133 = arith.mulf %132, %126 : vector<16x64xf32>
      %134 = vector.extract_strided_slice %37 {offsets = [0, 7], sizes = [16, 1], strides = [1, 1]} : vector<16x8xf32> to vector<16x1xf32>
      %135 = vector.extract_strided_slice %36 {offsets = [7, 0], sizes = [1, 64], strides = [1, 1]} : vector<8x64xf32> to vector<1x64xf32>
      %136 = vector.broadcast %134 : vector<16x1xf32> to vector<16x64xf32>
      %137 = vector.broadcast %135 : vector<1x64xf32> to vector<16x64xf32>
      %138 = arith.mulf %136, %137 : vector<16x64xf32>
      %139 = arith.addf %133, %138 : vector<16x64xf32>
      %140 = vector.extract_strided_slice %25 {offsets = [7, 0], sizes = [1, 16], strides = [1, 1]} : vector<8x16xf32> to vector<1x16xf32>
      %cst_30 = arith.constant dense<0.000000e+00> : vector<1x64xf32>
      %141 = tpu.matmul %140, %139, %cst_30 {dimension_numbers = #tpu.dot_dimension_numbers<[1], [0], [0], [1], [0, 0, 1, 1], [], []>} : vector<1x16xf32>, vector<16x64xf32>, vector<1x64xf32> -> vector<1x64xf32>
      %142 = tpu.concatenate %50, %63, %76, %89, %102, %115, %128, %141 in 0 : vector<1x64xf32>, vector<1x64xf32>, vector<1x64xf32>, vector<1x64xf32>, vector<1x64xf32>, vector<1x64xf32>, vector<1x64xf32>, vector<1x64xf32> -> vector<8x64xf32>
      %143 = vector.broadcast %3 : vector<1x64xf32> to vector<8x64xf32>
      %144 = arith.mulf %143, %16 : vector<8x64xf32>
      %145 = arith.addf %142, %144 : vector<8x64xf32>
      %c0_31 = arith.constant 0 : index
      %c0_32 = arith.constant 0 : index
      %146 = arith.index_cast %13 : i32 to index
      %c0_33 = arith.constant 0 : index
      %147 = vector.load %arg8[%c0_31, %c0_32, %146, %c0_33] : memref<1x1x64x64xf32, #tpu.memory_space<vmem>>, vector<1x1x8x64xf32>
      %148 = vector.shape_cast %147 : vector<1x1x8x64xf32> to vector<8x64xf32>
      %149 = vector.shape_cast %145 : vector<8x64xf32> to vector<1x1x8x64xf32>
      tpu.vector_store %arg8[%c0_31, %c0_32, %146, %c0_33], %149 {strides = array<i32>} : memref<1x1x64x64xf32, #tpu.memory_space<vmem>>, vector<1x1x8x64xf32>,
      scf.yield %139 : vector<16x64xf32>
    }
    %c8_i32_5 = arith.constant 8 : i32
    return
  }
  func.func @transform_0(%arg0: i32, %arg1: i32) -> (i32, i32, i32, i32) {
    %c0_i32 = arith.constant 0 : i32
    %c0_i32_0 = arith.constant 0 : i32
    %c0_i32_1 = arith.constant 0 : i32
    return %arg1, %arg0, %c0_i32, %c0_i32_0 : i32, i32, i32, i32
  }
  func.func @transform_1(%arg0: i32, %arg1: i32) -> (i32, i32, i32, i32) {
    %c0_i32 = arith.constant 0 : i32
    %c0_i32_0 = arith.constant 0 : i32
    %c0_i32_1 = arith.constant 0 : i32
    return %arg1, %arg0, %c0_i32, %c0_i32_0 : i32, i32, i32, i32
  }
  func.func @transform_2(%arg0: i32, %arg1: i32) -> (i32, i32, i32, i32) {
    %c0_i32 = arith.constant 0 : i32
    %c0_i32_0 = arith.constant 0 : i32
    %c0_i32_1 = arith.constant 0 : i32
    return %arg1, %arg0, %c0_i32, %c0_i32_0 : i32, i32, i32, i32
  }
  func.func @transform_3(%arg0: i32, %arg1: i32) -> (i32, i32, i32, i32) {
    %c0_i32 = arith.constant 0 : i32
    %c0_i32_0 = arith.constant 0 : i32
    %c0_i32_1 = arith.constant 0 : i32
    return %arg1, %arg0, %c0_i32, %c0_i32_0 : i32, i32, i32, i32
  }
  func.func @transform_4(%arg0: i32, %arg1: i32) -> (i32, i32, i32) {
    %c0_i32 = arith.constant 0 : i32
    %c0_i32_0 = arith.constant 0 : i32
    %c0_i32_1 = arith.constant 0 : i32
    return %arg1, %c0_i32, %c0_i32_0 : i32, i32, i32
  }
  func.func @transform_5(%arg0: i32, %arg1: i32) -> (i32, i32, i32) {
    %c0_i32 = arith.constant 0 : i32
    %c0_i32_0 = arith.constant 0 : i32
    %c0_i32_1 = arith.constant 0 : i32
    return %arg1, %c0_i32, %c0_i32_0 : i32, i32, i32
  }
  func.func @transform_6(%arg0: i32, %arg1: i32) -> (i32, i32, i32, i32) {
    %c0_i32 = arith.constant 0 : i32
    %c0_i32_0 = arith.constant 0 : i32
    %c0_i32_1 = arith.constant 0 : i32
    return %arg0, %arg1, %c0_i32, %c0_i32_0 : i32, i32, i32, i32
  }
}

module attributes {stable_mosaic.version = 11 : i64} {
  func.func @scan_kernel(%arg0: i32, %arg1: i32, %arg2: memref<1x1x64x64xf32, #tpu.memory_space<vmem>>, %arg3: memref<1x1x64x64xf32, #tpu.memory_space<vmem>>, %arg4: memref<1x1x64x16xf32, #tpu.memory_space<vmem>>, %arg5: memref<1x1x64x16xf32, #tpu.memory_space<vmem>>, %arg6: memref<1x16x64xf32, #tpu.memory_space<vmem>>, %arg7: memref<1x1x64xf32, #tpu.memory_space<vmem>>, %arg8: memref<1x1x64x64xf32, #tpu.memory_space<vmem>>, %arg9: memref<1x1x64x64xf32, #tpu.memory_space<vmem>>) attributes {dimension_semantics = [#tpu.dimension_semantics<parallel>, #tpu.dimension_semantics<parallel>], iteration_bounds = array<i64: 2, 2>, scalar_prefetch = 0 : i64, scratch_operands = 0 : i64, tpu.core_type = #tpu.core_type<tc>, window_params = [{transform_indices = @transform_0, window_bounds = array<i64: 1, 1, 64, 64>}, {transform_indices = @transform_1, window_bounds = array<i64: 1, 1, 64, 64>}, {transform_indices = @transform_2, window_bounds = array<i64: 1, 1, 64, 16>}, {transform_indices = @transform_3, window_bounds = array<i64: 1, 1, 64, 16>}, {transform_indices = @transform_4, window_bounds = array<i64: 1, 16, 64>}, {transform_indices = @transform_5, window_bounds = array<i64: 1, 1, 64>}, {transform_indices = @transform_6, window_bounds = array<i64: 1, 1, 64, 64>}, {transform_indices = @transform_7, window_bounds = array<i64: 1, 1, 64, 64>}]} {
    %c0 = arith.constant 0 : index
    %c0_0 = arith.constant 0 : index
    %c0_1 = arith.constant 0 : index
    %0 = vector.load %arg6[%c0, %c0_0, %c0_1] : memref<1x16x64xf32, #tpu.memory_space<vmem>>, vector<1x16x64xf32>
    %1 = vector.shape_cast %0 : vector<1x16x64xf32> to vector<16x64xf32>
    %c0_2 = arith.constant 0 : index
    %c0_3 = arith.constant 0 : index
    %c0_4 = arith.constant 0 : index
    %2 = vector.load %arg7[%c0_2, %c0_3, %c0_4] : memref<1x1x64xf32, #tpu.memory_space<vmem>>, vector<1x1x64xf32>
    %3 = vector.shape_cast %2 : vector<1x1x64xf32> to vector<1x64xf32>
    %4 = tpu.iota {dimensions = array<i32: 0>} : vector<16x16xi32>
    %5 = tpu.iota {dimensions = array<i32: 1>} : vector<16x16xi32>
    %6 = arith.cmpi eq, %4, %5 : vector<16x16xi32>
    %7 = arith.extui %6 : vector<16x16xi1> to vector<16x16xi32>
    %8 = arith.sitofp %7 : vector<16x16xi32> to vector<16x16xf32>
    %cst = arith.constant 0.000000e+00 : f32
    %9 = vector.broadcast %cst : f32 to vector<16x64xf32>
    %c0_i32 = arith.constant 0 : i32
    %c8_i32 = arith.constant 8 : i32
    %10 = arith.addi %c0_i32, %c8_i32 : i32
    %c1_i32 = arith.constant 1 : i32
    %11 = scf.for %arg10 = %c0_i32 to %10 step %c1_i32 iter_args(%arg11 = %9) -> (vector<16x64xf32>)  : i32 {
      %c7_i32 = arith.constant 7 : i32
      %12 = arith.subi %c7_i32, %arg10 : i32
      %c8_i32_6 = arith.constant 8 : i32
      %13 = arith.muli %12, %c8_i32_6 : i32
      %14 = tpu.assume_multiple %13, 8 : i32
      %c0_7 = arith.constant 0 : index
      %c0_8 = arith.constant 0 : index
      %15 = arith.index_cast %14 : i32 to index
      %c0_9 = arith.constant 0 : index
      %16 = vector.load %arg2[%c0_7, %c0_8, %15, %c0_9] : memref<1x1x64x64xf32, #tpu.memory_space<vmem>>, vector<1x1x8x64xf32>
      %17 = vector.shape_cast %16 : vector<1x1x8x64xf32> to vector<8x64xf32>
      %c0_10 = arith.constant 0 : index
      %c0_11 = arith.constant 0 : index
      %18 = arith.index_cast %14 : i32 to index
      %c0_12 = arith.constant 0 : index
      %19 = vector.load %arg3[%c0_10, %c0_11, %18, %c0_12] : memref<1x1x64x64xf32, #tpu.memory_space<vmem>>, vector<1x1x8x64xf32>
      %20 = vector.shape_cast %19 : vector<1x1x8x64xf32> to vector<8x64xf32>
      %c0_13 = arith.constant 0 : index
      %c0_14 = arith.constant 0 : index
      %21 = arith.index_cast %14 : i32 to index
      %c0_15 = arith.constant 0 : index
      %22 = vector.load %arg4[%c0_13, %c0_14, %21, %c0_15] : memref<1x1x64x16xf32, #tpu.memory_space<vmem>>, vector<1x1x8x16xf32>
      %23 = vector.shape_cast %22 : vector<1x1x8x16xf32> to vector<8x16xf32>
      %c0_16 = arith.constant 0 : index
      %c0_17 = arith.constant 0 : index
      %24 = arith.index_cast %14 : i32 to index
      %c0_18 = arith.constant 0 : index
      %25 = vector.load %arg5[%c0_16, %c0_17, %24, %c0_18] : memref<1x1x64x16xf32, #tpu.memory_space<vmem>>, vector<1x1x8x16xf32>
      %26 = vector.shape_cast %25 : vector<1x1x8x16xf32> to vector<8x16xf32>
      %cst_19 = arith.constant 0.000000e+00 : f32
      %27 = vector.broadcast %cst_19 : f32 to vector<8x64xf32>
      %28 = arith.maximumf %20, %27 : vector<8x64xf32>
      %29 = math.absf %20 : vector<8x64xf32>
      %cst_20 = arith.constant 0.000000e+00 : f32
      %30 = vector.broadcast %cst_20 : f32 to vector<8x64xf32>
      %31 = arith.subf %30, %29 : vector<8x64xf32>
      %32 = math.exp %31 : vector<8x64xf32>
      %cst_21 = arith.constant 1.000000e+00 : f32
      %33 = vector.broadcast %cst_21 : f32 to vector<8x64xf32>
      %34 = arith.addf %33, %32 : vector<8x64xf32>
      %35 = math.log %34 : vector<8x64xf32>
      %36 = arith.addf %28, %35 : vector<8x64xf32>
      %37 = arith.mulf %36, %17 : vector<8x64xf32>
      %cst_22 = arith.constant dense<0.000000e+00> : vector<16x8xf32>
      %38 = tpu.matmul %8, %23, %cst_22 {dimension_numbers = #tpu.dot_dimension_numbers<[1], [1], [0], [0], [0, 0, 1, 0], [], []>} : vector<16x16xf32>, vector<8x16xf32>, vector<16x8xf32> -> vector<16x8xf32>
      %39 = vector.extract_strided_slice %36 {offsets = [7, 0], sizes = [1, 64], strides = [1, 1]} : vector<8x64xf32> to vector<1x64xf32>
      %40 = vector.broadcast %39 : vector<1x64xf32> to vector<16x64xf32>
      %41 = arith.mulf %40, %1 : vector<16x64xf32>
      %42 = math.exp %41 : vector<16x64xf32>
      %43 = arith.mulf %42, %arg11 : vector<16x64xf32>
      %44 = vector.extract_strided_slice %38 {offsets = [0, 7], sizes = [16, 1], strides = [1, 1]} : vector<16x8xf32> to vector<16x1xf32>
      %45 = vector.extract_strided_slice %37 {offsets = [7, 0], sizes = [1, 64], strides = [1, 1]} : vector<8x64xf32> to vector<1x64xf32>
      %46 = vector.broadcast %44 : vector<16x1xf32> to vector<16x64xf32>
      %47 = vector.broadcast %45 : vector<1x64xf32> to vector<16x64xf32>
      %48 = arith.mulf %46, %47 : vector<16x64xf32>
      %49 = arith.addf %43, %48 : vector<16x64xf32>
      %50 = vector.extract_strided_slice %26 {offsets = [7, 0], sizes = [1, 16], strides = [1, 1]} : vector<8x16xf32> to vector<1x16xf32>
      %cst_23 = arith.constant dense<0.000000e+00> : vector<1x64xf32>
      %51 = tpu.matmul %50, %49, %cst_23 {dimension_numbers = #tpu.dot_dimension_numbers<[1], [0], [0], [1], [0, 0, 1, 1], [], []>} : vector<1x16xf32>, vector<16x64xf32>, vector<1x64xf32> -> vector<1x64xf32>
      %52 = vector.extract_strided_slice %36 {offsets = [6, 0], sizes = [1, 64], strides = [1, 1]} : vector<8x64xf32> to vector<1x64xf32>
      %53 = vector.broadcast %52 : vector<1x64xf32> to vector<16x64xf32>
      %54 = arith.mulf %53, %1 : vector<16x64xf32>
      %55 = math.exp %54 : vector<16x64xf32>
      %56 = arith.mulf %55, %49 : vector<16x64xf32>
      %57 = vector.extract_strided_slice %38 {offsets = [0, 6], sizes = [16, 1], strides = [1, 1]} : vector<16x8xf32> to vector<16x1xf32>
      %58 = vector.extract_strided_slice %37 {offsets = [6, 0], sizes = [1, 64], strides = [1, 1]} : vector<8x64xf32> to vector<1x64xf32>
      %59 = vector.broadcast %57 : vector<16x1xf32> to vector<16x64xf32>
      %60 = vector.broadcast %58 : vector<1x64xf32> to vector<16x64xf32>
      %61 = arith.mulf %59, %60 : vector<16x64xf32>
      %62 = arith.addf %56, %61 : vector<16x64xf32>
      %63 = vector.extract_strided_slice %26 {offsets = [6, 0], sizes = [1, 16], strides = [1, 1]} : vector<8x16xf32> to vector<1x16xf32>
      %cst_24 = arith.constant dense<0.000000e+00> : vector<1x64xf32>
      %64 = tpu.matmul %63, %62, %cst_24 {dimension_numbers = #tpu.dot_dimension_numbers<[1], [0], [0], [1], [0, 0, 1, 1], [], []>} : vector<1x16xf32>, vector<16x64xf32>, vector<1x64xf32> -> vector<1x64xf32>
      %65 = vector.extract_strided_slice %36 {offsets = [5, 0], sizes = [1, 64], strides = [1, 1]} : vector<8x64xf32> to vector<1x64xf32>
      %66 = vector.broadcast %65 : vector<1x64xf32> to vector<16x64xf32>
      %67 = arith.mulf %66, %1 : vector<16x64xf32>
      %68 = math.exp %67 : vector<16x64xf32>
      %69 = arith.mulf %68, %62 : vector<16x64xf32>
      %70 = vector.extract_strided_slice %38 {offsets = [0, 5], sizes = [16, 1], strides = [1, 1]} : vector<16x8xf32> to vector<16x1xf32>
      %71 = vector.extract_strided_slice %37 {offsets = [5, 0], sizes = [1, 64], strides = [1, 1]} : vector<8x64xf32> to vector<1x64xf32>
      %72 = vector.broadcast %70 : vector<16x1xf32> to vector<16x64xf32>
      %73 = vector.broadcast %71 : vector<1x64xf32> to vector<16x64xf32>
      %74 = arith.mulf %72, %73 : vector<16x64xf32>
      %75 = arith.addf %69, %74 : vector<16x64xf32>
      %76 = vector.extract_strided_slice %26 {offsets = [5, 0], sizes = [1, 16], strides = [1, 1]} : vector<8x16xf32> to vector<1x16xf32>
      %cst_25 = arith.constant dense<0.000000e+00> : vector<1x64xf32>
      %77 = tpu.matmul %76, %75, %cst_25 {dimension_numbers = #tpu.dot_dimension_numbers<[1], [0], [0], [1], [0, 0, 1, 1], [], []>} : vector<1x16xf32>, vector<16x64xf32>, vector<1x64xf32> -> vector<1x64xf32>
      %78 = vector.extract_strided_slice %36 {offsets = [4, 0], sizes = [1, 64], strides = [1, 1]} : vector<8x64xf32> to vector<1x64xf32>
      %79 = vector.broadcast %78 : vector<1x64xf32> to vector<16x64xf32>
      %80 = arith.mulf %79, %1 : vector<16x64xf32>
      %81 = math.exp %80 : vector<16x64xf32>
      %82 = arith.mulf %81, %75 : vector<16x64xf32>
      %83 = vector.extract_strided_slice %38 {offsets = [0, 4], sizes = [16, 1], strides = [1, 1]} : vector<16x8xf32> to vector<16x1xf32>
      %84 = vector.extract_strided_slice %37 {offsets = [4, 0], sizes = [1, 64], strides = [1, 1]} : vector<8x64xf32> to vector<1x64xf32>
      %85 = vector.broadcast %83 : vector<16x1xf32> to vector<16x64xf32>
      %86 = vector.broadcast %84 : vector<1x64xf32> to vector<16x64xf32>
      %87 = arith.mulf %85, %86 : vector<16x64xf32>
      %88 = arith.addf %82, %87 : vector<16x64xf32>
      %89 = vector.extract_strided_slice %26 {offsets = [4, 0], sizes = [1, 16], strides = [1, 1]} : vector<8x16xf32> to vector<1x16xf32>
      %cst_26 = arith.constant dense<0.000000e+00> : vector<1x64xf32>
      %90 = tpu.matmul %89, %88, %cst_26 {dimension_numbers = #tpu.dot_dimension_numbers<[1], [0], [0], [1], [0, 0, 1, 1], [], []>} : vector<1x16xf32>, vector<16x64xf32>, vector<1x64xf32> -> vector<1x64xf32>
      %91 = vector.extract_strided_slice %36 {offsets = [3, 0], sizes = [1, 64], strides = [1, 1]} : vector<8x64xf32> to vector<1x64xf32>
      %92 = vector.broadcast %91 : vector<1x64xf32> to vector<16x64xf32>
      %93 = arith.mulf %92, %1 : vector<16x64xf32>
      %94 = math.exp %93 : vector<16x64xf32>
      %95 = arith.mulf %94, %88 : vector<16x64xf32>
      %96 = vector.extract_strided_slice %38 {offsets = [0, 3], sizes = [16, 1], strides = [1, 1]} : vector<16x8xf32> to vector<16x1xf32>
      %97 = vector.extract_strided_slice %37 {offsets = [3, 0], sizes = [1, 64], strides = [1, 1]} : vector<8x64xf32> to vector<1x64xf32>
      %98 = vector.broadcast %96 : vector<16x1xf32> to vector<16x64xf32>
      %99 = vector.broadcast %97 : vector<1x64xf32> to vector<16x64xf32>
      %100 = arith.mulf %98, %99 : vector<16x64xf32>
      %101 = arith.addf %95, %100 : vector<16x64xf32>
      %102 = vector.extract_strided_slice %26 {offsets = [3, 0], sizes = [1, 16], strides = [1, 1]} : vector<8x16xf32> to vector<1x16xf32>
      %cst_27 = arith.constant dense<0.000000e+00> : vector<1x64xf32>
      %103 = tpu.matmul %102, %101, %cst_27 {dimension_numbers = #tpu.dot_dimension_numbers<[1], [0], [0], [1], [0, 0, 1, 1], [], []>} : vector<1x16xf32>, vector<16x64xf32>, vector<1x64xf32> -> vector<1x64xf32>
      %104 = vector.extract_strided_slice %36 {offsets = [2, 0], sizes = [1, 64], strides = [1, 1]} : vector<8x64xf32> to vector<1x64xf32>
      %105 = vector.broadcast %104 : vector<1x64xf32> to vector<16x64xf32>
      %106 = arith.mulf %105, %1 : vector<16x64xf32>
      %107 = math.exp %106 : vector<16x64xf32>
      %108 = arith.mulf %107, %101 : vector<16x64xf32>
      %109 = vector.extract_strided_slice %38 {offsets = [0, 2], sizes = [16, 1], strides = [1, 1]} : vector<16x8xf32> to vector<16x1xf32>
      %110 = vector.extract_strided_slice %37 {offsets = [2, 0], sizes = [1, 64], strides = [1, 1]} : vector<8x64xf32> to vector<1x64xf32>
      %111 = vector.broadcast %109 : vector<16x1xf32> to vector<16x64xf32>
      %112 = vector.broadcast %110 : vector<1x64xf32> to vector<16x64xf32>
      %113 = arith.mulf %111, %112 : vector<16x64xf32>
      %114 = arith.addf %108, %113 : vector<16x64xf32>
      %115 = vector.extract_strided_slice %26 {offsets = [2, 0], sizes = [1, 16], strides = [1, 1]} : vector<8x16xf32> to vector<1x16xf32>
      %cst_28 = arith.constant dense<0.000000e+00> : vector<1x64xf32>
      %116 = tpu.matmul %115, %114, %cst_28 {dimension_numbers = #tpu.dot_dimension_numbers<[1], [0], [0], [1], [0, 0, 1, 1], [], []>} : vector<1x16xf32>, vector<16x64xf32>, vector<1x64xf32> -> vector<1x64xf32>
      %117 = vector.extract_strided_slice %36 {offsets = [1, 0], sizes = [1, 64], strides = [1, 1]} : vector<8x64xf32> to vector<1x64xf32>
      %118 = vector.broadcast %117 : vector<1x64xf32> to vector<16x64xf32>
      %119 = arith.mulf %118, %1 : vector<16x64xf32>
      %120 = math.exp %119 : vector<16x64xf32>
      %121 = arith.mulf %120, %114 : vector<16x64xf32>
      %122 = vector.extract_strided_slice %38 {offsets = [0, 1], sizes = [16, 1], strides = [1, 1]} : vector<16x8xf32> to vector<16x1xf32>
      %123 = vector.extract_strided_slice %37 {offsets = [1, 0], sizes = [1, 64], strides = [1, 1]} : vector<8x64xf32> to vector<1x64xf32>
      %124 = vector.broadcast %122 : vector<16x1xf32> to vector<16x64xf32>
      %125 = vector.broadcast %123 : vector<1x64xf32> to vector<16x64xf32>
      %126 = arith.mulf %124, %125 : vector<16x64xf32>
      %127 = arith.addf %121, %126 : vector<16x64xf32>
      %128 = vector.extract_strided_slice %26 {offsets = [1, 0], sizes = [1, 16], strides = [1, 1]} : vector<8x16xf32> to vector<1x16xf32>
      %cst_29 = arith.constant dense<0.000000e+00> : vector<1x64xf32>
      %129 = tpu.matmul %128, %127, %cst_29 {dimension_numbers = #tpu.dot_dimension_numbers<[1], [0], [0], [1], [0, 0, 1, 1], [], []>} : vector<1x16xf32>, vector<16x64xf32>, vector<1x64xf32> -> vector<1x64xf32>
      %130 = vector.extract_strided_slice %36 {offsets = [0, 0], sizes = [1, 64], strides = [1, 1]} : vector<8x64xf32> to vector<1x64xf32>
      %131 = vector.broadcast %130 : vector<1x64xf32> to vector<16x64xf32>
      %132 = arith.mulf %131, %1 : vector<16x64xf32>
      %133 = math.exp %132 : vector<16x64xf32>
      %134 = arith.mulf %133, %127 : vector<16x64xf32>
      %135 = vector.extract_strided_slice %38 {offsets = [0, 0], sizes = [16, 1], strides = [1, 1]} : vector<16x8xf32> to vector<16x1xf32>
      %136 = vector.extract_strided_slice %37 {offsets = [0, 0], sizes = [1, 64], strides = [1, 1]} : vector<8x64xf32> to vector<1x64xf32>
      %137 = vector.broadcast %135 : vector<16x1xf32> to vector<16x64xf32>
      %138 = vector.broadcast %136 : vector<1x64xf32> to vector<16x64xf32>
      %139 = arith.mulf %137, %138 : vector<16x64xf32>
      %140 = arith.addf %134, %139 : vector<16x64xf32>
      %141 = vector.extract_strided_slice %26 {offsets = [0, 0], sizes = [1, 16], strides = [1, 1]} : vector<8x16xf32> to vector<1x16xf32>
      %cst_30 = arith.constant dense<0.000000e+00> : vector<1x64xf32>
      %142 = tpu.matmul %141, %140, %cst_30 {dimension_numbers = #tpu.dot_dimension_numbers<[1], [0], [0], [1], [0, 0, 1, 1], [], []>} : vector<1x16xf32>, vector<16x64xf32>, vector<1x64xf32> -> vector<1x64xf32>
      %143 = tpu.concatenate %142, %129, %116, %103, %90, %77, %64, %51 in 0 : vector<1x64xf32>, vector<1x64xf32>, vector<1x64xf32>, vector<1x64xf32>, vector<1x64xf32>, vector<1x64xf32>, vector<1x64xf32>, vector<1x64xf32> -> vector<8x64xf32>
      %144 = vector.broadcast %3 : vector<1x64xf32> to vector<8x64xf32>
      %145 = arith.mulf %144, %17 : vector<8x64xf32>
      %146 = arith.addf %143, %145 : vector<8x64xf32>
      %c0_31 = arith.constant 0 : index
      %c0_32 = arith.constant 0 : index
      %147 = arith.index_cast %14 : i32 to index
      %c0_33 = arith.constant 0 : index
      %148 = vector.load %arg8[%c0_31, %c0_32, %147, %c0_33] : memref<1x1x64x64xf32, #tpu.memory_space<vmem>>, vector<1x1x8x64xf32>
      %149 = vector.shape_cast %148 : vector<1x1x8x64xf32> to vector<8x64xf32>
      %150 = arith.addf %146, %149 : vector<8x64xf32>
      %c0_34 = arith.constant 0 : index
      %c0_35 = arith.constant 0 : index
      %151 = arith.index_cast %14 : i32 to index
      %c0_36 = arith.constant 0 : index
      %152 = vector.load %arg9[%c0_34, %c0_35, %151, %c0_36] : memref<1x1x64x64xf32, #tpu.memory_space<vmem>>, vector<1x1x8x64xf32>
      %153 = vector.shape_cast %152 : vector<1x1x8x64xf32> to vector<8x64xf32>
      %154 = vector.shape_cast %150 : vector<8x64xf32> to vector<1x1x8x64xf32>
      tpu.vector_store %arg9[%c0_34, %c0_35, %151, %c0_36], %154 {strides = array<i32>} : memref<1x1x64x64xf32, #tpu.memory_space<vmem>>, vector<1x1x8x64xf32>,
      scf.yield %140 : vector<16x64xf32>
    }
    %c8_i32_5 = arith.constant 8 : i32
    return
  }
  func.func @transform_0(%arg0: i32, %arg1: i32) -> (i32, i32, i32, i32) {
    %c0_i32 = arith.constant 0 : i32
    %c0_i32_0 = arith.constant 0 : i32
    %c0_i32_1 = arith.constant 0 : i32
    return %arg1, %arg0, %c0_i32, %c0_i32_0 : i32, i32, i32, i32
  }
  func.func @transform_1(%arg0: i32, %arg1: i32) -> (i32, i32, i32, i32) {
    %c2_i32 = arith.constant 2 : i32
    %0 = arith.addi %arg1, %c2_i32 : i32
    %c0_i32 = arith.constant 0 : i32
    %c0_i32_0 = arith.constant 0 : i32
    %c0_i32_1 = arith.constant 0 : i32
    return %0, %arg0, %c0_i32, %c0_i32_0 : i32, i32, i32, i32
  }
  func.func @transform_2(%arg0: i32, %arg1: i32) -> (i32, i32, i32, i32) {
    %c2_i32 = arith.constant 2 : i32
    %0 = arith.addi %arg1, %c2_i32 : i32
    %c0_i32 = arith.constant 0 : i32
    %c0_i32_0 = arith.constant 0 : i32
    %c0_i32_1 = arith.constant 0 : i32
    return %0, %arg0, %c0_i32, %c0_i32_0 : i32, i32, i32, i32
  }
  func.func @transform_3(%arg0: i32, %arg1: i32) -> (i32, i32, i32, i32) {
    %c2_i32 = arith.constant 2 : i32
    %0 = arith.addi %arg1, %c2_i32 : i32
    %c0_i32 = arith.constant 0 : i32
    %c0_i32_0 = arith.constant 0 : i32
    %c0_i32_1 = arith.constant 0 : i32
    return %0, %arg0, %c0_i32, %c0_i32_0 : i32, i32, i32, i32
  }
  func.func @transform_4(%arg0: i32, %arg1: i32) -> (i32, i32, i32) {
    %c2_i32 = arith.constant 2 : i32
    %0 = arith.addi %arg1, %c2_i32 : i32
    %c0_i32 = arith.constant 0 : i32
    %c0_i32_0 = arith.constant 0 : i32
    %c0_i32_1 = arith.constant 0 : i32
    return %0, %c0_i32, %c0_i32_0 : i32, i32, i32
  }
  func.func @transform_5(%arg0: i32, %arg1: i32) -> (i32, i32, i32) {
    %c2_i32 = arith.constant 2 : i32
    %0 = arith.addi %arg1, %c2_i32 : i32
    %c0_i32 = arith.constant 0 : i32
    %c0_i32_0 = arith.constant 0 : i32
    %c0_i32_1 = arith.constant 0 : i32
    return %0, %c0_i32, %c0_i32_0 : i32, i32, i32
  }
  func.func @transform_6(%arg0: i32, %arg1: i32) -> (i32, i32, i32, i32) {
    %c0_i32 = arith.constant 0 : i32
    %c0_i32_0 = arith.constant 0 : i32
    %c0_i32_1 = arith.constant 0 : i32
    return %arg0, %arg1, %c0_i32, %c0_i32_0 : i32, i32, i32, i32
  }
  func.func @transform_7(%arg0: i32, %arg1: i32) -> (i32, i32, i32, i32) {
    %c0_i32 = arith.constant 0 : i32
    %c0_i32_0 = arith.constant 0 : i32
    %c0_i32_1 = arith.constant 0 : i32
    return %arg0, %arg1, %c0_i32, %c0_i32_0 : i32, i32, i32, i32
  }
}

module attributes {stable_mosaic.version = 11 : i64} {
  func.func @out_kernel(%arg0: i32, %arg1: memref<128x64xf32, #tpu.memory_space<vmem>>, %arg2: memref<128x64xf32, #tpu.memory_space<vmem>>, %arg3: memref<128x64xf32, #tpu.memory_space<vmem>>, %arg4: memref<128x32xf32, #tpu.memory_space<vmem>>, %arg5: memref<1x64xf32, #tpu.memory_space<vmem>>, %arg6: memref<1x64xf32, #tpu.memory_space<vmem>>, %arg7: memref<64x32xbf16, #tpu.memory_space<vmem>>, %arg8: memref<128x32xf32, #tpu.memory_space<vmem>>) attributes {dimension_semantics = [#tpu.dimension_semantics<parallel>], iteration_bounds = array<i64: 1>, scalar_prefetch = 0 : i64, scratch_operands = 0 : i64, tpu.core_type = #tpu.core_type<tc>, window_params = [{transform_indices = @transform_0, window_bounds = array<i64: 128, 64>}, {transform_indices = @transform_1, window_bounds = array<i64: 128, 64>}, {transform_indices = @transform_2, window_bounds = array<i64: 128, 64>}, {transform_indices = @transform_3, window_bounds = array<i64: 128, 32>}, {pipeline_mode = #tpu.pipeline_mode<synchronous>, transform_indices = @transform_4, window_bounds = array<i64: 1, 64>}, {pipeline_mode = #tpu.pipeline_mode<synchronous>, transform_indices = @transform_5, window_bounds = array<i64: 1, 64>}, {pipeline_mode = #tpu.pipeline_mode<synchronous>, transform_indices = @transform_6, window_bounds = array<i64: 64, 32>}, {transform_indices = @transform_7, window_bounds = array<i64: 128, 32>}]} {
    %c0 = arith.constant 0 : index
    %c0_0 = arith.constant 0 : index
    %0 = vector.load %arg1[%c0, %c0_0] : memref<128x64xf32, #tpu.memory_space<vmem>>, vector<128x64xf32>
    %c0_1 = arith.constant 0 : index
    %c0_2 = arith.constant 0 : index
    %1 = vector.load %arg2[%c0_1, %c0_2] : memref<128x64xf32, #tpu.memory_space<vmem>>, vector<128x64xf32>
    %2 = arith.addf %0, %1 : vector<128x64xf32>
    %c0_3 = arith.constant 0 : index
    %c0_4 = arith.constant 0 : index
    %3 = vector.load %arg5[%c0_3, %c0_4] : memref<1x64xf32, #tpu.memory_space<vmem>>, vector<1x64xf32>
    %c0_5 = arith.constant 0 : index
    %c0_6 = arith.constant 0 : index
    %4 = vector.load %arg6[%c0_5, %c0_6] : memref<1x64xf32, #tpu.memory_space<vmem>>, vector<1x64xf32>
    %cst = arith.constant dense<0.000000e+00> : vector<128xf32>
    %5 = vector.multi_reduction <add>, %2, %cst [1] : vector<128x64xf32> to vector<128xf32>
    %6 = vector.shape_cast %5 : vector<128xf32> to vector<128x1xf32>
    %cst_7 = arith.constant 6.400000e+01 : f32
    %7 = vector.broadcast %cst_7 : f32 to vector<128x1xf32>
    %8 = arith.divf %6, %7 : vector<128x1xf32>
    %9 = vector.broadcast %8 : vector<128x1xf32> to vector<128x64xf32>
    %10 = arith.subf %2, %9 : vector<128x64xf32>
    %11 = arith.mulf %10, %10 : vector<128x64xf32>
    %cst_8 = arith.constant dense<0.000000e+00> : vector<128xf32>
    %12 = vector.multi_reduction <add>, %11, %cst_8 [1] : vector<128x64xf32> to vector<128xf32>
    %13 = vector.shape_cast %12 : vector<128xf32> to vector<128x1xf32>
    %cst_9 = arith.constant 6.400000e+01 : f32
    %14 = vector.broadcast %cst_9 : f32 to vector<128x1xf32>
    %15 = arith.divf %13, %14 : vector<128x1xf32>
    %16 = vector.broadcast %8 : vector<128x1xf32> to vector<128x64xf32>
    %17 = arith.subf %2, %16 : vector<128x64xf32>
    %cst_10 = arith.constant 9.99999974E-6 : f32
    %18 = vector.broadcast %cst_10 : f32 to vector<128x1xf32>
    %19 = arith.addf %15, %18 : vector<128x1xf32>
    %20 = math.rsqrt %19 : vector<128x1xf32>
    %21 = vector.broadcast %20 : vector<128x1xf32> to vector<128x64xf32>
    %22 = arith.mulf %17, %21 : vector<128x64xf32>
    %23 = vector.broadcast %3 : vector<1x64xf32> to vector<128x64xf32>
    %24 = arith.mulf %22, %23 : vector<128x64xf32>
    %25 = vector.broadcast %4 : vector<1x64xf32> to vector<128x64xf32>
    %26 = arith.addf %24, %25 : vector<128x64xf32>
    %c0_11 = arith.constant 0 : index
    %c0_12 = arith.constant 0 : index
    %27 = vector.load %arg3[%c0_11, %c0_12] : memref<128x64xf32, #tpu.memory_space<vmem>>, vector<128x64xf32>
    %cst_13 = arith.constant 5.000000e-01 : f32
    %28 = vector.broadcast %cst_13 : f32 to vector<128x64xf32>
    %29 = arith.mulf %28, %27 : vector<128x64xf32>
    %30 = math.tanh %29 : vector<128x64xf32>
    %cst_14 = arith.constant 1.000000e+00 : f32
    %31 = vector.broadcast %cst_14 : f32 to vector<128x64xf32>
    %32 = arith.addf %30, %31 : vector<128x64xf32>
    %cst_15 = arith.constant 5.000000e-01 : f32
    %33 = vector.broadcast %cst_15 : f32 to vector<128x64xf32>
    %34 = arith.mulf %33, %32 : vector<128x64xf32>
    %35 = arith.mulf %27, %34 : vector<128x64xf32>
    %36 = arith.mulf %26, %35 : vector<128x64xf32>
    %37 = arith.truncf %36 : vector<128x64xf32> to vector<128x64xbf16>
    %c0_16 = arith.constant 0 : index
    %c0_17 = arith.constant 0 : index
    %38 = vector.load %arg7[%c0_16, %c0_17] : memref<64x32xbf16, #tpu.memory_space<vmem>>, vector<64x32xbf16>
    %cst_18 = arith.constant dense<0.000000e+00> : vector<128x32xf32>
    %39 = tpu.matmul %37, %38, %cst_18 {dimension_numbers = #tpu.dot_dimension_numbers<[1], [0], [0], [1], [0, 0, 1, 1], [], []>} : vector<128x64xbf16>, vector<64x32xbf16>, vector<128x32xf32> -> vector<128x32xf32>
    %c0_19 = arith.constant 0 : index
    %c0_20 = arith.constant 0 : index
    %40 = vector.load %arg4[%c0_19, %c0_20] : memref<128x32xf32, #tpu.memory_space<vmem>>, vector<128x32xf32>
    %41 = arith.addf %39, %40 : vector<128x32xf32>
    %c0_21 = arith.constant 0 : index
    %c0_22 = arith.constant 0 : index
    %42 = vector.load %arg8[%c0_21, %c0_22] : memref<128x32xf32, #tpu.memory_space<vmem>>, vector<128x32xf32>
    tpu.vector_store %arg8[%c0_21, %c0_22], %41 {strides = array<i32>} : memref<128x32xf32, #tpu.memory_space<vmem>>, vector<128x32xf32>,
    return
  }
  func.func @transform_0(%arg0: i32) -> (i32, i32) {
    %c0_i32 = arith.constant 0 : i32
    %c0_i32_0 = arith.constant 0 : i32
    return %arg0, %c0_i32 : i32, i32
  }
  func.func @transform_1(%arg0: i32) -> (i32, i32) {
    %c0_i32 = arith.constant 0 : i32
    %c0_i32_0 = arith.constant 0 : i32
    return %arg0, %c0_i32 : i32, i32
  }
  func.func @transform_2(%arg0: i32) -> (i32, i32) {
    %c0_i32 = arith.constant 0 : i32
    %c0_i32_0 = arith.constant 0 : i32
    return %arg0, %c0_i32 : i32, i32
  }
  func.func @transform_3(%arg0: i32) -> (i32, i32) {
    %c0_i32 = arith.constant 0 : i32
    %c0_i32_0 = arith.constant 0 : i32
    return %arg0, %c0_i32 : i32, i32
  }
  func.func @transform_4(%arg0: i32) -> (i32, i32) {
    %c0_i32 = arith.constant 0 : i32
    %c0_i32_0 = arith.constant 0 : i32
    %c0_i32_1 = arith.constant 0 : i32
    return %c0_i32, %c0_i32_0 : i32, i32
  }
  func.func @transform_5(%arg0: i32) -> (i32, i32) {
    %c0_i32 = arith.constant 0 : i32
    %c0_i32_0 = arith.constant 0 : i32
    %c0_i32_1 = arith.constant 0 : i32
    return %c0_i32, %c0_i32_0 : i32, i32
  }
  func.func @transform_6(%arg0: i32) -> (i32, i32) {
    %c0_i32 = arith.constant 0 : i32
    %c0_i32_0 = arith.constant 0 : i32
    %c0_i32_1 = arith.constant 0 : i32
    return %c0_i32, %c0_i32_0 : i32, i32
  }
  func.func @transform_7(%arg0: i32) -> (i32, i32) {
    %c0_i32 = arith.constant 0 : i32
    %c0_i32_0 = arith.constant 0 : i32
    return %arg0, %c0_i32 : i32, i32
  }
}

</mosaic_0001>

<llo_original>
// kernel: temporal_spectrum_block.7
$region0: #{temporal_spectrum_block.7}
  #allocation0 [shape = 'u32[]', space=smem, size = 0x4, offset = 0x4, fixed_abs, tag = 'smem constant byte address 0x4 - core index']
  #allocation1 [shape = 'u32[144,128]{1,0:T(1,128)}', space=vmem, size = 0x12000, scoped, tag = 'internal scratch']
  #allocation2 [shape = 'f32[10,10,64]{2,1,0:T(8,128)}', space=vmem, size = 0x14000, scoped, tag = 'scratch operand']
  %s0 = inlined_call_operand.vmem [shape: f32[2,8,8,64], index: 0, kind: input, shape index: {}]
  %s1 = inlined_call_operand.vmem [shape: f32[3,3,64], index: 1, kind: input, shape index: {}]
  %s2 = inlined_call_operand.vmem [shape: f32[1,64], index: 2, kind: input, shape index: {}]
  %s3 = inlined_call_operand.vmem [shape: f32[2,8,8,64], index: 3, kind: output, shape index: {}]
  %s4 = sld [smem:[#allocation0]]
  $region45: #{temporal_spectrum_block.7} parent=0
    _
  %s6 = ssub.s32 1, %s4
  %s7 = scalar_select 0, %s6, %s4
  loop: start=0, step=1, limit=4
  $region2: #{temporal_spectrum_block.7} parent=0 // loop_pre_header
    _
  $region3: #{temporal_spectrum_block.7} parent=0 // loop_header
    %s9 = sphi 0, %s13
    %p10 = scmp.ge.s32.totalorder %s9, 4
    %s19 = sphi 0, %s21
    %s22 = sphi 0, %s19
    %s23 = sphi 0, %s22
    %s39 = sphi 0, %s23
    %s43 = sphi 0, %s43
    %s45 = sphi 0, %s43
    %s46 = sphi 0, %s45
    %s60 = sphi 0, %s46
    %s64 = sphi 0, %s64
    %s66 = sphi 0, %s64
    %s67 = sphi 0, %s66
    %s81 = sphi 0, %s67
    %s87 = sphi 0, %s89
    %s90 = sphi 0, %s87
    %s91 = sphi 0, %s90
    %s107 = sphi 0, %s91
  $region4: #{temporal_spectrum_block.7} parent=0 // loop_header_branch
    %12 = sbr.rel (%p10) target = $region8
  $region5: #{temporal_spectrum_block.7} parent=0 // loop_body
    %s14 = ssub.s32 %s9, 1
    %s15 = ssub.s32 %s9, 2
    %s16 = sadd.s32 %s9, 1
    %s17 = ssub.s32 %s9, %s16
    %p18 = scmp.eq.s32.totalorder %s17, 0
    %s20 = sadd.s32 %s19, 1
    %s21 = scalar_select %p18, %s19, %s20
    %p24 = pneg %p18
    %p25 = scmp.eq.s32.totalorder %s9, 1
    %p26 = por %p24, %p25
    %p27 = scmp.ne.s32.totalorder %s19, %s22
    %p28 = scmp.eq.s32.totalorder %s9, 0
    %p29 = por %p27, %p28
    %p30 = scmp.ne.s32.totalorder %s19, %s22
    %p31 = scmp.eq.s32.totalorder %s14, 1
    %p32 = por %p30, %p31
    %p33 = scmp.ne.s32.totalorder %s22, %s23
    %p34 = scmp.eq.s32.totalorder %s14, 0
    %p35 = por %p33, %p34
    %p36 = scmp.ne.s32.totalorder %s22, %s23
    %p37 = scmp.eq.s32.totalorder %s15, 1
    %p38 = por %p36, %p37
    %p40 = scmp.ne.s32.totalorder %s23, %s39
    %p41 = scmp.eq.s32.totalorder %s15, 0
    %p42 = por %p40, %p41
    %s44 = sadd.s32 %s43, 1
    %p47 = scmp.eq.s32.totalorder %s9, 1
    %p48 = scmp.ne.s32.totalorder %s43, %s45
    %p49 = scmp.eq.s32.totalorder %s9, 0
    %p50 = por %p48, %p49
    %p51 = scmp.ne.s32.totalorder %s43, %s45
    %p52 = scmp.eq.s32.totalorder %s14, 1
    %p53 = por %p51, %p52
    %p54 = scmp.ne.s32.totalorder %s45, %s46
    %p55 = scmp.eq.s32.totalorder %s14, 0
    %p56 = por %p54, %p55
    %p57 = scmp.ne.s32.totalorder %s45, %s46
    %p58 = scmp.eq.s32.totalorder %s15, 1
    %p59 = por %p57, %p58
    %p61 = scmp.ne.s32.totalorder %s46, %s60
    %p62 = scmp.eq.s32.totalorder %s15, 0
    %p63 = por %p61, %p62
    %s65 = sadd.s32 %s64, 1
    %p68 = scmp.eq.s32.totalorder %s9, 1
    %p69 = scmp.ne.s32.totalorder %s64, %s66
    %p70 = scmp.eq.s32.totalorder %s9, 0
    %p71 = por %p69, %p70
    %p72 = scmp.ne.s32.totalorder %s64, %s66
    %p73 = scmp.eq.s32.totalorder %s14, 1
    %p74 = por %p72, %p73
    %p75 = scmp.ne.s32.totalorder %s66, %s67
    %p76 = scmp.eq.s32.totalorder %s14, 0
    %p77 = por %p75, %p76
    %p78 = scmp.ne.s32.totalorder %s66, %s67
    %p79 = scmp.eq.s32.totalorder %s15, 1
    %p80 = por %p78, %p79
    %p82 = scmp.ne.s32.totalorder %s67, %s81
    %p83 = scmp.eq.s32.totalorder %s15, 0
    %p84 = por %p82, %p83
    %s85 = ssub.s32 %s9, %s16
    %p86 = scmp.eq.s32.totalorder %s85, 0
    %s88 = sadd.s32 %s87, 1
    %s89 = scalar_select %p86, %s87, %s88
    %p92 = pneg %p86
    %p93 = scmp.eq.s32.totalorder %s9, 1
    %p94 = por %p92, %p93
    %p95 = scmp.ne.s32.totalorder %s87, %s90
    %p96 = scmp.eq.s32.totalorder %s9, 0
    %p97 = por %p95, %p96
    %p98 = scmp.ne.s32.totalorder %s87, %s90
    %p99 = scmp.eq.s32.totalorder %s14, 1
    %p100 = por %p98, %p99
    %p101 = scmp.ne.s32.totalorder %s90, %s91
    %p102 = scmp.eq.s32.totalorder %s14, 0
    %p103 = por %p101, %p102
    %p104 = scmp.ne.s32.totalorder %s90, %s91
    %p105 = scmp.eq.s32.totalorder %s15, 1
    %p106 = por %p104, %p105
    %p108 = scmp.ne.s32.totalorder %s91, %s107
    %p109 = scmp.eq.s32.totalorder %s15, 0
    %p110 = por %p108, %p109
    %p111 = scmp.le.s32.totalorder 1, %s9
    %p112 = scmp.lt.s32.totalorder %s9, 3
    %p113 = pnand %p111, %p112
    %p114 = pneg %p113
    // Predicated region
    $region9: #{temporal_spectrum_block.7} parent=5 // pred_check
      _
    $region10: #{temporal_spectrum_block.7} parent=5 // pred_check_branch
      %116 = sbr.rel (%p113) target = $region12
    $region11: #{temporal_spectrum_block.7} parent=5 // pred_region
      %s117 = ssub.s32 %s9, 1
      // Predicated region
      $region13: #{temporal_spectrum_block.7} parent=11 // pred_check
        %p118 = pneg %p56
      $region14: #{temporal_spectrum_block.7} parent=11 // pred_check_branch
        %120 = sbr.rel (%p118) target = $region16
      $region15: #{temporal_spectrum_block.7} parent=11 // pred_region
        _
      $region16: #{temporal_spectrum_block.7} parent=11 // pred_fallthru
        _
      // Predicated region
      $region17: #{temporal_spectrum_block.7} parent=11 // pred_check
        %p121 = pneg %p77
      $region18: #{temporal_spectrum_block.7} parent=11 // pred_check_branch
        %123 = sbr.rel (%p121) target = $region20
      $region19: #{temporal_spectrum_block.7} parent=11 // pred_region
        _
      $region20: #{temporal_spectrum_block.7} parent=11 // pred_fallthru
        _
    $region12: #{temporal_spectrum_block.7} parent=5 // pred_fallthru
      _
    %p124 = scmp.lt.s32.totalorder %s9, 2
    // Predicated region
    $region21: #{temporal_spectrum_block.7} parent=5 // pred_check
      %p125 = pneg %p124
    $region22: #{temporal_spectrum_block.7} parent=5 // pred_check_branch
      %127 = sbr.rel (%p125) target = $region24
    $region23: #{temporal_spectrum_block.7} parent=5 // pred_region
      // Predicated region
      $region25: #{temporal_spectrum_block.7} parent=23 // pred_check
        %p128 = pneg %p29
      $region26: #{temporal_spectrum_block.7} parent=23 // pred_check_branch
        %130 = sbr.rel (%p128) target = $region28
      $region27: #{temporal_spectrum_block.7} parent=23 // pred_region
        %p131 = scmp.lt.s32.totalorder %s9, 1
        %s132 = scalar_select %p131, %s9, 1
        %s133 = smul.addr %s132, 8
        %s134 = smul.addr %s133, 8
        %s135 = scalar_lea.vmem %s0, %s134
      $region28: #{temporal_spectrum_block.7} parent=23 // pred_fallthru
        _
    $region24: #{temporal_spectrum_block.7} parent=5 // pred_fallthru
      _
    %p136 = scmp.le.s32.totalorder 1, %s9
    %p137 = scmp.lt.s32.totalorder %s9, 3
    %p138 = pnand %p136, %p137
    %p139 = pneg %p138
    // Predicated region
    $region29: #{temporal_spectrum_block.7} parent=5 // pred_check
      _
    $region30: #{temporal_spectrum_block.7} parent=5 // pred_check_branch
      %141 = sbr.rel (%p138) target = $region32
    $region31: #{temporal_spectrum_block.7} parent=5 // pred_region
      %s142 = ssub.s32 %s9, 1
      %p143 = scmp.lt.s32.totalorder %s14, 1
      %s144 = scalar_select %p143, %s14, 1
      %s145 = smul.addr %s144, 8
      %s146 = smul.addr %s145, 8
      %s147 = scalar_lea.vmem %s0, %s146
      %p148 = pneg %p35
      %p149 = pneg %p32
      %p150 = pneg %p56
      %p151 = pneg %p53
      %p152 = pneg %p77
      %p153 = pneg %p74
      %p154 = pneg %p103
      %p155 = pneg %p100
      %p156 = scmp.lt.s32.totalorder %s14, 1
      %s157 = scalar_select %p156, %s14, 1
      %s158 = smul.addr %s157, 8
      %s159 = smul.addr %s158, 8
      %s160 = scalar_lea.vmem %s3, %s159
      %p161 = scmp.lt.s32.totalorder %s14, 1
      %s162 = scalar_select %p161, %s14, 1
      %s163 = smul.addr %s162, 8
      %s164 = smul.addr %s163, 8
      %s165 = scalar_lea.vmem %s0, %s164
      %p166 = scmp.lt.s32.totalorder %s14, 1
      %s167 = scalar_select %p166, %s14, 1
      %s168 = smul.addr %s167, 8
      %s169 = smul.addr %s168, 8
      %s170 = scalar_lea.vmem %s3, %s169
      %vm171 = vcmask 523264
      %172 = vst.msk [vmem:[#allocation2] sm:$0xff] %vm171, 0.0
      %vm173 = vcmask 517120
      %174 = vst.msk [vmem:[#allocation2 + $0x8] sm:$0x3] %vm173, 0.0
      %175 = vst.msk [vmem:[#allocation2 + $0x10] sm:$0xff] %vm171, 0.0
      %176 = vst.msk [vmem:[#allocation2 + $0x18] sm:$0x3] %vm173, 0.0
      %177 = vst.msk [vmem:[#allocation2 + $0x20] sm:$0xff] %vm171, 0.0
      %178 = vst.msk [vmem:[#allocation2 + $0x28] sm:$0x3] %vm173, 0.0
      %179 = vst.msk [vmem:[#allocation2 + $0x30] sm:$0xff] %vm171, 0.0
      %180 = vst.msk [vmem:[#allocation2 + $0x38] sm:$0x3] %vm173, 0.0
      %181 = vst.msk [vmem:[#allocation2 + $0x40] sm:$0xff] %vm171, 0.0
      %182 = vst.msk [vmem:[#allocation2 + $0x48] sm:$0x3] %vm173, 0.0
      %183 = vst.msk [vmem:[#allocation2 + $0x50] sm:$0xff] %vm171, 0.0
      %184 = vst.msk [vmem:[#allocation2 + $0x58] sm:$0x3] %vm173, 0.0
      %185 = vst.msk [vmem:[#allocation2 + $0x60] sm:$0xff] %vm171, 0.0
      %186 = vst.msk [vmem:[#allocation2 + $0x68] sm:$0x3] %vm173, 0.0
      %187 = vst.msk [vmem:[#allocation2 + $0x70] sm:$0xff] %vm171, 0.0
      %188 = vst.msk [vmem:[#allocation2 + $0x78] sm:$0x3] %vm173, 0.0
      %189 = vst.msk [vmem:[#allocation2 + $0x80] sm:$0xff] %vm171, 0.0
      %190 = vst.msk [vmem:[#allocation2 + $0x88] sm:$0x3] %vm173, 0.0
      %191 = vst.msk [vmem:[#allocation2 + $0x90] sm:$0xff] %vm171, 0.0
      %192 = vst.msk [vmem:[#allocation2 + $0x98] sm:$0x3] %vm173, 0.0
      %v193 = vld [vmem:[%s165] sm:$0xff]
      %v194 = vld [vmem:[%s165 + $0x8] sm:$0xff]
      %v195 = vld [vmem:[%s165 + $0x10] sm:$0xff]
      %v196 = vld [vmem:[%s165 + $0x18] sm:$0xff]
      %v197 = vld [vmem:[%s165 + $0x20] sm:$0xff]
      %v198 = vld [vmem:[%s165 + $0x28] sm:$0xff]
      %v199 = vld [vmem:[%s165 + $0x30] sm:$0xff]
      %v200 = vld [vmem:[%s165 + $0x38] sm:$0xff]
      %s201 = scalar_lea.vmem [#allocation2], 16
      %202 = vst.msk [vmem:[%s201 + $0x1] sm:$0xff] %vm171, %v193
      %203 = vst.msk [vmem:[%s201 + $0x11] sm:$0xff] %vm171, %v194
      %204 = vst.msk [vmem:[%s201 + $0x21] sm:$0xff] %vm171, %v195
      %205 = vst.msk [vmem:[%s201 + $0x31] sm:$0xff] %vm171, %v196
      %206 = vst.msk [vmem:[%s201 + $0x41] sm:$0xff] %vm171, %v197
      %207 = vst.msk [vmem:[%s201 + $0x51] sm:$0xff] %vm171, %v198
      %208 = vst.msk [vmem:[%s201 + $0x61] sm:$0xff] %vm171, %v199
      %209 = vst.msk [vmem:[%s201 + $0x71] sm:$0xff] %vm171, %v200
      %v210 = vld [vmem:[%s2] sm:$0x1]
      %v212 = vlaneseq
      %v213 = vshrl.u32 %v212, 7
      %v214 = vsub.s32 0, %v213
      %v215 = vrot.slane %v210, %v214
      %v217 = vadd.f32 %v215, 0.0
      %v218 = vld [vmem:[#allocation2] sm:$0xff]
      %v219 = vld [vmem:[#allocation2 + $0x10] sm:$0xff]
      %v220 = vld [vmem:[#allocation2 + $0x20] sm:$0xff]
      %v221 = vld [vmem:[#allocation2 + $0x30] sm:$0xff]
      %v222 = vld [vmem:[#allocation2 + $0x40] sm:$0xff]
      %v223 = vld [vmem:[#allocation2 + $0x50] sm:$0xff]
      %v224 = vld [vmem:[#allocation2 + $0x60] sm:$0xff]
      %v225 = vld [vmem:[#allocation2 + $0x70] sm:$0xff]
      %v226 = vld [vmem:[%s1] sm:$0x1]
      %v227 = vlaneseq
      %v228 = vshrl.u32 %v227, 7
      %v229 = vsub.s32 0, %v228
      %v230 = vrot.slane %v226, %v229
      %v231 = vmul.f32 %v218, %v230
      %v232 = vmul.f32 %v219, %v230
      %v233 = vmul.f32 %v220, %v230
      %v234 = vmul.f32 %v221, %v230
      %v235 = vmul.f32 %v222, %v230
      %v236 = vmul.f32 %v223, %v230
      %v237 = vmul.f32 %v224, %v230
      %v238 = vmul.f32 %v225, %v230
      %v239 = vadd.f32 %v217, %v231
      %v240 = vadd.f32 %v217, %v232
      %v241 = vadd.f32 %v217, %v233
      %v242 = vadd.f32 %v217, %v234
      %v243 = vadd.f32 %v217, %v235
      %v244 = vadd.f32 %v217, %v236
      %v245 = vadd.f32 %v217, %v237
      %v246 = vadd.f32 %v217, %v238
      %v247 = vld [vmem:[#allocation2 + $0x1] sm:$0xff]
      %v248 = vld [vmem:[#allocation2 + $0x11] sm:$0xff]
      %v249 = vld [vmem:[#allocation2 + $0x21] sm:$0xff]
      %v250 = vld [vmem:[#allocation2 + $0x31] sm:$0xff]
      %v251 = vld [vmem:[#allocation2 + $0x41] sm:$0xff]
      %v252 = vld [vmem:[#allocation2 + $0x51] sm:$0xff]
      %v253 = vld [vmem:[#allocation2 + $0x61] sm:$0xff]
      %v254 = vld [vmem:[#allocation2 + $0x71] sm:$0xff]
      %v255 = vld [vmem:[%s1 + $0x1] sm:$0x1]
      %v256 = vlaneseq
      %v257 = vshrl.u32 %v256, 7
      %v258 = vsub.s32 0, %v257
      %v259 = vrot.slane %v255, %v258
      %v260 = vmul.f32 %v247, %v259
      %v261 = vmul.f32 %v248, %v259
      %v262 = vmul.f32 %v249, %v259
      %v263 = vmul.f32 %v250, %v259
      %v264 = vmul.f32 %v251, %v259
      %v265 = vmul.f32 %v252, %v259
      %v266 = vmul.f32 %v253, %v259
      %v267 = vmul.f32 %v254, %v259
      %v268 = vadd.f32 %v239, %v260
      %v269 = vadd.f32 %v240, %v261
      %v270 = vadd.f32 %v241, %v262
      %v271 = vadd.f32 %v242, %v263
      %v272 = vadd.f32 %v243, %v264
      %v273 = vadd.f32 %v244, %v265
      %v274 = vadd.f32 %v245, %v266
      %v275 = vadd.f32 %v246, %v267
      %v276 = vld [vmem:[#allocation2 + $0x2] sm:$0xff]
      %v277 = vld [vmem:[#allocation2 + $0x12] sm:$0xff]
      %v278 = vld [vmem:[#allocation2 + $0x22] sm:$0xff]
      %v279 = vld [vmem:[#allocation2 + $0x32] sm:$0xff]
      %v280 = vld [vmem:[#allocation2 + $0x42] sm:$0xff]
      %v281 = vld [vmem:[#allocation2 + $0x52] sm:$0xff]
      %v282 = vld [vmem:[#allocation2 + $0x62] sm:$0xff]
      %v283 = vld [vmem:[#allocation2 + $0x72] sm:$0xff]
      %v284 = vld [vmem:[%s1 + $0x2] sm:$0x1]
      %v285 = vlaneseq
      %v286 = vshrl.u32 %v285, 7
      %v287 = vsub.s32 0, %v286
      %v288 = vrot.slane %v284, %v287
      %v289 = vmul.f32 %v276, %v288
      %v290 = vmul.f32 %v277, %v288
      %v291 = vmul.f32 %v278, %v288
      %v292 = vmul.f32 %v279, %v288
      %v293 = vmul.f32 %v280, %v288
      %v294 = vmul.f32 %v281, %v288
      %v295 = vmul.f32 %v282, %v288
      %v296 = vmul.f32 %v283, %v288
      %v297 = vadd.f32 %v268, %v289
      %v298 = vadd.f32 %v269, %v290
      %v299 = vadd.f32 %v270, %v291
      %v300 = vadd.f32 %v271, %v292
      %v301 = vadd.f32 %v272, %v293
      %v302 = vadd.f32 %v273, %v294
      %v303 = vadd.f32 %v274, %v295
      %v304 = vadd.f32 %v275, %v296
      %v305 = vld [vmem:[%s201] sm:$0xff]
      %v306 = vld [vmem:[%s201 + $0x10] sm:$0xff]
      %v307 = vld [vmem:[%s201 + $0x20] sm:$0xff]
      %v308 = vld [vmem:[%s201 + $0x30] sm:$0xff]
      %v309 = vld [vmem:[%s201 + $0x40] sm:$0xff]
      %v310 = vld [vmem:[%s201 + $0x50] sm:$0xff]
      %v311 = vld [vmem:[%s201 + $0x60] sm:$0xff]
      %v312 = vld [vmem:[%s201 + $0x70] sm:$0xff]
      %s313 = scalar_lea.vmem %s1, 4
      %v314 = vld [vmem:[%s313] sm:$0x1]
      %v315 = vlaneseq
      %v316 = vshrl.u32 %v315, 7
      %v317 = vsub.s32 0, %v316
      %v318 = vrot.slane %v314, %v317
      %v319 = vmul.f32 %v305, %v318
      %v320 = vmul.f32 %v306, %v318
      %v321 = vmul.f32 %v307, %v318
      %v322 = vmul.f32 %v308, %v318
      %v323 = vmul.f32 %v309, %v318
      %v324 = vmul.f32 %v310, %v318
      %v325 = vmul.f32 %v311, %v318
      %v326 = vmul.f32 %v312, %v318
      %v327 = vadd.f32 %v297, %v319
      %v328 = vadd.f32 %v298, %v320
      %v329 = vadd.f32 %v299, %v321
      %v330 = vadd.f32 %v300, %v322
      %v331 = vadd.f32 %v301, %v323
      %v332 = vadd.f32 %v302, %v324
      %v333 = vadd.f32 %v303, %v325
      %v334 = vadd.f32 %v304, %v326
      %v335 = vld [vmem:[%s201 + $0x1] sm:$0xff]
      %v336 = vld [vmem:[%s201 + $0x11] sm:$0xff]
      %v337 = vld [vmem:[%s201 + $0x21] sm:$0xff]
      %v338 = vld [vmem:[%s201 + $0x31] sm:$0xff]
      %v339 = vld [vmem:[%s201 + $0x41] sm:$0xff]
      %v340 = vld [vmem:[%s201 + $0x51] sm:$0xff]
      %v341 = vld [vmem:[%s201 + $0x61] sm:$0xff]
      %v342 = vld [vmem:[%s201 + $0x71] sm:$0xff]
      %v343 = vld [vmem:[%s313 + $0x1] sm:$0x1]
      %v344 = vlaneseq
      %v345 = vshrl.u32 %v344, 7
      %v346 = vsub.s32 0, %v345
      %v347 = vrot.slane %v343, %v346
      %v348 = vmul.f32 %v335, %v347
      %v349 = vmul.f32 %v336, %v347
      %v350 = vmul.f32 %v337, %v347
      %v351 = vmul.f32 %v338, %v347
      %v352 = vmul.f32 %v339, %v347
      %v353 = vmul.f32 %v340, %v347
      %v354 = vmul.f32 %v341, %v347
      %v355 = vmul.f32 %v342, %v347
      %v356 = vadd.f32 %v327, %v348
      %v357 = vadd.f32 %v328, %v349
      %v358 = vadd.f32 %v329, %v350
      %v359 = vadd.f32 %v330, %v351
      %v360 = vadd.f32 %v331, %v352
      %v361 = vadd.f32 %v332, %v353
      %v362 = vadd.f32 %v333, %v354
      %v363 = vadd.f32 %v334, %v355
      %v364 = vld [vmem:[%s201 + $0x2] sm:$0xff]
      %v365 = vld [vmem:[%s201 + $0x12] sm:$0xff]
      %v366 = vld [vmem:[%s201 + $0x22] sm:$0xff]
      %v367 = vld [vmem:[%s201 + $0x32] sm:$0xff]
      %v368 = vld [vmem:[%s201 + $0x42] sm:$0xff]
      %v369 = vld [vmem:[%s201 + $0x52] sm:$0xff]
      %v370 = vld [vmem:[%s201 + $0x62] sm:$0xff]
      %v371 = vld [vmem:[%s201 + $0x72] sm:$0xff]
      %v372 = vld [vmem:[%s313 + $0x2] sm:$0x1]
      %v373 = vlaneseq
      %v374 = vshrl.u32 %v373, 7
      %v375 = vsub.s32 0, %v374
      %v376 = vrot.slane %v372, %v375
      %v377 = vmul.f32 %v364, %v376
      %v378 = vmul.f32 %v365, %v376
      %v379 = vmul.f32 %v366, %v376
      %v380 = vmul.f32 %v367, %v376
      %v381 = vmul.f32 %v368, %v376
      %v382 = vmul.f32 %v369, %v376
      %v383 = vmul.f32 %v370, %v376
      %v384 = vmul.f32 %v371, %v376
      %v385 = vadd.f32 %v356, %v377
      %v386 = vadd.f32 %v357, %v378
      %v387 = vadd.f32 %v358, %v379
      %v388 = vadd.f32 %v359, %v380
      %v389 = vadd.f32 %v360, %v381
      %v390 = vadd.f32 %v361, %v382
      %v391 = vadd.f32 %v362, %v383
      %v392 = vadd.f32 %v363, %v384
      %s393 = scalar_lea.vmem [#allocation2], 32
      %v394 = vld [vmem:[%s393] sm:$0xff]
      %v395 = vld [vmem:[%s393 + $0x10] sm:$0xff]
      %v396 = vld [vmem:[%s393 + $0x20] sm:$0xff]
      %v397 = vld [vmem:[%s393 + $0x30] sm:$0xff]
      %v398 = vld [vmem:[%s393 + $0x40] sm:$0xff]
      %v399 = vld [vmem:[%s393 + $0x50] sm:$0xff]
      %v400 = vld [vmem:[%s393 + $0x60] sm:$0xff]
      %v401 = vld [vmem:[%s393 + $0x70] sm:$0xff]
      %s402 = scalar_lea.vmem %s1, 8
      %v403 = vld [vmem:[%s402] sm:$0x1]
      %v404 = vlaneseq
      %v405 = vshrl.u32 %v404, 7
      %v406 = vsub.s32 0, %v405
      %v407 = vrot.slane %v403, %v406
      %v408 = vmul.f32 %v394, %v407
      %v409 = vmul.f32 %v395, %v407
      %v410 = vmul.f32 %v396, %v407
      %v411 = vmul.f32 %v397, %v407
      %v412 = vmul.f32 %v398, %v407
      %v413 = vmul.f32 %v399, %v407
      %v414 = vmul.f32 %v400, %v407
      %v415 = vmul.f32 %v401, %v407
      %v416 = vadd.f32 %v385, %v408
      %v417 = vadd.f32 %v386, %v409
      %v418 = vadd.f32 %v387, %v410
      %v419 = vadd.f32 %v388, %v411
      %v420 = vadd.f32 %v389, %v412
      %v421 = vadd.f32 %v390, %v413
      %v422 = vadd.f32 %v391, %v414
      %v423 = vadd.f32 %v392, %v415
      %v424 = vld [vmem:[%s393 + $0x1] sm:$0xff]
      %v425 = vld [vmem:[%s393 + $0x11] sm:$0xff]
      %v426 = vld [vmem:[%s393 + $0x21] sm:$0xff]
      %v427 = vld [vmem:[%s393 + $0x31] sm:$0xff]
      %v428 = vld [vmem:[%s393 + $0x41] sm:$0xff]
      %v429 = vld [vmem:[%s393 + $0x51] sm:$0xff]
      %v430 = vld [vmem:[%s393 + $0x61] sm:$0xff]
      %v431 = vld [vmem:[%s393 + $0x71] sm:$0xff]
      %v432 = vld [vmem:[%s402 + $0x1] sm:$0x1]
      %v433 = vlaneseq
      %v434 = vshrl.u32 %v433, 7
      %v435 = vsub.s32 0, %v434
      %v436 = vrot.slane %v432, %v435
      %v437 = vmul.f32 %v424, %v436
      %v438 = vmul.f32 %v425, %v436
      %v439 = vmul.f32 %v426, %v436
      %v440 = vmul.f32 %v427, %v436
      %v441 = vmul.f32 %v428, %v436
      %v442 = vmul.f32 %v429, %v436
      %v443 = vmul.f32 %v430, %v436
      %v444 = vmul.f32 %v431, %v436
      %v445 = vadd.f32 %v416, %v437
      %v446 = vadd.f32 %v417, %v438
      %v447 = vadd.f32 %v418, %v439
      %v448 = vadd.f32 %v419, %v440
      %v449 = vadd.f32 %v420, %v441
      %v450 = vadd.f32 %v421, %v442
      %v451 = vadd.f32 %v422, %v443
      %v452 = vadd.f32 %v423, %v444
      %v453 = vld [vmem:[%s393 + $0x2] sm:$0xff]
      %v454 = vld [vmem:[%s393 + $0x12] sm:$0xff]
      %v455 = vld [vmem:[%s393 + $0x22] sm:$0xff]
      %v456 = vld [vmem:[%s393 + $0x32] sm:$0xff]
      %v457 = vld [vmem:[%s393 + $0x42] sm:$0xff]
      %v458 = vld [vmem:[%s393 + $0x52] sm:$0xff]
      %v459 = vld [vmem:[%s393 + $0x62] sm:$0xff]
      %v460 = vld [vmem:[%s393 + $0x72] sm:$0xff]
      %v461 = vld [vmem:[%s402 + $0x2] sm:$0x1]
      %v462 = vlaneseq
      %v463 = vshrl.u32 %v462, 7
      %v464 = vsub.s32 0, %v463
      %v465 = vrot.slane %v461, %v464
      %v466 = vmul.f32 %v453, %v465
      %v467 = vmul.f32 %v454, %v465
      %v468 = vmul.f32 %v455, %v465
      %v469 = vmul.f32 %v456, %v465
      %v470 = vmul.f32 %v457, %v465
      %v471 = vmul.f32 %v458, %v465
      %v472 = vmul.f32 %v459, %v465
      %v473 = vmul.f32 %v460, %v465
      %v474 = vadd.f32 %v445, %v466
      %v475 = vadd.f32 %v446, %v467
      %v476 = vadd.f32 %v447, %v468
      %v477 = vadd.f32 %v448, %v469
      %v478 = vadd.f32 %v449, %v470
      %v479 = vadd.f32 %v450, %v471
      %v480 = vadd.f32 %v451, %v472
      %v481 = vadd.f32 %v452, %v473
      %v482 = vmul.f32 %v474, 0.5
      %v483 = vmul.f32 %v475, 0.5
      %v484 = vmul.f32 %v476, 0.5
      %v485 = vmul.f32 %v477, 0.5
      %v486 = vmul.f32 %v478, 0.5
      %v487 = vmul.f32 %v479, 0.5
      %v488 = vmul.f32 %v480, 0.5
      %v489 = vmul.f32 %v481, 0.5
      %v490 = vtanh.pop %v482
      %v491 = vtanh.pop %v483
      %v492 = vtanh.pop %v484
      %v493 = vtanh.pop %v485
      %v494 = vtanh.pop %v486
      %v495 = vtanh.pop %v487
      %v496 = vtanh.pop %v488
      %v497 = vtanh.pop %v489
      %v498 = vadd.f32 %v490, 1.0
      %v499 = vadd.f32 %v491, 1.0
      %v500 = vadd.f32 %v492, 1.0
      %v501 = vadd.f32 %v493, 1.0
      %v502 = vadd.f32 %v494, 1.0
      %v503 = vadd.f32 %v495, 1.0
      %v504 = vadd.f32 %v496, 1.0
      %v505 = vadd.f32 %v497, 1.0
      %v506 = vmul.f32 %v498, 0.5
      %v507 = vmul.f32 %v499, 0.5
      %v508 = vmul.f32 %v500, 0.5
      %v509 = vmul.f32 %v501, 0.5
      %v510 = vmul.f32 %v502, 0.5
      %v511 = vmul.f32 %v503, 0.5
      %v512 = vmul.f32 %v504, 0.5
      %v513 = vmul.f32 %v505, 0.5
      %v514 = vmul.f32 %v474, %v506
      %v515 = vmul.f32 %v475, %v507
      %v516 = vmul.f32 %v476, %v508
      %v517 = vmul.f32 %v477, %v509
      %v518 = vmul.f32 %v478, %v510
      %v519 = vmul.f32 %v479, %v511
      %v520 = vmul.f32 %v480, %v512
      %v521 = vmul.f32 %v481, %v513
      %522 = vst.msk [vmem:[%s170] sm:$0xff] %vm171, %v514
      %523 = vst.msk [vmem:[%s170 + $0x8] sm:$0xff] %vm171, %v515
      %524 = vst.msk [vmem:[%s170 + $0x10] sm:$0xff] %vm171, %v516
      %525 = vst.msk [vmem:[%s170 + $0x18] sm:$0xff] %vm171, %v517
      %526 = vst.msk [vmem:[%s170 + $0x20] sm:$0xff] %vm171, %v518
      %527 = vst.msk [vmem:[%s170 + $0x28] sm:$0xff] %vm171, %v519
      %528 = vst.msk [vmem:[%s170 + $0x30] sm:$0xff] %vm171, %v520
      %529 = vst.msk [vmem:[%s170 + $0x38] sm:$0xff] %vm171, %v521
      %p530 = scmp.lt.s32.totalorder %s14, 1
      %s531 = scalar_select %p530, %s14, 1
      %s532 = smul.addr %s531, 8
      %s533 = smul.addr %s532, 8
      %s534 = scalar_lea.vmem %s3, %s533
      // Predicated region
      $region33: #{temporal_spectrum_block.7} parent=31 // pred_check
        %p535 = pneg %p100
      $region34: #{temporal_spectrum_block.7} parent=31 // pred_check_branch
        %537 = sbr.rel (%p535) target = $region36
      $region35: #{temporal_spectrum_block.7} parent=31 // pred_region
        _
      $region36: #{temporal_spectrum_block.7} parent=31 // pred_fallthru
        _
    $region32: #{temporal_spectrum_block.7} parent=5 // pred_fallthru
      _
    %p538 = scmp.le.s32.totalorder 2, %s9
    // Predicated region
    $region37: #{temporal_spectrum_block.7} parent=5 // pred_check
      %p539 = pneg %p538
    $region38: #{temporal_spectrum_block.7} parent=5 // pred_check_branch
      %541 = sbr.rel (%p539) target = $region40
    $region39: #{temporal_spectrum_block.7} parent=5 // pred_region
      %s542 = ssub.s32 %s9, 2
      // Predicated region
      $region41: #{temporal_spectrum_block.7} parent=39 // pred_check
        %p543 = pneg %p106
      $region42: #{temporal_spectrum_block.7} parent=39 // pred_check_branch
        %545 = sbr.rel (%p543) target = $region44
      $region43: #{temporal_spectrum_block.7} parent=39 // pred_region
        %p546 = scmp.lt.s32.totalorder %s15, 1
        %s547 = scalar_select %p546, %s15, 1
        %s548 = smul.addr %s547, 8
        %s549 = smul.addr %s548, 8
        %s550 = scalar_lea.vmem %s3, %s549
      $region44: #{temporal_spectrum_block.7} parent=39 // pred_fallthru
        _
    $region40: #{temporal_spectrum_block.7} parent=5 // pred_fallthru
      _
  $region6: #{temporal_spectrum_block.7} parent=0 // loop_footer
    %s13 = sadd.s32 1, %s9
  $region7: #{temporal_spectrum_block.7} parent=0 // loop_footer_branch
    %8 = sbr.rel target = $region3
  $region8: #{temporal_spectrum_block.7} parent=0 // loop_exit
    _

// kernel: temporal_spectrum_block.6
$region0: #{temporal_spectrum_block.6}
  #allocation0 [shape = 'u32[]', space=smem, size = 0x4, offset = 0x4, fixed_abs, tag = 'smem constant byte address 0x4 - core index']
  #allocation1 [shape = 'u32[144,128]{1,0:T(1,128)}', space=vmem, size = 0x12000, scoped, tag = 'internal scratch']
  %s0 = inlined_call_operand.vmem [shape: f32[128,32], index: 0, kind: input, shape index: {}]
  %s1 = inlined_call_operand.hbm [shape: f32[128,32], index: 1, kind: input, shape index: {}]
  %s2 = inlined_call_operand.vmem [shape: f32[1,32], index: 2, kind: input, shape index: {}]
  %s3 = inlined_call_operand.vmem [shape: f32[1,32], index: 3, kind: input, shape index: {}]
  %s4 = inlined_call_operand.vmem [shape: bf16[32,64], index: 4, kind: input, shape index: {}]
  %s5 = inlined_call_operand.vmem [shape: bf16[32,64], index: 5, kind: input, shape index: {}]
  %s6 = inlined_call_operand.vmem [shape: f32[128,32], index: 6, kind: output, shape index: {0}]
  %s7 = inlined_call_operand.vmem [shape: f32[128,64], index: 7, kind: output, shape index: {1}]
  %s8 = inlined_call_operand.vmem [shape: f32[128,64], index: 8, kind: output, shape index: {2}]
  %9 = xla_tuple %s6, %s7, %s8
  %s10 = sld [smem:[#allocation0]]
  $region54: #{temporal_spectrum_block.6} parent=0
    _
  %s12 = ssub.s32 1, %s10
  %s13 = scalar_select 0, %s12, %s10
  $region1: #{temporal_spectrum_block.6} parent=0
    #allocation2 [shape = 'u8[65536]{0}', space=vmem, size = 0x10000, scoped, tag = 'input window, operand 1, single buffered']
    #allocation3 [shape = 's32[1]{0}', space=sflag, size = 0x4, scoped, tag = 'scoped memory for temporal_spectrum_block.6']
    %14 = vsyncpa [#allocation3], 0
    // Predicated region
    $region2: #{temporal_spectrum_block.6} parent=1 // pred_check
      _
    $region3: #{temporal_spectrum_block.6} parent=1 // pred_check_branch
      %16 = sbr.rel (0) target = $region5
    $region4: #{temporal_spectrum_block.6} parent=1 // pred_region
      _
    $region5: #{temporal_spectrum_block.6} parent=1 // pred_fallthru
      _
    // Predicated region
    $region6: #{temporal_spectrum_block.6} parent=1 // pred_check
      _
    $region7: #{temporal_spectrum_block.6} parent=1 // pred_check_branch
      %18 = sbr.rel (0) target = $region9
    $region8: #{temporal_spectrum_block.6} parent=1 // pred_region
      %s20 = ssub.s32 2048, 2048
      %21 = vsyncadd [#allocation3], %s20
      %s22 = sshll.u32 [#allocation2], 4
      %s23 = int_to_ptr.vmem [resolvable:$true] %s22
      %28 = dma.hbm_to_vmem [thread:$0]  %s1, 2048, %s23, [#allocation3], 128, 128, 8
    $region9: #{temporal_spectrum_block.6} parent=1 // pred_fallthru
      _
    // Predicated region
    $region10: #{temporal_spectrum_block.6} parent=1 // pred_check
      _
    $region11: #{temporal_spectrum_block.6} parent=1 // pred_check_branch
      %30 = sbr.rel (0) target = $region13
    $region12: #{temporal_spectrum_block.6} parent=1 // pred_region
      _
    $region13: #{temporal_spectrum_block.6} parent=1 // pred_fallthru
      _
    // Predicated region
    $region14: #{temporal_spectrum_block.6} parent=1 // pred_check
      _
    $region15: #{temporal_spectrum_block.6} parent=1 // pred_check_branch
      %32 = sbr.rel (0) target = $region17
    $region16: #{temporal_spectrum_block.6} parent=1 // pred_region
      _
    $region17: #{temporal_spectrum_block.6} parent=1 // pred_fallthru
      _
    // Predicated region
    $region18: #{temporal_spectrum_block.6} parent=1 // pred_check
      _
    $region19: #{temporal_spectrum_block.6} parent=1 // pred_check_branch
      %34 = sbr.rel (0) target = $region21
    $region20: #{temporal_spectrum_block.6} parent=1 // pred_region
      _
    $region21: #{temporal_spectrum_block.6} parent=1 // pred_fallthru
      _
    // Predicated region
    $region22: #{temporal_spectrum_block.6} parent=1 // pred_check
      _
    $region23: #{temporal_spectrum_block.6} parent=1 // pred_check_branch
      %36 = sbr.rel (0) target = $region25
    $region24: #{temporal_spectrum_block.6} parent=1 // pred_region
      _
    $region25: #{temporal_spectrum_block.6} parent=1 // pred_fallthru
      _
    // Predicated region
    $region26: #{temporal_spectrum_block.6} parent=1 // pred_check
      _
    $region27: #{temporal_spectrum_block.6} parent=1 // pred_check_branch
      %38 = sbr.rel (0) target = $region29
    $region28: #{temporal_spectrum_block.6} parent=1 // pred_region
      %39 = dma.done [#allocation3], 2048
    $region29: #{temporal_spectrum_block.6} parent=1 // pred_fallthru
      _
    %v41 = vld [vmem:[%s0] sm:$0xff]
    %v42 = vld [vmem:[%s0 + $0x8] sm:$0xff]
    %v43 = vld [vmem:[%s0 + $0x10] sm:$0xff]
    %v44 = vld [vmem:[%s0 + $0x18] sm:$0xff]
    %v45 = vld [vmem:[%s0 + $0x20] sm:$0xff]
    %v46 = vld [vmem:[%s0 + $0x28] sm:$0xff]
    %v47 = vld [vmem:[%s0 + $0x30] sm:$0xff]
    %v48 = vld [vmem:[%s0 + $0x38] sm:$0xff]
    %v49 = vld [vmem:[%s0 + $0x40] sm:$0xff]
    %v50 = vld [vmem:[%s0 + $0x48] sm:$0xff]
    %v51 = vld [vmem:[%s0 + $0x50] sm:$0xff]
    %v52 = vld [vmem:[%s0 + $0x58] sm:$0xff]
    %v53 = vld [vmem:[%s0 + $0x60] sm:$0xff]
    %v54 = vld [vmem:[%s0 + $0x68] sm:$0xff]
    %v55 = vld [vmem:[%s0 + $0x70] sm:$0xff]
    %v56 = vld [vmem:[%s0 + $0x78] sm:$0xff]
    %v57 = vld [vmem:[#allocation2] sm:$0xff]
    %v58 = vld [vmem:[#allocation2 + $0x8] sm:$0xff]
    %v59 = vld [vmem:[#allocation2 + $0x10] sm:$0xff]
    %v60 = vld [vmem:[#allocation2 + $0x18] sm:$0xff]
    %v61 = vld [vmem:[#allocation2 + $0x20] sm:$0xff]
    %v62 = vld [vmem:[#allocation2 + $0x28] sm:$0xff]
    %v63 = vld [vmem:[#allocation2 + $0x30] sm:$0xff]
    %v64 = vld [vmem:[#allocation2 + $0x38] sm:$0xff]
    %v65 = vld [vmem:[#allocation2 + $0x40] sm:$0xff]
    %v66 = vld [vmem:[#allocation2 + $0x48] sm:$0xff]
    %v67 = vld [vmem:[#allocation2 + $0x50] sm:$0xff]
    %v68 = vld [vmem:[#allocation2 + $0x58] sm:$0xff]
    %v69 = vld [vmem:[#allocation2 + $0x60] sm:$0xff]
    %v70 = vld [vmem:[#allocation2 + $0x68] sm:$0xff]
    %v71 = vld [vmem:[#allocation2 + $0x70] sm:$0xff]
    %v72 = vld [vmem:[#allocation2 + $0x78] sm:$0xff]
    %v73 = vsub.f32 %v41, %v57
    %v74 = vsub.f32 %v42, %v58
    %v75 = vsub.f32 %v43, %v59
    %v76 = vsub.f32 %v44, %v60
    %v77 = vsub.f32 %v45, %v61
    %v78 = vsub.f32 %v46, %v62
    %v79 = vsub.f32 %v47, %v63
    %v80 = vsub.f32 %v48, %v64
    %v81 = vsub.f32 %v49, %v65
    %v82 = vsub.f32 %v50, %v66
    %v83 = vsub.f32 %v51, %v67
    %v84 = vsub.f32 %v52, %v68
    %v85 = vsub.f32 %v53, %v69
    %v86 = vsub.f32 %v54, %v70
    %v87 = vsub.f32 %v55, %v71
    %v88 = vsub.f32 %v56, %v72
    %v89 = vand.u32 2147483647, %v73
    %v90 = vand.u32 2147483647, %v74
    %v91 = vand.u32 2147483647, %v75
    %v92 = vand.u32 2147483647, %v76
    %v93 = vand.u32 2147483647, %v77
    %v94 = vand.u32 2147483647, %v78
    %v95 = vand.u32 2147483647, %v79
    %v96 = vand.u32 2147483647, %v80
    %v97 = vand.u32 2147483647, %v81
    %v98 = vand.u32 2147483647, %v82
    %v99 = vand.u32 2147483647, %v83
    %v100 = vand.u32 2147483647, %v84
    %v101 = vand.u32 2147483647, %v85
    %v102 = vand.u32 2147483647, %v86
    %v103 = vand.u32 2147483647, %v87
    %v104 = vand.u32 2147483647, %v88
    %vm105 = vcmask 261120
    %106 = vst.msk [vmem:[%s6] sm:$0xff] %vm105, %v89
    %107 = vst.msk [vmem:[%s6 + $0x8] sm:$0xff] %vm105, %v90
    %108 = vst.msk [vmem:[%s6 + $0x10] sm:$0xff] %vm105, %v91
    %109 = vst.msk [vmem:[%s6 + $0x18] sm:$0xff] %vm105, %v92
    %110 = vst.msk [vmem:[%s6 + $0x20] sm:$0xff] %vm105, %v93
    %111 = vst.msk [vmem:[%s6 + $0x28] sm:$0xff] %vm105, %v94
    %112 = vst.msk [vmem:[%s6 + $0x30] sm:$0xff] %vm105, %v95
    %113 = vst.msk [vmem:[%s6 + $0x38] sm:$0xff] %vm105, %v96
    %114 = vst.msk [vmem:[%s6 + $0x40] sm:$0xff] %vm105, %v97
    %115 = vst.msk [vmem:[%s6 + $0x48] sm:$0xff] %vm105, %v98
    %116 = vst.msk [vmem:[%s6 + $0x50] sm:$0xff] %vm105, %v99
    %117 = vst.msk [vmem:[%s6 + $0x58] sm:$0xff] %vm105, %v100
    %118 = vst.msk [vmem:[%s6 + $0x60] sm:$0xff] %vm105, %v101
    %119 = vst.msk [vmem:[%s6 + $0x68] sm:$0xff] %vm105, %v102
    %120 = vst.msk [vmem:[%s6 + $0x70] sm:$0xff] %vm105, %v103
    %121 = vst.msk [vmem:[%s6 + $0x78] sm:$0xff] %vm105, %v104
    %v122 = vld [vmem:[%s2] sm:$0x1]
    %v123 = vld [vmem:[%s3] sm:$0x1]
    %v124 = vsel %vm105, %v89, 0.0
    %125 = vadd.xlane.f32.xlu0 %v124
    %v126 = vpop.xlane.xlu0 %125
    %v127 = vsel %vm105, %v90, 0.0
    %128 = vadd.xlane.f32.xlu0 %v127
    %v129 = vpop.xlane.xlu0 %128
    %v130 = vsel %vm105, %v91, 0.0
    %131 = vadd.xlane.f32.xlu0 %v130
    %v132 = vpop.xlane.xlu0 %131
    %v133 = vsel %vm105, %v92, 0.0
    %134 = vadd.xlane.f32.xlu0 %v133
    %v135 = vpop.xlane.xlu0 %134
    %v136 = vsel %vm105, %v93, 0.0
    %137 = vadd.xlane.f32.xlu0 %v136
    %v138 = vpop.xlane.xlu0 %137
    %v139 = vsel %vm105, %v94, 0.0
    %140 = vadd.xlane.f32.xlu0 %v139
    %v141 = vpop.xlane.xlu0 %140
    %v142 = vsel %vm105, %v95, 0.0
    %143 = vadd.xlane.f32.xlu0 %v142
    %v144 = vpop.xlane.xlu0 %143
    %v145 = vsel %vm105, %v96, 0.0
    %146 = vadd.xlane.f32.xlu0 %v145
    %v147 = vpop.xlane.xlu0 %146
    %v148 = vsel %vm105, %v97, 0.0
    %149 = vadd.xlane.f32.xlu0 %v148
    %v150 = vpop.xlane.xlu0 %149
    %v151 = vsel %vm105, %v98, 0.0
    %152 = vadd.xlane.f32.xlu0 %v151
    %v153 = vpop.xlane.xlu0 %152
    %v154 = vsel %vm105, %v99, 0.0
    %155 = vadd.xlane.f32.xlu0 %v154
    %v156 = vpop.xlane.xlu0 %155
    %v157 = vsel %vm105, %v100, 0.0
    %158 = vadd.xlane.f32.xlu0 %v157
    %v159 = vpop.xlane.xlu0 %158
    %v160 = vsel %vm105, %v101, 0.0
    %161 = vadd.xlane.f32.xlu0 %v160
    %v162 = vpop.xlane.xlu0 %161
    %v163 = vsel %vm105, %v102, 0.0
    %164 = vadd.xlane.f32.xlu0 %v163
    %v165 = vpop.xlane.xlu0 %164
    %v166 = vsel %vm105, %v103, 0.0
    %167 = vadd.xlane.f32.xlu0 %v166
    %v168 = vpop.xlane.xlu0 %167
    %v169 = vsel %vm105, %v104, 0.0
    %170 = vadd.xlane.f32.xlu0 %v169
    %v171 = vpop.xlane.xlu0 %170
    %v172 = vrcp.pop 32.0
    %v173 = vmul.f32 %v126, %v172
    %v174 = vmul.f32 %v129, %v172
    %v175 = vmul.f32 %v132, %v172
    %v176 = vmul.f32 %v135, %v172
    %v177 = vmul.f32 %v138, %v172
    %v178 = vmul.f32 %v141, %v172
    %v179 = vmul.f32 %v144, %v172
    %v180 = vmul.f32 %v147, %v172
    %v181 = vmul.f32 %v150, %v172
    %v182 = vmul.f32 %v153, %v172
    %v183 = vmul.f32 %v156, %v172
    %v184 = vmul.f32 %v159, %v172
    %v185 = vmul.f32 %v162, %v172
    %v186 = vmul.f32 %v165, %v172
    %v187 = vmul.f32 %v168, %v172
    %v188 = vmul.f32 %v171, %v172
    %v189 = vsub.f32 %v89, %v173
    %v190 = vsub.f32 %v90, %v174
    %v191 = vsub.f32 %v91, %v175
    %v192 = vsub.f32 %v92, %v176
    %v193 = vsub.f32 %v93, %v177
    %v194 = vsub.f32 %v94, %v178
    %v195 = vsub.f32 %v95, %v179
    %v196 = vsub.f32 %v96, %v180
    %v197 = vsub.f32 %v97, %v181
    %v198 = vsub.f32 %v98, %v182
    %v199 = vsub.f32 %v99, %v183
    %v200 = vsub.f32 %v100, %v184
    %v201 = vsub.f32 %v101, %v185
    %v202 = vsub.f32 %v102, %v186
    %v203 = vsub.f32 %v103, %v187
    %v204 = vsub.f32 %v104, %v188
    %v205 = vmul.f32 %v189, %v189
    %v206 = vmul.f32 %v190, %v190
    %v207 = vmul.f32 %v191, %v191
    %v208 = vmul.f32 %v192, %v192
    %v209 = vmul.f32 %v193, %v193
    %v210 = vmul.f32 %v194, %v194
    %v211 = vmul.f32 %v195, %v195
    %v212 = vmul.f32 %v196, %v196
    %v213 = vmul.f32 %v197, %v197
    %v214 = vmul.f32 %v198, %v198
    %v215 = vmul.f32 %v199, %v199
    %v216 = vmul.f32 %v200, %v200
    %v217 = vmul.f32 %v201, %v201
    %v218 = vmul.f32 %v202, %v202
    %v219 = vmul.f32 %v203, %v203
    %v220 = vmul.f32 %v204, %v204
    %v221 = vsel %vm105, %v205, 0.0
    %222 = vadd.xlane.f32.xlu0 %v221
    %v223 = vpop.xlane.xlu0 %222
    %v224 = vsel %vm105, %v206, 0.0
    %225 = vadd.xlane.f32.xlu0 %v224
    %v226 = vpop.xlane.xlu0 %225
    %v227 = vsel %vm105, %v207, 0.0
    %228 = vadd.xlane.f32.xlu0 %v227
    %v229 = vpop.xlane.xlu0 %228
    %v230 = vsel %vm105, %v208, 0.0
    %231 = vadd.xlane.f32.xlu0 %v230
    %v232 = vpop.xlane.xlu0 %231
    %v233 = vsel %vm105, %v209, 0.0
    %234 = vadd.xlane.f32.xlu0 %v233
    %v235 = vpop.xlane.xlu0 %234
    %v236 = vsel %vm105, %v210, 0.0
    %237 = vadd.xlane.f32.xlu0 %v236
    %v238 = vpop.xlane.xlu0 %237
    %v239 = vsel %vm105, %v211, 0.0
    %240 = vadd.xlane.f32.xlu0 %v239
    %v241 = vpop.xlane.xlu0 %240
    %v242 = vsel %vm105, %v212, 0.0
    %243 = vadd.xlane.f32.xlu0 %v242
    %v244 = vpop.xlane.xlu0 %243
    %v245 = vsel %vm105, %v213, 0.0
    %246 = vadd.xlane.f32.xlu0 %v245
    %v247 = vpop.xlane.xlu0 %246
    %v248 = vsel %vm105, %v214, 0.0
    %249 = vadd.xlane.f32.xlu0 %v248
    %v250 = vpop.xlane.xlu0 %249
    %v251 = vsel %vm105, %v215, 0.0
    %252 = vadd.xlane.f32.xlu0 %v251
    %v253 = vpop.xlane.xlu0 %252
    %v254 = vsel %vm105, %v216, 0.0
    %255 = vadd.xlane.f32.xlu0 %v254
    %v256 = vpop.xlane.xlu0 %255
    %v257 = vsel %vm105, %v217, 0.0
    %258 = vadd.xlane.f32.xlu0 %v257
    %v259 = vpop.xlane.xlu0 %258
    %v260 = vsel %vm105, %v218, 0.0
    %261 = vadd.xlane.f32.xlu0 %v260
    %v262 = vpop.xlane.xlu0 %261
    %v263 = vsel %vm105, %v219, 0.0
    %264 = vadd.xlane.f32.xlu0 %v263
    %v265 = vpop.xlane.xlu0 %264
    %v266 = vsel %vm105, %v220, 0.0
    %267 = vadd.xlane.f32.xlu0 %v266
    %v268 = vpop.xlane.xlu0 %267
    %v269 = vmul.f32 %v223, %v172
    %v270 = vmul.f32 %v226, %v172
    %v271 = vmul.f32 %v229, %v172
    %v272 = vmul.f32 %v232, %v172
    %v273 = vmul.f32 %v235, %v172
    %v274 = vmul.f32 %v238, %v172
    %v275 = vmul.f32 %v241, %v172
    %v276 = vmul.f32 %v244, %v172
    %v277 = vmul.f32 %v247, %v172
    %v278 = vmul.f32 %v250, %v172
    %v279 = vmul.f32 %v253, %v172
    %v280 = vmul.f32 %v256, %v172
    %v281 = vmul.f32 %v259, %v172
    %v282 = vmul.f32 %v262, %v172
    %v283 = vmul.f32 %v265, %v172
    %v284 = vmul.f32 %v268, %v172
    %v285 = vadd.f32 %v269, 1e-05
    %v286 = vadd.f32 %v270, 1e-05
    %v287 = vadd.f32 %v271, 1e-05
    %v288 = vadd.f32 %v272, 1e-05
    %v289 = vadd.f32 %v273, 1e-05
    %v290 = vadd.f32 %v274, 1e-05
    %v291 = vadd.f32 %v275, 1e-05
    %v292 = vadd.f32 %v276, 1e-05
    %v293 = vadd.f32 %v277, 1e-05
    %v294 = vadd.f32 %v278, 1e-05
    %v295 = vadd.f32 %v279, 1e-05
    %v296 = vadd.f32 %v280, 1e-05
    %v297 = vadd.f32 %v281, 1e-05
    %v298 = vadd.f32 %v282, 1e-05
    %v299 = vadd.f32 %v283, 1e-05
    %v300 = vadd.f32 %v284, 1e-05
    %v301 = vrsqrt.pop %v285
    %v302 = vrsqrt.pop %v286
    %v303 = vrsqrt.pop %v287
    %v304 = vrsqrt.pop %v288
    %v305 = vrsqrt.pop %v289
    %v306 = vrsqrt.pop %v290
    %v307 = vrsqrt.pop %v291
    %v308 = vrsqrt.pop %v292
    %v309 = vrsqrt.pop %v293
    %v310 = vrsqrt.pop %v294
    %v311 = vrsqrt.pop %v295
    %v312 = vrsqrt.pop %v296
    %v313 = vrsqrt.pop %v297
    %v314 = vrsqrt.pop %v298
    %v315 = vrsqrt.pop %v299
    %v316 = vrsqrt.pop %v300
    %v317 = vmul.f32 %v189, %v301
    %v318 = vmul.f32 %v190, %v302
    %v319 = vmul.f32 %v191, %v303
    %v320 = vmul.f32 %v192, %v304
    %v321 = vmul.f32 %v193, %v305
    %v322 = vmul.f32 %v194, %v306
    %v323 = vmul.f32 %v195, %v307
    %v324 = vmul.f32 %v196, %v308
    %v325 = vmul.f32 %v197, %v309
    %v326 = vmul.f32 %v198, %v310
    %v327 = vmul.f32 %v199, %v311
    %v328 = vmul.f32 %v200, %v312
    %v329 = vmul.f32 %v201, %v313
    %v330 = vmul.f32 %v202, %v314
    %v331 = vmul.f32 %v203, %v315
    %v332 = vmul.f32 %v204, %v316
    %v334 = vlaneseq
    %v335 = vshrl.u32 %v334, 7
    %v336 = vsub.s32 0, %v335
    %v337 = vrot.slane %v122, %v336
    %v339 = vmul.f32 %v317, %v337
    %v340 = vmul.f32 %v318, %v337
    %v341 = vmul.f32 %v319, %v337
    %v342 = vmul.f32 %v320, %v337
    %v343 = vmul.f32 %v321, %v337
    %v344 = vmul.f32 %v322, %v337
    %v345 = vmul.f32 %v323, %v337
    %v346 = vmul.f32 %v324, %v337
    %v347 = vmul.f32 %v325, %v337
    %v348 = vmul.f32 %v326, %v337
    %v349 = vmul.f32 %v327, %v337
    %v350 = vmul.f32 %v328, %v337
    %v351 = vmul.f32 %v329, %v337
    %v352 = vmul.f32 %v330, %v337
    %v353 = vmul.f32 %v331, %v337
    %v354 = vmul.f32 %v332, %v337
    %v356 = vlaneseq
    %v357 = vshrl.u32 %v356, 7
    %v358 = vsub.s32 0, %v357
    %v359 = vrot.slane %v123, %v358
    %v361 = vadd.f32 %v339, %v359
    %v362 = vadd.f32 %v340, %v359
    %v363 = vadd.f32 %v341, %v359
    %v364 = vadd.f32 %v342, %v359
    %v365 = vadd.f32 %v343, %v359
    %v366 = vadd.f32 %v344, %v359
    %v367 = vadd.f32 %v345, %v359
    %v368 = vadd.f32 %v346, %v359
    %v369 = vadd.f32 %v347, %v359
    %v370 = vadd.f32 %v348, %v359
    %v371 = vadd.f32 %v349, %v359
    %v372 = vadd.f32 %v350, %v359
    %v373 = vadd.f32 %v351, %v359
    %v374 = vadd.f32 %v352, %v359
    %v375 = vadd.f32 %v353, %v359
    %v376 = vadd.f32 %v354, %v359
    %v377 = vpack.c.bf16 %v362, %v361
    %v378 = vpack.c.bf16 %v364, %v363
    %v379 = vpack.c.bf16 %v366, %v365
    %v380 = vpack.c.bf16 %v368, %v367
    %v381 = vpack.c.bf16 %v370, %v369
    %v382 = vpack.c.bf16 %v372, %v371
    %v383 = vpack.c.bf16 %v374, %v373
    %v384 = vpack.c.bf16 %v376, %v375
    %v385 = vld [vmem:[%s4] sm:$0xf]
    %v386 = vld [vmem:[%s4 + $0x4] sm:$0xf]
    %v387 = vld [vmem:[%s4 + $0x8] sm:$0xf]
    %v388 = vld [vmem:[%s4 + $0xc] sm:$0xf]
    %v393 = vunpack.c.l.b16 %v385
    %v394 = vunpack.c.l.b16 %v386
    %v395 = vunpack.c.l.b16 %v387
    %v396 = vunpack.c.l.b16 %v388
    %v397 = vpack.c.b16 %v394, %v393
    %v398 = vpack.c.b16 %v396, %v395
    %v402 = vsel %vm105, %v377, 0
    %v405 = vsel %vm105, %v378, 0
    %v408 = vsel %vm105, %v379, 0
    %v411 = vsel %vm105, %v380, 0
    %v414 = vsel %vm105, %v381, 0
    %v417 = vsel %vm105, %v382, 0
    %v420 = vsel %vm105, %v383, 0
    %v423 = vsel %vm105, %v384, 0
    %425 = vmatprep.subr.bf16.mxu0 0
    %426 = vmatpush1.bf16.msra.mxu0 0
    %427 = vmatprep.subr.bf16.mxu0 0
    %428 = vmatpush1.bf16.msra.mxu0 0
    %429 = vmatprep.subr.bf16.mxu0 0
    %430 = vmatpush1.bf16.msra.mxu0 0
    %431 = vmatprep.subr.bf16.mxu0 0
    %432 = vmatpush1.bf16.msra.mxu0 0
    %433 = vmatprep.subr.bf16.mxu0 0
    %434 = vmatpush1.bf16.msra.mxu0 0
    %435 = vmatprep.subr.bf16.mxu0 0
    %436 = vmatpush1.bf16.msra.mxu0 0
    %437 = vmatprep.subr.bf16.mxu0 0
    %438 = vmatpush1.bf16.msra.mxu0 %v398
    %439 = vmatprep.subr.bf16.mxu0 0
    %440 = vmatpush1.bf16.msra.mxu0 %v397
    %441 = vmatprep.subr.bf16.mxu0 0
    %442 = vmatpush2.bf16.msra.mxu0 0
    %443 = vmatprep.subr.bf16.mxu0 0
    %444 = vmatpush2.bf16.msra.mxu0 0
    %445 = vmatprep.subr.bf16.mxu0 0
    %446 = vmatpush2.bf16.msra.mxu0 0
    %447 = vmatprep.subr.bf16.mxu0 0
    %448 = vmatpush2.bf16.msra.mxu0 0
    %449 = vmatprep.subr.bf16.mxu0 0
    %450 = vmatpush2.bf16.msra.mxu0 0
    %451 = vmatprep.subr.bf16.mxu0 0
    %452 = vmatpush2.bf16.msra.mxu0 0
    %453 = vmatprep.subr.bf16.mxu0 0
    %454 = vmatpush2.bf16.msra.mxu0 0
    %455 = vmatprep.subr.bf16.mxu0 0
    %456 = vmatpush2.bf16.msra.mxu0 0
    %457 = vmatprep.mubr.bf16.mxu0 0
    %458 = vmatmul.mubr.bf16.gmra.mxu0 %v402
    %v459 = vpop.f32.mrf.mxu0
    %v460 = vadd.f32 0.0, %v459
    %v461 = vpop.f32.mrf.mxu0
    %v462 = vpop.f32.mrf.mxu0
    %v463 = vadd.f32 0.0, %v462
    %v464 = vpop.f32.mrf.mxu0
    %465 = vmatprep.mubr.bf16.mxu0 0
    %466 = vmatmul.mubr.bf16.gmra.mxu0 %v405
    %v467 = vpop.f32.mrf.mxu0
    %v468 = vadd.f32 0.0, %v467
    %v469 = vpop.f32.mrf.mxu0
    %v470 = vpop.f32.mrf.mxu0
    %v471 = vadd.f32 0.0, %v470
    %v472 = vpop.f32.mrf.mxu0
    %473 = vmatprep.mubr.bf16.mxu0 0
    %474 = vmatmul.mubr.bf16.gmra.mxu0 %v408
    %v475 = vpop.f32.mrf.mxu0
    %v476 = vadd.f32 0.0, %v475
    %v477 = vpop.f32.mrf.mxu0
    %v478 = vpop.f32.mrf.mxu0
    %v479 = vadd.f32 0.0, %v478
    %v480 = vpop.f32.mrf.mxu0
    %481 = vmatprep.mubr.bf16.mxu0 0
    %482 = vmatmul.mubr.bf16.gmra.mxu0 %v411
    %v483 = vpop.f32.mrf.mxu0
    %v484 = vadd.f32 0.0, %v483
    %v485 = vpop.f32.mrf.mxu0
    %v486 = vpop.f32.mrf.mxu0
    %v487 = vadd.f32 0.0, %v486
    %v488 = vpop.f32.mrf.mxu0
    %489 = vmatprep.mubr.bf16.mxu0 0
    %490 = vmatmul.mubr.bf16.gmra.mxu0 %v414
    %v491 = vpop.f32.mrf.mxu0
    %v492 = vadd.f32 0.0, %v491
    %v493 = vpop.f32.mrf.mxu0
    %v494 = vpop.f32.mrf.mxu0
    %v495 = vadd.f32 0.0, %v494
    %v496 = vpop.f32.mrf.mxu0
    %497 = vmatprep.mubr.bf16.mxu0 0
    %498 = vmatmul.mubr.bf16.gmra.mxu0 %v417
    %v499 = vpop.f32.mrf.mxu0
    %v500 = vadd.f32 0.0, %v499
    %v501 = vpop.f32.mrf.mxu0
    %v502 = vpop.f32.mrf.mxu0
    %v503 = vadd.f32 0.0, %v502
    %v504 = vpop.f32.mrf.mxu0
    %505 = vmatprep.mubr.bf16.mxu0 0
    %506 = vmatmul.mubr.bf16.gmra.mxu0 %v420
    %v507 = vpop.f32.mrf.mxu0
    %v508 = vadd.f32 0.0, %v507
    %v509 = vpop.f32.mrf.mxu0
    %v510 = vpop.f32.mrf.mxu0
    %v511 = vadd.f32 0.0, %v510
    %v512 = vpop.f32.mrf.mxu0
    %513 = vmatprep.mubr.bf16.mxu0 0
    %514 = vmatmul.mubr.bf16.gmra.mxu0 %v423
    %v515 = vpop.f32.mrf.mxu0
    %v516 = vadd.f32 0.0, %v515
    %v517 = vpop.f32.mrf.mxu0
    %v518 = vpop.f32.mrf.mxu0
    %v519 = vadd.f32 0.0, %v518
    %v520 = vpop.f32.mrf.mxu0
    %521 = vdwg.mxu0
    %vm522 = vcmask 523264
    %523 = vst.msk [vmem:[%s7] sm:$0xff] %vm522, %v460
    %524 = vst.msk [vmem:[%s7 + $0x8] sm:$0xff] %vm522, %v463
    %525 = vst.msk [vmem:[%s7 + $0x10] sm:$0xff] %vm522, %v468
    %526 = vst.msk [vmem:[%s7 + $0x18] sm:$0xff] %vm522, %v471
    %527 = vst.msk [vmem:[%s7 + $0x20] sm:$0xff] %vm522, %v476
    %528 = vst.msk [vmem:[%s7 + $0x28] sm:$0xff] %vm522, %v479
    %529 = vst.msk [vmem:[%s7 + $0x30] sm:$0xff] %vm522, %v484
    %530 = vst.msk [vmem:[%s7 + $0x38] sm:$0xff] %vm522, %v487
    %531 = vst.msk [vmem:[%s7 + $0x40] sm:$0xff] %vm522, %v492
    %532 = vst.msk [vmem:[%s7 + $0x48] sm:$0xff] %vm522, %v495
    %533 = vst.msk [vmem:[%s7 + $0x50] sm:$0xff] %vm522, %v500
    %534 = vst.msk [vmem:[%s7 + $0x58] sm:$0xff] %vm522, %v503
    %535 = vst.msk [vmem:[%s7 + $0x60] sm:$0xff] %vm522, %v508
    %536 = vst.msk [vmem:[%s7 + $0x68] sm:$0xff] %vm522, %v511
    %537 = vst.msk [vmem:[%s7 + $0x70] sm:$0xff] %vm522, %v516
    %538 = vst.msk [vmem:[%s7 + $0x78] sm:$0xff] %vm522, %v519
    %v539 = vld [vmem:[%s5] sm:$0xf]
    %v540 = vld [vmem:[%s5 + $0x4] sm:$0xf]
    %v541 = vld [vmem:[%s5 + $0x8] sm:$0xf]
    %v542 = vld [vmem:[%s5 + $0xc] sm:$0xf]
    %v547 = vunpack.c.l.b16 %v539
    %v548 = vunpack.c.l.b16 %v540
    %v549 = vunpack.c.l.b16 %v541
    %v550 = vunpack.c.l.b16 %v542
    %v551 = vpack.c.b16 %v548, %v547
    %v552 = vpack.c.b16 %v550, %v549
    %555 = vmatprep.subr.bf16.mxu0 0
    %556 = vmatpush1.bf16.msra.mxu0 0
    %557 = vmatprep.subr.bf16.mxu0 0
    %558 = vmatpush1.bf16.msra.mxu0 0
    %559 = vmatprep.subr.bf16.mxu0 0
    %560 = vmatpush1.bf16.msra.mxu0 0
    %561 = vmatprep.subr.bf16.mxu0 0
    %562 = vmatpush1.bf16.msra.mxu0 0
    %563 = vmatprep.subr.bf16.mxu0 0
    %564 = vmatpush1.bf16.msra.mxu0 0
    %565 = vmatprep.subr.bf16.mxu0 0
    %566 = vmatpush1.bf16.msra.mxu0 0
    %567 = vmatprep.subr.bf16.mxu0 0
    %568 = vmatpush1.bf16.msra.mxu0 %v552
    %569 = vmatprep.subr.bf16.mxu0 0
    %570 = vmatpush1.bf16.msra.mxu0 %v551
    %571 = vmatprep.subr.bf16.mxu0 0
    %572 = vmatpush2.bf16.msra.mxu0 0
    %573 = vmatprep.subr.bf16.mxu0 0
    %574 = vmatpush2.bf16.msra.mxu0 0
    %575 = vmatprep.subr.bf16.mxu0 0
    %576 = vmatpush2.bf16.msra.mxu0 0
    %577 = vmatprep.subr.bf16.mxu0 0
    %578 = vmatpush2.bf16.msra.mxu0 0
    %579 = vmatprep.subr.bf16.mxu0 0
    %580 = vmatpush2.bf16.msra.mxu0 0
    %581 = vmatprep.subr.bf16.mxu0 0
    %582 = vmatpush2.bf16.msra.mxu0 0
    %583 = vmatprep.subr.bf16.mxu0 0
    %584 = vmatpush2.bf16.msra.mxu0 0
    %585 = vmatprep.subr.bf16.mxu0 0
    %586 = vmatpush2.bf16.msra.mxu0 0
    %587 = vmatprep.mubr.bf16.mxu0 0
    %588 = vmatmul.mubr.bf16.gmra.mxu0 %v402
    %v589 = vpop.f32.mrf.mxu0
    %v590 = vadd.f32 0.0, %v589
    %v591 = vpop.f32.mrf.mxu0
    %v592 = vpop.f32.mrf.mxu0
    %v593 = vadd.f32 0.0, %v592
    %v594 = vpop.f32.mrf.mxu0
    %595 = vmatprep.mubr.bf16.mxu0 0
    %596 = vmatmul.mubr.bf16.gmra.mxu0 %v405
    %v597 = vpop.f32.mrf.mxu0
    %v598 = vadd.f32 0.0, %v597
    %v599 = vpop.f32.mrf.mxu0
    %v600 = vpop.f32.mrf.mxu0
    %v601 = vadd.f32 0.0, %v600
    %v602 = vpop.f32.mrf.mxu0
    %603 = vmatprep.mubr.bf16.mxu0 0
    %604 = vmatmul.mubr.bf16.gmra.mxu0 %v408
    %v605 = vpop.f32.mrf.mxu0
    %v606 = vadd.f32 0.0, %v605
    %v607 = vpop.f32.mrf.mxu0
    %v608 = vpop.f32.mrf.mxu0
    %v609 = vadd.f32 0.0, %v608
    %v610 = vpop.f32.mrf.mxu0
    %611 = vmatprep.mubr.bf16.mxu0 0
    %612 = vmatmul.mubr.bf16.gmra.mxu0 %v411
    %v613 = vpop.f32.mrf.mxu0
    %v614 = vadd.f32 0.0, %v613
    %v615 = vpop.f32.mrf.mxu0
    %v616 = vpop.f32.mrf.mxu0
    %v617 = vadd.f32 0.0, %v616
    %v618 = vpop.f32.mrf.mxu0
    %619 = vmatprep.mubr.bf16.mxu0 0
    %620 = vmatmul.mubr.bf16.gmra.mxu0 %v414
    %v621 = vpop.f32.mrf.mxu0
    %v622 = vadd.f32 0.0, %v621
    %v623 = vpop.f32.mrf.mxu0
    %v624 = vpop.f32.mrf.mxu0
    %v625 = vadd.f32 0.0, %v624
    %v626 = vpop.f32.mrf.mxu0
    %627 = vmatprep.mubr.bf16.mxu0 0
    %628 = vmatmul.mubr.bf16.gmra.mxu0 %v417
    %v629 = vpop.f32.mrf.mxu0
    %v630 = vadd.f32 0.0, %v629
    %v631 = vpop.f32.mrf.mxu0
    %v632 = vpop.f32.mrf.mxu0
    %v633 = vadd.f32 0.0, %v632
    %v634 = vpop.f32.mrf.mxu0
    %635 = vmatprep.mubr.bf16.mxu0 0
    %636 = vmatmul.mubr.bf16.gmra.mxu0 %v420
    %v637 = vpop.f32.mrf.mxu0
    %v638 = vadd.f32 0.0, %v637
    %v639 = vpop.f32.mrf.mxu0
    %v640 = vpop.f32.mrf.mxu0
    %v641 = vadd.f32 0.0, %v640
    %v642 = vpop.f32.mrf.mxu0
    %643 = vmatprep.mubr.bf16.mxu0 0
    %644 = vmatmul.mubr.bf16.gmra.mxu0 %v423
    %v645 = vpop.f32.mrf.mxu0
    %v646 = vadd.f32 0.0, %v645
    %v647 = vpop.f32.mrf.mxu0
    %v648 = vpop.f32.mrf.mxu0
    %v649 = vadd.f32 0.0, %v648
    %v650 = vpop.f32.mrf.mxu0
    %651 = vdwg.mxu0
    %652 = vst.msk [vmem:[%s8] sm:$0xff] %vm522, %v590
    %653 = vst.msk [vmem:[%s8 + $0x8] sm:$0xff] %vm522, %v593
    %654 = vst.msk [vmem:[%s8 + $0x10] sm:$0xff] %vm522, %v598
    %655 = vst.msk [vmem:[%s8 + $0x18] sm:$0xff] %vm522, %v601
    %656 = vst.msk [vmem:[%s8 + $0x20] sm:$0xff] %vm522, %v606
    %657 = vst.msk [vmem:[%s8 + $0x28] sm:$0xff] %vm522, %v609
    %658 = vst.msk [vmem:[%s8 + $0x30] sm:$0xff] %vm522, %v614
    %659 = vst.msk [vmem:[%s8 + $0x38] sm:$0xff] %vm522, %v617
    %660 = vst.msk [vmem:[%s8 + $0x40] sm:$0xff] %vm522, %v622
    %661 = vst.msk [vmem:[%s8 + $0x48] sm:$0xff] %vm522, %v625
    %662 = vst.msk [vmem:[%s8 + $0x50] sm:$0xff] %vm522, %v630
    %663 = vst.msk [vmem:[%s8 + $0x58] sm:$0xff] %vm522, %v633
    %664 = vst.msk [vmem:[%s8 + $0x60] sm:$0xff] %vm522, %v638
    %665 = vst.msk [vmem:[%s8 + $0x68] sm:$0xff] %vm522, %v641
    %666 = vst.msk [vmem:[%s8 + $0x70] sm:$0xff] %vm522, %v646
    %667 = vst.msk [vmem:[%s8 + $0x78] sm:$0xff] %vm522, %v649
    // Predicated region
    $region30: #{temporal_spectrum_block.6} parent=1 // pred_check
      _
    $region31: #{temporal_spectrum_block.6} parent=1 // pred_check_branch
      %669 = sbr.rel (0) target = $region33
    $region32: #{temporal_spectrum_block.6} parent=1 // pred_region
      _
    $region33: #{temporal_spectrum_block.6} parent=1 // pred_fallthru
      _
    // Predicated region
    $region34: #{temporal_spectrum_block.6} parent=1 // pred_check
      _
    $region35: #{temporal_spectrum_block.6} parent=1 // pred_check_branch
      %671 = sbr.rel (0) target = $region37
    $region36: #{temporal_spectrum_block.6} parent=1 // pred_region
      _
    $region37: #{temporal_spectrum_block.6} parent=1 // pred_fallthru
      _
    // Predicated region
    $region38: #{temporal_spectrum_block.6} parent=1 // pred_check
      _
    $region39: #{temporal_spectrum_block.6} parent=1 // pred_check_branch
      %673 = sbr.rel (0) target = $region41
    $region40: #{temporal_spectrum_block.6} parent=1 // pred_region
      _
    $region41: #{temporal_spectrum_block.6} parent=1 // pred_fallthru
      _
    // Predicated region
    $region42: #{temporal_spectrum_block.6} parent=1 // pred_check
      _
    $region43: #{temporal_spectrum_block.6} parent=1 // pred_check_branch
      %675 = sbr.rel (0) target = $region45
    $region44: #{temporal_spectrum_block.6} parent=1 // pred_region
      _
    $region45: #{temporal_spectrum_block.6} parent=1 // pred_fallthru
      _
    // Predicated region
    $region46: #{temporal_spectrum_block.6} parent=1 // pred_check
      _
    $region47: #{temporal_spectrum_block.6} parent=1 // pred_check_branch
      %677 = sbr.rel (0) target = $region49
    $region48: #{temporal_spectrum_block.6} parent=1 // pred_region
      _
    $region49: #{temporal_spectrum_block.6} parent=1 // pred_fallthru
      _
    // Predicated region
    $region50: #{temporal_spectrum_block.6} parent=1 // pred_check
      _
    $region51: #{temporal_spectrum_block.6} parent=1 // pred_check_branch
      %679 = sbr.rel (0) target = $region53
    $region52: #{temporal_spectrum_block.6} parent=1 // pred_region
      _
    $region53: #{temporal_spectrum_block.6} parent=1 // pred_fallthru
      _
    %680 = vsyncpa [#allocation3], 1

// kernel: temporal_spectrum_block.8
$region0: #{temporal_spectrum_block.8}
  #allocation0 [shape = 'u32[]', space=smem, size = 0x4, offset = 0x4, fixed_abs, tag = 'smem constant byte address 0x4 - core index']
  #allocation1 [shape = 'u32[144,128]{1,0:T(1,128)}', space=vmem, size = 0x12000, scoped, tag = 'internal scratch']
  %s0 = inlined_call_operand.vmem [shape: f32[2,128,64], index: 0, kind: input, shape index: {}]
  %s1 = inlined_call_operand.vmem [shape: bf16[4,64,34], index: 1, kind: input, shape index: {}]
  %s2 = inlined_call_operand.vmem [shape: bf16[4,2,64], index: 2, kind: input, shape index: {}]
  %s3 = inlined_call_operand.vmem [shape: f32[4,1,64], index: 3, kind: input, shape index: {}]
  %s4 = inlined_call_operand.vmem [shape: f32[4,128,64], index: 4, kind: output, shape index: {0}]
  %s5 = inlined_call_operand.vmem [shape: f32[4,128,16], index: 5, kind: output, shape index: {1}]
  %s6 = inlined_call_operand.vmem [shape: f32[4,128,16], index: 6, kind: output, shape index: {2}]
  %7 = xla_tuple %s4, %s5, %s6
  %s8 = sld [smem:[#allocation0]]
  $region65: #{temporal_spectrum_block.8} parent=0
    _
  %s10 = ssub.s32 1, %s8
  %s11 = scalar_select 0, %s10, %s8
  loop: start=0, step=1, limit=6
  $region2: #{temporal_spectrum_block.8} parent=0 // loop_pre_header
    _
  $region3: #{temporal_spectrum_block.8} parent=0 // loop_header
    %s13 = sphi 0, %s17
    %p14 = scmp.ge.s32.totalorder %s13, 6
    %s20 = sphi 0, %s32
    %s21 = sphi 0, %s28
    %s22 = sphi 0, %s20
    %s23 = sphi 0, %s21
    %s24 = sphi 0, %s22
    %s25 = sphi 0, %s23
    %s61 = sphi 0, %s63
    %s64 = sphi 0, %s61
    %s65 = sphi 0, %s64
    %s81 = sphi 0, %s65
    %s87 = sphi 0, %s89
    %s90 = sphi 0, %s87
    %s91 = sphi 0, %s90
    %s107 = sphi 0, %s91
    %s113 = sphi 0, %s115
    %s116 = sphi 0, %s113
    %s117 = sphi 0, %s116
    %s133 = sphi 0, %s117
    %s139 = sphi 0, %s141
    %s142 = sphi 0, %s139
    %s143 = sphi 0, %s142
    %s159 = sphi 0, %s143
    %s167 = sphi 0, %s169
    %s170 = sphi 0, %s167
    %s171 = sphi 0, %s170
    %s187 = sphi 0, %s171
    %s195 = sphi 0, %s197
    %s198 = sphi 0, %s195
    %s199 = sphi 0, %s198
    %s215 = sphi 0, %s199
    %s223 = sphi 0, %s225
    %s226 = sphi 0, %s223
    %s227 = sphi 0, %s226
    %s243 = sphi 0, %s227
  $region4: #{temporal_spectrum_block.8} parent=0 // loop_header_branch
    %16 = sbr.rel (%p14) target = $region8
  $region5: #{temporal_spectrum_block.8} parent=0 // loop_body
    %s18 = ssub.s32 %s13, 1
    %s19 = ssub.s32 %s13, 2
    %s26 = sadd.s32 1, %s21
    %p27 = scmp.ge.s32.totalorder %s26, 1
    %s28 = scalar_select %p27, 0, %s26
    %s29 = sadd.s32 1, %s20
    %s30 = scalar_select %p27, %s29, %s20
    %p31 = scmp.ge.s32.totalorder %s30, 4
    %s32 = scalar_select %p31, 0, %s30
    %p33 = scmp.lt.s32.totalorder %s20, 0
    %s34 = ssub.s32 0, %s20
    %s35 = scalar_select %p33, %s34, %s20
    %s36 = sand.u32 %s35, 1
    %s37 = ssub.s32 0, %s36
    %s38 = scalar_select %p33, %s37, %s36
    %p39 = scmp.ne.s32.totalorder %s38, 0
    %p40 = scmp.lt.s32.totalorder %s38, 0
    %p41 = pnand %p40, %p39
    %p42 = pneg %p41
    %s43 = sadd.s32 %s38, 2
    %s44 = scalar_select %p42, %s43, %s38
    %p45 = scmp.lt.s32.totalorder %s32, 0
    %s46 = ssub.s32 0, %s32
    %s47 = scalar_select %p45, %s46, %s32
    %s48 = sand.u32 %s47, 1
    %s49 = ssub.s32 0, %s48
    %s50 = scalar_select %p45, %s49, %s48
    %p51 = scmp.ne.s32.totalorder %s50, 0
    %p52 = scmp.lt.s32.totalorder %s50, 0
    %p53 = pnand %p52, %p51
    %p54 = pneg %p53
    %s55 = sadd.s32 %s50, 2
    %s56 = scalar_select %p54, %s55, %s50
    %s57 = ssub.s32 %s44, %s56
    %s58 = ssub.s32 %s21, %s28
    %s59 = sor.u32 %s57, %s58
    %p60 = scmp.eq.s32.totalorder %s59, 0
    %s62 = sadd.s32 %s61, 1
    %s63 = scalar_select %p60, %s61, %s62
    %p66 = pneg %p60
    %p67 = scmp.eq.s32.totalorder %s13, 3
    %p68 = por %p66, %p67
    %p69 = scmp.ne.s32.totalorder %s61, %s64
    %p70 = scmp.eq.s32.totalorder %s13, 0
    %p71 = por %p69, %p70
    %p72 = scmp.ne.s32.totalorder %s61, %s64
    %p73 = scmp.eq.s32.totalorder %s18, 3
    %p74 = por %p72, %p73
    %p75 = scmp.ne.s32.totalorder %s64, %s65
    %p76 = scmp.eq.s32.totalorder %s18, 0
    %p77 = por %p75, %p76
    %p78 = scmp.ne.s32.totalorder %s64, %s65
    %p79 = scmp.eq.s32.totalorder %s19, 3
    %p80 = por %p78, %p79
    %p82 = scmp.ne.s32.totalorder %s65, %s81
    %p83 = scmp.eq.s32.totalorder %s19, 0
    %p84 = por %p82, %p83
    %s85 = ssub.s32 %s20, %s32
    %p86 = scmp.eq.s32.totalorder %s85, 0
    %s88 = sadd.s32 %s87, 1
    %s89 = scalar_select %p86, %s87, %s88
    %p92 = pneg %p86
    %p93 = scmp.eq.s32.totalorder %s13, 3
    %p94 = por %p92, %p93
    %p95 = scmp.ne.s32.totalorder %s87, %s90
    %p96 = scmp.eq.s32.totalorder %s13, 0
    %p97 = por %p95, %p96
    %p98 = scmp.ne.s32.totalorder %s87, %s90
    %p99 = scmp.eq.s32.totalorder %s18, 3
    %p100 = por %p98, %p99
    %p101 = scmp.ne.s32.totalorder %s90, %s91
    %p102 = scmp.eq.s32.totalorder %s18, 0
    %p103 = por %p101, %p102
    %p104 = scmp.ne.s32.totalorder %s90, %s91
    %p105 = scmp.eq.s32.totalorder %s19, 3
    %p106 = por %p104, %p105
    %p108 = scmp.ne.s32.totalorder %s91, %s107
    %p109 = scmp.eq.s32.totalorder %s19, 0
    %p110 = por %p108, %p109
    %s111 = ssub.s32 %s20, %s32
    %p112 = scmp.eq.s32.totalorder %s111, 0
    %s114 = sadd.s32 %s113, 1
    %s115 = scalar_select %p112, %s113, %s114
    %p118 = pneg %p112
    %p119 = scmp.eq.s32.totalorder %s13, 3
    %p120 = por %p118, %p119
    %p121 = scmp.ne.s32.totalorder %s113, %s116
    %p122 = scmp.eq.s32.totalorder %s13, 0
    %p123 = por %p121, %p122
    %p124 = scmp.ne.s32.totalorder %s113, %s116
    %p125 = scmp.eq.s32.totalorder %s18, 3
    %p126 = por %p124, %p125
    %p127 = scmp.ne.s32.totalorder %s116, %s117
    %p128 = scmp.eq.s32.totalorder %s18, 0
    %p129 = por %p127, %p128
    %p130 = scmp.ne.s32.totalorder %s116, %s117
    %p131 = scmp.eq.s32.totalorder %s19, 3
    %p132 = por %p130, %p131
    %p134 = scmp.ne.s32.totalorder %s117, %s133
    %p135 = scmp.eq.s32.totalorder %s19, 0
    %p136 = por %p134, %p135
    %s137 = ssub.s32 %s20, %s32
    %p138 = scmp.eq.s32.totalorder %s137, 0
    %s140 = sadd.s32 %s139, 1
    %s141 = scalar_select %p138, %s139, %s140
    %p144 = pneg %p138
    %p145 = scmp.eq.s32.totalorder %s13, 3
    %p146 = por %p144, %p145
    %p147 = scmp.ne.s32.totalorder %s139, %s142
    %p148 = scmp.eq.s32.totalorder %s13, 0
    %p149 = por %p147, %p148
    %p150 = scmp.ne.s32.totalorder %s139, %s142
    %p151 = scmp.eq.s32.totalorder %s18, 3
    %p152 = por %p150, %p151
    %p153 = scmp.ne.s32.totalorder %s142, %s143
    %p154 = scmp.eq.s32.totalorder %s18, 0
    %p155 = por %p153, %p154
    %p156 = scmp.ne.s32.totalorder %s142, %s143
    %p157 = scmp.eq.s32.totalorder %s19, 3
    %p158 = por %p156, %p157
    %p160 = scmp.ne.s32.totalorder %s143, %s159
    %p161 = scmp.eq.s32.totalorder %s19, 0
    %p162 = por %p160, %p161
    %s163 = ssub.s32 %s20, %s32
    %s164 = ssub.s32 %s21, %s28
    %s165 = sor.u32 %s163, %s164
    %p166 = scmp.eq.s32.totalorder %s165, 0
    %s168 = sadd.s32 %s167, 1
    %s169 = scalar_select %p166, %s167, %s168
    %p172 = pneg %p166
    %p173 = scmp.eq.s32.totalorder %s13, 3
    %p174 = por %p172, %p173
    %p175 = scmp.ne.s32.totalorder %s167, %s170
    %p176 = scmp.eq.s32.totalorder %s13, 0
    %p177 = por %p175, %p176
    %p178 = scmp.ne.s32.totalorder %s167, %s170
    %p179 = scmp.eq.s32.totalorder %s18, 3
    %p180 = por %p178, %p179
    %p181 = scmp.ne.s32.totalorder %s170, %s171
    %p182 = scmp.eq.s32.totalorder %s18, 0
    %p183 = por %p181, %p182
    %p184 = scmp.ne.s32.totalorder %s170, %s171
    %p185 = scmp.eq.s32.totalorder %s19, 3
    %p186 = por %p184, %p185
    %p188 = scmp.ne.s32.totalorder %s171, %s187
    %p189 = scmp.eq.s32.totalorder %s19, 0
    %p190 = por %p188, %p189
    %s191 = ssub.s32 %s20, %s32
    %s192 = ssub.s32 %s21, %s28
    %s193 = sor.u32 %s191, %s192
    %p194 = scmp.eq.s32.totalorder %s193, 0
    %s196 = sadd.s32 %s195, 1
    %s197 = scalar_select %p194, %s195, %s196
    %p200 = pneg %p194
    %p201 = scmp.eq.s32.totalorder %s13, 3
    %p202 = por %p200, %p201
    %p203 = scmp.ne.s32.totalorder %s195, %s198
    %p204 = scmp.eq.s32.totalorder %s13, 0
    %p205 = por %p203, %p204
    %p206 = scmp.ne.s32.totalorder %s195, %s198
    %p207 = scmp.eq.s32.totalorder %s18, 3
    %p208 = por %p206, %p207
    %p209 = scmp.ne.s32.totalorder %s198, %s199
    %p210 = scmp.eq.s32.totalorder %s18, 0
    %p211 = por %p209, %p210
    %p212 = scmp.ne.s32.totalorder %s198, %s199
    %p213 = scmp.eq.s32.totalorder %s19, 3
    %p214 = por %p212, %p213
    %p216 = scmp.ne.s32.totalorder %s199, %s215
    %p217 = scmp.eq.s32.totalorder %s19, 0
    %p218 = por %p216, %p217
    %s219 = ssub.s32 %s20, %s32
    %s220 = ssub.s32 %s21, %s28
    %s221 = sor.u32 %s219, %s220
    %p222 = scmp.eq.s32.totalorder %s221, 0
    %s224 = sadd.s32 %s223, 1
    %s225 = scalar_select %p222, %s223, %s224
    %p228 = pneg %p222
    %p229 = scmp.eq.s32.totalorder %s13, 3
    %p230 = por %p228, %p229
    %p231 = scmp.ne.s32.totalorder %s223, %s226
    %p232 = scmp.eq.s32.totalorder %s13, 0
    %p233 = por %p231, %p232
    %p234 = scmp.ne.s32.totalorder %s223, %s226
    %p235 = scmp.eq.s32.totalorder %s18, 3
    %p236 = por %p234, %p235
    %p237 = scmp.ne.s32.totalorder %s226, %s227
    %p238 = scmp.eq.s32.totalorder %s18, 0
    %p239 = por %p237, %p238
    %p240 = scmp.ne.s32.totalorder %s226, %s227
    %p241 = scmp.eq.s32.totalorder %s19, 3
    %p242 = por %p240, %p241
    %p244 = scmp.ne.s32.totalorder %s227, %s243
    %p245 = scmp.eq.s32.totalorder %s19, 0
    %p246 = por %p244, %p245
    %p247 = scmp.le.s32.totalorder 1, %s13
    %p248 = scmp.lt.s32.totalorder %s13, 5
    %p249 = pnand %p247, %p248
    %p250 = pneg %p249
    // Predicated region
    $region9: #{temporal_spectrum_block.8} parent=5 // pred_check
      _
    $region10: #{temporal_spectrum_block.8} parent=5 // pred_check_branch
      %252 = sbr.rel (%p249) target = $region12
    $region11: #{temporal_spectrum_block.8} parent=5 // pred_region
      %s253 = ssub.s32 %s13, 1
    $region12: #{temporal_spectrum_block.8} parent=5 // pred_fallthru
      _
    %p254 = scmp.lt.s32.totalorder %s13, 4
    // Predicated region
    $region13: #{temporal_spectrum_block.8} parent=5 // pred_check
      %p255 = pneg %p254
    $region14: #{temporal_spectrum_block.8} parent=5 // pred_check_branch
      %257 = sbr.rel (%p255) target = $region16
    $region15: #{temporal_spectrum_block.8} parent=5 // pred_region
      // Predicated region
      $region17: #{temporal_spectrum_block.8} parent=15 // pred_check
        %p258 = pneg %p71
      $region18: #{temporal_spectrum_block.8} parent=15 // pred_check_branch
        %260 = sbr.rel (%p258) target = $region20
      $region19: #{temporal_spectrum_block.8} parent=15 // pred_region
        %p261 = scmp.lt.s32.totalorder %s20, 0
        %s262 = ssub.s32 0, %s20
        %s263 = scalar_select %p261, %s262, %s20
        %s264 = sand.u32 %s263, 1
        %s265 = ssub.s32 0, %s264
        %s266 = scalar_select %p261, %s265, %s264
        %p267 = scmp.ne.s32.totalorder %s266, 0
        %p268 = scmp.lt.s32.totalorder %s266, 0
        %p269 = pnand %p268, %p267
        %p270 = pneg %p269
        %s271 = sadd.s32 %s266, 2
        %s272 = scalar_select %p270, %s271, %s266
        %s273 = smul.u32 16, %s21
        %p274 = scmp.lt.s32.totalorder %s272, 1
        %s275 = scalar_select %p274, %s272, 1
        %p276 = scmp.lt.s32.totalorder %s273, 15
        %s277 = scalar_select %p276, %s273, 15
        %s278 = smul.addr %s275, 16
        %s279 = sadd.s32 %s277, %s278
        %s280 = smul.addr %s279, 8
        %s281 = scalar_lea.vmem %s0, %s280
        %p282 = scmp.lt.s32.totalorder %s20, 0
        %s283 = ssub.s32 0, %s20
        %s284 = scalar_select %p282, %s283, %s20
        %s285 = sand.u32 %s284, 1
        %s286 = ssub.s32 0, %s285
        %s287 = scalar_select %p282, %s286, %s285
        %p288 = scmp.ne.s32.totalorder %s287, 0
        %p289 = scmp.lt.s32.totalorder %s287, 0
        %p290 = pnand %p289, %p288
        %p291 = pneg %p290
        %s292 = sadd.s32 %s287, 2
        %s293 = scalar_select %p291, %s292, %s287
        %s294 = smul.u32 16, %s21
      $region20: #{temporal_spectrum_block.8} parent=15 // pred_fallthru
        _
      // Predicated region
      $region21: #{temporal_spectrum_block.8} parent=15 // pred_check
        %p295 = pneg %p97
      $region22: #{temporal_spectrum_block.8} parent=15 // pred_check_branch
        %297 = sbr.rel (%p295) target = $region24
      $region23: #{temporal_spectrum_block.8} parent=15 // pred_region
        %p298 = scmp.lt.s32.totalorder %s20, 3
        %s299 = scalar_select %p298, %s20, 3
        %s300 = smul.addr %s299, 8
        %s301 = smul.addr %s300, 4
        %s302 = scalar_lea.vmem %s1, %s301
      $region24: #{temporal_spectrum_block.8} parent=15 // pred_fallthru
        _
      // Predicated region
      $region25: #{temporal_spectrum_block.8} parent=15 // pred_check
        %p303 = pneg %p123
      $region26: #{temporal_spectrum_block.8} parent=15 // pred_check_branch
        %305 = sbr.rel (%p303) target = $region28
      $region27: #{temporal_spectrum_block.8} parent=15 // pred_region
        %p306 = scmp.lt.s32.totalorder %s20, 3
        %s307 = scalar_select %p306, %s20, 3
        %s308 = scalar_lea.vmem %s2, %s307
      $region28: #{temporal_spectrum_block.8} parent=15 // pred_fallthru
        _
      // Predicated region
      $region29: #{temporal_spectrum_block.8} parent=15 // pred_check
        %p309 = pneg %p149
      $region30: #{temporal_spectrum_block.8} parent=15 // pred_check_branch
        %311 = sbr.rel (%p309) target = $region32
      $region31: #{temporal_spectrum_block.8} parent=15 // pred_region
        %p312 = scmp.lt.s32.totalorder %s20, 3
        %s313 = scalar_select %p312, %s20, 3
        %s314 = scalar_lea.vmem %s3, %s313
      $region32: #{temporal_spectrum_block.8} parent=15 // pred_fallthru
        _
    $region16: #{temporal_spectrum_block.8} parent=5 // pred_fallthru
      _
    %p315 = scmp.le.s32.totalorder 1, %s13
    %p316 = scmp.lt.s32.totalorder %s13, 5
    %p317 = pnand %p315, %p316
    %p318 = pneg %p317
    // Predicated region
    $region33: #{temporal_spectrum_block.8} parent=5 // pred_check
      _
    $region34: #{temporal_spectrum_block.8} parent=5 // pred_check_branch
      %320 = sbr.rel (%p317) target = $region36
    $region35: #{temporal_spectrum_block.8} parent=5 // pred_region
      %s321 = ssub.s32 %s13, 1
      %p322 = scmp.lt.s32.totalorder %s22, 0
      %s323 = ssub.s32 0, %s22
      %s324 = scalar_select %p322, %s323, %s22
      %s325 = sand.u32 %s324, 1
      %s326 = ssub.s32 0, %s325
      %s327 = scalar_select %p322, %s326, %s325
      %p328 = scmp.ne.s32.totalorder %s327, 0
      %p329 = scmp.lt.s32.totalorder %s327, 0
      %p330 = pnand %p329, %p328
      %p331 = pneg %p330
      %s332 = sadd.s32 %s327, 2
      %s333 = scalar_select %p331, %s332, %s327
      %s334 = smul.u32 16, %s23
      %p335 = scmp.lt.s32.totalorder %s333, 1
      %s336 = scalar_select %p335, %s333, 1
      %p337 = scmp.lt.s32.totalorder %s334, 15
      %s338 = scalar_select %p337, %s334, 15
      %s339 = smul.addr %s336, 16
      %s340 = sadd.s32 %s338, %s339
      %s341 = smul.addr %s340, 8
      %s342 = scalar_lea.vmem %s0, %s341
      %p343 = pneg %p77
      %p344 = pneg %p74
      %p345 = scmp.lt.s32.totalorder %s22, 3
      %s346 = scalar_select %p345, %s22, 3
      %s347 = smul.addr %s346, 8
      %s348 = smul.addr %s347, 4
      %s349 = scalar_lea.vmem %s1, %s348
      %p350 = pneg %p103
      %p351 = pneg %p100
      %p352 = scmp.lt.s32.totalorder %s22, 3
      %s353 = scalar_select %p352, %s22, 3
      %s354 = scalar_lea.vmem %s2, %s353
      %p355 = pneg %p129
      %p356 = pneg %p126
      %p357 = scmp.lt.s32.totalorder %s22, 3
      %s358 = scalar_select %p357, %s22, 3
      %s359 = scalar_lea.vmem %s3, %s358
      %p360 = pneg %p155
      %p361 = pneg %p152
      %p362 = pneg %p183
      %p363 = pneg %p180
      %s364 = smul.u32 16, %s23
      %p365 = scmp.lt.s32.totalorder %s22, 3
      %s366 = scalar_select %p365, %s22, 3
      %p367 = scmp.lt.s32.totalorder %s364, 15
      %s368 = scalar_select %p367, %s364, 15
      %s369 = smul.addr %s366, 16
      %s370 = sadd.s32 %s368, %s369
      %s371 = smul.addr %s370, 8
      %s372 = scalar_lea.vmem %s4, %s371
      %p373 = pneg %p211
      %p374 = pneg %p208
      %s375 = smul.u32 16, %s23
      %p376 = scmp.lt.s32.totalorder %s22, 3
      %s377 = scalar_select %p376, %s22, 3
      %p378 = scmp.lt.s32.totalorder %s375, 15
      %s379 = scalar_select %p378, %s375, 15
      %s380 = smul.addr %s377, 16
      %s381 = sadd.s32 %s379, %s380
      %s382 = smul.addr %s381, 8
      %s383 = scalar_lea.vmem %s5, %s382
      %p384 = pneg %p239
      %p385 = pneg %p236
      %s386 = smul.u32 16, %s23
      %p387 = scmp.lt.s32.totalorder %s22, 3
      %s388 = scalar_select %p387, %s22, 3
      %p389 = scmp.lt.s32.totalorder %s386, 15
      %s390 = scalar_select %p389, %s386, 15
      %s391 = smul.addr %s388, 16
      %s392 = sadd.s32 %s390, %s391
      %s393 = smul.addr %s392, 8
      %s394 = scalar_lea.vmem %s6, %s393
      %p395 = scmp.lt.s32.totalorder %s22, 0
      %s396 = ssub.s32 0, %s22
      %s397 = scalar_select %p395, %s396, %s22
      %s398 = sand.u32 %s397, 1
      %s399 = ssub.s32 0, %s398
      %s400 = scalar_select %p395, %s399, %s398
      %p401 = scmp.ne.s32.totalorder %s400, 0
      %p402 = scmp.lt.s32.totalorder %s400, 0
      %p403 = pnand %p402, %p401
      %p404 = pneg %p403
      %s405 = sadd.s32 %s400, 2
      %s406 = scalar_select %p404, %s405, %s400
      %s407 = smul.u32 16, %s23
      %p408 = scmp.lt.s32.totalorder %s406, 1
      %s409 = scalar_select %p408, %s406, 1
      %p410 = scmp.lt.s32.totalorder %s407, 15
      %s411 = scalar_select %p410, %s407, 15
      %s412 = smul.addr %s409, 16
      %s413 = sadd.s32 %s411, %s412
      %s414 = smul.addr %s413, 8
      %s415 = scalar_lea.vmem %s0, %s414
      %p416 = scmp.lt.s32.totalorder %s22, 0
      %s417 = ssub.s32 0, %s22
      %s418 = scalar_select %p416, %s417, %s22
      %s419 = sand.u32 %s418, 1
      %s420 = ssub.s32 0, %s419
      %s421 = scalar_select %p416, %s420, %s419
      %p422 = scmp.ne.s32.totalorder %s421, 0
      %p423 = scmp.lt.s32.totalorder %s421, 0
      %p424 = pnand %p423, %p422
      %p425 = pneg %p424
      %s426 = sadd.s32 %s421, 2
      %s427 = scalar_select %p425, %s426, %s421
      %s428 = smul.u32 16, %s23
      %p429 = scmp.lt.s32.totalorder %s22, 3
      %s430 = scalar_select %p429, %s22, 3
      %s431 = smul.addr %s430, 8
      %s432 = smul.addr %s431, 4
      %s433 = scalar_lea.vmem %s1, %s432
      %p434 = scmp.lt.s32.totalorder %s22, 3
      %s435 = scalar_select %p434, %s22, 3
      %s436 = scalar_lea.vmem %s2, %s435
      %p437 = scmp.lt.s32.totalorder %s22, 3
      %s438 = scalar_select %p437, %s22, 3
      %s439 = scalar_lea.vmem %s3, %s438
      %s440 = smul.u32 16, %s23
      %p441 = scmp.lt.s32.totalorder %s22, 3
      %s442 = scalar_select %p441, %s22, 3
      %p443 = scmp.lt.s32.totalorder %s440, 15
      %s444 = scalar_select %p443, %s440, 15
      %s445 = smul.addr %s442, 16
      %s446 = sadd.s32 %s444, %s445
      %s447 = smul.addr %s446, 8
      %s448 = scalar_lea.vmem %s4, %s447
      %s449 = smul.u32 16, %s23
      %s450 = smul.u32 16, %s23
      %p451 = scmp.lt.s32.totalorder %s22, 3
      %s452 = scalar_select %p451, %s22, 3
      %p453 = scmp.lt.s32.totalorder %s450, 15
      %s454 = scalar_select %p453, %s450, 15
      %s455 = smul.addr %s452, 16
      %s456 = sadd.s32 %s454, %s455
      %s457 = smul.addr %s456, 8
      %s458 = scalar_lea.vmem %s5, %s457
      %s459 = smul.u32 16, %s23
      %s460 = smul.u32 16, %s23
      %p461 = scmp.lt.s32.totalorder %s22, 3
      %s462 = scalar_select %p461, %s22, 3
      %p463 = scmp.lt.s32.totalorder %s460, 15
      %s464 = scalar_select %p463, %s460, 15
      %s465 = smul.addr %s462, 16
      %s466 = sadd.s32 %s464, %s465
      %s467 = smul.addr %s466, 8
      %s468 = scalar_lea.vmem %s6, %s467
      %s469 = smul.u32 16, %s23
      %v471 = vld [vmem:[%s415] sm:$0xff]
      %v472 = vld [vmem:[%s415 + $0x8] sm:$0xff]
      %v473 = vld [vmem:[%s415 + $0x10] sm:$0xff]
      %v474 = vld [vmem:[%s415 + $0x18] sm:$0xff]
      %v475 = vld [vmem:[%s415 + $0x20] sm:$0xff]
      %v476 = vld [vmem:[%s415 + $0x28] sm:$0xff]
      %v477 = vld [vmem:[%s415 + $0x30] sm:$0xff]
      %v478 = vld [vmem:[%s415 + $0x38] sm:$0xff]
      %v479 = vld [vmem:[%s415 + $0x40] sm:$0xff]
      %v480 = vld [vmem:[%s415 + $0x48] sm:$0xff]
      %v481 = vld [vmem:[%s415 + $0x50] sm:$0xff]
      %v482 = vld [vmem:[%s415 + $0x58] sm:$0xff]
      %v483 = vld [vmem:[%s415 + $0x60] sm:$0xff]
      %v484 = vld [vmem:[%s415 + $0x68] sm:$0xff]
      %v485 = vld [vmem:[%s415 + $0x70] sm:$0xff]
      %v486 = vld [vmem:[%s415 + $0x78] sm:$0xff]
      %v487 = vpack.c.bf16 %v472, %v471
      %v488 = vpack.c.bf16 %v474, %v473
      %v489 = vpack.c.bf16 %v476, %v475
      %v490 = vpack.c.bf16 %v478, %v477
      %v491 = vpack.c.bf16 %v480, %v479
      %v492 = vpack.c.bf16 %v482, %v481
      %v493 = vpack.c.bf16 %v484, %v483
      %v494 = vpack.c.bf16 %v486, %v485
      %v495 = vld [vmem:[%s433] sm:$0xf]
      %v496 = vld [vmem:[%s433 + $0x4] sm:$0xf]
      %v497 = vld [vmem:[%s433 + $0x8] sm:$0xf]
      %v498 = vld [vmem:[%s433 + $0xc] sm:$0xf]
      %v499 = vld [vmem:[%s433 + $0x10] sm:$0xf]
      %v500 = vld [vmem:[%s433 + $0x14] sm:$0xf]
      %v501 = vld [vmem:[%s433 + $0x18] sm:$0xf]
      %v502 = vld [vmem:[%s433 + $0x1c] sm:$0xf]
      %v511 = vunpack.c.l.b16 %v495
      %v512 = vunpack.c.l.b16 %v496
      %v513 = vunpack.c.l.b16 %v497
      %v514 = vunpack.c.l.b16 %v498
      %v515 = vunpack.c.l.b16 %v499
      %v516 = vunpack.c.l.b16 %v500
      %v517 = vunpack.c.l.b16 %v501
      %v518 = vunpack.c.l.b16 %v502
      %v519 = vpack.c.b16 %v512, %v511
      %v520 = vpack.c.b16 %v514, %v513
      %v521 = vpack.c.b16 %v516, %v515
      %v522 = vpack.c.b16 %v518, %v517
      %vm527 = vcmask 523264
      %v529 = vsel %vm527, %v487, 0
      %v532 = vsel %vm527, %v488, 0
      %v535 = vsel %vm527, %v489, 0
      %v538 = vsel %vm527, %v490, 0
      %v541 = vsel %vm527, %v491, 0
      %v544 = vsel %vm527, %v492, 0
      %v547 = vsel %vm527, %v493, 0
      %v550 = vsel %vm527, %v494, 0
      %552 = vmatprep.subr.bf16.mxu0 0
      %553 = vmatpush1.bf16.msra.mxu0 0
      %554 = vmatprep.subr.bf16.mxu0 0
      %555 = vmatpush1.bf16.msra.mxu0 0
      %556 = vmatprep.subr.bf16.mxu0 0
      %557 = vmatpush1.bf16.msra.mxu0 0
      %558 = vmatprep.subr.bf16.mxu0 0
      %559 = vmatpush1.bf16.msra.mxu0 0
      %560 = vmatprep.subr.bf16.mxu0 0
      %561 = vmatpush1.bf16.msra.mxu0 %v522
      %562 = vmatprep.subr.bf16.mxu0 0
      %563 = vmatpush1.bf16.msra.mxu0 %v521
      %564 = vmatprep.subr.bf16.mxu0 0
      %565 = vmatpush1.bf16.msra.mxu0 %v520
      %566 = vmatprep.subr.bf16.mxu0 0
      %567 = vmatpush1.bf16.msra.mxu0 %v519
      %568 = vmatprep.subr.bf16.mxu0 0
      %569 = vmatpush2.bf16.msra.mxu0 0
      %570 = vmatprep.subr.bf16.mxu0 0
      %571 = vmatpush2.bf16.msra.mxu0 0
      %572 = vmatprep.subr.bf16.mxu0 0
      %573 = vmatpush2.bf16.msra.mxu0 0
      %574 = vmatprep.subr.bf16.mxu0 0
      %575 = vmatpush2.bf16.msra.mxu0 0
      %576 = vmatprep.subr.bf16.mxu0 0
      %577 = vmatpush2.bf16.msra.mxu0 0
      %578 = vmatprep.subr.bf16.mxu0 0
      %579 = vmatpush2.bf16.msra.mxu0 0
      %580 = vmatprep.subr.bf16.mxu0 0
      %581 = vmatpush2.bf16.msra.mxu0 0
      %582 = vmatprep.subr.bf16.mxu0 0
      %583 = vmatpush2.bf16.msra.mxu0 0
      %584 = vmatprep.mubr.bf16.mxu0 0
      %585 = vmatmul.mubr.bf16.gmra.mxu0 %v529
      %v586 = vpop.f32.mrf.mxu0
      %v587 = vadd.f32 0.0, %v586
      %v588 = vpop.f32.mrf.mxu0
      %v589 = vpop.f32.mrf.mxu0
      %v590 = vadd.f32 0.0, %v589
      %v591 = vpop.f32.mrf.mxu0
      %592 = vmatprep.mubr.bf16.mxu0 0
      %593 = vmatmul.mubr.bf16.gmra.mxu0 %v532
      %v594 = vpop.f32.mrf.mxu0
      %v595 = vadd.f32 0.0, %v594
      %v596 = vpop.f32.mrf.mxu0
      %v597 = vpop.f32.mrf.mxu0
      %v598 = vadd.f32 0.0, %v597
      %v599 = vpop.f32.mrf.mxu0
      %600 = vmatprep.mubr.bf16.mxu0 0
      %601 = vmatmul.mubr.bf16.gmra.mxu0 %v535
      %v602 = vpop.f32.mrf.mxu0
      %v603 = vadd.f32 0.0, %v602
      %v604 = vpop.f32.mrf.mxu0
      %v605 = vpop.f32.mrf.mxu0
      %v606 = vadd.f32 0.0, %v605
      %v607 = vpop.f32.mrf.mxu0
      %608 = vmatprep.mubr.bf16.mxu0 0
      %609 = vmatmul.mubr.bf16.gmra.mxu0 %v538
      %v610 = vpop.f32.mrf.mxu0
      %v611 = vadd.f32 0.0, %v610
      %v612 = vpop.f32.mrf.mxu0
      %v613 = vpop.f32.mrf.mxu0
      %v614 = vadd.f32 0.0, %v613
      %v615 = vpop.f32.mrf.mxu0
      %616 = vmatprep.mubr.bf16.mxu0 0
      %617 = vmatmul.mubr.bf16.gmra.mxu0 %v541
      %v618 = vpop.f32.mrf.mxu0
      %v619 = vadd.f32 0.0, %v618
      %v620 = vpop.f32.mrf.mxu0
      %v621 = vpop.f32.mrf.mxu0
      %v622 = vadd.f32 0.0, %v621
      %v623 = vpop.f32.mrf.mxu0
      %624 = vmatprep.mubr.bf16.mxu0 0
      %625 = vmatmul.mubr.bf16.gmra.mxu0 %v544
      %v626 = vpop.f32.mrf.mxu0
      %v627 = vadd.f32 0.0, %v626
      %v628 = vpop.f32.mrf.mxu0
      %v629 = vpop.f32.mrf.mxu0
      %v630 = vadd.f32 0.0, %v629
      %v631 = vpop.f32.mrf.mxu0
      %632 = vmatprep.mubr.bf16.mxu0 0
      %633 = vmatmul.mubr.bf16.gmra.mxu0 %v547
      %v634 = vpop.f32.mrf.mxu0
      %v635 = vadd.f32 0.0, %v634
      %v636 = vpop.f32.mrf.mxu0
      %v637 = vpop.f32.mrf.mxu0
      %v638 = vadd.f32 0.0, %v637
      %v639 = vpop.f32.mrf.mxu0
      %640 = vmatprep.mubr.bf16.mxu0 0
      %641 = vmatmul.mubr.bf16.gmra.mxu0 %v550
      %v642 = vpop.f32.mrf.mxu0
      %v643 = vadd.f32 0.0, %v642
      %v644 = vpop.f32.mrf.mxu0
      %v645 = vpop.f32.mrf.mxu0
      %v646 = vadd.f32 0.0, %v645
      %v647 = vpop.f32.mrf.mxu0
      %648 = vdwg.mxu0
      %v649 = vpack.c.bf16 %v590, %v587
      %v650 = vpack.c.bf16 %v598, %v595
      %v651 = vpack.c.bf16 %v606, %v603
      %v652 = vpack.c.bf16 %v614, %v611
      %v653 = vpack.c.bf16 %v622, %v619
      %v654 = vpack.c.bf16 %v630, %v627
      %v655 = vpack.c.bf16 %v638, %v635
      %v656 = vpack.c.bf16 %v646, %v643
      %v657 = vld [vmem:[%s436] sm:$0x1]
      %v658 = vld [vmem:[%s439] sm:$0x1]
      %v660 = vlaneseq
      %v661 = vshrl.u32 %v660, 7
      %v662 = vsub.s32 0, %v661
      %v663 = vrot.slane %v658, %v662
      %vm665 = vcmask 15360
      %v667 = vsel %vm665, %v649, 0
      %v670 = vsel %vm665, %v650, 0
      %v673 = vsel %vm665, %v651, 0
      %v676 = vsel %vm665, %v652, 0
      %v679 = vsel %vm665, %v653, 0
      %v682 = vsel %vm665, %v654, 0
      %v685 = vsel %vm665, %v655, 0
      %v688 = vsel %vm665, %v656, 0
      %vm690 = vcmask 1040384
      %v692 = vsel %vm690, %v657, 0
      %694 = vmatprep.subr.bf16.mxu0 0
      %695 = vmatpush1.bf16.msra.mxu0 0
      %696 = vmatprep.subr.bf16.mxu0 0
      %697 = vmatpush1.bf16.msra.mxu0 0
      %698 = vmatprep.subr.bf16.mxu0 0
      %699 = vmatpush1.bf16.msra.mxu0 0
      %700 = vmatprep.subr.bf16.mxu0 0
      %701 = vmatpush1.bf16.msra.mxu0 0
      %702 = vmatprep.subr.bf16.mxu0 0
      %703 = vmatpush1.bf16.msra.mxu0 0
      %704 = vmatprep.subr.bf16.mxu0 0
      %705 = vmatpush1.bf16.msra.mxu0 0
      %706 = vmatprep.subr.bf16.mxu0 0
      %707 = vmatpush1.bf16.msra.mxu0 0
      %708 = vmatprep.subr.bf16.mxu0 0
      %709 = vmatpush1.bf16.msra.mxu0 %v692
      %710 = vmatprep.subr.bf16.mxu0 0
      %711 = vmatpush2.bf16.msra.mxu0 0
      %712 = vmatprep.subr.bf16.mxu0 0
      %713 = vmatpush2.bf16.msra.mxu0 0
      %714 = vmatprep.subr.bf16.mxu0 0
      %715 = vmatpush2.bf16.msra.mxu0 0
      %716 = vmatprep.subr.bf16.mxu0 0
      %717 = vmatpush2.bf16.msra.mxu0 0
      %718 = vmatprep.subr.bf16.mxu0 0
      %719 = vmatpush2.bf16.msra.mxu0 0
      %720 = vmatprep.subr.bf16.mxu0 0
      %721 = vmatpush2.bf16.msra.mxu0 0
      %722 = vmatprep.subr.bf16.mxu0 0
      %723 = vmatpush2.bf16.msra.mxu0 0
      %724 = vmatprep.subr.bf16.mxu0 0
      %725 = vmatpush2.bf16.msra.mxu0 0
      %726 = vmatprep.mubr.bf16.mxu0 0
      %727 = vmatmul.mubr.bf16.gmra.mxu0 %v667
      %v728 = vpop.f32.mrf.mxu0
      %v729 = vadd.f32 %v663, %v728
      %v730 = vpop.f32.mrf.mxu0
      %v731 = vpop.f32.mrf.mxu0
      %v732 = vadd.f32 %v663, %v731
      %v733 = vpop.f32.mrf.mxu0
      %734 = vmatprep.mubr.bf16.mxu0 0
      %735 = vmatmul.mubr.bf16.gmra.mxu0 %v670
      %v736 = vpop.f32.mrf.mxu0
      %v737 = vadd.f32 %v663, %v736
      %v738 = vpop.f32.mrf.mxu0
      %v739 = vpop.f32.mrf.mxu0
      %v740 = vadd.f32 %v663, %v739
      %v741 = vpop.f32.mrf.mxu0
      %742 = vmatprep.mubr.bf16.mxu0 0
      %743 = vmatmul.mubr.bf16.gmra.mxu0 %v673
      %v744 = vpop.f32.mrf.mxu0
      %v745 = vadd.f32 %v663, %v744
      %v746 = vpop.f32.mrf.mxu0
      %v747 = vpop.f32.mrf.mxu0
      %v748 = vadd.f32 %v663, %v747
      %v749 = vpop.f32.mrf.mxu0
      %750 = vmatprep.mubr.bf16.mxu0 0
      %751 = vmatmul.mubr.bf16.gmra.mxu0 %v676
      %v752 = vpop.f32.mrf.mxu0
      %v753 = vadd.f32 %v663, %v752
      %v754 = vpop.f32.mrf.mxu0
      %v755 = vpop.f32.mrf.mxu0
      %v756 = vadd.f32 %v663, %v755
      %v757 = vpop.f32.mrf.mxu0
      %758 = vmatprep.mubr.bf16.mxu0 0
      %759 = vmatmul.mubr.bf16.gmra.mxu0 %v679
      %v760 = vpop.f32.mrf.mxu0
      %v761 = vadd.f32 %v663, %v760
      %v762 = vpop.f32.mrf.mxu0
      %v763 = vpop.f32.mrf.mxu0
      %v764 = vadd.f32 %v663, %v763
      %v765 = vpop.f32.mrf.mxu0
      %766 = vmatprep.mubr.bf16.mxu0 0
      %767 = vmatmul.mubr.bf16.gmra.mxu0 %v682
      %v768 = vpop.f32.mrf.mxu0
      %v769 = vadd.f32 %v663, %v768
      %v770 = vpop.f32.mrf.mxu0
      %v771 = vpop.f32.mrf.mxu0
      %v772 = vadd.f32 %v663, %v771
      %v773 = vpop.f32.mrf.mxu0
      %774 = vmatprep.mubr.bf16.mxu0 0
      %775 = vmatmul.mubr.bf16.gmra.mxu0 %v685
      %v776 = vpop.f32.mrf.mxu0
      %v777 = vadd.f32 %v663, %v776
      %v778 = vpop.f32.mrf.mxu0
      %v779 = vpop.f32.mrf.mxu0
      %v780 = vadd.f32 %v663, %v779
      %v781 = vpop.f32.mrf.mxu0
      %782 = vmatprep.mubr.bf16.mxu0 0
      %783 = vmatmul.mubr.bf16.gmra.mxu0 %v688
      %v784 = vpop.f32.mrf.mxu0
      %v785 = vadd.f32 %v663, %v784
      %v786 = vpop.f32.mrf.mxu0
      %v787 = vpop.f32.mrf.mxu0
      %v788 = vadd.f32 %v663, %v787
      %v789 = vpop.f32.mrf.mxu0
      %790 = vdwg.mxu0
      %791 = vst.msk [vmem:[%s448] sm:$0xff] %vm527, %v729
      %792 = vst.msk [vmem:[%s448 + $0x8] sm:$0xff] %vm527, %v732
      %793 = vst.msk [vmem:[%s448 + $0x10] sm:$0xff] %vm527, %v737
      %794 = vst.msk [vmem:[%s448 + $0x18] sm:$0xff] %vm527, %v740
      %795 = vst.msk [vmem:[%s448 + $0x20] sm:$0xff] %vm527, %v745
      %796 = vst.msk [vmem:[%s448 + $0x28] sm:$0xff] %vm527, %v748
      %797 = vst.msk [vmem:[%s448 + $0x30] sm:$0xff] %vm527, %v753
      %798 = vst.msk [vmem:[%s448 + $0x38] sm:$0xff] %vm527, %v756
      %799 = vst.msk [vmem:[%s448 + $0x40] sm:$0xff] %vm527, %v761
      %800 = vst.msk [vmem:[%s448 + $0x48] sm:$0xff] %vm527, %v764
      %801 = vst.msk [vmem:[%s448 + $0x50] sm:$0xff] %vm527, %v769
      %802 = vst.msk [vmem:[%s448 + $0x58] sm:$0xff] %vm527, %v772
      %803 = vst.msk [vmem:[%s448 + $0x60] sm:$0xff] %vm527, %v777
      %804 = vst.msk [vmem:[%s448 + $0x68] sm:$0xff] %vm527, %v780
      %805 = vst.msk [vmem:[%s448 + $0x70] sm:$0xff] %vm527, %v785
      %806 = vst.msk [vmem:[%s448 + $0x78] sm:$0xff] %vm527, %v788
      %823 = vrot.lane.b32.xlu0 %v587, 126
      %v824 = vpop.permute.xlu0 %823
      %825 = vrot.lane.b32.xlu0 %v590, 126
      %v826 = vpop.permute.xlu0 %825
      %827 = vrot.lane.b32.xlu0 %v595, 126
      %v828 = vpop.permute.xlu0 %827
      %829 = vrot.lane.b32.xlu0 %v598, 126
      %v830 = vpop.permute.xlu0 %829
      %831 = vrot.lane.b32.xlu0 %v603, 126
      %v832 = vpop.permute.xlu0 %831
      %833 = vrot.lane.b32.xlu0 %v606, 126
      %v834 = vpop.permute.xlu0 %833
      %835 = vrot.lane.b32.xlu0 %v611, 126
      %v836 = vpop.permute.xlu0 %835
      %837 = vrot.lane.b32.xlu0 %v614, 126
      %v838 = vpop.permute.xlu0 %837
      %839 = vrot.lane.b32.xlu0 %v619, 126
      %v840 = vpop.permute.xlu0 %839
      %841 = vrot.lane.b32.xlu0 %v622, 126
      %v842 = vpop.permute.xlu0 %841
      %843 = vrot.lane.b32.xlu0 %v627, 126
      %v844 = vpop.permute.xlu0 %843
      %845 = vrot.lane.b32.xlu0 %v630, 126
      %v846 = vpop.permute.xlu0 %845
      %847 = vrot.lane.b32.xlu0 %v635, 126
      %v848 = vpop.permute.xlu0 %847
      %849 = vrot.lane.b32.xlu0 %v638, 126
      %v850 = vpop.permute.xlu0 %849
      %851 = vrot.lane.b32.xlu0 %v643, 126
      %v852 = vpop.permute.xlu0 %851
      %853 = vrot.lane.b32.xlu0 %v646, 126
      %v854 = vpop.permute.xlu0 %853
      %vm871 = vcmask 130048
      %872 = vst.msk [vmem:[%s458] sm:$0xff] %vm871, %v824
      %873 = vst.msk [vmem:[%s458 + $0x8] sm:$0xff] %vm871, %v826
      %874 = vst.msk [vmem:[%s458 + $0x10] sm:$0xff] %vm871, %v828
      %875 = vst.msk [vmem:[%s458 + $0x18] sm:$0xff] %vm871, %v830
      %876 = vst.msk [vmem:[%s458 + $0x20] sm:$0xff] %vm871, %v832
      %877 = vst.msk [vmem:[%s458 + $0x28] sm:$0xff] %vm871, %v834
      %878 = vst.msk [vmem:[%s458 + $0x30] sm:$0xff] %vm871, %v836
      %879 = vst.msk [vmem:[%s458 + $0x38] sm:$0xff] %vm871, %v838
      %880 = vst.msk [vmem:[%s458 + $0x40] sm:$0xff] %vm871, %v840
      %881 = vst.msk [vmem:[%s458 + $0x48] sm:$0xff] %vm871, %v842
      %882 = vst.msk [vmem:[%s458 + $0x50] sm:$0xff] %vm871, %v844
      %883 = vst.msk [vmem:[%s458 + $0x58] sm:$0xff] %vm871, %v846
      %884 = vst.msk [vmem:[%s458 + $0x60] sm:$0xff] %vm871, %v848
      %885 = vst.msk [vmem:[%s458 + $0x68] sm:$0xff] %vm871, %v850
      %886 = vst.msk [vmem:[%s458 + $0x70] sm:$0xff] %vm871, %v852
      %887 = vst.msk [vmem:[%s458 + $0x78] sm:$0xff] %vm871, %v854
      %888 = vrot.lane.b32.xlu0 %v587, 110
      %v889 = vpop.permute.xlu0 %888
      %890 = vrot.lane.b32.xlu0 %v590, 110
      %v891 = vpop.permute.xlu0 %890
      %892 = vrot.lane.b32.xlu0 %v595, 110
      %v893 = vpop.permute.xlu0 %892
      %894 = vrot.lane.b32.xlu0 %v598, 110
      %v895 = vpop.permute.xlu0 %894
      %896 = vrot.lane.b32.xlu0 %v603, 110
      %v897 = vpop.permute.xlu0 %896
      %898 = vrot.lane.b32.xlu0 %v606, 110
      %v899 = vpop.permute.xlu0 %898
      %900 = vrot.lane.b32.xlu0 %v611, 110
      %v901 = vpop.permute.xlu0 %900
      %902 = vrot.lane.b32.xlu0 %v614, 110
      %v903 = vpop.permute.xlu0 %902
      %904 = vrot.lane.b32.xlu0 %v619, 110
      %v905 = vpop.permute.xlu0 %904
      %906 = vrot.lane.b32.xlu0 %v622, 110
      %v907 = vpop.permute.xlu0 %906
      %908 = vrot.lane.b32.xlu0 %v627, 110
      %v909 = vpop.permute.xlu0 %908
      %910 = vrot.lane.b32.xlu0 %v630, 110
      %v911 = vpop.permute.xlu0 %910
      %912 = vrot.lane.b32.xlu0 %v635, 110
      %v913 = vpop.permute.xlu0 %912
      %914 = vrot.lane.b32.xlu0 %v638, 110
      %v915 = vpop.permute.xlu0 %914
      %916 = vrot.lane.b32.xlu0 %v643, 110
      %v917 = vpop.permute.xlu0 %916
      %918 = vrot.lane.b32.xlu0 %v646, 110
      %v919 = vpop.permute.xlu0 %918
      %936 = vst.msk [vmem:[%s468] sm:$0xff] %vm871, %v889
      %937 = vst.msk [vmem:[%s468 + $0x8] sm:$0xff] %vm871, %v891
      %938 = vst.msk [vmem:[%s468 + $0x10] sm:$0xff] %vm871, %v893
      %939 = vst.msk [vmem:[%s468 + $0x18] sm:$0xff] %vm871, %v895
      %940 = vst.msk [vmem:[%s468 + $0x20] sm:$0xff] %vm871, %v897
      %941 = vst.msk [vmem:[%s468 + $0x28] sm:$0xff] %vm871, %v899
      %942 = vst.msk [vmem:[%s468 + $0x30] sm:$0xff] %vm871, %v901
      %943 = vst.msk [vmem:[%s468 + $0x38] sm:$0xff] %vm871, %v903
      %944 = vst.msk [vmem:[%s468 + $0x40] sm:$0xff] %vm871, %v905
      %945 = vst.msk [vmem:[%s468 + $0x48] sm:$0xff] %vm871, %v907
      %946 = vst.msk [vmem:[%s468 + $0x50] sm:$0xff] %vm871, %v909
      %947 = vst.msk [vmem:[%s468 + $0x58] sm:$0xff] %vm871, %v911
      %948 = vst.msk [vmem:[%s468 + $0x60] sm:$0xff] %vm871, %v913
      %949 = vst.msk [vmem:[%s468 + $0x68] sm:$0xff] %vm871, %v915
      %950 = vst.msk [vmem:[%s468 + $0x70] sm:$0xff] %vm871, %v917
      %951 = vst.msk [vmem:[%s468 + $0x78] sm:$0xff] %vm871, %v919
      %s952 = smul.u32 16, %s23
      %p953 = scmp.lt.s32.totalorder %s22, 3
      %s954 = scalar_select %p953, %s22, 3
      %p955 = scmp.lt.s32.totalorder %s952, 15
      %s956 = scalar_select %p955, %s952, 15
      %s957 = smul.addr %s954, 16
      %s958 = sadd.s32 %s956, %s957
      %s959 = smul.addr %s958, 8
      %s960 = scalar_lea.vmem %s4, %s959
      %s961 = smul.u32 16, %s23
      %p962 = scmp.lt.s32.totalorder %s22, 3
      %s963 = scalar_select %p962, %s22, 3
      %p964 = scmp.lt.s32.totalorder %s961, 15
      %s965 = scalar_select %p964, %s961, 15
      %s966 = smul.addr %s963, 16
      %s967 = sadd.s32 %s965, %s966
      %s968 = smul.addr %s967, 8
      %s969 = scalar_lea.vmem %s5, %s968
      %s970 = smul.u32 16, %s23
      %p971 = scmp.lt.s32.totalorder %s22, 3
      %s972 = scalar_select %p971, %s22, 3
      %p973 = scmp.lt.s32.totalorder %s970, 15
      %s974 = scalar_select %p973, %s970, 15
      %s975 = smul.addr %s972, 16
      %s976 = sadd.s32 %s974, %s975
      %s977 = smul.addr %s976, 8
      %s978 = scalar_lea.vmem %s6, %s977
      // Predicated region
      $region37: #{temporal_spectrum_block.8} parent=35 // pred_check
        %p979 = pneg %p180
      $region38: #{temporal_spectrum_block.8} parent=35 // pred_check_branch
        %981 = sbr.rel (%p979) target = $region40
      $region39: #{temporal_spectrum_block.8} parent=35 // pred_region
        %s982 = smul.u32 16, %s23
      $region40: #{temporal_spectrum_block.8} parent=35 // pred_fallthru
        _
      // Predicated region
      $region41: #{temporal_spectrum_block.8} parent=35 // pred_check
        %p983 = pneg %p208
      $region42: #{temporal_spectrum_block.8} parent=35 // pred_check_branch
        %985 = sbr.rel (%p983) target = $region44
      $region43: #{temporal_spectrum_block.8} parent=35 // pred_region
        %s986 = smul.u32 16, %s23
      $region44: #{temporal_spectrum_block.8} parent=35 // pred_fallthru
        _
      // Predicated region
      $region45: #{temporal_spectrum_block.8} parent=35 // pred_check
        %p987 = pneg %p236
      $region46: #{temporal_spectrum_block.8} parent=35 // pred_check_branch
        %989 = sbr.rel (%p987) target = $region48
      $region47: #{temporal_spectrum_block.8} parent=35 // pred_region
        %s990 = smul.u32 16, %s23
      $region48: #{temporal_spectrum_block.8} parent=35 // pred_fallthru
        _
    $region36: #{temporal_spectrum_block.8} parent=5 // pred_fallthru
      _
    %p991 = scmp.le.s32.totalorder 2, %s13
    // Predicated region
    $region49: #{temporal_spectrum_block.8} parent=5 // pred_check
      %p992 = pneg %p991
    $region50: #{temporal_spectrum_block.8} parent=5 // pred_check_branch
      %994 = sbr.rel (%p992) target = $region52
    $region51: #{temporal_spectrum_block.8} parent=5 // pred_region
      %s995 = ssub.s32 %s13, 2
      // Predicated region
      $region53: #{temporal_spectrum_block.8} parent=51 // pred_check
        %p996 = pneg %p186
      $region54: #{temporal_spectrum_block.8} parent=51 // pred_check_branch
        %998 = sbr.rel (%p996) target = $region56
      $region55: #{temporal_spectrum_block.8} parent=51 // pred_region
        %s999 = smul.u32 16, %s25
        %p1000 = scmp.lt.s32.totalorder %s24, 3
        %s1001 = scalar_select %p1000, %s24, 3
        %p1002 = scmp.lt.s32.totalorder %s999, 15
        %s1003 = scalar_select %p1002, %s999, 15
        %s1004 = smul.addr %s1001, 16
        %s1005 = sadd.s32 %s1003, %s1004
        %s1006 = smul.addr %s1005, 8
        %s1007 = scalar_lea.vmem %s4, %s1006
      $region56: #{temporal_spectrum_block.8} parent=51 // pred_fallthru
        _
      // Predicated region
      $region57: #{temporal_spectrum_block.8} parent=51 // pred_check
        %p1008 = pneg %p214
      $region58: #{temporal_spectrum_block.8} parent=51 // pred_check_branch
        %1010 = sbr.rel (%p1008) target = $region60
      $region59: #{temporal_spectrum_block.8} parent=51 // pred_region
        %s1011 = smul.u32 16, %s25
        %p1012 = scmp.lt.s32.totalorder %s24, 3
        %s1013 = scalar_select %p1012, %s24, 3
        %p1014 = scmp.lt.s32.totalorder %s1011, 15
        %s1015 = scalar_select %p1014, %s1011, 15
        %s1016 = smul.addr %s1013, 16
        %s1017 = sadd.s32 %s1015, %s1016
        %s1018 = smul.addr %s1017, 8
        %s1019 = scalar_lea.vmem %s5, %s1018
      $region60: #{temporal_spectrum_block.8} parent=51 // pred_fallthru
        _
      // Predicated region
      $region61: #{temporal_spectrum_block.8} parent=51 // pred_check
        %p1020 = pneg %p242
      $region62: #{temporal_spectrum_block.8} parent=51 // pred_check_branch
        %1022 = sbr.rel (%p1020) target = $region64
      $region63: #{temporal_spectrum_block.8} parent=51 // pred_region
        %s1023 = smul.u32 16, %s25
        %p1024 = scmp.lt.s32.totalorder %s24, 3
        %s1025 = scalar_select %p1024, %s24, 3
        %p1026 = scmp.lt.s32.totalorder %s1023, 15
        %s1027 = scalar_select %p1026, %s1023, 15
        %s1028 = smul.addr %s1025, 16
        %s1029 = sadd.s32 %s1027, %s1028
        %s1030 = smul.addr %s1029, 8
        %s1031 = scalar_lea.vmem %s6, %s1030
      $region64: #{temporal_spectrum_block.8} parent=51 // pred_fallthru
        _
    $region52: #{temporal_spectrum_block.8} parent=5 // pred_fallthru
      _
  $region6: #{temporal_spectrum_block.8} parent=0 // loop_footer
    %s17 = sadd.s32 1, %s13
  $region7: #{temporal_spectrum_block.8} parent=0 // loop_footer_branch
    %12 = sbr.rel target = $region3
  $region8: #{temporal_spectrum_block.8} parent=0 // loop_exit
    _

// kernel: temporal_spectrum_block.9
$region0: #{temporal_spectrum_block.9}
  #allocation0 [shape = 'u32[]', space=smem, size = 0x4, offset = 0x4, fixed_abs, tag = 'smem constant byte address 0x4 - core index']
  #allocation1 [shape = 'u32[144,128]{1,0:T(1,128)}', space=vmem, size = 0x12000, scoped, tag = 'internal scratch']
  %s0 = inlined_call_operand.vmem [shape: f32[2,2,64,64], index: 0, kind: input, shape index: {}]
  %s1 = inlined_call_operand.vmem [shape: f32[4,2,64,64], index: 1, kind: input, shape index: {}]
  %s2 = inlined_call_operand.vmem [shape: f32[4,2,64,16], index: 2, kind: input, shape index: {}]
  %s3 = inlined_call_operand.vmem [shape: f32[4,2,64,16], index: 3, kind: input, shape index: {}]
  %s4 = inlined_call_operand.vmem [shape: f32[4,16,64], index: 4, kind: input, shape index: {}]
  %s5 = inlined_call_operand.vmem [shape: f32[4,1,64], index: 5, kind: input, shape index: {}]
  %s6 = inlined_call_operand.vmem [shape: f32[2,2,64,64], index: 6, kind: output, shape index: {}]
  %s7 = sld [smem:[#allocation0]]
  $region64: #{temporal_spectrum_block.9} parent=0
    _
  %s9 = ssub.s32 1, %s7
  %s10 = scalar_select 0, %s9, %s7
  loop: start=0, step=1, limit=6
  $region2: #{temporal_spectrum_block.9} parent=0 // loop_pre_header
    _
  $region3: #{temporal_spectrum_block.9} parent=0 // loop_header
    %s12 = sphi 0, %s16
    %p13 = scmp.ge.s32.totalorder %s12, 6
    %s19 = sphi 0, %s31
    %s20 = sphi 0, %s27
    %s21 = sphi 0, %s19
    %s22 = sphi 0, %s20
    %s23 = sphi 0, %s21
    %s24 = sphi 0, %s22
    %s36 = sphi 0, %s38
    %s39 = sphi 0, %s36
    %s40 = sphi 0, %s39
    %s56 = sphi 0, %s40
    %s64 = sphi 0, %s66
    %s67 = sphi 0, %s64
    %s68 = sphi 0, %s67
    %s84 = sphi 0, %s68
    %s92 = sphi 0, %s94
    %s95 = sphi 0, %s92
    %s96 = sphi 0, %s95
    %s112 = sphi 0, %s96
    %s120 = sphi 0, %s122
    %s123 = sphi 0, %s120
    %s124 = sphi 0, %s123
    %s140 = sphi 0, %s124
    %s146 = sphi 0, %s148
    %s149 = sphi 0, %s146
    %s150 = sphi 0, %s149
    %s166 = sphi 0, %s150
    %s172 = sphi 0, %s174
    %s175 = sphi 0, %s172
    %s176 = sphi 0, %s175
    %s192 = sphi 0, %s176
    %s200 = sphi 0, %s202
    %s203 = sphi 0, %s200
    %s204 = sphi 0, %s203
    %s220 = sphi 0, %s204
  $region4: #{temporal_spectrum_block.9} parent=0 // loop_header_branch
    %15 = sbr.rel (%p13) target = $region8
  $region5: #{temporal_spectrum_block.9} parent=0 // loop_body
    %s17 = ssub.s32 %s12, 1
    %s18 = ssub.s32 %s12, 2
    %s25 = sadd.s32 1, %s20
    %p26 = scmp.ge.s32.totalorder %s25, 2
    %s27 = scalar_select %p26, 0, %s25
    %s28 = sadd.s32 1, %s19
    %s29 = scalar_select %p26, %s28, %s19
    %p30 = scmp.ge.s32.totalorder %s29, 2
    %s31 = scalar_select %p30, 0, %s29
    %s32 = ssub.s32 %s20, %s27
    %s33 = ssub.s32 %s19, %s31
    %s34 = sor.u32 %s32, %s33
    %p35 = scmp.eq.s32.totalorder %s34, 0
    %s37 = sadd.s32 %s36, 1
    %s38 = scalar_select %p35, %s36, %s37
    %p41 = pneg %p35
    %p42 = scmp.eq.s32.totalorder %s12, 3
    %p43 = por %p41, %p42
    %p44 = scmp.ne.s32.totalorder %s36, %s39
    %p45 = scmp.eq.s32.totalorder %s12, 0
    %p46 = por %p44, %p45
    %p47 = scmp.ne.s32.totalorder %s36, %s39
    %p48 = scmp.eq.s32.totalorder %s17, 3
    %p49 = por %p47, %p48
    %p50 = scmp.ne.s32.totalorder %s39, %s40
    %p51 = scmp.eq.s32.totalorder %s17, 0
    %p52 = por %p50, %p51
    %p53 = scmp.ne.s32.totalorder %s39, %s40
    %p54 = scmp.eq.s32.totalorder %s18, 3
    %p55 = por %p53, %p54
    %p57 = scmp.ne.s32.totalorder %s40, %s56
    %p58 = scmp.eq.s32.totalorder %s18, 0
    %p59 = por %p57, %p58
    %s60 = ssub.s32 %s20, %s27
    %s61 = ssub.s32 %s19, %s31
    %s62 = sor.u32 %s60, %s61
    %p63 = scmp.eq.s32.totalorder %s62, 0
    %s65 = sadd.s32 %s64, 1
    %s66 = scalar_select %p63, %s64, %s65
    %p69 = pneg %p63
    %p70 = scmp.eq.s32.totalorder %s12, 3
    %p71 = por %p69, %p70
    %p72 = scmp.ne.s32.totalorder %s64, %s67
    %p73 = scmp.eq.s32.totalorder %s12, 0
    %p74 = por %p72, %p73
    %p75 = scmp.ne.s32.totalorder %s64, %s67
    %p76 = scmp.eq.s32.totalorder %s17, 3
    %p77 = por %p75, %p76
    %p78 = scmp.ne.s32.totalorder %s67, %s68
    %p79 = scmp.eq.s32.totalorder %s17, 0
    %p80 = por %p78, %p79
    %p81 = scmp.ne.s32.totalorder %s67, %s68
    %p82 = scmp.eq.s32.totalorder %s18, 3
    %p83 = por %p81, %p82
    %p85 = scmp.ne.s32.totalorder %s68, %s84
    %p86 = scmp.eq.s32.totalorder %s18, 0
    %p87 = por %p85, %p86
    %s88 = ssub.s32 %s20, %s27
    %s89 = ssub.s32 %s19, %s31
    %s90 = sor.u32 %s88, %s89
    %p91 = scmp.eq.s32.totalorder %s90, 0
    %s93 = sadd.s32 %s92, 1
    %s94 = scalar_select %p91, %s92, %s93
    %p97 = pneg %p91
    %p98 = scmp.eq.s32.totalorder %s12, 3
    %p99 = por %p97, %p98
    %p100 = scmp.ne.s32.totalorder %s92, %s95
    %p101 = scmp.eq.s32.totalorder %s12, 0
    %p102 = por %p100, %p101
    %p103 = scmp.ne.s32.totalorder %s92, %s95
    %p104 = scmp.eq.s32.totalorder %s17, 3
    %p105 = por %p103, %p104
    %p106 = scmp.ne.s32.totalorder %s95, %s96
    %p107 = scmp.eq.s32.totalorder %s17, 0
    %p108 = por %p106, %p107
    %p109 = scmp.ne.s32.totalorder %s95, %s96
    %p110 = scmp.eq.s32.totalorder %s18, 3
    %p111 = por %p109, %p110
    %p113 = scmp.ne.s32.totalorder %s96, %s112
    %p114 = scmp.eq.s32.totalorder %s18, 0
    %p115 = por %p113, %p114
    %s116 = ssub.s32 %s20, %s27
    %s117 = ssub.s32 %s19, %s31
    %s118 = sor.u32 %s116, %s117
    %p119 = scmp.eq.s32.totalorder %s118, 0
    %s121 = sadd.s32 %s120, 1
    %s122 = scalar_select %p119, %s120, %s121
    %p125 = pneg %p119
    %p126 = scmp.eq.s32.totalorder %s12, 3
    %p127 = por %p125, %p126
    %p128 = scmp.ne.s32.totalorder %s120, %s123
    %p129 = scmp.eq.s32.totalorder %s12, 0
    %p130 = por %p128, %p129
    %p131 = scmp.ne.s32.totalorder %s120, %s123
    %p132 = scmp.eq.s32.totalorder %s17, 3
    %p133 = por %p131, %p132
    %p134 = scmp.ne.s32.totalorder %s123, %s124
    %p135 = scmp.eq.s32.totalorder %s17, 0
    %p136 = por %p134, %p135
    %p137 = scmp.ne.s32.totalorder %s123, %s124
    %p138 = scmp.eq.s32.totalorder %s18, 3
    %p139 = por %p137, %p138
    %p141 = scmp.ne.s32.totalorder %s124, %s140
    %p142 = scmp.eq.s32.totalorder %s18, 0
    %p143 = por %p141, %p142
    %s144 = ssub.s32 %s20, %s27
    %p145 = scmp.eq.s32.totalorder %s144, 0
    %s147 = sadd.s32 %s146, 1
    %s148 = scalar_select %p145, %s146, %s147
    %p151 = pneg %p145
    %p152 = scmp.eq.s32.totalorder %s12, 3
    %p153 = por %p151, %p152
    %p154 = scmp.ne.s32.totalorder %s146, %s149
    %p155 = scmp.eq.s32.totalorder %s12, 0
    %p156 = por %p154, %p155
    %p157 = scmp.ne.s32.totalorder %s146, %s149
    %p158 = scmp.eq.s32.totalorder %s17, 3
    %p159 = por %p157, %p158
    %p160 = scmp.ne.s32.totalorder %s149, %s150
    %p161 = scmp.eq.s32.totalorder %s17, 0
    %p162 = por %p160, %p161
    %p163 = scmp.ne.s32.totalorder %s149, %s150
    %p164 = scmp.eq.s32.totalorder %s18, 3
    %p165 = por %p163, %p164
    %p167 = scmp.ne.s32.totalorder %s150, %s166
    %p168 = scmp.eq.s32.totalorder %s18, 0
    %p169 = por %p167, %p168
    %s170 = ssub.s32 %s20, %s27
    %p171 = scmp.eq.s32.totalorder %s170, 0
    %s173 = sadd.s32 %s172, 1
    %s174 = scalar_select %p171, %s172, %s173
    %p177 = pneg %p171
    %p178 = scmp.eq.s32.totalorder %s12, 3
    %p179 = por %p177, %p178
    %p180 = scmp.ne.s32.totalorder %s172, %s175
    %p181 = scmp.eq.s32.totalorder %s12, 0
    %p182 = por %p180, %p181
    %p183 = scmp.ne.s32.totalorder %s172, %s175
    %p184 = scmp.eq.s32.totalorder %s17, 3
    %p185 = por %p183, %p184
    %p186 = scmp.ne.s32.totalorder %s175, %s176
    %p187 = scmp.eq.s32.totalorder %s17, 0
    %p188 = por %p186, %p187
    %p189 = scmp.ne.s32.totalorder %s175, %s176
    %p190 = scmp.eq.s32.totalorder %s18, 3
    %p191 = por %p189, %p190
    %p193 = scmp.ne.s32.totalorder %s176, %s192
    %p194 = scmp.eq.s32.totalorder %s18, 0
    %p195 = por %p193, %p194
    %s196 = ssub.s32 %s19, %s31
    %s197 = ssub.s32 %s20, %s27
    %s198 = sor.u32 %s196, %s197
    %p199 = scmp.eq.s32.totalorder %s198, 0
    %s201 = sadd.s32 %s200, 1
    %s202 = scalar_select %p199, %s200, %s201
    %p205 = pneg %p199
    %p206 = scmp.eq.s32.totalorder %s12, 3
    %p207 = por %p205, %p206
    %p208 = scmp.ne.s32.totalorder %s200, %s203
    %p209 = scmp.eq.s32.totalorder %s12, 0
    %p210 = por %p208, %p209
    %p211 = scmp.ne.s32.totalorder %s200, %s203
    %p212 = scmp.eq.s32.totalorder %s17, 3
    %p213 = por %p211, %p212
    %p214 = scmp.ne.s32.totalorder %s203, %s204
    %p215 = scmp.eq.s32.totalorder %s17, 0
    %p216 = por %p214, %p215
    %p217 = scmp.ne.s32.totalorder %s203, %s204
    %p218 = scmp.eq.s32.totalorder %s18, 3
    %p219 = por %p217, %p218
    %p221 = scmp.ne.s32.totalorder %s204, %s220
    %p222 = scmp.eq.s32.totalorder %s18, 0
    %p223 = por %p221, %p222
    %p224 = scmp.le.s32.totalorder 1, %s12
    %p225 = scmp.lt.s32.totalorder %s12, 5
    %p226 = pnand %p224, %p225
    %p227 = pneg %p226
    // Predicated region
    $region9: #{temporal_spectrum_block.9} parent=5 // pred_check
      _
    $region10: #{temporal_spectrum_block.9} parent=5 // pred_check_branch
      %229 = sbr.rel (%p226) target = $region12
    $region11: #{temporal_spectrum_block.9} parent=5 // pred_region
      %s230 = ssub.s32 %s12, 1
    $region12: #{temporal_spectrum_block.9} parent=5 // pred_fallthru
      _
    %p231 = scmp.lt.s32.totalorder %s12, 4
    // Predicated region
    $region13: #{temporal_spectrum_block.9} parent=5 // pred_check
      %p232 = pneg %p231
    $region14: #{temporal_spectrum_block.9} parent=5 // pred_check_branch
      %234 = sbr.rel (%p232) target = $region16
    $region15: #{temporal_spectrum_block.9} parent=5 // pred_region
      // Predicated region
      $region17: #{temporal_spectrum_block.9} parent=15 // pred_check
        %p235 = pneg %p46
      $region18: #{temporal_spectrum_block.9} parent=15 // pred_check_branch
        %237 = sbr.rel (%p235) target = $region20
      $region19: #{temporal_spectrum_block.9} parent=15 // pred_region
        %p238 = scmp.lt.s32.totalorder %s20, 1
        %s239 = scalar_select %p238, %s20, 1
        %p240 = scmp.lt.s32.totalorder %s19, 1
        %s241 = scalar_select %p240, %s19, 1
        %s242 = smul.addr %s241, 8
        %s243 = smul.addr %s239, 16
        %s244 = sadd.s32 %s242, %s243
        %s245 = smul.addr %s244, 8
        %s246 = scalar_lea.vmem %s0, %s245
      $region20: #{temporal_spectrum_block.9} parent=15 // pred_fallthru
        _
      // Predicated region
      $region21: #{temporal_spectrum_block.9} parent=15 // pred_check
        %p247 = pneg %p74
      $region22: #{temporal_spectrum_block.9} parent=15 // pred_check_branch
        %249 = sbr.rel (%p247) target = $region24
      $region23: #{temporal_spectrum_block.9} parent=15 // pred_region
        %p250 = scmp.lt.s32.totalorder %s20, 3
        %s251 = scalar_select %p250, %s20, 3
        %p252 = scmp.lt.s32.totalorder %s19, 1
        %s253 = scalar_select %p252, %s19, 1
        %s254 = smul.addr %s253, 8
        %s255 = smul.addr %s251, 16
        %s256 = sadd.s32 %s254, %s255
        %s257 = smul.addr %s256, 8
        %s258 = scalar_lea.vmem %s1, %s257
      $region24: #{temporal_spectrum_block.9} parent=15 // pred_fallthru
        _
      // Predicated region
      $region25: #{temporal_spectrum_block.9} parent=15 // pred_check
        %p259 = pneg %p102
      $region26: #{temporal_spectrum_block.9} parent=15 // pred_check_branch
        %261 = sbr.rel (%p259) target = $region28
      $region27: #{temporal_spectrum_block.9} parent=15 // pred_region
        %p262 = scmp.lt.s32.totalorder %s20, 3
        %s263 = scalar_select %p262, %s20, 3
        %p264 = scmp.lt.s32.totalorder %s19, 1
        %s265 = scalar_select %p264, %s19, 1
        %s266 = smul.addr %s265, 8
        %s267 = smul.addr %s263, 16
        %s268 = sadd.s32 %s266, %s267
        %s269 = smul.addr %s268, 8
        %s270 = scalar_lea.vmem %s2, %s269
      $region28: #{temporal_spectrum_block.9} parent=15 // pred_fallthru
        _
      // Predicated region
      $region29: #{temporal_spectrum_block.9} parent=15 // pred_check
        %p271 = pneg %p130
      $region30: #{temporal_spectrum_block.9} parent=15 // pred_check_branch
        %273 = sbr.rel (%p271) target = $region32
      $region31: #{temporal_spectrum_block.9} parent=15 // pred_region
        %p274 = scmp.lt.s32.totalorder %s20, 3
        %s275 = scalar_select %p274, %s20, 3
        %p276 = scmp.lt.s32.totalorder %s19, 1
        %s277 = scalar_select %p276, %s19, 1
        %s278 = smul.addr %s277, 8
        %s279 = smul.addr %s275, 16
        %s280 = sadd.s32 %s278, %s279
        %s281 = smul.addr %s280, 8
        %s282 = scalar_lea.vmem %s3, %s281
      $region32: #{temporal_spectrum_block.9} parent=15 // pred_fallthru
        _
      // Predicated region
      $region33: #{temporal_spectrum_block.9} parent=15 // pred_check
        %p283 = pneg %p156
      $region34: #{temporal_spectrum_block.9} parent=15 // pred_check_branch
        %285 = sbr.rel (%p283) target = $region36
      $region35: #{temporal_spectrum_block.9} parent=15 // pred_region
        %p286 = scmp.lt.s32.totalorder %s20, 3
        %s287 = scalar_select %p286, %s20, 3
        %s288 = smul.addr %s287, 2
        %s289 = smul.addr %s288, 8
        %s290 = scalar_lea.vmem %s4, %s289
      $region36: #{temporal_spectrum_block.9} parent=15 // pred_fallthru
        _
      // Predicated region
      $region37: #{temporal_spectrum_block.9} parent=15 // pred_check
        %p291 = pneg %p182
      $region38: #{temporal_spectrum_block.9} parent=15 // pred_check_branch
        %293 = sbr.rel (%p291) target = $region40
      $region39: #{temporal_spectrum_block.9} parent=15 // pred_region
        %p294 = scmp.lt.s32.totalorder %s20, 3
        %s295 = scalar_select %p294, %s20, 3
        %s296 = scalar_lea.vmem %s5, %s295
      $region40: #{temporal_spectrum_block.9} parent=15 // pred_fallthru
        _
    $region16: #{temporal_spectrum_block.9} parent=5 // pred_fallthru
      _
    %p297 = scmp.le.s32.totalorder 1, %s12
    %p298 = scmp.lt.s32.totalorder %s12, 5
    %p299 = pnand %p297, %p298
    %p300 = pneg %p299
    // Predicated region
    $region41: #{temporal_spectrum_block.9} parent=5 // pred_check
      _
    $region42: #{temporal_spectrum_block.9} parent=5 // pred_check_branch
      %302 = sbr.rel (%p299) target = $region44
    $region43: #{temporal_spectrum_block.9} parent=5 // pred_region
      %s303 = ssub.s32 %s12, 1
      %p304 = scmp.lt.s32.totalorder %s22, 1
      %s305 = scalar_select %p304, %s22, 1
      %p306 = scmp.lt.s32.totalorder %s21, 1
      %s307 = scalar_select %p306, %s21, 1
      %s308 = smul.addr %s307, 8
      %s309 = smul.addr %s305, 16
      %s310 = sadd.s32 %s308, %s309
      %s311 = smul.addr %s310, 8
      %s312 = scalar_lea.vmem %s0, %s311
      %p313 = pneg %p52
      %p314 = pneg %p49
      %p315 = scmp.lt.s32.totalorder %s22, 3
      %s316 = scalar_select %p315, %s22, 3
      %p317 = scmp.lt.s32.totalorder %s21, 1
      %s318 = scalar_select %p317, %s21, 1
      %s319 = smul.addr %s318, 8
      %s320 = smul.addr %s316, 16
      %s321 = sadd.s32 %s319, %s320
      %s322 = smul.addr %s321, 8
      %s323 = scalar_lea.vmem %s1, %s322
      %p324 = pneg %p80
      %p325 = pneg %p77
      %p326 = scmp.lt.s32.totalorder %s22, 3
      %s327 = scalar_select %p326, %s22, 3
      %p328 = scmp.lt.s32.totalorder %s21, 1
      %s329 = scalar_select %p328, %s21, 1
      %s330 = smul.addr %s329, 8
      %s331 = smul.addr %s327, 16
      %s332 = sadd.s32 %s330, %s331
      %s333 = smul.addr %s332, 8
      %s334 = scalar_lea.vmem %s2, %s333
      %p335 = pneg %p108
      %p336 = pneg %p105
      %p337 = scmp.lt.s32.totalorder %s22, 3
      %s338 = scalar_select %p337, %s22, 3
      %p339 = scmp.lt.s32.totalorder %s21, 1
      %s340 = scalar_select %p339, %s21, 1
      %s341 = smul.addr %s340, 8
      %s342 = smul.addr %s338, 16
      %s343 = sadd.s32 %s341, %s342
      %s344 = smul.addr %s343, 8
      %s345 = scalar_lea.vmem %s3, %s344
      %p346 = pneg %p136
      %p347 = pneg %p133
      %p348 = scmp.lt.s32.totalorder %s22, 3
      %s349 = scalar_select %p348, %s22, 3
      %s350 = smul.addr %s349, 2
      %s351 = smul.addr %s350, 8
      %s352 = scalar_lea.vmem %s4, %s351
      %p353 = pneg %p162
      %p354 = pneg %p159
      %p355 = scmp.lt.s32.totalorder %s22, 3
      %s356 = scalar_select %p355, %s22, 3
      %s357 = scalar_lea.vmem %s5, %s356
      %p358 = pneg %p188
      %p359 = pneg %p185
      %p360 = pneg %p216
      %p361 = pneg %p213
      %p362 = scmp.lt.s32.totalorder %s21, 1
      %s363 = scalar_select %p362, %s21, 1
      %p364 = scmp.lt.s32.totalorder %s22, 1
      %s365 = scalar_select %p364, %s22, 1
      %s366 = smul.addr %s365, 8
      %s367 = smul.addr %s363, 16
      %s368 = sadd.s32 %s366, %s367
      %s369 = smul.addr %s368, 8
      %s370 = scalar_lea.vmem %s6, %s369
      %p371 = scmp.lt.s32.totalorder %s22, 1
      %s372 = scalar_select %p371, %s22, 1
      %p373 = scmp.lt.s32.totalorder %s21, 1
      %s374 = scalar_select %p373, %s21, 1
      %s375 = smul.addr %s374, 8
      %s376 = smul.addr %s372, 16
      %s377 = sadd.s32 %s375, %s376
      %s378 = smul.addr %s377, 8
      %s379 = scalar_lea.vmem %s0, %s378
      %p380 = scmp.lt.s32.totalorder %s22, 3
      %s381 = scalar_select %p380, %s22, 3
      %p382 = scmp.lt.s32.totalorder %s21, 1
      %s383 = scalar_select %p382, %s21, 1
      %s384 = smul.addr %s383, 8
      %s385 = smul.addr %s381, 16
      %s386 = sadd.s32 %s384, %s385
      %s387 = smul.addr %s386, 8
      %s388 = scalar_lea.vmem %s1, %s387
      %p389 = scmp.lt.s32.totalorder %s22, 3
      %s390 = scalar_select %p389, %s22, 3
      %p391 = scmp.lt.s32.totalorder %s21, 1
      %s392 = scalar_select %p391, %s21, 1
      %s393 = smul.addr %s392, 8
      %s394 = smul.addr %s390, 16
      %s395 = sadd.s32 %s393, %s394
      %s396 = smul.addr %s395, 8
      %s397 = scalar_lea.vmem %s2, %s396
      %p398 = scmp.lt.s32.totalorder %s22, 3
      %s399 = scalar_select %p398, %s22, 3
      %p400 = scmp.lt.s32.totalorder %s21, 1
      %s401 = scalar_select %p400, %s21, 1
      %s402 = smul.addr %s401, 8
      %s403 = smul.addr %s399, 16
      %s404 = sadd.s32 %s402, %s403
      %s405 = smul.addr %s404, 8
      %s406 = scalar_lea.vmem %s3, %s405
      %p407 = scmp.lt.s32.totalorder %s22, 3
      %s408 = scalar_select %p407, %s22, 3
      %s409 = smul.addr %s408, 2
      %s410 = smul.addr %s409, 8
      %s411 = scalar_lea.vmem %s4, %s410
      %p412 = scmp.lt.s32.totalorder %s22, 3
      %s413 = scalar_select %p412, %s22, 3
      %s414 = scalar_lea.vmem %s5, %s413
      %p415 = scmp.lt.s32.totalorder %s21, 1
      %s416 = scalar_select %p415, %s21, 1
      %p417 = scmp.lt.s32.totalorder %s22, 1
      %s418 = scalar_select %p417, %s22, 1
      %s419 = smul.addr %s418, 8
      %s420 = smul.addr %s416, 16
      %s421 = sadd.s32 %s419, %s420
      %s422 = smul.addr %s421, 8
      %s423 = scalar_lea.vmem %s6, %s422
      %v424 = vld [vmem:[%s411] sm:$0xff]
      %v425 = vld [vmem:[%s411 + $0x8] sm:$0xff]
      %v426 = vld [vmem:[%s414] sm:$0x1]
      %v427 = vlaneseq
      %v428 = vshrl.u32 %v427, 7
      %v429 = vadd.s32 %v428, 8
      %v430 = vlaneseq
      %v431 = vand.u32 %v430, 127
      %vm432 = vcmp.eq.s32.totalorder %v428, %v431
      %vm433 = vcmp.eq.s32.totalorder %v429, %v431
      %v434 = vsel %vm432, 1, 0
      %v435 = vsel %vm433, 1, 0
      %v436 = vcvt.s32.f32 %v434
      %v437 = vcvt.s32.f32 %v435
      loop: start=0, step=1, limit=8
      $region45: #{temporal_spectrum_block.9} parent=43 // loop_pre_header
        _
      $region46: #{temporal_spectrum_block.9} parent=43 // loop_header
        %s439 = sphi 0, %s443
        %p440 = scmp.ge.s32.totalorder %s439, 8
        %v444 = vphi 0.0, %v1285
        %v445 = vphi 0.0, %v1286
      $region47: #{temporal_spectrum_block.9} parent=43 // loop_header_branch
        %442 = sbr.rel (%p440) target = $region51
      $region48: #{temporal_spectrum_block.9} parent=43 // loop_body
        %s446 = smul.u32 %s439, 8
        %s447 = scalar_lea.vmem %s379, %s446
        %v448 = vld [vmem:[%s447] sm:$0xff]
        %s449 = scalar_lea.vmem %s388, %s446
        %v450 = vld [vmem:[%s449] sm:$0xff]
        %s451 = scalar_lea.vmem %s397, %s446
        %v452 = vld [vmem:[%s451] sm:$0xff]
        %s453 = scalar_lea.vmem %s406, %s446
        %v454 = vld [vmem:[%s453] sm:$0xff]
        %v455 = vmax.f32 %v450, 0.0
        %v456 = vand.u32 2147483647, %v450
        %v457 = vsub.f32 0.0, %v456
        %v458 = vmul.f32 %v457, 1.442695
        %v459 = vpow.pop %v458
        %v460 = vadd.f32 %v459, 1.0
        %v461 = vlog2.pop %v460
        %v462 = vmul.f32 %v461, 0.6931472
        %v463 = vadd.f32 %v455, %v462
        %v464 = vmul.f32 %v463, %v448
        %vm465 = vcmask 130048
        %v467 = vsel %vm465, %v436, 0
        %v470 = vsel %vm465, %v437, 0
        %v473 = vsel %vm465, %v452, 0
        %475 = vmatprep.subr.mxu0 0.0
        %476 = vmatpush1.xpose.msra.mxu0 0.0
        %477 = vmatprep.subr.mxu0 0.0
        %478 = vmatpush1.xpose.msra.mxu0 0.0
        %479 = vmatprep.subr.mxu0 0.0
        %480 = vmatpush1.xpose.msra.mxu0 0.0
        %481 = vmatprep.subr.mxu0 0.0
        %482 = vmatpush1.xpose.msra.mxu0 0.0
        %483 = vmatprep.subr.mxu0 0.0
        %484 = vmatpush1.xpose.msra.mxu0 0.0
        %485 = vmatprep.subr.mxu0 0.0
        %486 = vmatpush1.xpose.msra.mxu0 0.0
        %487 = vmatprep.subr.mxu0 0.0
        %488 = vmatpush1.xpose.msra.mxu0 0.0
        %489 = vmatprep.subr.mxu0 0.0
        %490 = vmatpush1.xpose.msra.mxu0 0.0
        %491 = vmatprep.subr.mxu0 0.0
        %492 = vmatpush1.xpose.msra.mxu0 0.0
        %493 = vmatprep.subr.mxu0 0.0
        %494 = vmatpush1.xpose.msra.mxu0 0.0
        %495 = vmatprep.subr.mxu0 0.0
        %496 = vmatpush1.xpose.msra.mxu0 0.0
        %497 = vmatprep.subr.mxu0 0.0
        %498 = vmatpush1.xpose.msra.mxu0 0.0
        %499 = vmatprep.subr.mxu0 0.0
        %500 = vmatpush1.xpose.msra.mxu0 0.0
        %501 = vmatprep.subr.mxu0 0.0
        %502 = vmatpush1.xpose.msra.mxu0 0.0
        %503 = vmatprep.subr.mxu0 0.0
        %504 = vmatpush1.xpose.msra.mxu0 0.0
        %505 = vmatprep.subr.mxu0 0.0
        %506 = vmatpush1.xpose.msra.mxu0 %v473
        %507 = vmatprep.subr.mxu0 0.0
        %508 = vmatpush2.xpose.msra.mxu0 0.0
        %509 = vmatprep.subr.mxu0 0.0
        %510 = vmatpush2.xpose.msra.mxu0 0.0
        %511 = vmatprep.subr.mxu0 0.0
        %512 = vmatpush2.xpose.msra.mxu0 0.0
        %513 = vmatprep.subr.mxu0 0.0
        %514 = vmatpush2.xpose.msra.mxu0 0.0
        %515 = vmatprep.subr.mxu0 0.0
        %516 = vmatpush2.xpose.msra.mxu0 0.0
        %517 = vmatprep.subr.mxu0 0.0
        %518 = vmatpush2.xpose.msra.mxu0 0.0
        %519 = vmatprep.subr.mxu0 0.0
        %520 = vmatpush2.xpose.msra.mxu0 0.0
        %521 = vmatprep.subr.mxu0 0.0
        %522 = vmatpush2.xpose.msra.mxu0 0.0
        %523 = vmatprep.subr.mxu0 0.0
        %524 = vmatpush2.xpose.msra.mxu0 0.0
        %525 = vmatprep.subr.mxu0 0.0
        %526 = vmatpush2.xpose.msra.mxu0 0.0
        %527 = vmatprep.subr.mxu0 0.0
        %528 = vmatpush2.xpose.msra.mxu0 0.0
        %529 = vmatprep.subr.mxu0 0.0
        %530 = vmatpush2.xpose.msra.mxu0 0.0
        %531 = vmatprep.subr.mxu0 0.0
        %532 = vmatpush2.xpose.msra.mxu0 0.0
        %533 = vmatprep.subr.mxu0 0.0
        %534 = vmatpush2.xpose.msra.mxu0 0.0
        %535 = vmatprep.subr.mxu0 0.0
        %536 = vmatpush2.xpose.msra.mxu0 0.0
        %537 = vmatprep.subr.mxu0 0.0
        %538 = vmatpush2.xpose.msra.mxu0 0.0
        %539 = vmatprep.mubr.f32.mxu0 0.0
        %540 = vmatmul.mubr.f32.gmra.mxu0 %v467
        %v541 = vpop.f32.mrf.mxu0
        %v542 = vadd.f32 0.0, %v541
        %v543 = vpop.f32.mrf.mxu0
        %544 = vmatprep.mubr.f32.mxu0 0.0
        %545 = vmatmul.mubr.f32.gmra.mxu0 %v470
        %v546 = vpop.f32.mrf.mxu0
        %v547 = vadd.f32 0.0, %v546
        %v548 = vpop.f32.mrf.mxu0
        %549 = vdwg.mxu0
        %v550 = vlaneseq
        %v551 = vshrl.u32 %v550, 7
        %v552 = vsub.s32 0, %v551
        %v553 = vrot.slane %v463, %v552
        %v554 = vmul.f32 %v553, %v424
        %v555 = vmul.f32 %v553, %v425
        %v556 = vmul.f32 %v554, 1.442695
        %v557 = vpow.pop %v556
        %v558 = vmul.f32 %v555, 1.442695
        %v559 = vpow.pop %v558
        %v560 = vmul.f32 %v557, %v444
        %v561 = vmul.f32 %v559, %v445
        %563 = vset.pattern.permute.xlu0 0
        %564 = vperm.xlu0 %563, %v542
        %v565 = vpop.permute.xlu0 %564
        %568 = vset.pattern.permute.xlu0 0
        %569 = vperm.xlu0 %568, %v547
        %v570 = vpop.permute.xlu0 %569
        %v572 = vlaneseq
        %v573 = vshrl.u32 %v572, 7
        %v574 = vsub.s32 0, %v573
        %v575 = vrot.slane %v464, %v574
        %v576 = vmul.f32 %v565, %v575
        %v577 = vmul.f32 %v570, %v575
        %v578 = vadd.f32 %v560, %v576
        %v579 = vadd.f32 %v561, %v577
        %v581 = vsel %vm465, %v454, 0
        %583 = vmatprep.subr.mxu0 0.0
        %584 = vmatpush1.msra.mxu0 0.0
        %585 = vmatprep.subr.mxu0 0.0
        %586 = vmatpush1.msra.mxu0 0.0
        %587 = vmatprep.subr.mxu0 0.0
        %588 = vmatpush1.msra.mxu0 0.0
        %589 = vmatprep.subr.mxu0 0.0
        %590 = vmatpush1.msra.mxu0 0.0
        %591 = vmatprep.subr.mxu0 0.0
        %592 = vmatpush1.msra.mxu0 0.0
        %593 = vmatprep.subr.mxu0 0.0
        %594 = vmatpush1.msra.mxu0 0.0
        %595 = vmatprep.subr.mxu0 0.0
        %596 = vmatpush1.msra.mxu0 0.0
        %597 = vmatprep.subr.mxu0 0.0
        %598 = vmatpush1.msra.mxu0 0.0
        %599 = vmatprep.subr.mxu0 0.0
        %600 = vmatpush1.msra.mxu0 0.0
        %601 = vmatprep.subr.mxu0 0.0
        %602 = vmatpush1.msra.mxu0 0.0
        %603 = vmatprep.subr.mxu0 0.0
        %604 = vmatpush1.msra.mxu0 0.0
        %605 = vmatprep.subr.mxu0 0.0
        %606 = vmatpush1.msra.mxu0 0.0
        %607 = vmatprep.subr.mxu0 0.0
        %608 = vmatpush1.msra.mxu0 0.0
        %609 = vmatprep.subr.mxu0 0.0
        %610 = vmatpush1.msra.mxu0 0.0
        %611 = vmatprep.subr.mxu0 0.0
        %612 = vmatpush1.msra.mxu0 %v579
        %613 = vmatprep.subr.mxu0 0.0
        %614 = vmatpush1.msra.mxu0 %v578
        %615 = vmatprep.subr.mxu0 0.0
        %616 = vmatpush2.msra.mxu0 0.0
        %617 = vmatprep.subr.mxu0 0.0
        %618 = vmatpush2.msra.mxu0 0.0
        %619 = vmatprep.subr.mxu0 0.0
        %620 = vmatpush2.msra.mxu0 0.0
        %621 = vmatprep.subr.mxu0 0.0
        %622 = vmatpush2.msra.mxu0 0.0
        %623 = vmatprep.subr.mxu0 0.0
        %624 = vmatpush2.msra.mxu0 0.0
        %625 = vmatprep.subr.mxu0 0.0
        %626 = vmatpush2.msra.mxu0 0.0
        %627 = vmatprep.subr.mxu0 0.0
        %628 = vmatpush2.msra.mxu0 0.0
        %629 = vmatprep.subr.mxu0 0.0
        %630 = vmatpush2.msra.mxu0 0.0
        %631 = vmatprep.subr.mxu0 0.0
        %632 = vmatpush2.msra.mxu0 0.0
        %633 = vmatprep.subr.mxu0 0.0
        %634 = vmatpush2.msra.mxu0 0.0
        %635 = vmatprep.subr.mxu0 0.0
        %636 = vmatpush2.msra.mxu0 0.0
        %637 = vmatprep.subr.mxu0 0.0
        %638 = vmatpush2.msra.mxu0 0.0
        %639 = vmatprep.subr.mxu0 0.0
        %640 = vmatpush2.msra.mxu0 0.0
        %641 = vmatprep.subr.mxu0 0.0
        %642 = vmatpush2.msra.mxu0 0.0
        %643 = vmatprep.subr.mxu0 0.0
        %644 = vmatpush2.msra.mxu0 0.0
        %645 = vmatprep.subr.mxu0 0.0
        %646 = vmatpush2.msra.mxu0 0.0
        %647 = vmatprep.mubr.f32.mxu0 0.0
        %648 = vmatmul.mubr.f32.gmra.mxu0 %v581
        %v649 = vpop.f32.mrf.mxu0
        %v650 = vadd.f32 0.0, %v649
        %v651 = vpop.f32.mrf.mxu0
        %652 = vdwg.mxu0
        %v653 = vlaneseq
        %v654 = vshrl.u32 %v653, 7
        %v655 = vsub.s32 1, %v654
        %v656 = vrot.slane %v463, %v655
        %v657 = vmul.f32 %v656, %v424
        %v658 = vmul.f32 %v656, %v425
        %v659 = vmul.f32 %v657, 1.442695
        %v660 = vpow.pop %v659
        %v661 = vmul.f32 %v658, 1.442695
        %v662 = vpow.pop %v661
        %v663 = vmul.f32 %v660, %v578
        %v664 = vmul.f32 %v662, %v579
        %665 = vset.pattern.permute.xlu0 1
        %666 = vperm.xlu0 %665, %v542
        %v667 = vpop.permute.xlu0 %666
        %669 = vset.pattern.permute.xlu0 1
        %670 = vperm.xlu0 %669, %v547
        %v671 = vpop.permute.xlu0 %670
        %v673 = vlaneseq
        %v674 = vshrl.u32 %v673, 7
        %v675 = vsub.s32 1, %v674
        %v676 = vrot.slane %v464, %v675
        %v677 = vmul.f32 %v667, %v676
        %v678 = vmul.f32 %v671, %v676
        %v679 = vadd.f32 %v663, %v677
        %v680 = vadd.f32 %v664, %v678
        %v681 = vrot.slane %v454, 1
        %v682 = vsel %vm465, %v681, 0
        %684 = vmatprep.subr.mxu0 0.0
        %685 = vmatpush1.msra.mxu0 0.0
        %686 = vmatprep.subr.mxu0 0.0
        %687 = vmatpush1.msra.mxu0 0.0
        %688 = vmatprep.subr.mxu0 0.0
        %689 = vmatpush1.msra.mxu0 0.0
        %690 = vmatprep.subr.mxu0 0.0
        %691 = vmatpush1.msra.mxu0 0.0
        %692 = vmatprep.subr.mxu0 0.0
        %693 = vmatpush1.msra.mxu0 0.0
        %694 = vmatprep.subr.mxu0 0.0
        %695 = vmatpush1.msra.mxu0 0.0
        %696 = vmatprep.subr.mxu0 0.0
        %697 = vmatpush1.msra.mxu0 0.0
        %698 = vmatprep.subr.mxu0 0.0
        %699 = vmatpush1.msra.mxu0 0.0
        %700 = vmatprep.subr.mxu0 0.0
        %701 = vmatpush1.msra.mxu0 0.0
        %702 = vmatprep.subr.mxu0 0.0
        %703 = vmatpush1.msra.mxu0 0.0
        %704 = vmatprep.subr.mxu0 0.0
        %705 = vmatpush1.msra.mxu0 0.0
        %706 = vmatprep.subr.mxu0 0.0
        %707 = vmatpush1.msra.mxu0 0.0
        %708 = vmatprep.subr.mxu0 0.0
        %709 = vmatpush1.msra.mxu0 0.0
        %710 = vmatprep.subr.mxu0 0.0
        %711 = vmatpush1.msra.mxu0 0.0
        %712 = vmatprep.subr.mxu0 0.0
        %713 = vmatpush1.msra.mxu0 %v680
        %714 = vmatprep.subr.mxu0 0.0
        %715 = vmatpush1.msra.mxu0 %v679
        %716 = vmatprep.subr.mxu0 0.0
        %717 = vmatpush2.msra.mxu0 0.0
        %718 = vmatprep.subr.mxu0 0.0
        %719 = vmatpush2.msra.mxu0 0.0
        %720 = vmatprep.subr.mxu0 0.0
        %721 = vmatpush2.msra.mxu0 0.0
        %722 = vmatprep.subr.mxu0 0.0
        %723 = vmatpush2.msra.mxu0 0.0
        %724 = vmatprep.subr.mxu0 0.0
        %725 = vmatpush2.msra.mxu0 0.0
        %726 = vmatprep.subr.mxu0 0.0
        %727 = vmatpush2.msra.mxu0 0.0
        %728 = vmatprep.subr.mxu0 0.0
        %729 = vmatpush2.msra.mxu0 0.0
        %730 = vmatprep.subr.mxu0 0.0
        %731 = vmatpush2.msra.mxu0 0.0
        %732 = vmatprep.subr.mxu0 0.0
        %733 = vmatpush2.msra.mxu0 0.0
        %734 = vmatprep.subr.mxu0 0.0
        %735 = vmatpush2.msra.mxu0 0.0
        %736 = vmatprep.subr.mxu0 0.0
        %737 = vmatpush2.msra.mxu0 0.0
        %738 = vmatprep.subr.mxu0 0.0
        %739 = vmatpush2.msra.mxu0 0.0
        %740 = vmatprep.subr.mxu0 0.0
        %741 = vmatpush2.msra.mxu0 0.0
        %742 = vmatprep.subr.mxu0 0.0
        %743 = vmatpush2.msra.mxu0 0.0
        %744 = vmatprep.subr.mxu0 0.0
        %745 = vmatpush2.msra.mxu0 0.0
        %746 = vmatprep.subr.mxu0 0.0
        %747 = vmatpush2.msra.mxu0 0.0
        %748 = vmatprep.mubr.f32.mxu0 0.0
        %749 = vmatmul.mubr.f32.gmra.mxu0 %v682
        %v750 = vpop.f32.mrf.mxu0
        %v751 = vadd.f32 0.0, %v750
        %v752 = vpop.f32.mrf.mxu0
        %753 = vdwg.mxu0
        %v754 = vlaneseq
        %v755 = vshrl.u32 %v754, 7
        %v756 = vsub.s32 2, %v755
        %v757 = vrot.slane %v463, %v756
        %v758 = vmul.f32 %v757, %v424
        %v759 = vmul.f32 %v757, %v425
        %v760 = vmul.f32 %v758, 1.442695
        %v761 = vpow.pop %v760
        %v762 = vmul.f32 %v759, 1.442695
        %v763 = vpow.pop %v762
        %v764 = vmul.f32 %v761, %v679
        %v765 = vmul.f32 %v763, %v680
        %766 = vset.pattern.permute.xlu0 2
        %767 = vperm.xlu0 %766, %v542
        %v768 = vpop.permute.xlu0 %767
        %770 = vset.pattern.permute.xlu0 2
        %771 = vperm.xlu0 %770, %v547
        %v772 = vpop.permute.xlu0 %771
        %v774 = vlaneseq
        %v775 = vshrl.u32 %v774, 7
        %v776 = vsub.s32 2, %v775
        %v777 = vrot.slane %v464, %v776
        %v778 = vmul.f32 %v768, %v777
        %v779 = vmul.f32 %v772, %v777
        %v780 = vadd.f32 %v764, %v778
        %v781 = vadd.f32 %v765, %v779
        %v782 = vrot.slane %v454, 2
        %v783 = vsel %vm465, %v782, 0
        %785 = vmatprep.subr.mxu0 0.0
        %786 = vmatpush1.msra.mxu0 0.0
        %787 = vmatprep.subr.mxu0 0.0
        %788 = vmatpush1.msra.mxu0 0.0
        %789 = vmatprep.subr.mxu0 0.0
        %790 = vmatpush1.msra.mxu0 0.0
        %791 = vmatprep.subr.mxu0 0.0
        %792 = vmatpush1.msra.mxu0 0.0
        %793 = vmatprep.subr.mxu0 0.0
        %794 = vmatpush1.msra.mxu0 0.0
        %795 = vmatprep.subr.mxu0 0.0
        %796 = vmatpush1.msra.mxu0 0.0
        %797 = vmatprep.subr.mxu0 0.0
        %798 = vmatpush1.msra.mxu0 0.0
        %799 = vmatprep.subr.mxu0 0.0
        %800 = vmatpush1.msra.mxu0 0.0
        %801 = vmatprep.subr.mxu0 0.0
        %802 = vmatpush1.msra.mxu0 0.0
        %803 = vmatprep.subr.mxu0 0.0
        %804 = vmatpush1.msra.mxu0 0.0
        %805 = vmatprep.subr.mxu0 0.0
        %806 = vmatpush1.msra.mxu0 0.0
        %807 = vmatprep.subr.mxu0 0.0
        %808 = vmatpush1.msra.mxu0 0.0
        %809 = vmatprep.subr.mxu0 0.0
        %810 = vmatpush1.msra.mxu0 0.0
        %811 = vmatprep.subr.mxu0 0.0
        %812 = vmatpush1.msra.mxu0 0.0
        %813 = vmatprep.subr.mxu0 0.0
        %814 = vmatpush1.msra.mxu0 %v781
        %815 = vmatprep.subr.mxu0 0.0
        %816 = vmatpush1.msra.mxu0 %v780
        %817 = vmatprep.subr.mxu0 0.0
        %818 = vmatpush2.msra.mxu0 0.0
        %819 = vmatprep.subr.mxu0 0.0
        %820 = vmatpush2.msra.mxu0 0.0
        %821 = vmatprep.subr.mxu0 0.0
        %822 = vmatpush2.msra.mxu0 0.0
        %823 = vmatprep.subr.mxu0 0.0
        %824 = vmatpush2.msra.mxu0 0.0
        %825 = vmatprep.subr.mxu0 0.0
        %826 = vmatpush2.msra.mxu0 0.0
        %827 = vmatprep.subr.mxu0 0.0
        %828 = vmatpush2.msra.mxu0 0.0
        %829 = vmatprep.subr.mxu0 0.0
        %830 = vmatpush2.msra.mxu0 0.0
        %831 = vmatprep.subr.mxu0 0.0
        %832 = vmatpush2.msra.mxu0 0.0
        %833 = vmatprep.subr.mxu0 0.0
        %834 = vmatpush2.msra.mxu0 0.0
        %835 = vmatprep.subr.mxu0 0.0
        %836 = vmatpush2.msra.mxu0 0.0
        %837 = vmatprep.subr.mxu0 0.0
        %838 = vmatpush2.msra.mxu0 0.0
        %839 = vmatprep.subr.mxu0 0.0
        %840 = vmatpush2.msra.mxu0 0.0
        %841 = vmatprep.subr.mxu0 0.0
        %842 = vmatpush2.msra.mxu0 0.0
        %843 = vmatprep.subr.mxu0 0.0
        %844 = vmatpush2.msra.mxu0 0.0
        %845 = vmatprep.subr.mxu0 0.0
        %846 = vmatpush2.msra.mxu0 0.0
        %847 = vmatprep.subr.mxu0 0.0
        %848 = vmatpush2.msra.mxu0 0.0
        %849 = vmatprep.mubr.f32.mxu0 0.0
        %850 = vmatmul.mubr.f32.gmra.mxu0 %v783
        %v851 = vpop.f32.mrf.mxu0
        %v852 = vadd.f32 0.0, %v851
        %v853 = vpop.f32.mrf.mxu0
        %854 = vdwg.mxu0
        %v855 = vlaneseq
        %v856 = vshrl.u32 %v855, 7
        %v857 = vsub.s32 3, %v856
        %v858 = vrot.slane %v463, %v857
        %v859 = vmul.f32 %v858, %v424
        %v860 = vmul.f32 %v858, %v425
        %v861 = vmul.f32 %v859, 1.442695
        %v862 = vpow.pop %v861
        %v863 = vmul.f32 %v860, 1.442695
        %v864 = vpow.pop %v863
        %v865 = vmul.f32 %v862, %v780
        %v866 = vmul.f32 %v864, %v781
        %867 = vset.pattern.permute.xlu0 3
        %868 = vperm.xlu0 %867, %v542
        %v869 = vpop.permute.xlu0 %868
        %871 = vset.pattern.permute.xlu0 3
        %872 = vperm.xlu0 %871, %v547
        %v873 = vpop.permute.xlu0 %872
        %v875 = vlaneseq
        %v876 = vshrl.u32 %v875, 7
        %v877 = vsub.s32 3, %v876
        %v878 = vrot.slane %v464, %v877
        %v879 = vmul.f32 %v869, %v878
        %v880 = vmul.f32 %v873, %v878
        %v881 = vadd.f32 %v865, %v879
        %v882 = vadd.f32 %v866, %v880
        %v883 = vrot.slane %v454, 3
        %v884 = vsel %vm465, %v883, 0
        %886 = vmatprep.subr.mxu0 0.0
        %887 = vmatpush1.msra.mxu0 0.0
        %888 = vmatprep.subr.mxu0 0.0
        %889 = vmatpush1.msra.mxu0 0.0
        %890 = vmatprep.subr.mxu0 0.0
        %891 = vmatpush1.msra.mxu0 0.0
        %892 = vmatprep.subr.mxu0 0.0
        %893 = vmatpush1.msra.mxu0 0.0
        %894 = vmatprep.subr.mxu0 0.0
        %895 = vmatpush1.msra.mxu0 0.0
        %896 = vmatprep.subr.mxu0 0.0
        %897 = vmatpush1.msra.mxu0 0.0
        %898 = vmatprep.subr.mxu0 0.0
        %899 = vmatpush1.msra.mxu0 0.0
        %900 = vmatprep.subr.mxu0 0.0
        %901 = vmatpush1.msra.mxu0 0.0
        %902 = vmatprep.subr.mxu0 0.0
        %903 = vmatpush1.msra.mxu0 0.0
        %904 = vmatprep.subr.mxu0 0.0
        %905 = vmatpush1.msra.mxu0 0.0
        %906 = vmatprep.subr.mxu0 0.0
        %907 = vmatpush1.msra.mxu0 0.0
        %908 = vmatprep.subr.mxu0 0.0
        %909 = vmatpush1.msra.mxu0 0.0
        %910 = vmatprep.subr.mxu0 0.0
        %911 = vmatpush1.msra.mxu0 0.0
        %912 = vmatprep.subr.mxu0 0.0
        %913 = vmatpush1.msra.mxu0 0.0
        %914 = vmatprep.subr.mxu0 0.0
        %915 = vmatpush1.msra.mxu0 %v882
        %916 = vmatprep.subr.mxu0 0.0
        %917 = vmatpush1.msra.mxu0 %v881
        %918 = vmatprep.subr.mxu0 0.0
        %919 = vmatpush2.msra.mxu0 0.0
        %920 = vmatprep.subr.mxu0 0.0
        %921 = vmatpush2.msra.mxu0 0.0
        %922 = vmatprep.subr.mxu0 0.0
        %923 = vmatpush2.msra.mxu0 0.0
        %924 = vmatprep.subr.mxu0 0.0
        %925 = vmatpush2.msra.mxu0 0.0
        %926 = vmatprep.subr.mxu0 0.0
        %927 = vmatpush2.msra.mxu0 0.0
        %928 = vmatprep.subr.mxu0 0.0
        %929 = vmatpush2.msra.mxu0 0.0
        %930 = vmatprep.subr.mxu0 0.0
        %931 = vmatpush2.msra.mxu0 0.0
        %932 = vmatprep.subr.mxu0 0.0
        %933 = vmatpush2.msra.mxu0 0.0
        %934 = vmatprep.subr.mxu0 0.0
        %935 = vmatpush2.msra.mxu0 0.0
        %936 = vmatprep.subr.mxu0 0.0
        %937 = vmatpush2.msra.mxu0 0.0
        %938 = vmatprep.subr.mxu0 0.0
        %939 = vmatpush2.msra.mxu0 0.0
        %940 = vmatprep.subr.mxu0 0.0
        %941 = vmatpush2.msra.mxu0 0.0
        %942 = vmatprep.subr.mxu0 0.0
        %943 = vmatpush2.msra.mxu0 0.0
        %944 = vmatprep.subr.mxu0 0.0
        %945 = vmatpush2.msra.mxu0 0.0
        %946 = vmatprep.subr.mxu0 0.0
        %947 = vmatpush2.msra.mxu0 0.0
        %948 = vmatprep.subr.mxu0 0.0
        %949 = vmatpush2.msra.mxu0 0.0
        %950 = vmatprep.mubr.f32.mxu0 0.0
        %951 = vmatmul.mubr.f32.gmra.mxu0 %v884
        %v952 = vpop.f32.mrf.mxu0
        %v953 = vadd.f32 0.0, %v952
        %v954 = vpop.f32.mrf.mxu0
        %955 = vdwg.mxu0
        %v956 = vlaneseq
        %v957 = vshrl.u32 %v956, 7
        %v958 = vsub.s32 4, %v957
        %v959 = vrot.slane %v463, %v958
        %v960 = vmul.f32 %v959, %v424
        %v961 = vmul.f32 %v959, %v425
        %v962 = vmul.f32 %v960, 1.442695
        %v963 = vpow.pop %v962
        %v964 = vmul.f32 %v961, 1.442695
        %v965 = vpow.pop %v964
        %v966 = vmul.f32 %v963, %v881
        %v967 = vmul.f32 %v965, %v882
        %968 = vset.pattern.permute.xlu0 4
        %969 = vperm.xlu0 %968, %v542
        %v970 = vpop.permute.xlu0 %969
        %972 = vset.pattern.permute.xlu0 4
        %973 = vperm.xlu0 %972, %v547
        %v974 = vpop.permute.xlu0 %973
        %v976 = vlaneseq
        %v977 = vshrl.u32 %v976, 7
        %v978 = vsub.s32 4, %v977
        %v979 = vrot.slane %v464, %v978
        %v980 = vmul.f32 %v970, %v979
        %v981 = vmul.f32 %v974, %v979
        %v982 = vadd.f32 %v966, %v980
        %v983 = vadd.f32 %v967, %v981
        %v984 = vrot.slane %v454, 4
        %v985 = vsel %vm465, %v984, 0
        %987 = vmatprep.subr.mxu0 0.0
        %988 = vmatpush1.msra.mxu0 0.0
        %989 = vmatprep.subr.mxu0 0.0
        %990 = vmatpush1.msra.mxu0 0.0
        %991 = vmatprep.subr.mxu0 0.0
        %992 = vmatpush1.msra.mxu0 0.0
        %993 = vmatprep.subr.mxu0 0.0
        %994 = vmatpush1.msra.mxu0 0.0
        %995 = vmatprep.subr.mxu0 0.0
        %996 = vmatpush1.msra.mxu0 0.0
        %997 = vmatprep.subr.mxu0 0.0
        %998 = vmatpush1.msra.mxu0 0.0
        %999 = vmatprep.subr.mxu0 0.0
        %1000 = vmatpush1.msra.mxu0 0.0
        %1001 = vmatprep.subr.mxu0 0.0
        %1002 = vmatpush1.msra.mxu0 0.0
        %1003 = vmatprep.subr.mxu0 0.0
        %1004 = vmatpush1.msra.mxu0 0.0
        %1005 = vmatprep.subr.mxu0 0.0
        %1006 = vmatpush1.msra.mxu0 0.0
        %1007 = vmatprep.subr.mxu0 0.0
        %1008 = vmatpush1.msra.mxu0 0.0
        %1009 = vmatprep.subr.mxu0 0.0
        %1010 = vmatpush1.msra.mxu0 0.0
        %1011 = vmatprep.subr.mxu0 0.0
        %1012 = vmatpush1.msra.mxu0 0.0
        %1013 = vmatprep.subr.mxu0 0.0
        %1014 = vmatpush1.msra.mxu0 0.0
        %1015 = vmatprep.subr.mxu0 0.0
        %1016 = vmatpush1.msra.mxu0 %v983
        %1017 = vmatprep.subr.mxu0 0.0
        %1018 = vmatpush1.msra.mxu0 %v982
        %1019 = vmatprep.subr.mxu0 0.0
        %1020 = vmatpush2.msra.mxu0 0.0
        %1021 = vmatprep.subr.mxu0 0.0
        %1022 = vmatpush2.msra.mxu0 0.0
        %1023 = vmatprep.subr.mxu0 0.0
        %1024 = vmatpush2.msra.mxu0 0.0
        %1025 = vmatprep.subr.mxu0 0.0
        %1026 = vmatpush2.msra.mxu0 0.0
        %1027 = vmatprep.subr.mxu0 0.0
        %1028 = vmatpush2.msra.mxu0 0.0
        %1029 = vmatprep.subr.mxu0 0.0
        %1030 = vmatpush2.msra.mxu0 0.0
        %1031 = vmatprep.subr.mxu0 0.0
        %1032 = vmatpush2.msra.mxu0 0.0
        %1033 = vmatprep.subr.mxu0 0.0
        %1034 = vmatpush2.msra.mxu0 0.0
        %1035 = vmatprep.subr.mxu0 0.0
        %1036 = vmatpush2.msra.mxu0 0.0
        %1037 = vmatprep.subr.mxu0 0.0
        %1038 = vmatpush2.msra.mxu0 0.0
        %1039 = vmatprep.subr.mxu0 0.0
        %1040 = vmatpush2.msra.mxu0 0.0
        %1041 = vmatprep.subr.mxu0 0.0
        %1042 = vmatpush2.msra.mxu0 0.0
        %1043 = vmatprep.subr.mxu0 0.0
        %1044 = vmatpush2.msra.mxu0 0.0
        %1045 = vmatprep.subr.mxu0 0.0
        %1046 = vmatpush2.msra.mxu0 0.0
        %1047 = vmatprep.subr.mxu0 0.0
        %1048 = vmatpush2.msra.mxu0 0.0
        %1049 = vmatprep.subr.mxu0 0.0
        %1050 = vmatpush2.msra.mxu0 0.0
        %1051 = vmatprep.mubr.f32.mxu0 0.0
        %1052 = vmatmul.mubr.f32.gmra.mxu0 %v985
        %v1053 = vpop.f32.mrf.mxu0
        %v1054 = vadd.f32 0.0, %v1053
        %v1055 = vpop.f32.mrf.mxu0
        %1056 = vdwg.mxu0
        %v1057 = vlaneseq
        %v1058 = vshrl.u32 %v1057, 7
        %v1059 = vsub.s32 5, %v1058
        %v1060 = vrot.slane %v463, %v1059
        %v1061 = vmul.f32 %v1060, %v424
        %v1062 = vmul.f32 %v1060, %v425
        %v1063 = vmul.f32 %v1061, 1.442695
        %v1064 = vpow.pop %v1063
        %v1065 = vmul.f32 %v1062, 1.442695
        %v1066 = vpow.pop %v1065
        %v1067 = vmul.f32 %v1064, %v982
        %v1068 = vmul.f32 %v1066, %v983
        %1069 = vset.pattern.permute.xlu0 5
        %1070 = vperm.xlu0 %1069, %v542
        %v1071 = vpop.permute.xlu0 %1070
        %1073 = vset.pattern.permute.xlu0 5
        %1074 = vperm.xlu0 %1073, %v547
        %v1075 = vpop.permute.xlu0 %1074
        %v1077 = vlaneseq
        %v1078 = vshrl.u32 %v1077, 7
        %v1079 = vsub.s32 5, %v1078
        %v1080 = vrot.slane %v464, %v1079
        %v1081 = vmul.f32 %v1071, %v1080
        %v1082 = vmul.f32 %v1075, %v1080
        %v1083 = vadd.f32 %v1067, %v1081
        %v1084 = vadd.f32 %v1068, %v1082
        %v1085 = vrot.slane %v454, 5
        %v1086 = vsel %vm465, %v1085, 0
        %1088 = vmatprep.subr.mxu0 0.0
        %1089 = vmatpush1.msra.mxu0 0.0
        %1090 = vmatprep.subr.mxu0 0.0
        %1091 = vmatpush1.msra.mxu0 0.0
        %1092 = vmatprep.subr.mxu0 0.0
        %1093 = vmatpush1.msra.mxu0 0.0
        %1094 = vmatprep.subr.mxu0 0.0
        %1095 = vmatpush1.msra.mxu0 0.0
        %1096 = vmatprep.subr.mxu0 0.0
        %1097 = vmatpush1.msra.mxu0 0.0
        %1098 = vmatprep.subr.mxu0 0.0
        %1099 = vmatpush1.msra.mxu0 0.0
        %1100 = vmatprep.subr.mxu0 0.0
        %1101 = vmatpush1.msra.mxu0 0.0
        %1102 = vmatprep.subr.mxu0 0.0
        %1103 = vmatpush1.msra.mxu0 0.0
        %1104 = vmatprep.subr.mxu0 0.0
        %1105 = vmatpush1.msra.mxu0 0.0
        %1106 = vmatprep.subr.mxu0 0.0
        %1107 = vmatpush1.msra.mxu0 0.0
        %1108 = vmatprep.subr.mxu0 0.0
        %1109 = vmatpush1.msra.mxu0 0.0
        %1110 = vmatprep.subr.mxu0 0.0
        %1111 = vmatpush1.msra.mxu0 0.0
        %1112 = vmatprep.subr.mxu0 0.0
        %1113 = vmatpush1.msra.mxu0 0.0
        %1114 = vmatprep.subr.mxu0 0.0
        %1115 = vmatpush1.msra.mxu0 0.0
        %1116 = vmatprep.subr.mxu0 0.0
        %1117 = vmatpush1.msra.mxu0 %v1084
        %1118 = vmatprep.subr.mxu0 0.0
        %1119 = vmatpush1.msra.mxu0 %v1083
        %1120 = vmatprep.subr.mxu0 0.0
        %1121 = vmatpush2.msra.mxu0 0.0
        %1122 = vmatprep.subr.mxu0 0.0
        %1123 = vmatpush2.msra.mxu0 0.0
        %1124 = vmatprep.subr.mxu0 0.0
        %1125 = vmatpush2.msra.mxu0 0.0
        %1126 = vmatprep.subr.mxu0 0.0
        %1127 = vmatpush2.msra.mxu0 0.0
        %1128 = vmatprep.subr.mxu0 0.0
        %1129 = vmatpush2.msra.mxu0 0.0
        %1130 = vmatprep.subr.mxu0 0.0
        %1131 = vmatpush2.msra.mxu0 0.0
        %1132 = vmatprep.subr.mxu0 0.0
        %1133 = vmatpush2.msra.mxu0 0.0
        %1134 = vmatprep.subr.mxu0 0.0
        %1135 = vmatpush2.msra.mxu0 0.0
        %1136 = vmatprep.subr.mxu0 0.0
        %1137 = vmatpush2.msra.mxu0 0.0
        %1138 = vmatprep.subr.mxu0 0.0
        %1139 = vmatpush2.msra.mxu0 0.0
        %1140 = vmatprep.subr.mxu0 0.0
        %1141 = vmatpush2.msra.mxu0 0.0
        %1142 = vmatprep.subr.mxu0 0.0
        %1143 = vmatpush2.msra.mxu0 0.0
        %1144 = vmatprep.subr.mxu0 0.0
        %1145 = vmatpush2.msra.mxu0 0.0
        %1146 = vmatprep.subr.mxu0 0.0
        %1147 = vmatpush2.msra.mxu0 0.0
        %1148 = vmatprep.subr.mxu0 0.0
        %1149 = vmatpush2.msra.mxu0 0.0
        %1150 = vmatprep.subr.mxu0 0.0
        %1151 = vmatpush2.msra.mxu0 0.0
        %1152 = vmatprep.mubr.f32.mxu0 0.0
        %1153 = vmatmul.mubr.f32.gmra.mxu0 %v1086
        %v1154 = vpop.f32.mrf.mxu0
        %v1155 = vadd.f32 0.0, %v1154
        %v1156 = vpop.f32.mrf.mxu0
        %1157 = vdwg.mxu0
        %v1158 = vlaneseq
        %v1159 = vshrl.u32 %v1158, 7
        %v1160 = vsub.s32 6, %v1159
        %v1161 = vrot.slane %v463, %v1160
        %v1162 = vmul.f32 %v1161, %v424
        %v1163 = vmul.f32 %v1161, %v425
        %v1164 = vmul.f32 %v1162, 1.442695
        %v1165 = vpow.pop %v1164
        %v1166 = vmul.f32 %v1163, 1.442695
        %v1167 = vpow.pop %v1166
        %v1168 = vmul.f32 %v1165, %v1083
        %v1169 = vmul.f32 %v1167, %v1084
        %1170 = vset.pattern.permute.xlu0 6
        %1171 = vperm.xlu0 %1170, %v542
        %v1172 = vpop.permute.xlu0 %1171
        %1174 = vset.pattern.permute.xlu0 6
        %1175 = vperm.xlu0 %1174, %v547
        %v1176 = vpop.permute.xlu0 %1175
        %v1178 = vlaneseq
        %v1179 = vshrl.u32 %v1178, 7
        %v1180 = vsub.s32 6, %v1179
        %v1181 = vrot.slane %v464, %v1180
        %v1182 = vmul.f32 %v1172, %v1181
        %v1183 = vmul.f32 %v1176, %v1181
        %v1184 = vadd.f32 %v1168, %v1182
        %v1185 = vadd.f32 %v1169, %v1183
        %v1186 = vrot.slane %v454, 6
        %v1187 = vsel %vm465, %v1186, 0
        %1189 = vmatprep.subr.mxu0 0.0
        %1190 = vmatpush1.msra.mxu0 0.0
        %1191 = vmatprep.subr.mxu0 0.0
        %1192 = vmatpush1.msra.mxu0 0.0
        %1193 = vmatprep.subr.mxu0 0.0
        %1194 = vmatpush1.msra.mxu0 0.0
        %1195 = vmatprep.subr.mxu0 0.0
        %1196 = vmatpush1.msra.mxu0 0.0
        %1197 = vmatprep.subr.mxu0 0.0
        %1198 = vmatpush1.msra.mxu0 0.0
        %1199 = vmatprep.subr.mxu0 0.0
        %1200 = vmatpush1.msra.mxu0 0.0
        %1201 = vmatprep.subr.mxu0 0.0
        %1202 = vmatpush1.msra.mxu0 0.0
        %1203 = vmatprep.subr.mxu0 0.0
        %1204 = vmatpush1.msra.mxu0 0.0
        %1205 = vmatprep.subr.mxu0 0.0
        %1206 = vmatpush1.msra.mxu0 0.0
        %1207 = vmatprep.subr.mxu0 0.0
        %1208 = vmatpush1.msra.mxu0 0.0
        %1209 = vmatprep.subr.mxu0 0.0
        %1210 = vmatpush1.msra.mxu0 0.0
        %1211 = vmatprep.subr.mxu0 0.0
        %1212 = vmatpush1.msra.mxu0 0.0
        %1213 = vmatprep.subr.mxu0 0.0
        %1214 = vmatpush1.msra.mxu0 0.0
        %1215 = vmatprep.subr.mxu0 0.0
        %1216 = vmatpush1.msra.mxu0 0.0
        %1217 = vmatprep.subr.mxu0 0.0
        %1218 = vmatpush1.msra.mxu0 %v1185
        %1219 = vmatprep.subr.mxu0 0.0
        %1220 = vmatpush1.msra.mxu0 %v1184
        %1221 = vmatprep.subr.mxu0 0.0
        %1222 = vmatpush2.msra.mxu0 0.0
        %1223 = vmatprep.subr.mxu0 0.0
        %1224 = vmatpush2.msra.mxu0 0.0
        %1225 = vmatprep.subr.mxu0 0.0
        %1226 = vmatpush2.msra.mxu0 0.0
        %1227 = vmatprep.subr.mxu0 0.0
        %1228 = vmatpush2.msra.mxu0 0.0
        %1229 = vmatprep.subr.mxu0 0.0
        %1230 = vmatpush2.msra.mxu0 0.0
        %1231 = vmatprep.subr.mxu0 0.0
        %1232 = vmatpush2.msra.mxu0 0.0
        %1233 = vmatprep.subr.mxu0 0.0
        %1234 = vmatpush2.msra.mxu0 0.0
        %1235 = vmatprep.subr.mxu0 0.0
        %1236 = vmatpush2.msra.mxu0 0.0
        %1237 = vmatprep.subr.mxu0 0.0
        %1238 = vmatpush2.msra.mxu0 0.0
        %1239 = vmatprep.subr.mxu0 0.0
        %1240 = vmatpush2.msra.mxu0 0.0
        %1241 = vmatprep.subr.mxu0 0.0
        %1242 = vmatpush2.msra.mxu0 0.0
        %1243 = vmatprep.subr.mxu0 0.0
        %1244 = vmatpush2.msra.mxu0 0.0
        %1245 = vmatprep.subr.mxu0 0.0
        %1246 = vmatpush2.msra.mxu0 0.0
        %1247 = vmatprep.subr.mxu0 0.0
        %1248 = vmatpush2.msra.mxu0 0.0
        %1249 = vmatprep.subr.mxu0 0.0
        %1250 = vmatpush2.msra.mxu0 0.0
        %1251 = vmatprep.subr.mxu0 0.0
        %1252 = vmatpush2.msra.mxu0 0.0
        %1253 = vmatprep.mubr.f32.mxu0 0.0
        %1254 = vmatmul.mubr.f32.gmra.mxu0 %v1187
        %v1255 = vpop.f32.mrf.mxu0
        %v1256 = vadd.f32 0.0, %v1255
        %v1257 = vpop.f32.mrf.mxu0
        %1258 = vdwg.mxu0
        %v1259 = vlaneseq
        %v1260 = vshrl.u32 %v1259, 7
        %v1261 = vsub.s32 7, %v1260
        %v1262 = vrot.slane %v463, %v1261
        %v1263 = vmul.f32 %v1262, %v424
        %v1264 = vmul.f32 %v1262, %v425
        %v1265 = vmul.f32 %v1263, 1.442695
        %v1266 = vpow.pop %v1265
        %v1267 = vmul.f32 %v1264, 1.442695
        %v1268 = vpow.pop %v1267
        %v1269 = vmul.f32 %v1266, %v1184
        %v1270 = vmul.f32 %v1268, %v1185
        %1271 = vset.pattern.permute.xlu0 7
        %1272 = vperm.xlu0 %1271, %v542
        %v1273 = vpop.permute.xlu0 %1272
        %1275 = vset.pattern.permute.xlu0 7
        %1276 = vperm.xlu0 %1275, %v547
        %v1277 = vpop.permute.xlu0 %1276
        %v1279 = vlaneseq
        %v1280 = vshrl.u32 %v1279, 7
        %v1281 = vsub.s32 7, %v1280
        %v1282 = vrot.slane %v464, %v1281
        %v1283 = vmul.f32 %v1273, %v1282
        %v1284 = vmul.f32 %v1277, %v1282
        %v1285 = vadd.f32 %v1269, %v1283
        %v1286 = vadd.f32 %v1270, %v1284
        %v1287 = vrot.slane %v454, 7
        %v1288 = vsel %vm465, %v1287, 0
        %1290 = vmatprep.subr.mxu0 0.0
        %1291 = vmatpush1.msra.mxu0 0.0
        %1292 = vmatprep.subr.mxu0 0.0
        %1293 = vmatpush1.msra.mxu0 0.0
        %1294 = vmatprep.subr.mxu0 0.0
        %1295 = vmatpush1.msra.mxu0 0.0
        %1296 = vmatprep.subr.mxu0 0.0
        %1297 = vmatpush1.msra.mxu0 0.0
        %1298 = vmatprep.subr.mxu0 0.0
        %1299 = vmatpush1.msra.mxu0 0.0
        %1300 = vmatprep.subr.mxu0 0.0
        %1301 = vmatpush1.msra.mxu0 0.0
        %1302 = vmatprep.subr.mxu0 0.0
        %1303 = vmatpush1.msra.mxu0 0.0
        %1304 = vmatprep.subr.mxu0 0.0
        %1305 = vmatpush1.msra.mxu0 0.0
        %1306 = vmatprep.subr.mxu0 0.0
        %1307 = vmatpush1.msra.mxu0 0.0
        %1308 = vmatprep.subr.mxu0 0.0
        %1309 = vmatpush1.msra.mxu0 0.0
        %1310 = vmatprep.subr.mxu0 0.0
        %1311 = vmatpush1.msra.mxu0 0.0
        %1312 = vmatprep.subr.mxu0 0.0
        %1313 = vmatpush1.msra.mxu0 0.0
        %1314 = vmatprep.subr.mxu0 0.0
        %1315 = vmatpush1.msra.mxu0 0.0
        %1316 = vmatprep.subr.mxu0 0.0
        %1317 = vmatpush1.msra.mxu0 0.0
        %1318 = vmatprep.subr.mxu0 0.0
        %1319 = vmatpush1.msra.mxu0 %v1286
        %1320 = vmatprep.subr.mxu0 0.0
        %1321 = vmatpush1.msra.mxu0 %v1285
        %1322 = vmatprep.subr.mxu0 0.0
        %1323 = vmatpush2.msra.mxu0 0.0
        %1324 = vmatprep.subr.mxu0 0.0
        %1325 = vmatpush2.msra.mxu0 0.0
        %1326 = vmatprep.subr.mxu0 0.0
        %1327 = vmatpush2.msra.mxu0 0.0
        %1328 = vmatprep.subr.mxu0 0.0
        %1329 = vmatpush2.msra.mxu0 0.0
        %1330 = vmatprep.subr.mxu0 0.0
        %1331 = vmatpush2.msra.mxu0 0.0
        %1332 = vmatprep.subr.mxu0 0.0
        %1333 = vmatpush2.msra.mxu0 0.0
        %1334 = vmatprep.subr.mxu0 0.0
        %1335 = vmatpush2.msra.mxu0 0.0
        %1336 = vmatprep.subr.mxu0 0.0
        %1337 = vmatpush2.msra.mxu0 0.0
        %1338 = vmatprep.subr.mxu0 0.0
        %1339 = vmatpush2.msra.mxu0 0.0
        %1340 = vmatprep.subr.mxu0 0.0
        %1341 = vmatpush2.msra.mxu0 0.0
        %1342 = vmatprep.subr.mxu0 0.0
        %1343 = vmatpush2.msra.mxu0 0.0
        %1344 = vmatprep.subr.mxu0 0.0
        %1345 = vmatpush2.msra.mxu0 0.0
        %1346 = vmatprep.subr.mxu0 0.0
        %1347 = vmatpush2.msra.mxu0 0.0
        %1348 = vmatprep.subr.mxu0 0.0
        %1349 = vmatpush2.msra.mxu0 0.0
        %1350 = vmatprep.subr.mxu0 0.0
        %1351 = vmatpush2.msra.mxu0 0.0
        %1352 = vmatprep.subr.mxu0 0.0
        %1353 = vmatpush2.msra.mxu0 0.0
        %1354 = vmatprep.mubr.f32.mxu0 0.0
        %1355 = vmatmul.mubr.f32.gmra.mxu0 %v1288
        %v1356 = vpop.f32.mrf.mxu0
        %v1357 = vadd.f32 0.0, %v1356
        %v1358 = vpop.f32.mrf.mxu0
        %1359 = vdwg.mxu0
        %v1361 = vrot.slane %v751, 7
        %v1364 = vrot.slane %v852, 6
        %v1367 = vrot.slane %v953, 5
        %v1370 = vrot.slane %v1054, 4
        %v1373 = vrot.slane %v1155, 3
        %v1376 = vrot.slane %v1256, 2
        %v1379 = vrot.slane %v1357, 1
        %vm1381 = vcmask 1040384
        %v1382 = vsel %vm1381, %v650, %v1361
        %vm1383 = vcmask 1041408
        %v1384 = vsel %vm1383, %v1382, %v1364
        %vm1385 = vcmask 1042432
        %v1386 = vsel %vm1385, %v1384, %v1367
        %vm1387 = vcmask 1043456
        %v1388 = vsel %vm1387, %v1386, %v1370
        %vm1389 = vcmask 1044480
        %v1390 = vsel %vm1389, %v1388, %v1373
        %vm1391 = vcmask 1045504
        %v1392 = vsel %vm1391, %v1390, %v1376
        %vm1393 = vcmask 1046528
        %v1394 = vsel %vm1393, %v1392, %v1379
        %v1396 = vlaneseq
        %v1397 = vshrl.u32 %v1396, 7
        %v1398 = vsub.s32 0, %v1397
        %v1399 = vrot.slane %v426, %v1398
        %v1401 = vmul.f32 %v1399, %v448
        %v1402 = vadd.f32 %v1394, %v1401
        %s1403 = scalar_lea.vmem %s423, %s446
        %vm1404 = vcmask 523264
        %1405 = vst.msk [vmem:[%s1403] sm:$0xff] %vm1404, %v1402
      $region49: #{temporal_spectrum_block.9} parent=43 // loop_footer
        %s443 = sadd.s32 1, %s439
      $region50: #{temporal_spectrum_block.9} parent=43 // loop_footer_branch
        %438 = sbr.rel target = $region46
      $region51: #{temporal_spectrum_block.9} parent=43 // loop_exit
        _
      %p1406 = scmp.lt.s32.totalorder %s21, 1
      %s1407 = scalar_select %p1406, %s21, 1
      %p1408 = scmp.lt.s32.totalorder %s22, 1
      %s1409 = scalar_select %p1408, %s22, 1
      %s1410 = smul.addr %s1409, 8
      %s1411 = smul.addr %s1407, 16
      %s1412 = sadd.s32 %s1410, %s1411
      %s1413 = smul.addr %s1412, 8
      %s1414 = scalar_lea.vmem %s6, %s1413
      // Predicated region
      $region52: #{temporal_spectrum_block.9} parent=43 // pred_check
        %p1415 = pneg %p213
      $region53: #{temporal_spectrum_block.9} parent=43 // pred_check_branch
        %1417 = sbr.rel (%p1415) target = $region55
      $region54: #{temporal_spectrum_block.9} parent=43 // pred_region
        _
      $region55: #{temporal_spectrum_block.9} parent=43 // pred_fallthru
        _
    $region44: #{temporal_spectrum_block.9} parent=5 // pred_fallthru
      _
    %p1418 = scmp.le.s32.totalorder 2, %s12
    // Predicated region
    $region56: #{temporal_spectrum_block.9} parent=5 // pred_check
      %p1419 = pneg %p1418
    $region57: #{temporal_spectrum_block.9} parent=5 // pred_check_branch
      %1421 = sbr.rel (%p1419) target = $region59
    $region58: #{temporal_spectrum_block.9} parent=5 // pred_region
      %s1422 = ssub.s32 %s12, 2
      // Predicated region
      $region60: #{temporal_spectrum_block.9} parent=58 // pred_check
        %p1423 = pneg %p219
      $region61: #{temporal_spectrum_block.9} parent=58 // pred_check_branch
        %1425 = sbr.rel (%p1423) target = $region63
      $region62: #{temporal_spectrum_block.9} parent=58 // pred_region
        %p1426 = scmp.lt.s32.totalorder %s23, 1
        %s1427 = scalar_select %p1426, %s23, 1
        %p1428 = scmp.lt.s32.totalorder %s24, 1
        %s1429 = scalar_select %p1428, %s24, 1
        %s1430 = smul.addr %s1429, 8
        %s1431 = smul.addr %s1427, 16
        %s1432 = sadd.s32 %s1430, %s1431
        %s1433 = smul.addr %s1432, 8
        %s1434 = scalar_lea.vmem %s6, %s1433
      $region63: #{temporal_spectrum_block.9} parent=58 // pred_fallthru
        _
    $region59: #{temporal_spectrum_block.9} parent=5 // pred_fallthru
      _
  $region6: #{temporal_spectrum_block.9} parent=0 // loop_footer
    %s16 = sadd.s32 1, %s12
  $region7: #{temporal_spectrum_block.9} parent=0 // loop_footer_branch
    %11 = sbr.rel target = $region3
  $region8: #{temporal_spectrum_block.9} parent=0 // loop_exit
    _

// kernel: temporal_spectrum_block.10
$region0: #{temporal_spectrum_block.10}
  #allocation0 [shape = 'u32[]', space=smem, size = 0x4, offset = 0x4, fixed_abs, tag = 'smem constant byte address 0x4 - core index']
  #allocation1 [shape = 'u32[144,128]{1,0:T(1,128)}', space=vmem, size = 0x12000, scoped, tag = 'internal scratch']
  %s0 = inlined_call_operand.vmem [shape: f32[2,2,64,64], index: 0, kind: input, shape index: {}]
  %s1 = inlined_call_operand.vmem [shape: f32[4,2,64,64], index: 1, kind: input, shape index: {}]
  %s2 = inlined_call_operand.vmem [shape: f32[4,2,64,16], index: 2, kind: input, shape index: {}]
  %s3 = inlined_call_operand.vmem [shape: f32[4,2,64,16], index: 3, kind: input, shape index: {}]
  %s4 = inlined_call_operand.vmem [shape: f32[4,16,64], index: 4, kind: input, shape index: {}]
  %s5 = inlined_call_operand.vmem [shape: f32[4,1,64], index: 5, kind: input, shape index: {}]
  %s6 = inlined_call_operand.vmem [shape: f32[2,2,64,64], index: 6, kind: input, shape index: {}, may-alias: {6,7}]
  %s7 = inlined_call_operand.vmem [shape: f32[2,2,64,64], index: 7, kind: output, shape index: {}, may-alias: {6,7}]
  %s8 = sld [smem:[#allocation0]]
  $region68: #{temporal_spectrum_block.10} parent=0
    _
  %s10 = ssub.s32 1, %s8
  %s11 = scalar_select 0, %s10, %s8
  loop: start=0, step=1, limit=6
  $region2: #{temporal_spectrum_block.10} parent=0 // loop_pre_header
    _
  $region3: #{temporal_spectrum_block.10} parent=0 // loop_header
    %s13 = sphi 0, %s17
    %p14 = scmp.ge.s32.totalorder %s13, 6
    %s20 = sphi 0, %s32
    %s21 = sphi 0, %s28
    %s22 = sphi 0, %s20
    %s23 = sphi 0, %s21
    %s24 = sphi 0, %s22
    %s25 = sphi 0, %s23
    %s37 = sphi 0, %s39
    %s40 = sphi 0, %s37
    %s41 = sphi 0, %s40
    %s57 = sphi 0, %s41
    %s67 = sphi 0, %s69
    %s70 = sphi 0, %s67
    %s71 = sphi 0, %s70
    %s87 = sphi 0, %s71
    %s97 = sphi 0, %s99
    %s100 = sphi 0, %s97
    %s101 = sphi 0, %s100
    %s117 = sphi 0, %s101
    %s127 = sphi 0, %s129
    %s130 = sphi 0, %s127
    %s131 = sphi 0, %s130
    %s147 = sphi 0, %s131
    %s155 = sphi 0, %s157
    %s158 = sphi 0, %s155
    %s159 = sphi 0, %s158
    %s175 = sphi 0, %s159
    %s183 = sphi 0, %s185
    %s186 = sphi 0, %s183
    %s187 = sphi 0, %s186
    %s203 = sphi 0, %s187
    %s211 = sphi 0, %s213
    %s214 = sphi 0, %s211
    %s215 = sphi 0, %s214
    %s231 = sphi 0, %s215
    %s239 = sphi 0, %s241
    %s242 = sphi 0, %s239
    %s243 = sphi 0, %s242
    %s259 = sphi 0, %s243
  $region4: #{temporal_spectrum_block.10} parent=0 // loop_header_branch
    %16 = sbr.rel (%p14) target = $region8
  $region5: #{temporal_spectrum_block.10} parent=0 // loop_body
    %s18 = ssub.s32 %s13, 1
    %s19 = ssub.s32 %s13, 2
    %s26 = sadd.s32 1, %s21
    %p27 = scmp.ge.s32.totalorder %s26, 2
    %s28 = scalar_select %p27, 0, %s26
    %s29 = sadd.s32 1, %s20
    %s30 = scalar_select %p27, %s29, %s20
    %p31 = scmp.ge.s32.totalorder %s30, 2
    %s32 = scalar_select %p31, 0, %s30
    %s33 = ssub.s32 %s21, %s28
    %s34 = ssub.s32 %s20, %s32
    %s35 = sor.u32 %s33, %s34
    %p36 = scmp.eq.s32.totalorder %s35, 0
    %s38 = sadd.s32 %s37, 1
    %s39 = scalar_select %p36, %s37, %s38
    %p42 = pneg %p36
    %p43 = scmp.eq.s32.totalorder %s13, 3
    %p44 = por %p42, %p43
    %p45 = scmp.ne.s32.totalorder %s37, %s40
    %p46 = scmp.eq.s32.totalorder %s13, 0
    %p47 = por %p45, %p46
    %p48 = scmp.ne.s32.totalorder %s37, %s40
    %p49 = scmp.eq.s32.totalorder %s18, 3
    %p50 = por %p48, %p49
    %p51 = scmp.ne.s32.totalorder %s40, %s41
    %p52 = scmp.eq.s32.totalorder %s18, 0
    %p53 = por %p51, %p52
    %p54 = scmp.ne.s32.totalorder %s40, %s41
    %p55 = scmp.eq.s32.totalorder %s19, 3
    %p56 = por %p54, %p55
    %p58 = scmp.ne.s32.totalorder %s41, %s57
    %p59 = scmp.eq.s32.totalorder %s19, 0
    %p60 = por %p58, %p59
    %s61 = sadd.s32 %s21, 2
    %s62 = sadd.s32 %s28, 2
    %s63 = ssub.s32 %s61, %s62
    %s64 = ssub.s32 %s20, %s32
    %s65 = sor.u32 %s63, %s64
    %p66 = scmp.eq.s32.totalorder %s65, 0
    %s68 = sadd.s32 %s67, 1
    %s69 = scalar_select %p66, %s67, %s68
    %p72 = pneg %p66
    %p73 = scmp.eq.s32.totalorder %s13, 3
    %p74 = por %p72, %p73
    %p75 = scmp.ne.s32.totalorder %s67, %s70
    %p76 = scmp.eq.s32.totalorder %s13, 0
    %p77 = por %p75, %p76
    %p78 = scmp.ne.s32.totalorder %s67, %s70
    %p79 = scmp.eq.s32.totalorder %s18, 3
    %p80 = por %p78, %p79
    %p81 = scmp.ne.s32.totalorder %s70, %s71
    %p82 = scmp.eq.s32.totalorder %s18, 0
    %p83 = por %p81, %p82
    %p84 = scmp.ne.s32.totalorder %s70, %s71
    %p85 = scmp.eq.s32.totalorder %s19, 3
    %p86 = por %p84, %p85
    %p88 = scmp.ne.s32.totalorder %s71, %s87
    %p89 = scmp.eq.s32.totalorder %s19, 0
    %p90 = por %p88, %p89
    %s91 = sadd.s32 %s21, 2
    %s92 = sadd.s32 %s28, 2
    %s93 = ssub.s32 %s91, %s92
    %s94 = ssub.s32 %s20, %s32
    %s95 = sor.u32 %s93, %s94
    %p96 = scmp.eq.s32.totalorder %s95, 0
    %s98 = sadd.s32 %s97, 1
    %s99 = scalar_select %p96, %s97, %s98
    %p102 = pneg %p96
    %p103 = scmp.eq.s32.totalorder %s13, 3
    %p104 = por %p102, %p103
    %p105 = scmp.ne.s32.totalorder %s97, %s100
    %p106 = scmp.eq.s32.totalorder %s13, 0
    %p107 = por %p105, %p106
    %p108 = scmp.ne.s32.totalorder %s97, %s100
    %p109 = scmp.eq.s32.totalorder %s18, 3
    %p110 = por %p108, %p109
    %p111 = scmp.ne.s32.totalorder %s100, %s101
    %p112 = scmp.eq.s32.totalorder %s18, 0
    %p113 = por %p111, %p112
    %p114 = scmp.ne.s32.totalorder %s100, %s101
    %p115 = scmp.eq.s32.totalorder %s19, 3
    %p116 = por %p114, %p115
    %p118 = scmp.ne.s32.totalorder %s101, %s117
    %p119 = scmp.eq.s32.totalorder %s19, 0
    %p120 = por %p118, %p119
    %s121 = sadd.s32 %s21, 2
    %s122 = sadd.s32 %s28, 2
    %s123 = ssub.s32 %s121, %s122
    %s124 = ssub.s32 %s20, %s32
    %s125 = sor.u32 %s123, %s124
    %p126 = scmp.eq.s32.totalorder %s125, 0
    %s128 = sadd.s32 %s127, 1
    %s129 = scalar_select %p126, %s127, %s128
    %p132 = pneg %p126
    %p133 = scmp.eq.s32.totalorder %s13, 3
    %p134 = por %p132, %p133
    %p135 = scmp.ne.s32.totalorder %s127, %s130
    %p136 = scmp.eq.s32.totalorder %s13, 0
    %p137 = por %p135, %p136
    %p138 = scmp.ne.s32.totalorder %s127, %s130
    %p139 = scmp.eq.s32.totalorder %s18, 3
    %p140 = por %p138, %p139
    %p141 = scmp.ne.s32.totalorder %s130, %s131
    %p142 = scmp.eq.s32.totalorder %s18, 0
    %p143 = por %p141, %p142
    %p144 = scmp.ne.s32.totalorder %s130, %s131
    %p145 = scmp.eq.s32.totalorder %s19, 3
    %p146 = por %p144, %p145
    %p148 = scmp.ne.s32.totalorder %s131, %s147
    %p149 = scmp.eq.s32.totalorder %s19, 0
    %p150 = por %p148, %p149
    %s151 = sadd.s32 %s21, 2
    %s152 = sadd.s32 %s28, 2
    %s153 = ssub.s32 %s151, %s152
    %p154 = scmp.eq.s32.totalorder %s153, 0
    %s156 = sadd.s32 %s155, 1
    %s157 = scalar_select %p154, %s155, %s156
    %p160 = pneg %p154
    %p161 = scmp.eq.s32.totalorder %s13, 3
    %p162 = por %p160, %p161
    %p163 = scmp.ne.s32.totalorder %s155, %s158
    %p164 = scmp.eq.s32.totalorder %s13, 0
    %p165 = por %p163, %p164
    %p166 = scmp.ne.s32.totalorder %s155, %s158
    %p167 = scmp.eq.s32.totalorder %s18, 3
    %p168 = por %p166, %p167
    %p169 = scmp.ne.s32.totalorder %s158, %s159
    %p170 = scmp.eq.s32.totalorder %s18, 0
    %p171 = por %p169, %p170
    %p172 = scmp.ne.s32.totalorder %s158, %s159
    %p173 = scmp.eq.s32.totalorder %s19, 3
    %p174 = por %p172, %p173
    %p176 = scmp.ne.s32.totalorder %s159, %s175
    %p177 = scmp.eq.s32.totalorder %s19, 0
    %p178 = por %p176, %p177
    %s179 = sadd.s32 %s21, 2
    %s180 = sadd.s32 %s28, 2
    %s181 = ssub.s32 %s179, %s180
    %p182 = scmp.eq.s32.totalorder %s181, 0
    %s184 = sadd.s32 %s183, 1
    %s185 = scalar_select %p182, %s183, %s184
    %p188 = pneg %p182
    %p189 = scmp.eq.s32.totalorder %s13, 3
    %p190 = por %p188, %p189
    %p191 = scmp.ne.s32.totalorder %s183, %s186
    %p192 = scmp.eq.s32.totalorder %s13, 0
    %p193 = por %p191, %p192
    %p194 = scmp.ne.s32.totalorder %s183, %s186
    %p195 = scmp.eq.s32.totalorder %s18, 3
    %p196 = por %p194, %p195
    %p197 = scmp.ne.s32.totalorder %s186, %s187
    %p198 = scmp.eq.s32.totalorder %s18, 0
    %p199 = por %p197, %p198
    %p200 = scmp.ne.s32.totalorder %s186, %s187
    %p201 = scmp.eq.s32.totalorder %s19, 3
    %p202 = por %p200, %p201
    %p204 = scmp.ne.s32.totalorder %s187, %s203
    %p205 = scmp.eq.s32.totalorder %s19, 0
    %p206 = por %p204, %p205
    %s207 = ssub.s32 %s20, %s32
    %s208 = ssub.s32 %s21, %s28
    %s209 = sor.u32 %s207, %s208
    %p210 = scmp.eq.s32.totalorder %s209, 0
    %s212 = sadd.s32 %s211, 1
    %s213 = scalar_select %p210, %s211, %s212
    %p216 = pneg %p210
    %p217 = scmp.eq.s32.totalorder %s13, 3
    %p218 = por %p216, %p217
    %p219 = scmp.ne.s32.totalorder %s211, %s214
    %p220 = scmp.eq.s32.totalorder %s13, 0
    %p221 = por %p219, %p220
    %p222 = scmp.ne.s32.totalorder %s211, %s214
    %p223 = scmp.eq.s32.totalorder %s18, 3
    %p224 = por %p222, %p223
    %p225 = scmp.ne.s32.totalorder %s214, %s215
    %p226 = scmp.eq.s32.totalorder %s18, 0
    %p227 = por %p225, %p226
    %p228 = scmp.ne.s32.totalorder %s214, %s215
    %p229 = scmp.eq.s32.totalorder %s19, 3
    %p230 = por %p228, %p229
    %p232 = scmp.ne.s32.totalorder %s215, %s231
    %p233 = scmp.eq.s32.totalorder %s19, 0
    %p234 = por %p232, %p233
    %s235 = ssub.s32 %s20, %s32
    %s236 = ssub.s32 %s21, %s28
    %s237 = sor.u32 %s235, %s236
    %p238 = scmp.eq.s32.totalorder %s237, 0
    %s240 = sadd.s32 %s239, 1
    %s241 = scalar_select %p238, %s239, %s240
    %p244 = pneg %p238
    %p245 = scmp.eq.s32.totalorder %s13, 3
    %p246 = por %p244, %p245
    %p247 = scmp.ne.s32.totalorder %s239, %s242
    %p248 = scmp.eq.s32.totalorder %s13, 0
    %p249 = por %p247, %p248
    %p250 = scmp.ne.s32.totalorder %s239, %s242
    %p251 = scmp.eq.s32.totalorder %s18, 3
    %p252 = por %p250, %p251
    %p253 = scmp.ne.s32.totalorder %s242, %s243
    %p254 = scmp.eq.s32.totalorder %s18, 0
    %p255 = por %p253, %p254
    %p256 = scmp.ne.s32.totalorder %s242, %s243
    %p257 = scmp.eq.s32.totalorder %s19, 3
    %p258 = por %p256, %p257
    %p260 = scmp.ne.s32.totalorder %s243, %s259
    %p261 = scmp.eq.s32.totalorder %s19, 0
    %p262 = por %p260, %p261
    %p263 = scmp.le.s32.totalorder 1, %s13
    %p264 = scmp.lt.s32.totalorder %s13, 5
    %p265 = pnand %p263, %p264
    %p266 = pneg %p265
    // Predicated region
    $region9: #{temporal_spectrum_block.10} parent=5 // pred_check
      _
    $region10: #{temporal_spectrum_block.10} parent=5 // pred_check_branch
      %268 = sbr.rel (%p265) target = $region12
    $region11: #{temporal_spectrum_block.10} parent=5 // pred_region
      %s269 = ssub.s32 %s13, 1
    $region12: #{temporal_spectrum_block.10} parent=5 // pred_fallthru
      _
    %p270 = scmp.lt.s32.totalorder %s13, 4
    // Predicated region
    $region13: #{temporal_spectrum_block.10} parent=5 // pred_check
      %p271 = pneg %p270
    $region14: #{temporal_spectrum_block.10} parent=5 // pred_check_branch
      %273 = sbr.rel (%p271) target = $region16
    $region15: #{temporal_spectrum_block.10} parent=5 // pred_region
      // Predicated region
      $region17: #{temporal_spectrum_block.10} parent=15 // pred_check
        %p274 = pneg %p47
      $region18: #{temporal_spectrum_block.10} parent=15 // pred_check_branch
        %276 = sbr.rel (%p274) target = $region20
      $region19: #{temporal_spectrum_block.10} parent=15 // pred_region
        %p277 = scmp.lt.s32.totalorder %s21, 1
        %s278 = scalar_select %p277, %s21, 1
        %p279 = scmp.lt.s32.totalorder %s20, 1
        %s280 = scalar_select %p279, %s20, 1
        %s281 = smul.addr %s280, 8
        %s282 = smul.addr %s278, 16
        %s283 = sadd.s32 %s281, %s282
        %s284 = smul.addr %s283, 8
        %s285 = scalar_lea.vmem %s0, %s284
      $region20: #{temporal_spectrum_block.10} parent=15 // pred_fallthru
        _
      // Predicated region
      $region21: #{temporal_spectrum_block.10} parent=15 // pred_check
        %p286 = pneg %p77
      $region22: #{temporal_spectrum_block.10} parent=15 // pred_check_branch
        %288 = sbr.rel (%p286) target = $region24
      $region23: #{temporal_spectrum_block.10} parent=15 // pred_region
        %s289 = sadd.s32 %s21, 2
        %p290 = scmp.lt.s32.totalorder %s289, 3
        %s291 = scalar_select %p290, %s289, 3
        %p292 = scmp.lt.s32.totalorder %s20, 1
        %s293 = scalar_select %p292, %s20, 1
        %s294 = smul.addr %s293, 8
        %s295 = smul.addr %s291, 16
        %s296 = sadd.s32 %s294, %s295
        %s297 = smul.addr %s296, 8
        %s298 = scalar_lea.vmem %s1, %s297
        %s299 = sadd.s32 %s21, 2
      $region24: #{temporal_spectrum_block.10} parent=15 // pred_fallthru
        _
      // Predicated region
      $region25: #{temporal_spectrum_block.10} parent=15 // pred_check
        %p300 = pneg %p107
      $region26: #{temporal_spectrum_block.10} parent=15 // pred_check_branch
        %302 = sbr.rel (%p300) target = $region28
      $region27: #{temporal_spectrum_block.10} parent=15 // pred_region
        %s303 = sadd.s32 %s21, 2
        %p304 = scmp.lt.s32.totalorder %s303, 3
        %s305 = scalar_select %p304, %s303, 3
        %p306 = scmp.lt.s32.totalorder %s20, 1
        %s307 = scalar_select %p306, %s20, 1
        %s308 = smul.addr %s307, 8
        %s309 = smul.addr %s305, 16
        %s310 = sadd.s32 %s308, %s309
        %s311 = smul.addr %s310, 8
        %s312 = scalar_lea.vmem %s2, %s311
        %s313 = sadd.s32 %s21, 2
      $region28: #{temporal_spectrum_block.10} parent=15 // pred_fallthru
        _
      // Predicated region
      $region29: #{temporal_spectrum_block.10} parent=15 // pred_check
        %p314 = pneg %p137
      $region30: #{temporal_spectrum_block.10} parent=15 // pred_check_branch
        %316 = sbr.rel (%p314) target = $region32
      $region31: #{temporal_spectrum_block.10} parent=15 // pred_region
        %s317 = sadd.s32 %s21, 2
        %p318 = scmp.lt.s32.totalorder %s317, 3
        %s319 = scalar_select %p318, %s317, 3
        %p320 = scmp.lt.s32.totalorder %s20, 1
        %s321 = scalar_select %p320, %s20, 1
        %s322 = smul.addr %s321, 8
        %s323 = smul.addr %s319, 16
        %s324 = sadd.s32 %s322, %s323
        %s325 = smul.addr %s324, 8
        %s326 = scalar_lea.vmem %s3, %s325
        %s327 = sadd.s32 %s21, 2
      $region32: #{temporal_spectrum_block.10} parent=15 // pred_fallthru
        _
      // Predicated region
      $region33: #{temporal_spectrum_block.10} parent=15 // pred_check
        %p328 = pneg %p165
      $region34: #{temporal_spectrum_block.10} parent=15 // pred_check_branch
        %330 = sbr.rel (%p328) target = $region36
      $region35: #{temporal_spectrum_block.10} parent=15 // pred_region
        %s331 = sadd.s32 %s21, 2
        %p332 = scmp.lt.s32.totalorder %s331, 3
        %s333 = scalar_select %p332, %s331, 3
        %s334 = smul.addr %s333, 2
        %s335 = smul.addr %s334, 8
        %s336 = scalar_lea.vmem %s4, %s335
        %s337 = sadd.s32 %s21, 2
      $region36: #{temporal_spectrum_block.10} parent=15 // pred_fallthru
        _
      // Predicated region
      $region37: #{temporal_spectrum_block.10} parent=15 // pred_check
        %p338 = pneg %p193
      $region38: #{temporal_spectrum_block.10} parent=15 // pred_check_branch
        %340 = sbr.rel (%p338) target = $region40
      $region39: #{temporal_spectrum_block.10} parent=15 // pred_region
        %s341 = sadd.s32 %s21, 2
        %p342 = scmp.lt.s32.totalorder %s341, 3
        %s343 = scalar_select %p342, %s341, 3
        %s344 = scalar_lea.vmem %s5, %s343
        %s345 = sadd.s32 %s21, 2
      $region40: #{temporal_spectrum_block.10} parent=15 // pred_fallthru
        _
      // Predicated region
      $region41: #{temporal_spectrum_block.10} parent=15 // pred_check
        %p346 = pneg %p221
      $region42: #{temporal_spectrum_block.10} parent=15 // pred_check_branch
        %348 = sbr.rel (%p346) target = $region44
      $region43: #{temporal_spectrum_block.10} parent=15 // pred_region
        %p349 = scmp.lt.s32.totalorder %s20, 1
        %s350 = scalar_select %p349, %s20, 1
        %p351 = scmp.lt.s32.totalorder %s21, 1
        %s352 = scalar_select %p351, %s21, 1
        %s353 = smul.addr %s352, 8
        %s354 = smul.addr %s350, 16
        %s355 = sadd.s32 %s353, %s354
        %s356 = smul.addr %s355, 8
        %s357 = scalar_lea.vmem %s6, %s356
      $region44: #{temporal_spectrum_block.10} parent=15 // pred_fallthru
        _
    $region16: #{temporal_spectrum_block.10} parent=5 // pred_fallthru
      _
    %p358 = scmp.le.s32.totalorder 1, %s13
    %p359 = scmp.lt.s32.totalorder %s13, 5
    %p360 = pnand %p358, %p359
    %p361 = pneg %p360
    // Predicated region
    $region45: #{temporal_spectrum_block.10} parent=5 // pred_check
      _
    $region46: #{temporal_spectrum_block.10} parent=5 // pred_check_branch
      %363 = sbr.rel (%p360) target = $region48
    $region47: #{temporal_spectrum_block.10} parent=5 // pred_region
      %s364 = ssub.s32 %s13, 1
      %p365 = scmp.lt.s32.totalorder %s23, 1
      %s366 = scalar_select %p365, %s23, 1
      %p367 = scmp.lt.s32.totalorder %s22, 1
      %s368 = scalar_select %p367, %s22, 1
      %s369 = smul.addr %s368, 8
      %s370 = smul.addr %s366, 16
      %s371 = sadd.s32 %s369, %s370
      %s372 = smul.addr %s371, 8
      %s373 = scalar_lea.vmem %s0, %s372
      %p374 = pneg %p53
      %p375 = pneg %p50
      %s376 = sadd.s32 %s23, 2
      %p377 = scmp.lt.s32.totalorder %s376, 3
      %s378 = scalar_select %p377, %s376, 3
      %p379 = scmp.lt.s32.totalorder %s22, 1
      %s380 = scalar_select %p379, %s22, 1
      %s381 = smul.addr %s380, 8
      %s382 = smul.addr %s378, 16
      %s383 = sadd.s32 %s381, %s382
      %s384 = smul.addr %s383, 8
      %s385 = scalar_lea.vmem %s1, %s384
      %p386 = pneg %p83
      %p387 = pneg %p80
      %s388 = sadd.s32 %s23, 2
      %p389 = scmp.lt.s32.totalorder %s388, 3
      %s390 = scalar_select %p389, %s388, 3
      %p391 = scmp.lt.s32.totalorder %s22, 1
      %s392 = scalar_select %p391, %s22, 1
      %s393 = smul.addr %s392, 8
      %s394 = smul.addr %s390, 16
      %s395 = sadd.s32 %s393, %s394
      %s396 = smul.addr %s395, 8
      %s397 = scalar_lea.vmem %s2, %s396
      %p398 = pneg %p113
      %p399 = pneg %p110
      %s400 = sadd.s32 %s23, 2
      %p401 = scmp.lt.s32.totalorder %s400, 3
      %s402 = scalar_select %p401, %s400, 3
      %p403 = scmp.lt.s32.totalorder %s22, 1
      %s404 = scalar_select %p403, %s22, 1
      %s405 = smul.addr %s404, 8
      %s406 = smul.addr %s402, 16
      %s407 = sadd.s32 %s405, %s406
      %s408 = smul.addr %s407, 8
      %s409 = scalar_lea.vmem %s3, %s408
      %p410 = pneg %p143
      %p411 = pneg %p140
      %s412 = sadd.s32 %s23, 2
      %p413 = scmp.lt.s32.totalorder %s412, 3
      %s414 = scalar_select %p413, %s412, 3
      %s415 = smul.addr %s414, 2
      %s416 = smul.addr %s415, 8
      %s417 = scalar_lea.vmem %s4, %s416
      %p418 = pneg %p171
      %p419 = pneg %p168
      %s420 = sadd.s32 %s23, 2
      %p421 = scmp.lt.s32.totalorder %s420, 3
      %s422 = scalar_select %p421, %s420, 3
      %s423 = scalar_lea.vmem %s5, %s422
      %p424 = pneg %p199
      %p425 = pneg %p196
      %p426 = scmp.lt.s32.totalorder %s22, 1
      %s427 = scalar_select %p426, %s22, 1
      %p428 = scmp.lt.s32.totalorder %s23, 1
      %s429 = scalar_select %p428, %s23, 1
      %s430 = smul.addr %s429, 8
      %s431 = smul.addr %s427, 16
      %s432 = sadd.s32 %s430, %s431
      %s433 = smul.addr %s432, 8
      %s434 = scalar_lea.vmem %s6, %s433
      %p435 = pneg %p227
      %p436 = pneg %p224
      %p437 = pneg %p255
      %p438 = pneg %p252
      %p439 = scmp.lt.s32.totalorder %s22, 1
      %s440 = scalar_select %p439, %s22, 1
      %p441 = scmp.lt.s32.totalorder %s23, 1
      %s442 = scalar_select %p441, %s23, 1
      %s443 = smul.addr %s442, 8
      %s444 = smul.addr %s440, 16
      %s445 = sadd.s32 %s443, %s444
      %s446 = smul.addr %s445, 8
      %s447 = scalar_lea.vmem %s7, %s446
      %p448 = scmp.lt.s32.totalorder %s23, 1
      %s449 = scalar_select %p448, %s23, 1
      %p450 = scmp.lt.s32.totalorder %s22, 1
      %s451 = scalar_select %p450, %s22, 1
      %s452 = smul.addr %s451, 8
      %s453 = smul.addr %s449, 16
      %s454 = sadd.s32 %s452, %s453
      %s455 = smul.addr %s454, 8
      %s456 = scalar_lea.vmem %s0, %s455
      %s457 = sadd.s32 %s23, 2
      %p458 = scmp.lt.s32.totalorder %s457, 3
      %s459 = scalar_select %p458, %s457, 3
      %p460 = scmp.lt.s32.totalorder %s22, 1
      %s461 = scalar_select %p460, %s22, 1
      %s462 = smul.addr %s461, 8
      %s463 = smul.addr %s459, 16
      %s464 = sadd.s32 %s462, %s463
      %s465 = smul.addr %s464, 8
      %s466 = scalar_lea.vmem %s1, %s465
      %s467 = sadd.s32 %s23, 2
      %s468 = sadd.s32 %s23, 2
      %p469 = scmp.lt.s32.totalorder %s468, 3
      %s470 = scalar_select %p469, %s468, 3
      %p471 = scmp.lt.s32.totalorder %s22, 1
      %s472 = scalar_select %p471, %s22, 1
      %s473 = smul.addr %s472, 8
      %s474 = smul.addr %s470, 16
      %s475 = sadd.s32 %s473, %s474
      %s476 = smul.addr %s475, 8
      %s477 = scalar_lea.vmem %s2, %s476
      %s478 = sadd.s32 %s23, 2
      %s479 = sadd.s32 %s23, 2
      %p480 = scmp.lt.s32.totalorder %s479, 3
      %s481 = scalar_select %p480, %s479, 3
      %p482 = scmp.lt.s32.totalorder %s22, 1
      %s483 = scalar_select %p482, %s22, 1
      %s484 = smul.addr %s483, 8
      %s485 = smul.addr %s481, 16
      %s486 = sadd.s32 %s484, %s485
      %s487 = smul.addr %s486, 8
      %s488 = scalar_lea.vmem %s3, %s487
      %s489 = sadd.s32 %s23, 2
      %s490 = sadd.s32 %s23, 2
      %p491 = scmp.lt.s32.totalorder %s490, 3
      %s492 = scalar_select %p491, %s490, 3
      %s493 = smul.addr %s492, 2
      %s494 = smul.addr %s493, 8
      %s495 = scalar_lea.vmem %s4, %s494
      %s496 = sadd.s32 %s23, 2
      %s497 = sadd.s32 %s23, 2
      %p498 = scmp.lt.s32.totalorder %s497, 3
      %s499 = scalar_select %p498, %s497, 3
      %s500 = scalar_lea.vmem %s5, %s499
      %s501 = sadd.s32 %s23, 2
      %p502 = scmp.lt.s32.totalorder %s22, 1
      %s503 = scalar_select %p502, %s22, 1
      %p504 = scmp.lt.s32.totalorder %s23, 1
      %s505 = scalar_select %p504, %s23, 1
      %s506 = smul.addr %s505, 8
      %s507 = smul.addr %s503, 16
      %s508 = sadd.s32 %s506, %s507
      %s509 = smul.addr %s508, 8
      %s510 = scalar_lea.vmem %s6, %s509
      %p511 = scmp.lt.s32.totalorder %s22, 1
      %s512 = scalar_select %p511, %s22, 1
      %p513 = scmp.lt.s32.totalorder %s23, 1
      %s514 = scalar_select %p513, %s23, 1
      %s515 = smul.addr %s514, 8
      %s516 = smul.addr %s512, 16
      %s517 = sadd.s32 %s515, %s516
      %s518 = smul.addr %s517, 8
      %s519 = scalar_lea.vmem %s7, %s518
      %v520 = vld [vmem:[%s495] sm:$0xff]
      %v521 = vld [vmem:[%s495 + $0x8] sm:$0xff]
      %v522 = vld [vmem:[%s500] sm:$0x1]
      %v523 = vlaneseq
      %v524 = vshrl.u32 %v523, 7
      %v525 = vadd.s32 %v524, 8
      %v526 = vlaneseq
      %v527 = vand.u32 %v526, 127
      %vm528 = vcmp.eq.s32.totalorder %v524, %v527
      %vm529 = vcmp.eq.s32.totalorder %v525, %v527
      %v530 = vsel %vm528, 1, 0
      %v531 = vsel %vm529, 1, 0
      %v532 = vcvt.s32.f32 %v530
      %v533 = vcvt.s32.f32 %v531
      loop: start=0, step=1, limit=8
      $region49: #{temporal_spectrum_block.10} parent=47 // loop_pre_header
        _
      $region50: #{temporal_spectrum_block.10} parent=47 // loop_header
        %s535 = sphi 0, %s539
        %p536 = scmp.ge.s32.totalorder %s535, 8
        %v540 = vphi 0.0, %v1383
        %v541 = vphi 0.0, %v1384
      $region51: #{temporal_spectrum_block.10} parent=47 // loop_header_branch
        %538 = sbr.rel (%p536) target = $region55
      $region52: #{temporal_spectrum_block.10} parent=47 // loop_body
        %s542 = ssub.s32 7, %s535
        %s543 = smul.u32 %s542, 8
        %s544 = scalar_lea.vmem %s456, %s543
        %v545 = vld [vmem:[%s544] sm:$0xff]
        %s546 = scalar_lea.vmem %s466, %s543
        %v547 = vld [vmem:[%s546] sm:$0xff]
        %s548 = scalar_lea.vmem %s477, %s543
        %v549 = vld [vmem:[%s548] sm:$0xff]
        %s550 = scalar_lea.vmem %s488, %s543
        %v551 = vld [vmem:[%s550] sm:$0xff]
        %v552 = vmax.f32 %v547, 0.0
        %v553 = vand.u32 2147483647, %v547
        %v554 = vsub.f32 0.0, %v553
        %v555 = vmul.f32 %v554, 1.442695
        %v556 = vpow.pop %v555
        %v557 = vadd.f32 %v556, 1.0
        %v558 = vlog2.pop %v557
        %v559 = vmul.f32 %v558, 0.6931472
        %v560 = vadd.f32 %v552, %v559
        %v561 = vmul.f32 %v560, %v545
        %vm562 = vcmask 130048
        %v564 = vsel %vm562, %v532, 0
        %v567 = vsel %vm562, %v533, 0
        %v570 = vsel %vm562, %v549, 0
        %572 = vmatprep.subr.mxu0 0.0
        %573 = vmatpush1.xpose.msra.mxu0 0.0
        %574 = vmatprep.subr.mxu0 0.0
        %575 = vmatpush1.xpose.msra.mxu0 0.0
        %576 = vmatprep.subr.mxu0 0.0
        %577 = vmatpush1.xpose.msra.mxu0 0.0
        %578 = vmatprep.subr.mxu0 0.0
        %579 = vmatpush1.xpose.msra.mxu0 0.0
        %580 = vmatprep.subr.mxu0 0.0
        %581 = vmatpush1.xpose.msra.mxu0 0.0
        %582 = vmatprep.subr.mxu0 0.0
        %583 = vmatpush1.xpose.msra.mxu0 0.0
        %584 = vmatprep.subr.mxu0 0.0
        %585 = vmatpush1.xpose.msra.mxu0 0.0
        %586 = vmatprep.subr.mxu0 0.0
        %587 = vmatpush1.xpose.msra.mxu0 0.0
        %588 = vmatprep.subr.mxu0 0.0
        %589 = vmatpush1.xpose.msra.mxu0 0.0
        %590 = vmatprep.subr.mxu0 0.0
        %591 = vmatpush1.xpose.msra.mxu0 0.0
        %592 = vmatprep.subr.mxu0 0.0
        %593 = vmatpush1.xpose.msra.mxu0 0.0
        %594 = vmatprep.subr.mxu0 0.0
        %595 = vmatpush1.xpose.msra.mxu0 0.0
        %596 = vmatprep.subr.mxu0 0.0
        %597 = vmatpush1.xpose.msra.mxu0 0.0
        %598 = vmatprep.subr.mxu0 0.0
        %599 = vmatpush1.xpose.msra.mxu0 0.0
        %600 = vmatprep.subr.mxu0 0.0
        %601 = vmatpush1.xpose.msra.mxu0 0.0
        %602 = vmatprep.subr.mxu0 0.0
        %603 = vmatpush1.xpose.msra.mxu0 %v570
        %604 = vmatprep.subr.mxu0 0.0
        %605 = vmatpush2.xpose.msra.mxu0 0.0
        %606 = vmatprep.subr.mxu0 0.0
        %607 = vmatpush2.xpose.msra.mxu0 0.0
        %608 = vmatprep.subr.mxu0 0.0
        %609 = vmatpush2.xpose.msra.mxu0 0.0
        %610 = vmatprep.subr.mxu0 0.0
        %611 = vmatpush2.xpose.msra.mxu0 0.0
        %612 = vmatprep.subr.mxu0 0.0
        %613 = vmatpush2.xpose.msra.mxu0 0.0
        %614 = vmatprep.subr.mxu0 0.0
        %615 = vmatpush2.xpose.msra.mxu0 0.0
        %616 = vmatprep.subr.mxu0 0.0
        %617 = vmatpush2.xpose.msra.mxu0 0.0
        %618 = vmatprep.subr.mxu0 0.0
        %619 = vmatpush2.xpose.msra.mxu0 0.0
        %620 = vmatprep.subr.mxu0 0.0
        %621 = vmatpush2.xpose.msra.mxu0 0.0
        %622 = vmatprep.subr.mxu0 0.0
        %623 = vmatpush2.xpose.msra.mxu0 0.0
        %624 = vmatprep.subr.mxu0 0.0
        %625 = vmatpush2.xpose.msra.mxu0 0.0
        %626 = vmatprep.subr.mxu0 0.0
        %627 = vmatpush2.xpose.msra.mxu0 0.0
        %628 = vmatprep.subr.mxu0 0.0
        %629 = vmatpush2.xpose.msra.mxu0 0.0
        %630 = vmatprep.subr.mxu0 0.0
        %631 = vmatpush2.xpose.msra.mxu0 0.0
        %632 = vmatprep.subr.mxu0 0.0
        %633 = vmatpush2.xpose.msra.mxu0 0.0
        %634 = vmatprep.subr.mxu0 0.0
        %635 = vmatpush2.xpose.msra.mxu0 0.0
        %636 = vmatprep.mubr.f32.mxu0 0.0
        %637 = vmatmul.mubr.f32.gmra.mxu0 %v564
        %v638 = vpop.f32.mrf.mxu0
        %v639 = vadd.f32 0.0, %v638
        %v640 = vpop.f32.mrf.mxu0
        %641 = vmatprep.mubr.f32.mxu0 0.0
        %642 = vmatmul.mubr.f32.gmra.mxu0 %v567
        %v643 = vpop.f32.mrf.mxu0
        %v644 = vadd.f32 0.0, %v643
        %v645 = vpop.f32.mrf.mxu0
        %646 = vdwg.mxu0
        %v647 = vlaneseq
        %v648 = vshrl.u32 %v647, 7
        %v649 = vsub.s32 7, %v648
        %v650 = vrot.slane %v560, %v649
        %v651 = vmul.f32 %v650, %v520
        %v652 = vmul.f32 %v650, %v521
        %v653 = vmul.f32 %v651, 1.442695
        %v654 = vpow.pop %v653
        %v655 = vmul.f32 %v652, 1.442695
        %v656 = vpow.pop %v655
        %v657 = vmul.f32 %v654, %v540
        %v658 = vmul.f32 %v656, %v541
        %660 = vset.pattern.permute.xlu0 7
        %661 = vperm.xlu0 %660, %v639
        %v662 = vpop.permute.xlu0 %661
        %665 = vset.pattern.permute.xlu0 7
        %666 = vperm.xlu0 %665, %v644
        %v667 = vpop.permute.xlu0 %666
        %v669 = vlaneseq
        %v670 = vshrl.u32 %v669, 7
        %v671 = vsub.s32 7, %v670
        %v672 = vrot.slane %v561, %v671
        %v673 = vmul.f32 %v662, %v672
        %v674 = vmul.f32 %v667, %v672
        %v675 = vadd.f32 %v657, %v673
        %v676 = vadd.f32 %v658, %v674
        %v678 = vrot.slane %v551, 7
        %v679 = vsel %vm562, %v678, 0
        %681 = vmatprep.subr.mxu0 0.0
        %682 = vmatpush1.msra.mxu0 0.0
        %683 = vmatprep.subr.mxu0 0.0
        %684 = vmatpush1.msra.mxu0 0.0
        %685 = vmatprep.subr.mxu0 0.0
        %686 = vmatpush1.msra.mxu0 0.0
        %687 = vmatprep.subr.mxu0 0.0
        %688 = vmatpush1.msra.mxu0 0.0
        %689 = vmatprep.subr.mxu0 0.0
        %690 = vmatpush1.msra.mxu0 0.0
        %691 = vmatprep.subr.mxu0 0.0
        %692 = vmatpush1.msra.mxu0 0.0
        %693 = vmatprep.subr.mxu0 0.0
        %694 = vmatpush1.msra.mxu0 0.0
        %695 = vmatprep.subr.mxu0 0.0
        %696 = vmatpush1.msra.mxu0 0.0
        %697 = vmatprep.subr.mxu0 0.0
        %698 = vmatpush1.msra.mxu0 0.0
        %699 = vmatprep.subr.mxu0 0.0
        %700 = vmatpush1.msra.mxu0 0.0
        %701 = vmatprep.subr.mxu0 0.0
        %702 = vmatpush1.msra.mxu0 0.0
        %703 = vmatprep.subr.mxu0 0.0
        %704 = vmatpush1.msra.mxu0 0.0
        %705 = vmatprep.subr.mxu0 0.0
        %706 = vmatpush1.msra.mxu0 0.0
        %707 = vmatprep.subr.mxu0 0.0
        %708 = vmatpush1.msra.mxu0 0.0
        %709 = vmatprep.subr.mxu0 0.0
        %710 = vmatpush1.msra.mxu0 %v676
        %711 = vmatprep.subr.mxu0 0.0
        %712 = vmatpush1.msra.mxu0 %v675
        %713 = vmatprep.subr.mxu0 0.0
        %714 = vmatpush2.msra.mxu0 0.0
        %715 = vmatprep.subr.mxu0 0.0
        %716 = vmatpush2.msra.mxu0 0.0
        %717 = vmatprep.subr.mxu0 0.0
        %718 = vmatpush2.msra.mxu0 0.0
        %719 = vmatprep.subr.mxu0 0.0
        %720 = vmatpush2.msra.mxu0 0.0
        %721 = vmatprep.subr.mxu0 0.0
        %722 = vmatpush2.msra.mxu0 0.0
        %723 = vmatprep.subr.mxu0 0.0
        %724 = vmatpush2.msra.mxu0 0.0
        %725 = vmatprep.subr.mxu0 0.0
        %726 = vmatpush2.msra.mxu0 0.0
        %727 = vmatprep.subr.mxu0 0.0
        %728 = vmatpush2.msra.mxu0 0.0
        %729 = vmatprep.subr.mxu0 0.0
        %730 = vmatpush2.msra.mxu0 0.0
        %731 = vmatprep.subr.mxu0 0.0
        %732 = vmatpush2.msra.mxu0 0.0
        %733 = vmatprep.subr.mxu0 0.0
        %734 = vmatpush2.msra.mxu0 0.0
        %735 = vmatprep.subr.mxu0 0.0
        %736 = vmatpush2.msra.mxu0 0.0
        %737 = vmatprep.subr.mxu0 0.0
        %738 = vmatpush2.msra.mxu0 0.0
        %739 = vmatprep.subr.mxu0 0.0
        %740 = vmatpush2.msra.mxu0 0.0
        %741 = vmatprep.subr.mxu0 0.0
        %742 = vmatpush2.msra.mxu0 0.0
        %743 = vmatprep.subr.mxu0 0.0
        %744 = vmatpush2.msra.mxu0 0.0
        %745 = vmatprep.mubr.f32.mxu0 0.0
        %746 = vmatmul.mubr.f32.gmra.mxu0 %v679
        %v747 = vpop.f32.mrf.mxu0
        %v748 = vadd.f32 0.0, %v747
        %v749 = vpop.f32.mrf.mxu0
        %750 = vdwg.mxu0
        %v751 = vlaneseq
        %v752 = vshrl.u32 %v751, 7
        %v753 = vsub.s32 6, %v752
        %v754 = vrot.slane %v560, %v753
        %v755 = vmul.f32 %v754, %v520
        %v756 = vmul.f32 %v754, %v521
        %v757 = vmul.f32 %v755, 1.442695
        %v758 = vpow.pop %v757
        %v759 = vmul.f32 %v756, 1.442695
        %v760 = vpow.pop %v759
        %v761 = vmul.f32 %v758, %v675
        %v762 = vmul.f32 %v760, %v676
        %763 = vset.pattern.permute.xlu0 6
        %764 = vperm.xlu0 %763, %v639
        %v765 = vpop.permute.xlu0 %764
        %767 = vset.pattern.permute.xlu0 6
        %768 = vperm.xlu0 %767, %v644
        %v769 = vpop.permute.xlu0 %768
        %v771 = vlaneseq
        %v772 = vshrl.u32 %v771, 7
        %v773 = vsub.s32 6, %v772
        %v774 = vrot.slane %v561, %v773
        %v775 = vmul.f32 %v765, %v774
        %v776 = vmul.f32 %v769, %v774
        %v777 = vadd.f32 %v761, %v775
        %v778 = vadd.f32 %v762, %v776
        %v779 = vrot.slane %v551, 6
        %v780 = vsel %vm562, %v779, 0
        %782 = vmatprep.subr.mxu0 0.0
        %783 = vmatpush1.msra.mxu0 0.0
        %784 = vmatprep.subr.mxu0 0.0
        %785 = vmatpush1.msra.mxu0 0.0
        %786 = vmatprep.subr.mxu0 0.0
        %787 = vmatpush1.msra.mxu0 0.0
        %788 = vmatprep.subr.mxu0 0.0
        %789 = vmatpush1.msra.mxu0 0.0
        %790 = vmatprep.subr.mxu0 0.0
        %791 = vmatpush1.msra.mxu0 0.0
        %792 = vmatprep.subr.mxu0 0.0
        %793 = vmatpush1.msra.mxu0 0.0
        %794 = vmatprep.subr.mxu0 0.0
        %795 = vmatpush1.msra.mxu0 0.0
        %796 = vmatprep.subr.mxu0 0.0
        %797 = vmatpush1.msra.mxu0 0.0
        %798 = vmatprep.subr.mxu0 0.0
        %799 = vmatpush1.msra.mxu0 0.0
        %800 = vmatprep.subr.mxu0 0.0
        %801 = vmatpush1.msra.mxu0 0.0
        %802 = vmatprep.subr.mxu0 0.0
        %803 = vmatpush1.msra.mxu0 0.0
        %804 = vmatprep.subr.mxu0 0.0
        %805 = vmatpush1.msra.mxu0 0.0
        %806 = vmatprep.subr.mxu0 0.0
        %807 = vmatpush1.msra.mxu0 0.0
        %808 = vmatprep.subr.mxu0 0.0
        %809 = vmatpush1.msra.mxu0 0.0
        %810 = vmatprep.subr.mxu0 0.0
        %811 = vmatpush1.msra.mxu0 %v778
        %812 = vmatprep.subr.mxu0 0.0
        %813 = vmatpush1.msra.mxu0 %v777
        %814 = vmatprep.subr.mxu0 0.0
        %815 = vmatpush2.msra.mxu0 0.0
        %816 = vmatprep.subr.mxu0 0.0
        %817 = vmatpush2.msra.mxu0 0.0
        %818 = vmatprep.subr.mxu0 0.0
        %819 = vmatpush2.msra.mxu0 0.0
        %820 = vmatprep.subr.mxu0 0.0
        %821 = vmatpush2.msra.mxu0 0.0
        %822 = vmatprep.subr.mxu0 0.0
        %823 = vmatpush2.msra.mxu0 0.0
        %824 = vmatprep.subr.mxu0 0.0
        %825 = vmatpush2.msra.mxu0 0.0
        %826 = vmatprep.subr.mxu0 0.0
        %827 = vmatpush2.msra.mxu0 0.0
        %828 = vmatprep.subr.mxu0 0.0
        %829 = vmatpush2.msra.mxu0 0.0
        %830 = vmatprep.subr.mxu0 0.0
        %831 = vmatpush2.msra.mxu0 0.0
        %832 = vmatprep.subr.mxu0 0.0
        %833 = vmatpush2.msra.mxu0 0.0
        %834 = vmatprep.subr.mxu0 0.0
        %835 = vmatpush2.msra.mxu0 0.0
        %836 = vmatprep.subr.mxu0 0.0
        %837 = vmatpush2.msra.mxu0 0.0
        %838 = vmatprep.subr.mxu0 0.0
        %839 = vmatpush2.msra.mxu0 0.0
        %840 = vmatprep.subr.mxu0 0.0
        %841 = vmatpush2.msra.mxu0 0.0
        %842 = vmatprep.subr.mxu0 0.0
        %843 = vmatpush2.msra.mxu0 0.0
        %844 = vmatprep.subr.mxu0 0.0
        %845 = vmatpush2.msra.mxu0 0.0
        %846 = vmatprep.mubr.f32.mxu0 0.0
        %847 = vmatmul.mubr.f32.gmra.mxu0 %v780
        %v848 = vpop.f32.mrf.mxu0
        %v849 = vadd.f32 0.0, %v848
        %v850 = vpop.f32.mrf.mxu0
        %851 = vdwg.mxu0
        %v852 = vlaneseq
        %v853 = vshrl.u32 %v852, 7
        %v854 = vsub.s32 5, %v853
        %v855 = vrot.slane %v560, %v854
        %v856 = vmul.f32 %v855, %v520
        %v857 = vmul.f32 %v855, %v521
        %v858 = vmul.f32 %v856, 1.442695
        %v859 = vpow.pop %v858
        %v860 = vmul.f32 %v857, 1.442695
        %v861 = vpow.pop %v860
        %v862 = vmul.f32 %v859, %v777
        %v863 = vmul.f32 %v861, %v778
        %864 = vset.pattern.permute.xlu0 5
        %865 = vperm.xlu0 %864, %v639
        %v866 = vpop.permute.xlu0 %865
        %868 = vset.pattern.permute.xlu0 5
        %869 = vperm.xlu0 %868, %v644
        %v870 = vpop.permute.xlu0 %869
        %v872 = vlaneseq
        %v873 = vshrl.u32 %v872, 7
        %v874 = vsub.s32 5, %v873
        %v875 = vrot.slane %v561, %v874
        %v876 = vmul.f32 %v866, %v875
        %v877 = vmul.f32 %v870, %v875
        %v878 = vadd.f32 %v862, %v876
        %v879 = vadd.f32 %v863, %v877
        %v880 = vrot.slane %v551, 5
        %v881 = vsel %vm562, %v880, 0
        %883 = vmatprep.subr.mxu0 0.0
        %884 = vmatpush1.msra.mxu0 0.0
        %885 = vmatprep.subr.mxu0 0.0
        %886 = vmatpush1.msra.mxu0 0.0
        %887 = vmatprep.subr.mxu0 0.0
        %888 = vmatpush1.msra.mxu0 0.0
        %889 = vmatprep.subr.mxu0 0.0
        %890 = vmatpush1.msra.mxu0 0.0
        %891 = vmatprep.subr.mxu0 0.0
        %892 = vmatpush1.msra.mxu0 0.0
        %893 = vmatprep.subr.mxu0 0.0
        %894 = vmatpush1.msra.mxu0 0.0
        %895 = vmatprep.subr.mxu0 0.0
        %896 = vmatpush1.msra.mxu0 0.0
        %897 = vmatprep.subr.mxu0 0.0
        %898 = vmatpush1.msra.mxu0 0.0
        %899 = vmatprep.subr.mxu0 0.0
        %900 = vmatpush1.msra.mxu0 0.0
        %901 = vmatprep.subr.mxu0 0.0
        %902 = vmatpush1.msra.mxu0 0.0
        %903 = vmatprep.subr.mxu0 0.0
        %904 = vmatpush1.msra.mxu0 0.0
        %905 = vmatprep.subr.mxu0 0.0
        %906 = vmatpush1.msra.mxu0 0.0
        %907 = vmatprep.subr.mxu0 0.0
        %908 = vmatpush1.msra.mxu0 0.0
        %909 = vmatprep.subr.mxu0 0.0
        %910 = vmatpush1.msra.mxu0 0.0
        %911 = vmatprep.subr.mxu0 0.0
        %912 = vmatpush1.msra.mxu0 %v879
        %913 = vmatprep.subr.mxu0 0.0
        %914 = vmatpush1.msra.mxu0 %v878
        %915 = vmatprep.subr.mxu0 0.0
        %916 = vmatpush2.msra.mxu0 0.0
        %917 = vmatprep.subr.mxu0 0.0
        %918 = vmatpush2.msra.mxu0 0.0
        %919 = vmatprep.subr.mxu0 0.0
        %920 = vmatpush2.msra.mxu0 0.0
        %921 = vmatprep.subr.mxu0 0.0
        %922 = vmatpush2.msra.mxu0 0.0
        %923 = vmatprep.subr.mxu0 0.0
        %924 = vmatpush2.msra.mxu0 0.0
        %925 = vmatprep.subr.mxu0 0.0
        %926 = vmatpush2.msra.mxu0 0.0
        %927 = vmatprep.subr.mxu0 0.0
        %928 = vmatpush2.msra.mxu0 0.0
        %929 = vmatprep.subr.mxu0 0.0
        %930 = vmatpush2.msra.mxu0 0.0
        %931 = vmatprep.subr.mxu0 0.0
        %932 = vmatpush2.msra.mxu0 0.0
        %933 = vmatprep.subr.mxu0 0.0
        %934 = vmatpush2.msra.mxu0 0.0
        %935 = vmatprep.subr.mxu0 0.0
        %936 = vmatpush2.msra.mxu0 0.0
        %937 = vmatprep.subr.mxu0 0.0
        %938 = vmatpush2.msra.mxu0 0.0
        %939 = vmatprep.subr.mxu0 0.0
        %940 = vmatpush2.msra.mxu0 0.0
        %941 = vmatprep.subr.mxu0 0.0
        %942 = vmatpush2.msra.mxu0 0.0
        %943 = vmatprep.subr.mxu0 0.0
        %944 = vmatpush2.msra.mxu0 0.0
        %945 = vmatprep.subr.mxu0 0.0
        %946 = vmatpush2.msra.mxu0 0.0
        %947 = vmatprep.mubr.f32.mxu0 0.0
        %948 = vmatmul.mubr.f32.gmra.mxu0 %v881
        %v949 = vpop.f32.mrf.mxu0
        %v950 = vadd.f32 0.0, %v949
        %v951 = vpop.f32.mrf.mxu0
        %952 = vdwg.mxu0
        %v953 = vlaneseq
        %v954 = vshrl.u32 %v953, 7
        %v955 = vsub.s32 4, %v954
        %v956 = vrot.slane %v560, %v955
        %v957 = vmul.f32 %v956, %v520
        %v958 = vmul.f32 %v956, %v521
        %v959 = vmul.f32 %v957, 1.442695
        %v960 = vpow.pop %v959
        %v961 = vmul.f32 %v958, 1.442695
        %v962 = vpow.pop %v961
        %v963 = vmul.f32 %v960, %v878
        %v964 = vmul.f32 %v962, %v879
        %965 = vset.pattern.permute.xlu0 4
        %966 = vperm.xlu0 %965, %v639
        %v967 = vpop.permute.xlu0 %966
        %969 = vset.pattern.permute.xlu0 4
        %970 = vperm.xlu0 %969, %v644
        %v971 = vpop.permute.xlu0 %970
        %v973 = vlaneseq
        %v974 = vshrl.u32 %v973, 7
        %v975 = vsub.s32 4, %v974
        %v976 = vrot.slane %v561, %v975
        %v977 = vmul.f32 %v967, %v976
        %v978 = vmul.f32 %v971, %v976
        %v979 = vadd.f32 %v963, %v977
        %v980 = vadd.f32 %v964, %v978
        %v981 = vrot.slane %v551, 4
        %v982 = vsel %vm562, %v981, 0
        %984 = vmatprep.subr.mxu0 0.0
        %985 = vmatpush1.msra.mxu0 0.0
        %986 = vmatprep.subr.mxu0 0.0
        %987 = vmatpush1.msra.mxu0 0.0
        %988 = vmatprep.subr.mxu0 0.0
        %989 = vmatpush1.msra.mxu0 0.0
        %990 = vmatprep.subr.mxu0 0.0
        %991 = vmatpush1.msra.mxu0 0.0
        %992 = vmatprep.subr.mxu0 0.0
        %993 = vmatpush1.msra.mxu0 0.0
        %994 = vmatprep.subr.mxu0 0.0
        %995 = vmatpush1.msra.mxu0 0.0
        %996 = vmatprep.subr.mxu0 0.0
        %997 = vmatpush1.msra.mxu0 0.0
        %998 = vmatprep.subr.mxu0 0.0
        %999 = vmatpush1.msra.mxu0 0.0
        %1000 = vmatprep.subr.mxu0 0.0
        %1001 = vmatpush1.msra.mxu0 0.0
        %1002 = vmatprep.subr.mxu0 0.0
        %1003 = vmatpush1.msra.mxu0 0.0
        %1004 = vmatprep.subr.mxu0 0.0
        %1005 = vmatpush1.msra.mxu0 0.0
        %1006 = vmatprep.subr.mxu0 0.0
        %1007 = vmatpush1.msra.mxu0 0.0
        %1008 = vmatprep.subr.mxu0 0.0
        %1009 = vmatpush1.msra.mxu0 0.0
        %1010 = vmatprep.subr.mxu0 0.0
        %1011 = vmatpush1.msra.mxu0 0.0
        %1012 = vmatprep.subr.mxu0 0.0
        %1013 = vmatpush1.msra.mxu0 %v980
        %1014 = vmatprep.subr.mxu0 0.0
        %1015 = vmatpush1.msra.mxu0 %v979
        %1016 = vmatprep.subr.mxu0 0.0
        %1017 = vmatpush2.msra.mxu0 0.0
        %1018 = vmatprep.subr.mxu0 0.0
        %1019 = vmatpush2.msra.mxu0 0.0
        %1020 = vmatprep.subr.mxu0 0.0
        %1021 = vmatpush2.msra.mxu0 0.0
        %1022 = vmatprep.subr.mxu0 0.0
        %1023 = vmatpush2.msra.mxu0 0.0
        %1024 = vmatprep.subr.mxu0 0.0
        %1025 = vmatpush2.msra.mxu0 0.0
        %1026 = vmatprep.subr.mxu0 0.0
        %1027 = vmatpush2.msra.mxu0 0.0
        %1028 = vmatprep.subr.mxu0 0.0
        %1029 = vmatpush2.msra.mxu0 0.0
        %1030 = vmatprep.subr.mxu0 0.0
        %1031 = vmatpush2.msra.mxu0 0.0
        %1032 = vmatprep.subr.mxu0 0.0
        %1033 = vmatpush2.msra.mxu0 0.0
        %1034 = vmatprep.subr.mxu0 0.0
        %1035 = vmatpush2.msra.mxu0 0.0
        %1036 = vmatprep.subr.mxu0 0.0
        %1037 = vmatpush2.msra.mxu0 0.0
        %1038 = vmatprep.subr.mxu0 0.0
        %1039 = vmatpush2.msra.mxu0 0.0
        %1040 = vmatprep.subr.mxu0 0.0
        %1041 = vmatpush2.msra.mxu0 0.0
        %1042 = vmatprep.subr.mxu0 0.0
        %1043 = vmatpush2.msra.mxu0 0.0
        %1044 = vmatprep.subr.mxu0 0.0
        %1045 = vmatpush2.msra.mxu0 0.0
        %1046 = vmatprep.subr.mxu0 0.0
        %1047 = vmatpush2.msra.mxu0 0.0
        %1048 = vmatprep.mubr.f32.mxu0 0.0
        %1049 = vmatmul.mubr.f32.gmra.mxu0 %v982
        %v1050 = vpop.f32.mrf.mxu0
        %v1051 = vadd.f32 0.0, %v1050
        %v1052 = vpop.f32.mrf.mxu0
        %1053 = vdwg.mxu0
        %v1054 = vlaneseq
        %v1055 = vshrl.u32 %v1054, 7
        %v1056 = vsub.s32 3, %v1055
        %v1057 = vrot.slane %v560, %v1056
        %v1058 = vmul.f32 %v1057, %v520
        %v1059 = vmul.f32 %v1057, %v521
        %v1060 = vmul.f32 %v1058, 1.442695
        %v1061 = vpow.pop %v1060
        %v1062 = vmul.f32 %v1059, 1.442695
        %v1063 = vpow.pop %v1062
        %v1064 = vmul.f32 %v1061, %v979
        %v1065 = vmul.f32 %v1063, %v980
        %1066 = vset.pattern.permute.xlu0 3
        %1067 = vperm.xlu0 %1066, %v639
        %v1068 = vpop.permute.xlu0 %1067
        %1070 = vset.pattern.permute.xlu0 3
        %1071 = vperm.xlu0 %1070, %v644
        %v1072 = vpop.permute.xlu0 %1071
        %v1074 = vlaneseq
        %v1075 = vshrl.u32 %v1074, 7
        %v1076 = vsub.s32 3, %v1075
        %v1077 = vrot.slane %v561, %v1076
        %v1078 = vmul.f32 %v1068, %v1077
        %v1079 = vmul.f32 %v1072, %v1077
        %v1080 = vadd.f32 %v1064, %v1078
        %v1081 = vadd.f32 %v1065, %v1079
        %v1082 = vrot.slane %v551, 3
        %v1083 = vsel %vm562, %v1082, 0
        %1085 = vmatprep.subr.mxu0 0.0
        %1086 = vmatpush1.msra.mxu0 0.0
        %1087 = vmatprep.subr.mxu0 0.0
        %1088 = vmatpush1.msra.mxu0 0.0
        %1089 = vmatprep.subr.mxu0 0.0
        %1090 = vmatpush1.msra.mxu0 0.0
        %1091 = vmatprep.subr.mxu0 0.0
        %1092 = vmatpush1.msra.mxu0 0.0
        %1093 = vmatprep.subr.mxu0 0.0
        %1094 = vmatpush1.msra.mxu0 0.0
        %1095 = vmatprep.subr.mxu0 0.0
        %1096 = vmatpush1.msra.mxu0 0.0
        %1097 = vmatprep.subr.mxu0 0.0
        %1098 = vmatpush1.msra.mxu0 0.0
        %1099 = vmatprep.subr.mxu0 0.0
        %1100 = vmatpush1.msra.mxu0 0.0
        %1101 = vmatprep.subr.mxu0 0.0
        %1102 = vmatpush1.msra.mxu0 0.0
        %1103 = vmatprep.subr.mxu0 0.0
        %1104 = vmatpush1.msra.mxu0 0.0
        %1105 = vmatprep.subr.mxu0 0.0
        %1106 = vmatpush1.msra.mxu0 0.0
        %1107 = vmatprep.subr.mxu0 0.0
        %1108 = vmatpush1.msra.mxu0 0.0
        %1109 = vmatprep.subr.mxu0 0.0
        %1110 = vmatpush1.msra.mxu0 0.0
        %1111 = vmatprep.subr.mxu0 0.0
        %1112 = vmatpush1.msra.mxu0 0.0
        %1113 = vmatprep.subr.mxu0 0.0
        %1114 = vmatpush1.msra.mxu0 %v1081
        %1115 = vmatprep.subr.mxu0 0.0
        %1116 = vmatpush1.msra.mxu0 %v1080
        %1117 = vmatprep.subr.mxu0 0.0
        %1118 = vmatpush2.msra.mxu0 0.0
        %1119 = vmatprep.subr.mxu0 0.0
        %1120 = vmatpush2.msra.mxu0 0.0
        %1121 = vmatprep.subr.mxu0 0.0
        %1122 = vmatpush2.msra.mxu0 0.0
        %1123 = vmatprep.subr.mxu0 0.0
        %1124 = vmatpush2.msra.mxu0 0.0
        %1125 = vmatprep.subr.mxu0 0.0
        %1126 = vmatpush2.msra.mxu0 0.0
        %1127 = vmatprep.subr.mxu0 0.0
        %1128 = vmatpush2.msra.mxu0 0.0
        %1129 = vmatprep.subr.mxu0 0.0
        %1130 = vmatpush2.msra.mxu0 0.0
        %1131 = vmatprep.subr.mxu0 0.0
        %1132 = vmatpush2.msra.mxu0 0.0
        %1133 = vmatprep.subr.mxu0 0.0
        %1134 = vmatpush2.msra.mxu0 0.0
        %1135 = vmatprep.subr.mxu0 0.0
        %1136 = vmatpush2.msra.mxu0 0.0
        %1137 = vmatprep.subr.mxu0 0.0
        %1138 = vmatpush2.msra.mxu0 0.0
        %1139 = vmatprep.subr.mxu0 0.0
        %1140 = vmatpush2.msra.mxu0 0.0
        %1141 = vmatprep.subr.mxu0 0.0
        %1142 = vmatpush2.msra.mxu0 0.0
        %1143 = vmatprep.subr.mxu0 0.0
        %1144 = vmatpush2.msra.mxu0 0.0
        %1145 = vmatprep.subr.mxu0 0.0
        %1146 = vmatpush2.msra.mxu0 0.0
        %1147 = vmatprep.subr.mxu0 0.0
        %1148 = vmatpush2.msra.mxu0 0.0
        %1149 = vmatprep.mubr.f32.mxu0 0.0
        %1150 = vmatmul.mubr.f32.gmra.mxu0 %v1083
        %v1151 = vpop.f32.mrf.mxu0
        %v1152 = vadd.f32 0.0, %v1151
        %v1153 = vpop.f32.mrf.mxu0
        %1154 = vdwg.mxu0
        %v1155 = vlaneseq
        %v1156 = vshrl.u32 %v1155, 7
        %v1157 = vsub.s32 2, %v1156
        %v1158 = vrot.slane %v560, %v1157
        %v1159 = vmul.f32 %v1158, %v520
        %v1160 = vmul.f32 %v1158, %v521
        %v1161 = vmul.f32 %v1159, 1.442695
        %v1162 = vpow.pop %v1161
        %v1163 = vmul.f32 %v1160, 1.442695
        %v1164 = vpow.pop %v1163
        %v1165 = vmul.f32 %v1162, %v1080
        %v1166 = vmul.f32 %v1164, %v1081
        %1167 = vset.pattern.permute.xlu0 2
        %1168 = vperm.xlu0 %1167, %v639
        %v1169 = vpop.permute.xlu0 %1168
        %1171 = vset.pattern.permute.xlu0 2
        %1172 = vperm.xlu0 %1171, %v644
        %v1173 = vpop.permute.xlu0 %1172
        %v1175 = vlaneseq
        %v1176 = vshrl.u32 %v1175, 7
        %v1177 = vsub.s32 2, %v1176
        %v1178 = vrot.slane %v561, %v1177
        %v1179 = vmul.f32 %v1169, %v1178
        %v1180 = vmul.f32 %v1173, %v1178
        %v1181 = vadd.f32 %v1165, %v1179
        %v1182 = vadd.f32 %v1166, %v1180
        %v1183 = vrot.slane %v551, 2
        %v1184 = vsel %vm562, %v1183, 0
        %1186 = vmatprep.subr.mxu0 0.0
        %1187 = vmatpush1.msra.mxu0 0.0
        %1188 = vmatprep.subr.mxu0 0.0
        %1189 = vmatpush1.msra.mxu0 0.0
        %1190 = vmatprep.subr.mxu0 0.0
        %1191 = vmatpush1.msra.mxu0 0.0
        %1192 = vmatprep.subr.mxu0 0.0
        %1193 = vmatpush1.msra.mxu0 0.0
        %1194 = vmatprep.subr.mxu0 0.0
        %1195 = vmatpush1.msra.mxu0 0.0
        %1196 = vmatprep.subr.mxu0 0.0
        %1197 = vmatpush1.msra.mxu0 0.0
        %1198 = vmatprep.subr.mxu0 0.0
        %1199 = vmatpush1.msra.mxu0 0.0
        %1200 = vmatprep.subr.mxu0 0.0
        %1201 = vmatpush1.msra.mxu0 0.0
        %1202 = vmatprep.subr.mxu0 0.0
        %1203 = vmatpush1.msra.mxu0 0.0
        %1204 = vmatprep.subr.mxu0 0.0
        %1205 = vmatpush1.msra.mxu0 0.0
        %1206 = vmatprep.subr.mxu0 0.0
        %1207 = vmatpush1.msra.mxu0 0.0
        %1208 = vmatprep.subr.mxu0 0.0
        %1209 = vmatpush1.msra.mxu0 0.0
        %1210 = vmatprep.subr.mxu0 0.0
        %1211 = vmatpush1.msra.mxu0 0.0
        %1212 = vmatprep.subr.mxu0 0.0
        %1213 = vmatpush1.msra.mxu0 0.0
        %1214 = vmatprep.subr.mxu0 0.0
        %1215 = vmatpush1.msra.mxu0 %v1182
        %1216 = vmatprep.subr.mxu0 0.0
        %1217 = vmatpush1.msra.mxu0 %v1181
        %1218 = vmatprep.subr.mxu0 0.0
        %1219 = vmatpush2.msra.mxu0 0.0
        %1220 = vmatprep.subr.mxu0 0.0
        %1221 = vmatpush2.msra.mxu0 0.0
        %1222 = vmatprep.subr.mxu0 0.0
        %1223 = vmatpush2.msra.mxu0 0.0
        %1224 = vmatprep.subr.mxu0 0.0
        %1225 = vmatpush2.msra.mxu0 0.0
        %1226 = vmatprep.subr.mxu0 0.0
        %1227 = vmatpush2.msra.mxu0 0.0
        %1228 = vmatprep.subr.mxu0 0.0
        %1229 = vmatpush2.msra.mxu0 0.0
        %1230 = vmatprep.subr.mxu0 0.0
        %1231 = vmatpush2.msra.mxu0 0.0
        %1232 = vmatprep.subr.mxu0 0.0
        %1233 = vmatpush2.msra.mxu0 0.0
        %1234 = vmatprep.subr.mxu0 0.0
        %1235 = vmatpush2.msra.mxu0 0.0
        %1236 = vmatprep.subr.mxu0 0.0
        %1237 = vmatpush2.msra.mxu0 0.0
        %1238 = vmatprep.subr.mxu0 0.0
        %1239 = vmatpush2.msra.mxu0 0.0
        %1240 = vmatprep.subr.mxu0 0.0
        %1241 = vmatpush2.msra.mxu0 0.0
        %1242 = vmatprep.subr.mxu0 0.0
        %1243 = vmatpush2.msra.mxu0 0.0
        %1244 = vmatprep.subr.mxu0 0.0
        %1245 = vmatpush2.msra.mxu0 0.0
        %1246 = vmatprep.subr.mxu0 0.0
        %1247 = vmatpush2.msra.mxu0 0.0
        %1248 = vmatprep.subr.mxu0 0.0
        %1249 = vmatpush2.msra.mxu0 0.0
        %1250 = vmatprep.mubr.f32.mxu0 0.0
        %1251 = vmatmul.mubr.f32.gmra.mxu0 %v1184
        %v1252 = vpop.f32.mrf.mxu0
        %v1253 = vadd.f32 0.0, %v1252
        %v1254 = vpop.f32.mrf.mxu0
        %1255 = vdwg.mxu0
        %v1256 = vlaneseq
        %v1257 = vshrl.u32 %v1256, 7
        %v1258 = vsub.s32 1, %v1257
        %v1259 = vrot.slane %v560, %v1258
        %v1260 = vmul.f32 %v1259, %v520
        %v1261 = vmul.f32 %v1259, %v521
        %v1262 = vmul.f32 %v1260, 1.442695
        %v1263 = vpow.pop %v1262
        %v1264 = vmul.f32 %v1261, 1.442695
        %v1265 = vpow.pop %v1264
        %v1266 = vmul.f32 %v1263, %v1181
        %v1267 = vmul.f32 %v1265, %v1182
        %1268 = vset.pattern.permute.xlu0 1
        %1269 = vperm.xlu0 %1268, %v639
        %v1270 = vpop.permute.xlu0 %1269
        %1272 = vset.pattern.permute.xlu0 1
        %1273 = vperm.xlu0 %1272, %v644
        %v1274 = vpop.permute.xlu0 %1273
        %v1276 = vlaneseq
        %v1277 = vshrl.u32 %v1276, 7
        %v1278 = vsub.s32 1, %v1277
        %v1279 = vrot.slane %v561, %v1278
        %v1280 = vmul.f32 %v1270, %v1279
        %v1281 = vmul.f32 %v1274, %v1279
        %v1282 = vadd.f32 %v1266, %v1280
        %v1283 = vadd.f32 %v1267, %v1281
        %v1284 = vrot.slane %v551, 1
        %v1285 = vsel %vm562, %v1284, 0
        %1287 = vmatprep.subr.mxu0 0.0
        %1288 = vmatpush1.msra.mxu0 0.0
        %1289 = vmatprep.subr.mxu0 0.0
        %1290 = vmatpush1.msra.mxu0 0.0
        %1291 = vmatprep.subr.mxu0 0.0
        %1292 = vmatpush1.msra.mxu0 0.0
        %1293 = vmatprep.subr.mxu0 0.0
        %1294 = vmatpush1.msra.mxu0 0.0
        %1295 = vmatprep.subr.mxu0 0.0
        %1296 = vmatpush1.msra.mxu0 0.0
        %1297 = vmatprep.subr.mxu0 0.0
        %1298 = vmatpush1.msra.mxu0 0.0
        %1299 = vmatprep.subr.mxu0 0.0
        %1300 = vmatpush1.msra.mxu0 0.0
        %1301 = vmatprep.subr.mxu0 0.0
        %1302 = vmatpush1.msra.mxu0 0.0
        %1303 = vmatprep.subr.mxu0 0.0
        %1304 = vmatpush1.msra.mxu0 0.0
        %1305 = vmatprep.subr.mxu0 0.0
        %1306 = vmatpush1.msra.mxu0 0.0
        %1307 = vmatprep.subr.mxu0 0.0
        %1308 = vmatpush1.msra.mxu0 0.0
        %1309 = vmatprep.subr.mxu0 0.0
        %1310 = vmatpush1.msra.mxu0 0.0
        %1311 = vmatprep.subr.mxu0 0.0
        %1312 = vmatpush1.msra.mxu0 0.0
        %1313 = vmatprep.subr.mxu0 0.0
        %1314 = vmatpush1.msra.mxu0 0.0
        %1315 = vmatprep.subr.mxu0 0.0
        %1316 = vmatpush1.msra.mxu0 %v1283
        %1317 = vmatprep.subr.mxu0 0.0
        %1318 = vmatpush1.msra.mxu0 %v1282
        %1319 = vmatprep.subr.mxu0 0.0
        %1320 = vmatpush2.msra.mxu0 0.0
        %1321 = vmatprep.subr.mxu0 0.0
        %1322 = vmatpush2.msra.mxu0 0.0
        %1323 = vmatprep.subr.mxu0 0.0
        %1324 = vmatpush2.msra.mxu0 0.0
        %1325 = vmatprep.subr.mxu0 0.0
        %1326 = vmatpush2.msra.mxu0 0.0
        %1327 = vmatprep.subr.mxu0 0.0
        %1328 = vmatpush2.msra.mxu0 0.0
        %1329 = vmatprep.subr.mxu0 0.0
        %1330 = vmatpush2.msra.mxu0 0.0
        %1331 = vmatprep.subr.mxu0 0.0
        %1332 = vmatpush2.msra.mxu0 0.0
        %1333 = vmatprep.subr.mxu0 0.0
        %1334 = vmatpush2.msra.mxu0 0.0
        %1335 = vmatprep.subr.mxu0 0.0
        %1336 = vmatpush2.msra.mxu0 0.0
        %1337 = vmatprep.subr.mxu0 0.0
        %1338 = vmatpush2.msra.mxu0 0.0
        %1339 = vmatprep.subr.mxu0 0.0
        %1340 = vmatpush2.msra.mxu0 0.0
        %1341 = vmatprep.subr.mxu0 0.0
        %1342 = vmatpush2.msra.mxu0 0.0
        %1343 = vmatprep.subr.mxu0 0.0
        %1344 = vmatpush2.msra.mxu0 0.0
        %1345 = vmatprep.subr.mxu0 0.0
        %1346 = vmatpush2.msra.mxu0 0.0
        %1347 = vmatprep.subr.mxu0 0.0
        %1348 = vmatpush2.msra.mxu0 0.0
        %1349 = vmatprep.subr.mxu0 0.0
        %1350 = vmatpush2.msra.mxu0 0.0
        %1351 = vmatprep.mubr.f32.mxu0 0.0
        %1352 = vmatmul.mubr.f32.gmra.mxu0 %v1285
        %v1353 = vpop.f32.mrf.mxu0
        %v1354 = vadd.f32 0.0, %v1353
        %v1355 = vpop.f32.mrf.mxu0
        %1356 = vdwg.mxu0
        %v1357 = vlaneseq
        %v1358 = vshrl.u32 %v1357, 7
        %v1359 = vsub.s32 0, %v1358
        %v1360 = vrot.slane %v560, %v1359
        %v1361 = vmul.f32 %v1360, %v520
        %v1362 = vmul.f32 %v1360, %v521
        %v1363 = vmul.f32 %v1361, 1.442695
        %v1364 = vpow.pop %v1363
        %v1365 = vmul.f32 %v1362, 1.442695
        %v1366 = vpow.pop %v1365
        %v1367 = vmul.f32 %v1364, %v1282
        %v1368 = vmul.f32 %v1366, %v1283
        %1369 = vset.pattern.permute.xlu0 0
        %1370 = vperm.xlu0 %1369, %v639
        %v1371 = vpop.permute.xlu0 %1370
        %1373 = vset.pattern.permute.xlu0 0
        %1374 = vperm.xlu0 %1373, %v644
        %v1375 = vpop.permute.xlu0 %1374
        %v1377 = vlaneseq
        %v1378 = vshrl.u32 %v1377, 7
        %v1379 = vsub.s32 0, %v1378
        %v1380 = vrot.slane %v561, %v1379
        %v1381 = vmul.f32 %v1371, %v1380
        %v1382 = vmul.f32 %v1375, %v1380
        %v1383 = vadd.f32 %v1367, %v1381
        %v1384 = vadd.f32 %v1368, %v1382
        %v1385 = vsel %vm562, %v551, 0
        %1387 = vmatprep.subr.mxu0 0.0
        %1388 = vmatpush1.msra.mxu0 0.0
        %1389 = vmatprep.subr.mxu0 0.0
        %1390 = vmatpush1.msra.mxu0 0.0
        %1391 = vmatprep.subr.mxu0 0.0
        %1392 = vmatpush1.msra.mxu0 0.0
        %1393 = vmatprep.subr.mxu0 0.0
        %1394 = vmatpush1.msra.mxu0 0.0
        %1395 = vmatprep.subr.mxu0 0.0
        %1396 = vmatpush1.msra.mxu0 0.0
        %1397 = vmatprep.subr.mxu0 0.0
        %1398 = vmatpush1.msra.mxu0 0.0
        %1399 = vmatprep.subr.mxu0 0.0
        %1400 = vmatpush1.msra.mxu0 0.0
        %1401 = vmatprep.subr.mxu0 0.0
        %1402 = vmatpush1.msra.mxu0 0.0
        %1403 = vmatprep.subr.mxu0 0.0
        %1404 = vmatpush1.msra.mxu0 0.0
        %1405 = vmatprep.subr.mxu0 0.0
        %1406 = vmatpush1.msra.mxu0 0.0
        %1407 = vmatprep.subr.mxu0 0.0
        %1408 = vmatpush1.msra.mxu0 0.0
        %1409 = vmatprep.subr.mxu0 0.0
        %1410 = vmatpush1.msra.mxu0 0.0
        %1411 = vmatprep.subr.mxu0 0.0
        %1412 = vmatpush1.msra.mxu0 0.0
        %1413 = vmatprep.subr.mxu0 0.0
        %1414 = vmatpush1.msra.mxu0 0.0
        %1415 = vmatprep.subr.mxu0 0.0
        %1416 = vmatpush1.msra.mxu0 %v1384
        %1417 = vmatprep.subr.mxu0 0.0
        %1418 = vmatpush1.msra.mxu0 %v1383
        %1419 = vmatprep.subr.mxu0 0.0
        %1420 = vmatpush2.msra.mxu0 0.0
        %1421 = vmatprep.subr.mxu0 0.0
        %1422 = vmatpush2.msra.mxu0 0.0
        %1423 = vmatprep.subr.mxu0 0.0
        %1424 = vmatpush2.msra.mxu0 0.0
        %1425 = vmatprep.subr.mxu0 0.0
        %1426 = vmatpush2.msra.mxu0 0.0
        %1427 = vmatprep.subr.mxu0 0.0
        %1428 = vmatpush2.msra.mxu0 0.0
        %1429 = vmatprep.subr.mxu0 0.0
        %1430 = vmatpush2.msra.mxu0 0.0
        %1431 = vmatprep.subr.mxu0 0.0
        %1432 = vmatpush2.msra.mxu0 0.0
        %1433 = vmatprep.subr.mxu0 0.0
        %1434 = vmatpush2.msra.mxu0 0.0
        %1435 = vmatprep.subr.mxu0 0.0
        %1436 = vmatpush2.msra.mxu0 0.0
        %1437 = vmatprep.subr.mxu0 0.0
        %1438 = vmatpush2.msra.mxu0 0.0
        %1439 = vmatprep.subr.mxu0 0.0
        %1440 = vmatpush2.msra.mxu0 0.0
        %1441 = vmatprep.subr.mxu0 0.0
        %1442 = vmatpush2.msra.mxu0 0.0
        %1443 = vmatprep.subr.mxu0 0.0
        %1444 = vmatpush2.msra.mxu0 0.0
        %1445 = vmatprep.subr.mxu0 0.0
        %1446 = vmatpush2.msra.mxu0 0.0
        %1447 = vmatprep.subr.mxu0 0.0
        %1448 = vmatpush2.msra.mxu0 0.0
        %1449 = vmatprep.subr.mxu0 0.0
        %1450 = vmatpush2.msra.mxu0 0.0
        %1451 = vmatprep.mubr.f32.mxu0 0.0
        %1452 = vmatmul.mubr.f32.gmra.mxu0 %v1385
        %v1453 = vpop.f32.mrf.mxu0
        %v1454 = vadd.f32 0.0, %v1453
        %v1455 = vpop.f32.mrf.mxu0
        %1456 = vdwg.mxu0
        %v1458 = vrot.slane %v1354, 7
        %v1461 = vrot.slane %v1253, 6
        %v1464 = vrot.slane %v1152, 5
        %v1467 = vrot.slane %v1051, 4
        %v1470 = vrot.slane %v950, 3
        %v1473 = vrot.slane %v849, 2
        %v1476 = vrot.slane %v748, 1
        %vm1478 = vcmask 1040384
        %v1479 = vsel %vm1478, %v1454, %v1458
        %vm1480 = vcmask 1041408
        %v1481 = vsel %vm1480, %v1479, %v1461
        %vm1482 = vcmask 1042432
        %v1483 = vsel %vm1482, %v1481, %v1464
        %vm1484 = vcmask 1043456
        %v1485 = vsel %vm1484, %v1483, %v1467
        %vm1486 = vcmask 1044480
        %v1487 = vsel %vm1486, %v1485, %v1470
        %vm1488 = vcmask 1045504
        %v1489 = vsel %vm1488, %v1487, %v1473
        %vm1490 = vcmask 1046528
        %v1491 = vsel %vm1490, %v1489, %v1476
        %v1493 = vlaneseq
        %v1494 = vshrl.u32 %v1493, 7
        %v1495 = vsub.s32 0, %v1494
        %v1496 = vrot.slane %v522, %v1495
        %v1498 = vmul.f32 %v1496, %v545
        %v1499 = vadd.f32 %v1491, %v1498
        %s1500 = scalar_lea.vmem %s510, %s543
        %v1501 = vld [vmem:[%s1500] sm:$0xff]
        %v1502 = vadd.f32 %v1499, %v1501
        %s1503 = scalar_lea.vmem %s519, %s543
        %vm1504 = vcmask 523264
        %1505 = vst.msk [vmem:[%s1503] sm:$0xff] %vm1504, %v1502
      $region53: #{temporal_spectrum_block.10} parent=47 // loop_footer
        %s539 = sadd.s32 1, %s535
      $region54: #{temporal_spectrum_block.10} parent=47 // loop_footer_branch
        %534 = sbr.rel target = $region50
      $region55: #{temporal_spectrum_block.10} parent=47 // loop_exit
        _
      %p1506 = scmp.lt.s32.totalorder %s22, 1
      %s1507 = scalar_select %p1506, %s22, 1
      %p1508 = scmp.lt.s32.totalorder %s23, 1
      %s1509 = scalar_select %p1508, %s23, 1
      %s1510 = smul.addr %s1509, 8
      %s1511 = smul.addr %s1507, 16
      %s1512 = sadd.s32 %s1510, %s1511
      %s1513 = smul.addr %s1512, 8
      %s1514 = scalar_lea.vmem %s7, %s1513
      // Predicated region
      $region56: #{temporal_spectrum_block.10} parent=47 // pred_check
        %p1515 = pneg %p252
      $region57: #{temporal_spectrum_block.10} parent=47 // pred_check_branch
        %1517 = sbr.rel (%p1515) target = $region59
      $region58: #{temporal_spectrum_block.10} parent=47 // pred_region
        _
      $region59: #{temporal_spectrum_block.10} parent=47 // pred_fallthru
        _
    $region48: #{temporal_spectrum_block.10} parent=5 // pred_fallthru
      _
    %p1518 = scmp.le.s32.totalorder 2, %s13
    // Predicated region
    $region60: #{temporal_spectrum_block.10} parent=5 // pred_check
      %p1519 = pneg %p1518
    $region61: #{temporal_spectrum_block.10} parent=5 // pred_check_branch
      %1521 = sbr.rel (%p1519) target = $region63
    $region62: #{temporal_spectrum_block.10} parent=5 // pred_region
      %s1522 = ssub.s32 %s13, 2
      // Predicated region
      $region64: #{temporal_spectrum_block.10} parent=62 // pred_check
        %p1523 = pneg %p258
      $region65: #{temporal_spectrum_block.10} parent=62 // pred_check_branch
        %1525 = sbr.rel (%p1523) target = $region67
      $region66: #{temporal_spectrum_block.10} parent=62 // pred_region
        %p1526 = scmp.lt.s32.totalorder %s24, 1
        %s1527 = scalar_select %p1526, %s24, 1
        %p1528 = scmp.lt.s32.totalorder %s25, 1
        %s1529 = scalar_select %p1528, %s25, 1
        %s1530 = smul.addr %s1529, 8
        %s1531 = smul.addr %s1527, 16
        %s1532 = sadd.s32 %s1530, %s1531
        %s1533 = smul.addr %s1532, 8
        %s1534 = scalar_lea.vmem %s7, %s1533
      $region67: #{temporal_spectrum_block.10} parent=62 // pred_fallthru
        _
    $region63: #{temporal_spectrum_block.10} parent=5 // pred_fallthru
      _
  $region6: #{temporal_spectrum_block.10} parent=0 // loop_footer
    %s17 = sadd.s32 1, %s13
  $region7: #{temporal_spectrum_block.10} parent=0 // loop_footer_branch
    %12 = sbr.rel target = $region3
  $region8: #{temporal_spectrum_block.10} parent=0 // loop_exit
    _

// kernel: temporal_spectrum_block.11
$region0: #{temporal_spectrum_block.11}
  #allocation0 [shape = 'u32[]', space=smem, size = 0x4, offset = 0x4, fixed_abs, tag = 'smem constant byte address 0x4 - core index']
  #allocation1 [shape = 'u32[144,128]{1,0:T(1,128)}', space=vmem, size = 0x12000, scoped, tag = 'internal scratch']
  %s0 = inlined_call_operand.vmem [shape: f32[128,64], index: 0, kind: input, shape index: {}]
  %s1 = inlined_call_operand.vmem [shape: f32[128,64], index: 1, kind: input, shape index: {}]
  %s2 = inlined_call_operand.vmem [shape: f32[128,64], index: 2, kind: input, shape index: {}]
  %s3 = inlined_call_operand.vmem [shape: f32[128,32], index: 3, kind: input, shape index: {}]
  %s4 = inlined_call_operand.vmem [shape: f32[1,64], index: 4, kind: input, shape index: {}]
  %s5 = inlined_call_operand.vmem [shape: f32[1,64], index: 5, kind: input, shape index: {}]
  %s6 = inlined_call_operand.vmem [shape: bf16[64,32], index: 6, kind: input, shape index: {}]
  %s7 = inlined_call_operand.hbm [shape: f32[128,32], index: 7, kind: output, shape index: {}]
  %s8 = sld [smem:[#allocation0]]
  $region38: #{temporal_spectrum_block.11} parent=0
    _
  %s10 = ssub.s32 1, %s8
  %s11 = scalar_select 0, %s10, %s8
  $region1: #{temporal_spectrum_block.11} parent=0
    #allocation2 [shape = 'u8[65536]{0}', space=vmem, size = 0x10000, scoped, tag = 'output window, operand 0, single buffered']
    #allocation3 [shape = 's32[1]{0}', space=sflag, size = 0x4, scoped, tag = 'scoped memory for temporal_spectrum_block.11']
    %12 = vsyncpa [#allocation3], 0
    // Predicated region
    $region2: #{temporal_spectrum_block.11} parent=1 // pred_check
      _
    $region3: #{temporal_spectrum_block.11} parent=1 // pred_check_branch
      %14 = sbr.rel (0) target = $region5
    $region4: #{temporal_spectrum_block.11} parent=1 // pred_region
      _
    $region5: #{temporal_spectrum_block.11} parent=1 // pred_fallthru
      _
    // Predicated region
    $region6: #{temporal_spectrum_block.11} parent=1 // pred_check
      _
    $region7: #{temporal_spectrum_block.11} parent=1 // pred_check_branch
      %16 = sbr.rel (0) target = $region9
    $region8: #{temporal_spectrum_block.11} parent=1 // pred_region
      _
    $region9: #{temporal_spectrum_block.11} parent=1 // pred_fallthru
      _
    // Predicated region
    $region10: #{temporal_spectrum_block.11} parent=1 // pred_check
      _
    $region11: #{temporal_spectrum_block.11} parent=1 // pred_check_branch
      %18 = sbr.rel (0) target = $region13
    $region12: #{temporal_spectrum_block.11} parent=1 // pred_region
      _
    $region13: #{temporal_spectrum_block.11} parent=1 // pred_fallthru
      _
    // Predicated region
    $region14: #{temporal_spectrum_block.11} parent=1 // pred_check
      _
    $region15: #{temporal_spectrum_block.11} parent=1 // pred_check_branch
      %20 = sbr.rel (0) target = $region17
    $region16: #{temporal_spectrum_block.11} parent=1 // pred_region
      _
    $region17: #{temporal_spectrum_block.11} parent=1 // pred_fallthru
      _
    // Predicated region
    $region18: #{temporal_spectrum_block.11} parent=1 // pred_check
      _
    $region19: #{temporal_spectrum_block.11} parent=1 // pred_check_branch
      %22 = sbr.rel (0) target = $region21
    $region20: #{temporal_spectrum_block.11} parent=1 // pred_region
      _
    $region21: #{temporal_spectrum_block.11} parent=1 // pred_fallthru
      _
    // Predicated region
    $region22: #{temporal_spectrum_block.11} parent=1 // pred_check
      _
    $region23: #{temporal_spectrum_block.11} parent=1 // pred_check_branch
      %24 = sbr.rel (0) target = $region25
    $region24: #{temporal_spectrum_block.11} parent=1 // pred_region
      _
    $region25: #{temporal_spectrum_block.11} parent=1 // pred_fallthru
      _
    // Predicated region
    $region26: #{temporal_spectrum_block.11} parent=1 // pred_check
      _
    $region27: #{temporal_spectrum_block.11} parent=1 // pred_check_branch
      %26 = sbr.rel (0) target = $region29
    $region28: #{temporal_spectrum_block.11} parent=1 // pred_region
      _
    $region29: #{temporal_spectrum_block.11} parent=1 // pred_fallthru
      _
    %v28 = vld [vmem:[%s0] sm:$0xff]
    %v29 = vld [vmem:[%s0 + $0x8] sm:$0xff]
    %v30 = vld [vmem:[%s0 + $0x10] sm:$0xff]
    %v31 = vld [vmem:[%s0 + $0x18] sm:$0xff]
    %v32 = vld [vmem:[%s0 + $0x20] sm:$0xff]
    %v33 = vld [vmem:[%s0 + $0x28] sm:$0xff]
    %v34 = vld [vmem:[%s0 + $0x30] sm:$0xff]
    %v35 = vld [vmem:[%s0 + $0x38] sm:$0xff]
    %v36 = vld [vmem:[%s0 + $0x40] sm:$0xff]
    %v37 = vld [vmem:[%s0 + $0x48] sm:$0xff]
    %v38 = vld [vmem:[%s0 + $0x50] sm:$0xff]
    %v39 = vld [vmem:[%s0 + $0x58] sm:$0xff]
    %v40 = vld [vmem:[%s0 + $0x60] sm:$0xff]
    %v41 = vld [vmem:[%s0 + $0x68] sm:$0xff]
    %v42 = vld [vmem:[%s0 + $0x70] sm:$0xff]
    %v43 = vld [vmem:[%s0 + $0x78] sm:$0xff]
    %v44 = vld [vmem:[%s1] sm:$0xff]
    %v45 = vld [vmem:[%s1 + $0x8] sm:$0xff]
    %v46 = vld [vmem:[%s1 + $0x10] sm:$0xff]
    %v47 = vld [vmem:[%s1 + $0x18] sm:$0xff]
    %v48 = vld [vmem:[%s1 + $0x20] sm:$0xff]
    %v49 = vld [vmem:[%s1 + $0x28] sm:$0xff]
    %v50 = vld [vmem:[%s1 + $0x30] sm:$0xff]
    %v51 = vld [vmem:[%s1 + $0x38] sm:$0xff]
    %v52 = vld [vmem:[%s1 + $0x40] sm:$0xff]
    %v53 = vld [vmem:[%s1 + $0x48] sm:$0xff]
    %v54 = vld [vmem:[%s1 + $0x50] sm:$0xff]
    %v55 = vld [vmem:[%s1 + $0x58] sm:$0xff]
    %v56 = vld [vmem:[%s1 + $0x60] sm:$0xff]
    %v57 = vld [vmem:[%s1 + $0x68] sm:$0xff]
    %v58 = vld [vmem:[%s1 + $0x70] sm:$0xff]
    %v59 = vld [vmem:[%s1 + $0x78] sm:$0xff]
    %v60 = vadd.f32 %v28, %v44
    %v61 = vadd.f32 %v29, %v45
    %v62 = vadd.f32 %v30, %v46
    %v63 = vadd.f32 %v31, %v47
    %v64 = vadd.f32 %v32, %v48
    %v65 = vadd.f32 %v33, %v49
    %v66 = vadd.f32 %v34, %v50
    %v67 = vadd.f32 %v35, %v51
    %v68 = vadd.f32 %v36, %v52
    %v69 = vadd.f32 %v37, %v53
    %v70 = vadd.f32 %v38, %v54
    %v71 = vadd.f32 %v39, %v55
    %v72 = vadd.f32 %v40, %v56
    %v73 = vadd.f32 %v41, %v57
    %v74 = vadd.f32 %v42, %v58
    %v75 = vadd.f32 %v43, %v59
    %v76 = vld [vmem:[%s4] sm:$0x1]
    %v77 = vld [vmem:[%s5] sm:$0x1]
    %vm78 = vcmask 523264
    %v79 = vsel %vm78, %v60, 0.0
    %80 = vadd.xlane.f32.xlu0 %v79
    %v81 = vpop.xlane.xlu0 %80
    %v82 = vsel %vm78, %v61, 0.0
    %83 = vadd.xlane.f32.xlu0 %v82
    %v84 = vpop.xlane.xlu0 %83
    %v85 = vsel %vm78, %v62, 0.0
    %86 = vadd.xlane.f32.xlu0 %v85
    %v87 = vpop.xlane.xlu0 %86
    %v88 = vsel %vm78, %v63, 0.0
    %89 = vadd.xlane.f32.xlu0 %v88
    %v90 = vpop.xlane.xlu0 %89
    %v91 = vsel %vm78, %v64, 0.0
    %92 = vadd.xlane.f32.xlu0 %v91
    %v93 = vpop.xlane.xlu0 %92
    %v94 = vsel %vm78, %v65, 0.0
    %95 = vadd.xlane.f32.xlu0 %v94
    %v96 = vpop.xlane.xlu0 %95
    %v97 = vsel %vm78, %v66, 0.0
    %98 = vadd.xlane.f32.xlu0 %v97
    %v99 = vpop.xlane.xlu0 %98
    %v100 = vsel %vm78, %v67, 0.0
    %101 = vadd.xlane.f32.xlu0 %v100
    %v102 = vpop.xlane.xlu0 %101
    %v103 = vsel %vm78, %v68, 0.0
    %104 = vadd.xlane.f32.xlu0 %v103
    %v105 = vpop.xlane.xlu0 %104
    %v106 = vsel %vm78, %v69, 0.0
    %107 = vadd.xlane.f32.xlu0 %v106
    %v108 = vpop.xlane.xlu0 %107
    %v109 = vsel %vm78, %v70, 0.0
    %110 = vadd.xlane.f32.xlu0 %v109
    %v111 = vpop.xlane.xlu0 %110
    %v112 = vsel %vm78, %v71, 0.0
    %113 = vadd.xlane.f32.xlu0 %v112
    %v114 = vpop.xlane.xlu0 %113
    %v115 = vsel %vm78, %v72, 0.0
    %116 = vadd.xlane.f32.xlu0 %v115
    %v117 = vpop.xlane.xlu0 %116
    %v118 = vsel %vm78, %v73, 0.0
    %119 = vadd.xlane.f32.xlu0 %v118
    %v120 = vpop.xlane.xlu0 %119
    %v121 = vsel %vm78, %v74, 0.0
    %122 = vadd.xlane.f32.xlu0 %v121
    %v123 = vpop.xlane.xlu0 %122
    %v124 = vsel %vm78, %v75, 0.0
    %125 = vadd.xlane.f32.xlu0 %v124
    %v126 = vpop.xlane.xlu0 %125
    %v127 = vrcp.pop 64.0
    %v128 = vmul.f32 %v81, %v127
    %v129 = vmul.f32 %v84, %v127
    %v130 = vmul.f32 %v87, %v127
    %v131 = vmul.f32 %v90, %v127
    %v132 = vmul.f32 %v93, %v127
    %v133 = vmul.f32 %v96, %v127
    %v134 = vmul.f32 %v99, %v127
    %v135 = vmul.f32 %v102, %v127
    %v136 = vmul.f32 %v105, %v127
    %v137 = vmul.f32 %v108, %v127
    %v138 = vmul.f32 %v111, %v127
    %v139 = vmul.f32 %v114, %v127
    %v140 = vmul.f32 %v117, %v127
    %v141 = vmul.f32 %v120, %v127
    %v142 = vmul.f32 %v123, %v127
    %v143 = vmul.f32 %v126, %v127
    %v144 = vsub.f32 %v60, %v128
    %v145 = vsub.f32 %v61, %v129
    %v146 = vsub.f32 %v62, %v130
    %v147 = vsub.f32 %v63, %v131
    %v148 = vsub.f32 %v64, %v132
    %v149 = vsub.f32 %v65, %v133
    %v150 = vsub.f32 %v66, %v134
    %v151 = vsub.f32 %v67, %v135
    %v152 = vsub.f32 %v68, %v136
    %v153 = vsub.f32 %v69, %v137
    %v154 = vsub.f32 %v70, %v138
    %v155 = vsub.f32 %v71, %v139
    %v156 = vsub.f32 %v72, %v140
    %v157 = vsub.f32 %v73, %v141
    %v158 = vsub.f32 %v74, %v142
    %v159 = vsub.f32 %v75, %v143
    %v160 = vmul.f32 %v144, %v144
    %v161 = vmul.f32 %v145, %v145
    %v162 = vmul.f32 %v146, %v146
    %v163 = vmul.f32 %v147, %v147
    %v164 = vmul.f32 %v148, %v148
    %v165 = vmul.f32 %v149, %v149
    %v166 = vmul.f32 %v150, %v150
    %v167 = vmul.f32 %v151, %v151
    %v168 = vmul.f32 %v152, %v152
    %v169 = vmul.f32 %v153, %v153
    %v170 = vmul.f32 %v154, %v154
    %v171 = vmul.f32 %v155, %v155
    %v172 = vmul.f32 %v156, %v156
    %v173 = vmul.f32 %v157, %v157
    %v174 = vmul.f32 %v158, %v158
    %v175 = vmul.f32 %v159, %v159
    %v176 = vsel %vm78, %v160, 0.0
    %177 = vadd.xlane.f32.xlu0 %v176
    %v178 = vpop.xlane.xlu0 %177
    %v179 = vsel %vm78, %v161, 0.0
    %180 = vadd.xlane.f32.xlu0 %v179
    %v181 = vpop.xlane.xlu0 %180
    %v182 = vsel %vm78, %v162, 0.0
    %183 = vadd.xlane.f32.xlu0 %v182
    %v184 = vpop.xlane.xlu0 %183
    %v185 = vsel %vm78, %v163, 0.0
    %186 = vadd.xlane.f32.xlu0 %v185
    %v187 = vpop.xlane.xlu0 %186
    %v188 = vsel %vm78, %v164, 0.0
    %189 = vadd.xlane.f32.xlu0 %v188
    %v190 = vpop.xlane.xlu0 %189
    %v191 = vsel %vm78, %v165, 0.0
    %192 = vadd.xlane.f32.xlu0 %v191
    %v193 = vpop.xlane.xlu0 %192
    %v194 = vsel %vm78, %v166, 0.0
    %195 = vadd.xlane.f32.xlu0 %v194
    %v196 = vpop.xlane.xlu0 %195
    %v197 = vsel %vm78, %v167, 0.0
    %198 = vadd.xlane.f32.xlu0 %v197
    %v199 = vpop.xlane.xlu0 %198
    %v200 = vsel %vm78, %v168, 0.0
    %201 = vadd.xlane.f32.xlu0 %v200
    %v202 = vpop.xlane.xlu0 %201
    %v203 = vsel %vm78, %v169, 0.0
    %204 = vadd.xlane.f32.xlu0 %v203
    %v205 = vpop.xlane.xlu0 %204
    %v206 = vsel %vm78, %v170, 0.0
    %207 = vadd.xlane.f32.xlu0 %v206
    %v208 = vpop.xlane.xlu0 %207
    %v209 = vsel %vm78, %v171, 0.0
    %210 = vadd.xlane.f32.xlu0 %v209
    %v211 = vpop.xlane.xlu0 %210
    %v212 = vsel %vm78, %v172, 0.0
    %213 = vadd.xlane.f32.xlu0 %v212
    %v214 = vpop.xlane.xlu0 %213
    %v215 = vsel %vm78, %v173, 0.0
    %216 = vadd.xlane.f32.xlu0 %v215
    %v217 = vpop.xlane.xlu0 %216
    %v218 = vsel %vm78, %v174, 0.0
    %219 = vadd.xlane.f32.xlu0 %v218
    %v220 = vpop.xlane.xlu0 %219
    %v221 = vsel %vm78, %v175, 0.0
    %222 = vadd.xlane.f32.xlu0 %v221
    %v223 = vpop.xlane.xlu0 %222
    %v224 = vmul.f32 %v178, %v127
    %v225 = vmul.f32 %v181, %v127
    %v226 = vmul.f32 %v184, %v127
    %v227 = vmul.f32 %v187, %v127
    %v228 = vmul.f32 %v190, %v127
    %v229 = vmul.f32 %v193, %v127
    %v230 = vmul.f32 %v196, %v127
    %v231 = vmul.f32 %v199, %v127
    %v232 = vmul.f32 %v202, %v127
    %v233 = vmul.f32 %v205, %v127
    %v234 = vmul.f32 %v208, %v127
    %v235 = vmul.f32 %v211, %v127
    %v236 = vmul.f32 %v214, %v127
    %v237 = vmul.f32 %v217, %v127
    %v238 = vmul.f32 %v220, %v127
    %v239 = vmul.f32 %v223, %v127
    %v240 = vadd.f32 %v224, 1e-05
    %v241 = vadd.f32 %v225, 1e-05
    %v242 = vadd.f32 %v226, 1e-05
    %v243 = vadd.f32 %v227, 1e-05
    %v244 = vadd.f32 %v228, 1e-05
    %v245 = vadd.f32 %v229, 1e-05
    %v246 = vadd.f32 %v230, 1e-05
    %v247 = vadd.f32 %v231, 1e-05
    %v248 = vadd.f32 %v232, 1e-05
    %v249 = vadd.f32 %v233, 1e-05
    %v250 = vadd.f32 %v234, 1e-05
    %v251 = vadd.f32 %v235, 1e-05
    %v252 = vadd.f32 %v236, 1e-05
    %v253 = vadd.f32 %v237, 1e-05
    %v254 = vadd.f32 %v238, 1e-05
    %v255 = vadd.f32 %v239, 1e-05
    %v256 = vrsqrt.pop %v240
    %v257 = vrsqrt.pop %v241
    %v258 = vrsqrt.pop %v242
    %v259 = vrsqrt.pop %v243
    %v260 = vrsqrt.pop %v244
    %v261 = vrsqrt.pop %v245
    %v262 = vrsqrt.pop %v246
    %v263 = vrsqrt.pop %v247
    %v264 = vrsqrt.pop %v248
    %v265 = vrsqrt.pop %v249
    %v266 = vrsqrt.pop %v250
    %v267 = vrsqrt.pop %v251
    %v268 = vrsqrt.pop %v252
    %v269 = vrsqrt.pop %v253
    %v270 = vrsqrt.pop %v254
    %v271 = vrsqrt.pop %v255
    %v272 = vmul.f32 %v144, %v256
    %v273 = vmul.f32 %v145, %v257
    %v274 = vmul.f32 %v146, %v258
    %v275 = vmul.f32 %v147, %v259
    %v276 = vmul.f32 %v148, %v260
    %v277 = vmul.f32 %v149, %v261
    %v278 = vmul.f32 %v150, %v262
    %v279 = vmul.f32 %v151, %v263
    %v280 = vmul.f32 %v152, %v264
    %v281 = vmul.f32 %v153, %v265
    %v282 = vmul.f32 %v154, %v266
    %v283 = vmul.f32 %v155, %v267
    %v284 = vmul.f32 %v156, %v268
    %v285 = vmul.f32 %v157, %v269
    %v286 = vmul.f32 %v158, %v270
    %v287 = vmul.f32 %v159, %v271
    %v289 = vlaneseq
    %v290 = vshrl.u32 %v289, 7
    %v291 = vsub.s32 0, %v290
    %v292 = vrot.slane %v76, %v291
    %v294 = vmul.f32 %v272, %v292
    %v295 = vmul.f32 %v273, %v292
    %v296 = vmul.f32 %v274, %v292
    %v297 = vmul.f32 %v275, %v292
    %v298 = vmul.f32 %v276, %v292
    %v299 = vmul.f32 %v277, %v292
    %v300 = vmul.f32 %v278, %v292
    %v301 = vmul.f32 %v279, %v292
    %v302 = vmul.f32 %v280, %v292
    %v303 = vmul.f32 %v281, %v292
    %v304 = vmul.f32 %v282, %v292
    %v305 = vmul.f32 %v283, %v292
    %v306 = vmul.f32 %v284, %v292
    %v307 = vmul.f32 %v285, %v292
    %v308 = vmul.f32 %v286, %v292
    %v309 = vmul.f32 %v287, %v292
    %v311 = vlaneseq
    %v312 = vshrl.u32 %v311, 7
    %v313 = vsub.s32 0, %v312
    %v314 = vrot.slane %v77, %v313
    %v316 = vadd.f32 %v294, %v314
    %v317 = vadd.f32 %v295, %v314
    %v318 = vadd.f32 %v296, %v314
    %v319 = vadd.f32 %v297, %v314
    %v320 = vadd.f32 %v298, %v314
    %v321 = vadd.f32 %v299, %v314
    %v322 = vadd.f32 %v300, %v314
    %v323 = vadd.f32 %v301, %v314
    %v324 = vadd.f32 %v302, %v314
    %v325 = vadd.f32 %v303, %v314
    %v326 = vadd.f32 %v304, %v314
    %v327 = vadd.f32 %v305, %v314
    %v328 = vadd.f32 %v306, %v314
    %v329 = vadd.f32 %v307, %v314
    %v330 = vadd.f32 %v308, %v314
    %v331 = vadd.f32 %v309, %v314
    %v332 = vld [vmem:[%s2] sm:$0xff]
    %v333 = vld [vmem:[%s2 + $0x8] sm:$0xff]
    %v334 = vld [vmem:[%s2 + $0x10] sm:$0xff]
    %v335 = vld [vmem:[%s2 + $0x18] sm:$0xff]
    %v336 = vld [vmem:[%s2 + $0x20] sm:$0xff]
    %v337 = vld [vmem:[%s2 + $0x28] sm:$0xff]
    %v338 = vld [vmem:[%s2 + $0x30] sm:$0xff]
    %v339 = vld [vmem:[%s2 + $0x38] sm:$0xff]
    %v340 = vld [vmem:[%s2 + $0x40] sm:$0xff]
    %v341 = vld [vmem:[%s2 + $0x48] sm:$0xff]
    %v342 = vld [vmem:[%s2 + $0x50] sm:$0xff]
    %v343 = vld [vmem:[%s2 + $0x58] sm:$0xff]
    %v344 = vld [vmem:[%s2 + $0x60] sm:$0xff]
    %v345 = vld [vmem:[%s2 + $0x68] sm:$0xff]
    %v346 = vld [vmem:[%s2 + $0x70] sm:$0xff]
    %v347 = vld [vmem:[%s2 + $0x78] sm:$0xff]
    %v348 = vmul.f32 %v332, 0.5
    %v349 = vmul.f32 %v333, 0.5
    %v350 = vmul.f32 %v334, 0.5
    %v351 = vmul.f32 %v335, 0.5
    %v352 = vmul.f32 %v336, 0.5
    %v353 = vmul.f32 %v337, 0.5
    %v354 = vmul.f32 %v338, 0.5
    %v355 = vmul.f32 %v339, 0.5
    %v356 = vmul.f32 %v340, 0.5
    %v357 = vmul.f32 %v341, 0.5
    %v358 = vmul.f32 %v342, 0.5
    %v359 = vmul.f32 %v343, 0.5
    %v360 = vmul.f32 %v344, 0.5
    %v361 = vmul.f32 %v345, 0.5
    %v362 = vmul.f32 %v346, 0.5
    %v363 = vmul.f32 %v347, 0.5
    %v364 = vtanh.pop %v348
    %v365 = vtanh.pop %v349
    %v366 = vtanh.pop %v350
    %v367 = vtanh.pop %v351
    %v368 = vtanh.pop %v352
    %v369 = vtanh.pop %v353
    %v370 = vtanh.pop %v354
    %v371 = vtanh.pop %v355
    %v372 = vtanh.pop %v356
    %v373 = vtanh.pop %v357
    %v374 = vtanh.pop %v358
    %v375 = vtanh.pop %v359
    %v376 = vtanh.pop %v360
    %v377 = vtanh.pop %v361
    %v378 = vtanh.pop %v362
    %v379 = vtanh.pop %v363
    %v380 = vadd.f32 %v364, 1.0
    %v381 = vadd.f32 %v365, 1.0
    %v382 = vadd.f32 %v366, 1.0
    %v383 = vadd.f32 %v367, 1.0
    %v384 = vadd.f32 %v368, 1.0
    %v385 = vadd.f32 %v369, 1.0
    %v386 = vadd.f32 %v370, 1.0
    %v387 = vadd.f32 %v371, 1.0
    %v388 = vadd.f32 %v372, 1.0
    %v389 = vadd.f32 %v373, 1.0
    %v390 = vadd.f32 %v374, 1.0
    %v391 = vadd.f32 %v375, 1.0
    %v392 = vadd.f32 %v376, 1.0
    %v393 = vadd.f32 %v377, 1.0
    %v394 = vadd.f32 %v378, 1.0
    %v395 = vadd.f32 %v379, 1.0
    %v396 = vmul.f32 %v380, 0.5
    %v397 = vmul.f32 %v381, 0.5
    %v398 = vmul.f32 %v382, 0.5
    %v399 = vmul.f32 %v383, 0.5
    %v400 = vmul.f32 %v384, 0.5
    %v401 = vmul.f32 %v385, 0.5
    %v402 = vmul.f32 %v386, 0.5
    %v403 = vmul.f32 %v387, 0.5
    %v404 = vmul.f32 %v388, 0.5
    %v405 = vmul.f32 %v389, 0.5
    %v406 = vmul.f32 %v390, 0.5
    %v407 = vmul.f32 %v391, 0.5
    %v408 = vmul.f32 %v392, 0.5
    %v409 = vmul.f32 %v393, 0.5
    %v410 = vmul.f32 %v394, 0.5
    %v411 = vmul.f32 %v395, 0.5
    %v412 = vmul.f32 %v332, %v396
    %v413 = vmul.f32 %v333, %v397
    %v414 = vmul.f32 %v334, %v398
    %v415 = vmul.f32 %v335, %v399
    %v416 = vmul.f32 %v336, %v400
    %v417 = vmul.f32 %v337, %v401
    %v418 = vmul.f32 %v338, %v402
    %v419 = vmul.f32 %v339, %v403
    %v420 = vmul.f32 %v340, %v404
    %v421 = vmul.f32 %v341, %v405
    %v422 = vmul.f32 %v342, %v406
    %v423 = vmul.f32 %v343, %v407
    %v424 = vmul.f32 %v344, %v408
    %v425 = vmul.f32 %v345, %v409
    %v426 = vmul.f32 %v346, %v410
    %v427 = vmul.f32 %v347, %v411
    %v428 = vmul.f32 %v316, %v412
    %v429 = vmul.f32 %v317, %v413
    %v430 = vmul.f32 %v318, %v414
    %v431 = vmul.f32 %v319, %v415
    %v432 = vmul.f32 %v320, %v416
    %v433 = vmul.f32 %v321, %v417
    %v434 = vmul.f32 %v322, %v418
    %v435 = vmul.f32 %v323, %v419
    %v436 = vmul.f32 %v324, %v420
    %v437 = vmul.f32 %v325, %v421
    %v438 = vmul.f32 %v326, %v422
    %v439 = vmul.f32 %v327, %v423
    %v440 = vmul.f32 %v328, %v424
    %v441 = vmul.f32 %v329, %v425
    %v442 = vmul.f32 %v330, %v426
    %v443 = vmul.f32 %v331, %v427
    %v444 = vpack.c.bf16 %v429, %v428
    %v445 = vpack.c.bf16 %v431, %v430
    %v446 = vpack.c.bf16 %v433, %v432
    %v447 = vpack.c.bf16 %v435, %v434
    %v448 = vpack.c.bf16 %v437, %v436
    %v449 = vpack.c.bf16 %v439, %v438
    %v450 = vpack.c.bf16 %v441, %v440
    %v451 = vpack.c.bf16 %v443, %v442
    %v452 = vld [vmem:[%s6] sm:$0xf]
    %v453 = vld [vmem:[%s6 + $0x4] sm:$0xf]
    %v454 = vld [vmem:[%s6 + $0x8] sm:$0xf]
    %v455 = vld [vmem:[%s6 + $0xc] sm:$0xf]
    %v456 = vld [vmem:[%s6 + $0x10] sm:$0xf]
    %v457 = vld [vmem:[%s6 + $0x14] sm:$0xf]
    %v458 = vld [vmem:[%s6 + $0x18] sm:$0xf]
    %v459 = vld [vmem:[%s6 + $0x1c] sm:$0xf]
    %v460 = vld [vmem:[%s3] sm:$0xff]
    %v461 = vld [vmem:[%s3 + $0x8] sm:$0xff]
    %v462 = vld [vmem:[%s3 + $0x10] sm:$0xff]
    %v463 = vld [vmem:[%s3 + $0x18] sm:$0xff]
    %v464 = vld [vmem:[%s3 + $0x20] sm:$0xff]
    %v465 = vld [vmem:[%s3 + $0x28] sm:$0xff]
    %v466 = vld [vmem:[%s3 + $0x30] sm:$0xff]
    %v467 = vld [vmem:[%s3 + $0x38] sm:$0xff]
    %v468 = vld [vmem:[%s3 + $0x40] sm:$0xff]
    %v469 = vld [vmem:[%s3 + $0x48] sm:$0xff]
    %v470 = vld [vmem:[%s3 + $0x50] sm:$0xff]
    %v471 = vld [vmem:[%s3 + $0x58] sm:$0xff]
    %v472 = vld [vmem:[%s3 + $0x60] sm:$0xff]
    %v473 = vld [vmem:[%s3 + $0x68] sm:$0xff]
    %v474 = vld [vmem:[%s3 + $0x70] sm:$0xff]
    %v475 = vld [vmem:[%s3 + $0x78] sm:$0xff]
    %v484 = vunpack.c.l.b16 %v452
    %v485 = vunpack.c.l.b16 %v453
    %v486 = vunpack.c.l.b16 %v454
    %v487 = vunpack.c.l.b16 %v455
    %v488 = vunpack.c.l.b16 %v456
    %v489 = vunpack.c.l.b16 %v457
    %v490 = vunpack.c.l.b16 %v458
    %v491 = vunpack.c.l.b16 %v459
    %v492 = vpack.c.b16 %v485, %v484
    %v493 = vpack.c.b16 %v487, %v486
    %v494 = vpack.c.b16 %v489, %v488
    %v495 = vpack.c.b16 %v491, %v490
    %v501 = vsel %vm78, %v444, 0
    %v504 = vsel %vm78, %v445, 0
    %v507 = vsel %vm78, %v446, 0
    %v510 = vsel %vm78, %v447, 0
    %v513 = vsel %vm78, %v448, 0
    %v516 = vsel %vm78, %v449, 0
    %v519 = vsel %vm78, %v450, 0
    %v522 = vsel %vm78, %v451, 0
    %524 = vmatprep.subr.bf16.mxu0 0
    %525 = vmatpush1.bf16.msra.mxu0 0
    %526 = vmatprep.subr.bf16.mxu0 0
    %527 = vmatpush1.bf16.msra.mxu0 0
    %528 = vmatprep.subr.bf16.mxu0 0
    %529 = vmatpush1.bf16.msra.mxu0 0
    %530 = vmatprep.subr.bf16.mxu0 0
    %531 = vmatpush1.bf16.msra.mxu0 0
    %532 = vmatprep.subr.bf16.mxu0 0
    %533 = vmatpush1.bf16.msra.mxu0 %v495
    %534 = vmatprep.subr.bf16.mxu0 0
    %535 = vmatpush1.bf16.msra.mxu0 %v494
    %536 = vmatprep.subr.bf16.mxu0 0
    %537 = vmatpush1.bf16.msra.mxu0 %v493
    %538 = vmatprep.subr.bf16.mxu0 0
    %539 = vmatpush1.bf16.msra.mxu0 %v492
    %540 = vmatprep.subr.bf16.mxu0 0
    %541 = vmatpush2.bf16.msra.mxu0 0
    %542 = vmatprep.subr.bf16.mxu0 0
    %543 = vmatpush2.bf16.msra.mxu0 0
    %544 = vmatprep.subr.bf16.mxu0 0
    %545 = vmatpush2.bf16.msra.mxu0 0
    %546 = vmatprep.subr.bf16.mxu0 0
    %547 = vmatpush2.bf16.msra.mxu0 0
    %548 = vmatprep.subr.bf16.mxu0 0
    %549 = vmatpush2.bf16.msra.mxu0 0
    %550 = vmatprep.subr.bf16.mxu0 0
    %551 = vmatpush2.bf16.msra.mxu0 0
    %552 = vmatprep.subr.bf16.mxu0 0
    %553 = vmatpush2.bf16.msra.mxu0 0
    %554 = vmatprep.subr.bf16.mxu0 0
    %555 = vmatpush2.bf16.msra.mxu0 0
    %556 = vmatprep.mubr.bf16.mxu0 0
    %557 = vmatmul.mubr.bf16.gmra.mxu0 %v501
    %v558 = vpop.f32.mrf.mxu0
    %v559 = vadd.f32 %v460, %v558
    %v560 = vpop.f32.mrf.mxu0
    %v561 = vpop.f32.mrf.mxu0
    %v562 = vadd.f32 %v461, %v561
    %v563 = vpop.f32.mrf.mxu0
    %564 = vmatprep.mubr.bf16.mxu0 0
    %565 = vmatmul.mubr.bf16.gmra.mxu0 %v504
    %v566 = vpop.f32.mrf.mxu0
    %v567 = vadd.f32 %v462, %v566
    %v568 = vpop.f32.mrf.mxu0
    %v569 = vpop.f32.mrf.mxu0
    %v570 = vadd.f32 %v463, %v569
    %v571 = vpop.f32.mrf.mxu0
    %572 = vmatprep.mubr.bf16.mxu0 0
    %573 = vmatmul.mubr.bf16.gmra.mxu0 %v507
    %v574 = vpop.f32.mrf.mxu0
    %v575 = vadd.f32 %v464, %v574
    %v576 = vpop.f32.mrf.mxu0
    %v577 = vpop.f32.mrf.mxu0
    %v578 = vadd.f32 %v465, %v577
    %v579 = vpop.f32.mrf.mxu0
    %580 = vmatprep.mubr.bf16.mxu0 0
    %581 = vmatmul.mubr.bf16.gmra.mxu0 %v510
    %v582 = vpop.f32.mrf.mxu0
    %v583 = vadd.f32 %v466, %v582
    %v584 = vpop.f32.mrf.mxu0
    %v585 = vpop.f32.mrf.mxu0
    %v586 = vadd.f32 %v467, %v585
    %v587 = vpop.f32.mrf.mxu0
    %588 = vmatprep.mubr.bf16.mxu0 0
    %589 = vmatmul.mubr.bf16.gmra.mxu0 %v513
    %v590 = vpop.f32.mrf.mxu0
    %v591 = vadd.f32 %v468, %v590
    %v592 = vpop.f32.mrf.mxu0
    %v593 = vpop.f32.mrf.mxu0
    %v594 = vadd.f32 %v469, %v593
    %v595 = vpop.f32.mrf.mxu0
    %596 = vmatprep.mubr.bf16.mxu0 0
    %597 = vmatmul.mubr.bf16.gmra.mxu0 %v516
    %v598 = vpop.f32.mrf.mxu0
    %v599 = vadd.f32 %v470, %v598
    %v600 = vpop.f32.mrf.mxu0
    %v601 = vpop.f32.mrf.mxu0
    %v602 = vadd.f32 %v471, %v601
    %v603 = vpop.f32.mrf.mxu0
    %604 = vmatprep.mubr.bf16.mxu0 0
    %605 = vmatmul.mubr.bf16.gmra.mxu0 %v519
    %v606 = vpop.f32.mrf.mxu0
    %v607 = vadd.f32 %v472, %v606
    %v608 = vpop.f32.mrf.mxu0
    %v609 = vpop.f32.mrf.mxu0
    %v610 = vadd.f32 %v473, %v609
    %v611 = vpop.f32.mrf.mxu0
    %612 = vmatprep.mubr.bf16.mxu0 0
    %613 = vmatmul.mubr.bf16.gmra.mxu0 %v522
    %v614 = vpop.f32.mrf.mxu0
    %v615 = vadd.f32 %v474, %v614
    %v616 = vpop.f32.mrf.mxu0
    %v617 = vpop.f32.mrf.mxu0
    %v618 = vadd.f32 %v475, %v617
    %v619 = vpop.f32.mrf.mxu0
    %620 = vdwg.mxu0
    %vm621 = vcmask 261120
    %622 = vst.msk [vmem:[#allocation2] sm:$0xff] %vm621, %v559
    %623 = vst.msk [vmem:[#allocation2 + $0x8] sm:$0xff] %vm621, %v562
    %624 = vst.msk [vmem:[#allocation2 + $0x10] sm:$0xff] %vm621, %v567
    %625 = vst.msk [vmem:[#allocation2 + $0x18] sm:$0xff] %vm621, %v570
    %626 = vst.msk [vmem:[#allocation2 + $0x20] sm:$0xff] %vm621, %v575
    %627 = vst.msk [vmem:[#allocation2 + $0x28] sm:$0xff] %vm621, %v578
    %628 = vst.msk [vmem:[#allocation2 + $0x30] sm:$0xff] %vm621, %v583
    %629 = vst.msk [vmem:[#allocation2 + $0x38] sm:$0xff] %vm621, %v586
    %630 = vst.msk [vmem:[#allocation2 + $0x40] sm:$0xff] %vm621, %v591
    %631 = vst.msk [vmem:[#allocation2 + $0x48] sm:$0xff] %vm621, %v594
    %632 = vst.msk [vmem:[#allocation2 + $0x50] sm:$0xff] %vm621, %v599
    %633 = vst.msk [vmem:[#allocation2 + $0x58] sm:$0xff] %vm621, %v602
    %634 = vst.msk [vmem:[#allocation2 + $0x60] sm:$0xff] %vm621, %v607
    %635 = vst.msk [vmem:[#allocation2 + $0x68] sm:$0xff] %vm621, %v610
    %636 = vst.msk [vmem:[#allocation2 + $0x70] sm:$0xff] %vm621, %v615
    %637 = vst.msk [vmem:[#allocation2 + $0x78] sm:$0xff] %vm621, %v618
    // Predicated region
    $region30: #{temporal_spectrum_block.11} parent=1 // pred_check
      _
    $region31: #{temporal_spectrum_block.11} parent=1 // pred_check_branch
      %639 = sbr.rel (0) target = $region33
    $region32: #{temporal_spectrum_block.11} parent=1 // pred_region
      %s641 = ssub.s32 2048, 2048
      %642 = vsyncadd [#allocation3], %s641
      %s643 = sshll.u32 [#allocation2], 4
      %s644 = int_to_ptr.vmem [resolvable:$true] %s643
      %649 = dma.vmem_to_hbm [thread:$0]  %s644, 2048, %s7, [#allocation3], 128, 128, 8
    $region33: #{temporal_spectrum_block.11} parent=1 // pred_fallthru
      _
    // Predicated region
    $region34: #{temporal_spectrum_block.11} parent=1 // pred_check
      _
    $region35: #{temporal_spectrum_block.11} parent=1 // pred_check_branch
      %651 = sbr.rel (0) target = $region37
    $region36: #{temporal_spectrum_block.11} parent=1 // pred_region
      %652 = dma.done [#allocation3], 2048
    $region37: #{temporal_spectrum_block.11} parent=1 // pred_fallthru
      _
    %653 = vsyncpa [#allocation3], 1

</llo_original>
